<compile_context>
chip_gen: v7x
topology: tpu7x:2x2x1
jax: 0.10.0
libtpu: 0.0.40
codegen_flags: <defaults>
</compile_context>

<pallas_src>
import functools

import jax
import jax.numpy as jnp
from jax.experimental import pallas as pl
from jax.experimental.pallas import tpu as pltpu


def _round_up(x: int, m: int) -> int:
    return ((x + m - 1) // m) * m


# --------------------------------------------------------------------------- #
# Kernel
# --------------------------------------------------------------------------- #
def _spectral_mix_kernel(xr_ref, xi_ref, wr_ref, wi_ref, yr_ref, yi_ref):
    """One mode-tile of the per-mode complex channel mix.

    xr_ref, xi_ref: (MT, Bp, Cin_p)    bf16   real / imag activations
    wr_ref, wi_ref: (MT, Cin_p, Cout_p) bf16  real / imag weights
    yr_ref, yi_ref: (MT, Bp, Cout_p)   bf16   real / imag outputs
    """
    mt = xr_ref.shape[0]
    # Static unroll over the mode tile (MT is compile-time): 4 real dots per
    # mode, f32 accumulation on the MXU, single bf16 store per output.
    for m in range(mt):
        xr = xr_ref[m]
        xi = xi_ref[m]
        wr = wr_ref[m]
        wi = wi_ref[m]
        rr = jnp.dot(xr, wr, preferred_element_type=jnp.float32)
        ii = jnp.dot(xi, wi, preferred_element_type=jnp.float32)
        ri = jnp.dot(xr, wi, preferred_element_type=jnp.float32)
        ir = jnp.dot(xi, wr, preferred_element_type=jnp.float32)
        yr_ref[m] = (rr - ii).astype(yr_ref.dtype)
        yi_ref[m] = (ri + ir).astype(yi_ref.dtype)


# --------------------------------------------------------------------------- #
# Weight packing (call once; only re-run when the weights change)
# --------------------------------------------------------------------------- #
def pack_spectral_weights(weights1, weights2, *, mode_tile=32, batch_hint=8,
                          compute_dtype=jnp.bfloat16, out_dtype=jnp.bfloat16,
                          vmem_budget_bytes=40 * 1024 * 1024):
    """Repack complex weights into mode-major real/imag bf16 slabs.

    weights1/weights2: (Cin, Cout, m1, m2) complex64.
    Returns (wr_slab, wi_slab, mode_tile) where slabs are (Mp, Cin_p, Cout_p).
    """
    Cin, Cout, m1, m2 = weights1.shape
    Mtot = 2 * m1 * m2
    Cin_p = _round_up(Cin, 8)
    # Lane-dense (128) output padding only pays when Cout is already large;
    # otherwise pad minimally and accept masked stores (cheaper than 16x bytes).
    Cout_p = _round_up(Cout, 128) if Cout >= 64 else _round_up(Cout, 8)
    Bp = _round_up(max(int(batch_hint), 1), 8)

    in_isz = jnp.dtype(compute_dtype).itemsize
    out_isz = jnp.dtype(out_dtype).itemsize

    # Keep >= 2 grid steps (v7x: 2 TensorCores split the "parallel" mode axis).
    mt = max(8, min(int(mode_tile), _round_up(max(1, -(-Mtot // 2)), 8)))

    def _footprint(t):  # double-buffered per-step VMEM bytes
        x_b = 2 * t * Bp * Cin_p * in_isz
        w_b = 2 * t * Cin_p * Cout_p * in_isz
        o_b = 2 * t * Bp * Cout_p * out_isz
        return 2 * (x_b + w_b + o_b)

    while mt > 8 and _footprint(mt) > vmem_budget_bytes:
        mt = max(8, mt // 2)

    Mp = _round_up(Mtot, mt)

    wc = jnp.stack([weights1, weights2], axis=0)                 # (2,Cin,Cout,m1,m2)
    wc = jnp.transpose(wc, (0, 3, 4, 1, 2)).reshape(Mtot, Cin, Cout)
    pad = ((0, Mp - Mtot), (0, Cin_p - Cin), (0, Cout_p - Cout))
    wr_slab = jnp.pad(jnp.real(wc), pad).astype(compute_dtype)
    wi_slab = jnp.pad(jnp.imag(wc), pad).astype(compute_dtype)
    return wr_slab, wi_slab, mt


# --------------------------------------------------------------------------- #
# Forward pass
# --------------------------------------------------------------------------- #
def spectral_conv2d(x, wr_slab, wi_slab, *, modes1, modes2, out_channels,
                    mode_tile, compute_dtype=jnp.bfloat16,
                    out_dtype=jnp.bfloat16):
    """Forward pass equivalent to the PyTorch SpectralConv2d module.

    x:       (B, Cin, H, W) float32
    wr_slab/wi_slab: packed weight slabs from pack_spectral_weights().
    """
    B, Cin, H, W = x.shape
    Wf = W // 2 + 1
    Mp, Cin_p, Cout_p = wr_slab.shape
    Mtot = 2 * modes1 * modes2
    Bp = _round_up(B, 8)

    # ---- FFT (plain JAX glue) ------------------------------------------------
    x_ft = jnp.fft.rfft2(x)                                   # (B, Cin, H, Wf)

    # ---- slice only the kept corner modes, mode-major layout -----------------
    lo = x_ft[:, :, :modes1, :modes2]                         # (B, Cin, m1, m2)
    hi = x_ft[:, :, H - modes1:, :modes2]                     # (B, Cin, m1, m2)
    xc = jnp.stack([lo, hi], axis=0)                          # (2, B, Cin, m1, m2)
    xc = jnp.transpose(xc, (0, 3, 4, 1, 2)).reshape(Mtot, B, Cin)
    padx = ((0, Mp - Mtot), (0, Bp - B), (0, Cin_p - Cin))
    xr = jnp.pad(jnp.real(xc), padx).astype(compute_dtype)    # (Mp, Bp, Cin_p)
    xi = jnp.pad(jnp.imag(xc), padx).astype(compute_dtype)

    grid = (Mp // mode_tile,)
    in_isz = jnp.dtype(compute_dtype).itemsize
    out_isz = jnp.dtype(out_dtype).itemsize
    cost = pl.CostEstimate(
        flops=8 * Mp * Bp * Cin_p * Cout_p,                   # 4 real matmuls
        transcendentals=0,
        bytes_accessed=(2 * Mp * Bp * Cin_p * in_isz          # xr + xi
                        + 2 * Mp * Cin_p * Cout_p * in_isz    # wr + wi
                        + 2 * Mp * Bp * Cout_p * out_isz))    # yr + yi

    mode_idx = lambda i: (i, 0, 0)
    yr, yi = pl.pallas_call(
        _spectral_mix_kernel,
        out_shape=(jax.ShapeDtypeStruct((Mp, Bp, Cout_p), out_dtype),
                   jax.ShapeDtypeStruct((Mp, Bp, Cout_p), out_dtype)),
        grid_spec=pltpu.PrefetchScalarGridSpec(
            num_scalar_prefetch=0,
            grid=grid,
            in_specs=[
                pl.BlockSpec((mode_tile, Bp, Cin_p), mode_idx),
                pl.BlockSpec((mode_tile, Bp, Cin_p), mode_idx),
                pl.BlockSpec((mode_tile, Cin_p, Cout_p), mode_idx),
                pl.BlockSpec((mode_tile, Cin_p, Cout_p), mode_idx),
            ],
            out_specs=[
                pl.BlockSpec((mode_tile, Bp, Cout_p), mode_idx),
                pl.BlockSpec((mode_tile, Bp, Cout_p), mode_idx),
            ]),
        compiler_params=pltpu.CompilerParams(
            dimension_semantics=("parallel",),
            vmem_limit_bytes=48 * 1024 * 1024),   # < v7x's 64 MiB physical VMEM
        cost_estimate=cost,
    )(xr, xi, wr_slab, wi_slab)

    # ---- unpack back to the complex spectrum and inverse FFT -----------------
    yrf = yr[:Mtot, :B, :out_channels].astype(jnp.float32)
    yif = yi[:Mtot, :B, :out_channels].astype(jnp.float32)
    yc = (yrf + 1j * yif).astype(jnp.complex64)               # (Mtot, B, Cout)
    yc = yc.reshape(2, modes1, modes2, B, out_channels)
    yc = jnp.transpose(yc, (0, 3, 4, 1, 2))                   # (2, B, Cout, m1, m2)

    out_ft = jnp.zeros((B, out_channels, H, Wf), dtype=jnp.complex64)
    out_ft = out_ft.at[:, :, :modes1, :modes2].set(yc[0])
    out_ft = out_ft.at[:, :, H - modes1:, :modes2].set(yc[1])
    return jnp.fft.irfft2(out_ft, s=(H, W))


# --------------------------------------------------------------------------- #
# Pure-JAX reference (matches the PyTorch module exactly, f32/c64)
# --------------------------------------------------------------------------- #
def _reference(x, weights1, weights2, modes1, modes2):
    B, Cin, H, W = x.shape
    Cout = weights1.shape[1]
    x_ft = jnp.fft.rfft2(x)
    out_ft = jnp.zeros((B, Cout, H, W // 2 + 1), dtype=jnp.complex64)
    out_ft = out_ft.at[:, :, :modes1, :modes2].set(
        jnp.einsum("bixy,ioxy->boxy", x_ft[:, :, :modes1, :modes2], weights1))
    out_ft = out_ft.at[:, :, -modes1:, :modes2].set(
        jnp.einsum("bixy,ioxy->boxy", x_ft[:, :, -modes1:, :modes2], weights2))
    return jnp.fft.irfft2(out_ft, s=(H, W))


if __name__ == "__main__":
    B, Cin, Cout, H, W = 2, 4, 4, 16, 16
    m1, m2 = 6, 6
    scale = 1.0 / (Cin * Cout)

    key = jax.random.PRNGKey(0)
    kx, kw1r, kw1i, kw2r, kw2i = jax.random.split(key, 5)

    x = jax.random.normal(kx, (B, Cin, H, W), dtype=jnp.float32)
    w1 = (scale * (jax.random.uniform(kw1r, (Cin, Cout, m1, m2), dtype=jnp.float32)
                   + 1j * jax.random.uniform(kw1i, (Cin, Cout, m1, m2), dtype=jnp.float32))
          ).astype(jnp.complex64)
    w2 = (scale * (jax.random.uniform(kw2r, (Cin, Cout, m1, m2), dtype=jnp.float32)
                   + 1j * jax.random.uniform(kw2i, (Cin, Cout, m1, m2), dtype=jnp.float32))
          ).astype(jnp.complex64)

    # Weight repack is hoisted out of the per-forward path (cached).
    wr_slab, wi_slab, mode_tile = pack_spectral_weights(w1, w2, batch_hint=B)

    fwd = jax.jit(functools.partial(
        spectral_conv2d, modes1=m1, modes2=m2, out_channels=Cout,
        mode_tile=mode_tile))
    y = jax.block_until_ready(fwd(x, wr_slab, wi_slab))

    y_ref = jax.block_until_ready(_reference(x, w1, w2, m1, m2))

    rel_err = float(jnp.max(jnp.abs(y - y_ref)) / (jnp.max(jnp.abs(y_ref)) + 1e-8))
    if not (rel_err == rel_err) or rel_err > 5e-2:  # NaN-safe check
        raise AssertionError(f"SpectralConv2d mismatch: relative error {rel_err}")

    print("KERNEL_OK")
</pallas_src>

<mosaic_0001>
module attributes {stable_mosaic.version = 11 : i64} {
  func.func @_spectral_mix_kernel(%arg0: i32, %arg1: memref<32x8x8xbf16, #tpu.memory_space<vmem>>, %arg2: memref<32x8x8xbf16, #tpu.memory_space<vmem>>, %arg3: memref<32x8x8xbf16, #tpu.memory_space<vmem>>, %arg4: memref<32x8x8xbf16, #tpu.memory_space<vmem>>, %arg5: memref<32x8x8xbf16, #tpu.memory_space<vmem>>, %arg6: memref<32x8x8xbf16, #tpu.memory_space<vmem>>) attributes {dimension_semantics = [#tpu.dimension_semantics<parallel>], iteration_bounds = array<i64: 3>, scalar_prefetch = 0 : i64, scratch_operands = 0 : i64, tpu.core_type = #tpu.core_type<tc>, window_params = [{transform_indices = @transform_0, window_bounds = array<i64: 32, 8, 8>}, {transform_indices = @transform_1, window_bounds = array<i64: 32, 8, 8>}, {transform_indices = @transform_2, window_bounds = array<i64: 32, 8, 8>}, {transform_indices = @transform_3, window_bounds = array<i64: 32, 8, 8>}, {transform_indices = @transform_4, window_bounds = array<i64: 32, 8, 8>}, {transform_indices = @transform_5, window_bounds = array<i64: 32, 8, 8>}]} {
    %c0 = arith.constant 0 : index
    %c0_0 = arith.constant 0 : index
    %c0_1 = arith.constant 0 : index
    %0 = vector.load %arg1[%c0, %c0_0, %c0_1] : memref<32x8x8xbf16, #tpu.memory_space<vmem>>, vector<1x8x8xbf16>
    %1 = vector.shape_cast %0 : vector<1x8x8xbf16> to vector<8x8xbf16>
    %c0_2 = arith.constant 0 : index
    %c0_3 = arith.constant 0 : index
    %c0_4 = arith.constant 0 : index
    %2 = vector.load %arg2[%c0_2, %c0_3, %c0_4] : memref<32x8x8xbf16, #tpu.memory_space<vmem>>, vector<1x8x8xbf16>
    %3 = vector.shape_cast %2 : vector<1x8x8xbf16> to vector<8x8xbf16>
    %c0_5 = arith.constant 0 : index
    %c0_6 = arith.constant 0 : index
    %c0_7 = arith.constant 0 : index
    %4 = vector.load %arg3[%c0_5, %c0_6, %c0_7] : memref<32x8x8xbf16, #tpu.memory_space<vmem>>, vector<1x8x8xbf16>
    %5 = vector.shape_cast %4 : vector<1x8x8xbf16> to vector<8x8xbf16>
    %c0_8 = arith.constant 0 : index
    %c0_9 = arith.constant 0 : index
    %c0_10 = arith.constant 0 : index
    %6 = vector.load %arg4[%c0_8, %c0_9, %c0_10] : memref<32x8x8xbf16, #tpu.memory_space<vmem>>, vector<1x8x8xbf16>
    %7 = vector.shape_cast %6 : vector<1x8x8xbf16> to vector<8x8xbf16>
    %cst = arith.constant dense<0.000000e+00> : vector<8x8xf32>
    %8 = tpu.matmul %1, %5, %cst {dimension_numbers = #tpu.dot_dimension_numbers<[1], [0], [0], [1], [0, 0, 1, 1], [], []>} : vector<8x8xbf16>, vector<8x8xbf16>, vector<8x8xf32> -> vector<8x8xf32>
    %cst_11 = arith.constant dense<0.000000e+00> : vector<8x8xf32>
    %9 = tpu.matmul %3, %7, %cst_11 {dimension_numbers = #tpu.dot_dimension_numbers<[1], [0], [0], [1], [0, 0, 1, 1], [], []>} : vector<8x8xbf16>, vector<8x8xbf16>, vector<8x8xf32> -> vector<8x8xf32>
    %cst_12 = arith.constant dense<0.000000e+00> : vector<8x8xf32>
    %10 = tpu.matmul %1, %7, %cst_12 {dimension_numbers = #tpu.dot_dimension_numbers<[1], [0], [0], [1], [0, 0, 1, 1], [], []>} : vector<8x8xbf16>, vector<8x8xbf16>, vector<8x8xf32> -> vector<8x8xf32>
    %cst_13 = arith.constant dense<0.000000e+00> : vector<8x8xf32>
    %11 = tpu.matmul %3, %5, %cst_13 {dimension_numbers = #tpu.dot_dimension_numbers<[1], [0], [0], [1], [0, 0, 1, 1], [], []>} : vector<8x8xbf16>, vector<8x8xbf16>, vector<8x8xf32> -> vector<8x8xf32>
    %12 = arith.subf %8, %9 : vector<8x8xf32>
    %13 = arith.truncf %12 : vector<8x8xf32> to vector<8x8xbf16>
    %c0_14 = arith.constant 0 : index
    %c0_15 = arith.constant 0 : index
    %c0_16 = arith.constant 0 : index
    %14 = vector.load %arg5[%c0_14, %c0_15, %c0_16] : memref<32x8x8xbf16, #tpu.memory_space<vmem>>, vector<1x8x8xbf16>
    %15 = vector.shape_cast %14 : vector<1x8x8xbf16> to vector<8x8xbf16>
    %16 = vector.shape_cast %13 : vector<8x8xbf16> to vector<1x8x8xbf16>
    tpu.vector_store %arg5[%c0_14, %c0_15, %c0_16], %16 {strides = array<i32>} : memref<32x8x8xbf16, #tpu.memory_space<vmem>>, vector<1x8x8xbf16>,
    %17 = arith.addf %10, %11 : vector<8x8xf32>
    %18 = arith.truncf %17 : vector<8x8xf32> to vector<8x8xbf16>
    %c0_17 = arith.constant 0 : index
    %c0_18 = arith.constant 0 : index
    %c0_19 = arith.constant 0 : index
    %19 = vector.load %arg6[%c0_17, %c0_18, %c0_19] : memref<32x8x8xbf16, #tpu.memory_space<vmem>>, vector<1x8x8xbf16>
    %20 = vector.shape_cast %19 : vector<1x8x8xbf16> to vector<8x8xbf16>
    %21 = vector.shape_cast %18 : vector<8x8xbf16> to vector<1x8x8xbf16>
    tpu.vector_store %arg6[%c0_17, %c0_18, %c0_19], %21 {strides = array<i32>} : memref<32x8x8xbf16, #tpu.memory_space<vmem>>, vector<1x8x8xbf16>,
    %c1 = arith.constant 1 : index
    %c0_20 = arith.constant 0 : index
    %c0_21 = arith.constant 0 : index
    %22 = vector.load %arg1[%c1, %c0_20, %c0_21] : memref<32x8x8xbf16, #tpu.memory_space<vmem>>, vector<1x8x8xbf16>
    %23 = vector.shape_cast %22 : vector<1x8x8xbf16> to vector<8x8xbf16>
    %c1_22 = arith.constant 1 : index
    %c0_23 = arith.constant 0 : index
    %c0_24 = arith.constant 0 : index
    %24 = vector.load %arg2[%c1_22, %c0_23, %c0_24] : memref<32x8x8xbf16, #tpu.memory_space<vmem>>, vector<1x8x8xbf16>
    %25 = vector.shape_cast %24 : vector<1x8x8xbf16> to vector<8x8xbf16>
    %c1_25 = arith.constant 1 : index
    %c0_26 = arith.constant 0 : index
    %c0_27 = arith.constant 0 : index
    %26 = vector.load %arg3[%c1_25, %c0_26, %c0_27] : memref<32x8x8xbf16, #tpu.memory_space<vmem>>, vector<1x8x8xbf16>
    %27 = vector.shape_cast %26 : vector<1x8x8xbf16> to vector<8x8xbf16>
    %c1_28 = arith.constant 1 : index
    %c0_29 = arith.constant 0 : index
    %c0_30 = arith.constant 0 : index
    %28 = vector.load %arg4[%c1_28, %c0_29, %c0_30] : memref<32x8x8xbf16, #tpu.memory_space<vmem>>, vector<1x8x8xbf16>
    %29 = vector.shape_cast %28 : vector<1x8x8xbf16> to vector<8x8xbf16>
    %cst_31 = arith.constant dense<0.000000e+00> : vector<8x8xf32>
    %30 = tpu.matmul %23, %27, %cst_31 {dimension_numbers = #tpu.dot_dimension_numbers<[1], [0], [0], [1], [0, 0, 1, 1], [], []>} : vector<8x8xbf16>, vector<8x8xbf16>, vector<8x8xf32> -> vector<8x8xf32>
    %cst_32 = arith.constant dense<0.000000e+00> : vector<8x8xf32>
    %31 = tpu.matmul %25, %29, %cst_32 {dimension_numbers = #tpu.dot_dimension_numbers<[1], [0], [0], [1], [0, 0, 1, 1], [], []>} : vector<8x8xbf16>, vector<8x8xbf16>, vector<8x8xf32> -> vector<8x8xf32>
    %cst_33 = arith.constant dense<0.000000e+00> : vector<8x8xf32>
    %32 = tpu.matmul %23, %29, %cst_33 {dimension_numbers = #tpu.dot_dimension_numbers<[1], [0], [0], [1], [0, 0, 1, 1], [], []>} : vector<8x8xbf16>, vector<8x8xbf16>, vector<8x8xf32> -> vector<8x8xf32>
    %cst_34 = arith.constant dense<0.000000e+00> : vector<8x8xf32>
    %33 = tpu.matmul %25, %27, %cst_34 {dimension_numbers = #tpu.dot_dimension_numbers<[1], [0], [0], [1], [0, 0, 1, 1], [], []>} : vector<8x8xbf16>, vector<8x8xbf16>, vector<8x8xf32> -> vector<8x8xf32>
    %34 = arith.subf %30, %31 : vector<8x8xf32>
    %35 = arith.truncf %34 : vector<8x8xf32> to vector<8x8xbf16>
    %c1_35 = arith.constant 1 : index
    %c0_36 = arith.constant 0 : index
    %c0_37 = arith.constant 0 : index
    %36 = vector.load %arg5[%c1_35, %c0_36, %c0_37] : memref<32x8x8xbf16, #tpu.memory_space<vmem>>, vector<1x8x8xbf16>
    %37 = vector.shape_cast %36 : vector<1x8x8xbf16> to vector<8x8xbf16>
    %38 = vector.shape_cast %35 : vector<8x8xbf16> to vector<1x8x8xbf16>
    tpu.vector_store %arg5[%c1_35, %c0_36, %c0_37], %38 {strides = array<i32>} : memref<32x8x8xbf16, #tpu.memory_space<vmem>>, vector<1x8x8xbf16>,
    %39 = arith.addf %32, %33 : vector<8x8xf32>
    %40 = arith.truncf %39 : vector<8x8xf32> to vector<8x8xbf16>
    %c1_38 = arith.constant 1 : index
    %c0_39 = arith.constant 0 : index
    %c0_40 = arith.constant 0 : index
    %41 = vector.load %arg6[%c1_38, %c0_39, %c0_40] : memref<32x8x8xbf16, #tpu.memory_space<vmem>>, vector<1x8x8xbf16>
    %42 = vector.shape_cast %41 : vector<1x8x8xbf16> to vector<8x8xbf16>
    %43 = vector.shape_cast %40 : vector<8x8xbf16> to vector<1x8x8xbf16>
    tpu.vector_store %arg6[%c1_38, %c0_39, %c0_40], %43 {strides = array<i32>} : memref<32x8x8xbf16, #tpu.memory_space<vmem>>, vector<1x8x8xbf16>,
    %c2 = arith.constant 2 : index
    %c0_41 = arith.constant 0 : index
    %c0_42 = arith.constant 0 : index
    %44 = vector.load %arg1[%c2, %c0_41, %c0_42] : memref<32x8x8xbf16, #tpu.memory_space<vmem>>, vector<1x8x8xbf16>
    %45 = vector.shape_cast %44 : vector<1x8x8xbf16> to vector<8x8xbf16>
    %c2_43 = arith.constant 2 : index
    %c0_44 = arith.constant 0 : index
    %c0_45 = arith.constant 0 : index
    %46 = vector.load %arg2[%c2_43, %c0_44, %c0_45] : memref<32x8x8xbf16, #tpu.memory_space<vmem>>, vector<1x8x8xbf16>
    %47 = vector.shape_cast %46 : vector<1x8x8xbf16> to vector<8x8xbf16>
    %c2_46 = arith.constant 2 : index
    %c0_47 = arith.constant 0 : index
    %c0_48 = arith.constant 0 : index
    %48 = vector.load %arg3[%c2_46, %c0_47, %c0_48] : memref<32x8x8xbf16, #tpu.memory_space<vmem>>, vector<1x8x8xbf16>
    %49 = vector.shape_cast %48 : vector<1x8x8xbf16> to vector<8x8xbf16>
    %c2_49 = arith.constant 2 : index
    %c0_50 = arith.constant 0 : index
    %c0_51 = arith.constant 0 : index
    %50 = vector.load %arg4[%c2_49, %c0_50, %c0_51] : memref<32x8x8xbf16, #tpu.memory_space<vmem>>, vector<1x8x8xbf16>
    %51 = vector.shape_cast %50 : vector<1x8x8xbf16> to vector<8x8xbf16>
    %cst_52 = arith.constant dense<0.000000e+00> : vector<8x8xf32>
    %52 = tpu.matmul %45, %49, %cst_52 {dimension_numbers = #tpu.dot_dimension_numbers<[1], [0], [0], [1], [0, 0, 1, 1], [], []>} : vector<8x8xbf16>, vector<8x8xbf16>, vector<8x8xf32> -> vector<8x8xf32>
    %cst_53 = arith.constant dense<0.000000e+00> : vector<8x8xf32>
    %53 = tpu.matmul %47, %51, %cst_53 {dimension_numbers = #tpu.dot_dimension_numbers<[1], [0], [0], [1], [0, 0, 1, 1], [], []>} : vector<8x8xbf16>, vector<8x8xbf16>, vector<8x8xf32> -> vector<8x8xf32>
    %cst_54 = arith.constant dense<0.000000e+00> : vector<8x8xf32>
    %54 = tpu.matmul %45, %51, %cst_54 {dimension_numbers = #tpu.dot_dimension_numbers<[1], [0], [0], [1], [0, 0, 1, 1], [], []>} : vector<8x8xbf16>, vector<8x8xbf16>, vector<8x8xf32> -> vector<8x8xf32>
    %cst_55 = arith.constant dense<0.000000e+00> : vector<8x8xf32>
    %55 = tpu.matmul %47, %49, %cst_55 {dimension_numbers = #tpu.dot_dimension_numbers<[1], [0], [0], [1], [0, 0, 1, 1], [], []>} : vector<8x8xbf16>, vector<8x8xbf16>, vector<8x8xf32> -> vector<8x8xf32>
    %56 = arith.subf %52, %53 : vector<8x8xf32>
    %57 = arith.truncf %56 : vector<8x8xf32> to vector<8x8xbf16>
    %c2_56 = arith.constant 2 : index
    %c0_57 = arith.constant 0 : index
    %c0_58 = arith.constant 0 : index
    %58 = vector.load %arg5[%c2_56, %c0_57, %c0_58] : memref<32x8x8xbf16, #tpu.memory_space<vmem>>, vector<1x8x8xbf16>
    %59 = vector.shape_cast %58 : vector<1x8x8xbf16> to vector<8x8xbf16>
    %60 = vector.shape_cast %57 : vector<8x8xbf16> to vector<1x8x8xbf16>
    tpu.vector_store %arg5[%c2_56, %c0_57, %c0_58], %60 {strides = array<i32>} : memref<32x8x8xbf16, #tpu.memory_space<vmem>>, vector<1x8x8xbf16>,
    %61 = arith.addf %54, %55 : vector<8x8xf32>
    %62 = arith.truncf %61 : vector<8x8xf32> to vector<8x8xbf16>
    %c2_59 = arith.constant 2 : index
    %c0_60 = arith.constant 0 : index
    %c0_61 = arith.constant 0 : index
    %63 = vector.load %arg6[%c2_59, %c0_60, %c0_61] : memref<32x8x8xbf16, #tpu.memory_space<vmem>>, vector<1x8x8xbf16>
    %64 = vector.shape_cast %63 : vector<1x8x8xbf16> to vector<8x8xbf16>
    %65 = vector.shape_cast %62 : vector<8x8xbf16> to vector<1x8x8xbf16>
    tpu.vector_store %arg6[%c2_59, %c0_60, %c0_61], %65 {strides = array<i32>} : memref<32x8x8xbf16, #tpu.memory_space<vmem>>, vector<1x8x8xbf16>,
    %c3 = arith.constant 3 : index
    %c0_62 = arith.constant 0 : index
    %c0_63 = arith.constant 0 : index
    %66 = vector.load %arg1[%c3, %c0_62, %c0_63] : memref<32x8x8xbf16, #tpu.memory_space<vmem>>, vector<1x8x8xbf16>
    %67 = vector.shape_cast %66 : vector<1x8x8xbf16> to vector<8x8xbf16>
    %c3_64 = arith.constant 3 : index
    %c0_65 = arith.constant 0 : index
    %c0_66 = arith.constant 0 : index
    %68 = vector.load %arg2[%c3_64, %c0_65, %c0_66] : memref<32x8x8xbf16, #tpu.memory_space<vmem>>, vector<1x8x8xbf16>
    %69 = vector.shape_cast %68 : vector<1x8x8xbf16> to vector<8x8xbf16>
    %c3_67 = arith.constant 3 : index
    %c0_68 = arith.constant 0 : index
    %c0_69 = arith.constant 0 : index
    %70 = vector.load %arg3[%c3_67, %c0_68, %c0_69] : memref<32x8x8xbf16, #tpu.memory_space<vmem>>, vector<1x8x8xbf16>
    %71 = vector.shape_cast %70 : vector<1x8x8xbf16> to vector<8x8xbf16>
    %c3_70 = arith.constant 3 : index
    %c0_71 = arith.constant 0 : index
    %c0_72 = arith.constant 0 : index
    %72 = vector.load %arg4[%c3_70, %c0_71, %c0_72] : memref<32x8x8xbf16, #tpu.memory_space<vmem>>, vector<1x8x8xbf16>
    %73 = vector.shape_cast %72 : vector<1x8x8xbf16> to vector<8x8xbf16>
    %cst_73 = arith.constant dense<0.000000e+00> : vector<8x8xf32>
    %74 = tpu.matmul %67, %71, %cst_73 {dimension_numbers = #tpu.dot_dimension_numbers<[1], [0], [0], [1], [0, 0, 1, 1], [], []>} : vector<8x8xbf16>, vector<8x8xbf16>, vector<8x8xf32> -> vector<8x8xf32>
    %cst_74 = arith.constant dense<0.000000e+00> : vector<8x8xf32>
    %75 = tpu.matmul %69, %73, %cst_74 {dimension_numbers = #tpu.dot_dimension_numbers<[1], [0], [0], [1], [0, 0, 1, 1], [], []>} : vector<8x8xbf16>, vector<8x8xbf16>, vector<8x8xf32> -> vector<8x8xf32>
    %cst_75 = arith.constant dense<0.000000e+00> : vector<8x8xf32>
    %76 = tpu.matmul %67, %73, %cst_75 {dimension_numbers = #tpu.dot_dimension_numbers<[1], [0], [0], [1], [0, 0, 1, 1], [], []>} : vector<8x8xbf16>, vector<8x8xbf16>, vector<8x8xf32> -> vector<8x8xf32>
    %cst_76 = arith.constant dense<0.000000e+00> : vector<8x8xf32>
    %77 = tpu.matmul %69, %71, %cst_76 {dimension_numbers = #tpu.dot_dimension_numbers<[1], [0], [0], [1], [0, 0, 1, 1], [], []>} : vector<8x8xbf16>, vector<8x8xbf16>, vector<8x8xf32> -> vector<8x8xf32>
    %78 = arith.subf %74, %75 : vector<8x8xf32>
    %79 = arith.truncf %78 : vector<8x8xf32> to vector<8x8xbf16>
    %c3_77 = arith.constant 3 : index
    %c0_78 = arith.constant 0 : index
    %c0_79 = arith.constant 0 : index
    %80 = vector.load %arg5[%c3_77, %c0_78, %c0_79] : memref<32x8x8xbf16, #tpu.memory_space<vmem>>, vector<1x8x8xbf16>
    %81 = vector.shape_cast %80 : vector<1x8x8xbf16> to vector<8x8xbf16>
    %82 = vector.shape_cast %79 : vector<8x8xbf16> to vector<1x8x8xbf16>
    tpu.vector_store %arg5[%c3_77, %c0_78, %c0_79], %82 {strides = array<i32>} : memref<32x8x8xbf16, #tpu.memory_space<vmem>>, vector<1x8x8xbf16>,
    %83 = arith.addf %76, %77 : vector<8x8xf32>
    %84 = arith.truncf %83 : vector<8x8xf32> to vector<8x8xbf16>
    %c3_80 = arith.constant 3 : index
    %c0_81 = arith.constant 0 : index
    %c0_82 = arith.constant 0 : index
    %85 = vector.load %arg6[%c3_80, %c0_81, %c0_82] : memref<32x8x8xbf16, #tpu.memory_space<vmem>>, vector<1x8x8xbf16>
    %86 = vector.shape_cast %85 : vector<1x8x8xbf16> to vector<8x8xbf16>
    %87 = vector.shape_cast %84 : vector<8x8xbf16> to vector<1x8x8xbf16>
    tpu.vector_store %arg6[%c3_80, %c0_81, %c0_82], %87 {strides = array<i32>} : memref<32x8x8xbf16, #tpu.memory_space<vmem>>, vector<1x8x8xbf16>,
    %c4 = arith.constant 4 : index
    %c0_83 = arith.constant 0 : index
    %c0_84 = arith.constant 0 : index
    %88 = vector.load %arg1[%c4, %c0_83, %c0_84] : memref<32x8x8xbf16, #tpu.memory_space<vmem>>, vector<1x8x8xbf16>
    %89 = vector.shape_cast %88 : vector<1x8x8xbf16> to vector<8x8xbf16>
    %c4_85 = arith.constant 4 : index
    %c0_86 = arith.constant 0 : index
    %c0_87 = arith.constant 0 : index
    %90 = vector.load %arg2[%c4_85, %c0_86, %c0_87] : memref<32x8x8xbf16, #tpu.memory_space<vmem>>, vector<1x8x8xbf16>
    %91 = vector.shape_cast %90 : vector<1x8x8xbf16> to vector<8x8xbf16>
    %c4_88 = arith.constant 4 : index
    %c0_89 = arith.constant 0 : index
    %c0_90 = arith.constant 0 : index
    %92 = vector.load %arg3[%c4_88, %c0_89, %c0_90] : memref<32x8x8xbf16, #tpu.memory_space<vmem>>, vector<1x8x8xbf16>
    %93 = vector.shape_cast %92 : vector<1x8x8xbf16> to vector<8x8xbf16>
    %c4_91 = arith.constant 4 : index
    %c0_92 = arith.constant 0 : index
    %c0_93 = arith.constant 0 : index
    %94 = vector.load %arg4[%c4_91, %c0_92, %c0_93] : memref<32x8x8xbf16, #tpu.memory_space<vmem>>, vector<1x8x8xbf16>
    %95 = vector.shape_cast %94 : vector<1x8x8xbf16> to vector<8x8xbf16>
    %cst_94 = arith.constant dense<0.000000e+00> : vector<8x8xf32>
    %96 = tpu.matmul %89, %93, %cst_94 {dimension_numbers = #tpu.dot_dimension_numbers<[1], [0], [0], [1], [0, 0, 1, 1], [], []>} : vector<8x8xbf16>, vector<8x8xbf16>, vector<8x8xf32> -> vector<8x8xf32>
    %cst_95 = arith.constant dense<0.000000e+00> : vector<8x8xf32>
    %97 = tpu.matmul %91, %95, %cst_95 {dimension_numbers = #tpu.dot_dimension_numbers<[1], [0], [0], [1], [0, 0, 1, 1], [], []>} : vector<8x8xbf16>, vector<8x8xbf16>, vector<8x8xf32> -> vector<8x8xf32>
    %cst_96 = arith.constant dense<0.000000e+00> : vector<8x8xf32>
    %98 = tpu.matmul %89, %95, %cst_96 {dimension_numbers = #tpu.dot_dimension_numbers<[1], [0], [0], [1], [0, 0, 1, 1], [], []>} : vector<8x8xbf16>, vector<8x8xbf16>, vector<8x8xf32> -> vector<8x8xf32>
    %cst_97 = arith.constant dense<0.000000e+00> : vector<8x8xf32>
    %99 = tpu.matmul %91, %93, %cst_97 {dimension_numbers = #tpu.dot_dimension_numbers<[1], [0], [0], [1], [0, 0, 1, 1], [], []>} : vector<8x8xbf16>, vector<8x8xbf16>, vector<8x8xf32> -> vector<8x8xf32>
    %100 = arith.subf %96, %97 : vector<8x8xf32>
    %101 = arith.truncf %100 : vector<8x8xf32> to vector<8x8xbf16>
    %c4_98 = arith.constant 4 : index
    %c0_99 = arith.constant 0 : index
    %c0_100 = arith.constant 0 : index
    %102 = vector.load %arg5[%c4_98, %c0_99, %c0_100] : memref<32x8x8xbf16, #tpu.memory_space<vmem>>, vector<1x8x8xbf16>
    %103 = vector.shape_cast %102 : vector<1x8x8xbf16> to vector<8x8xbf16>
    %104 = vector.shape_cast %101 : vector<8x8xbf16> to vector<1x8x8xbf16>
    tpu.vector_store %arg5[%c4_98, %c0_99, %c0_100], %104 {strides = array<i32>} : memref<32x8x8xbf16, #tpu.memory_space<vmem>>, vector<1x8x8xbf16>,
    %105 = arith.addf %98, %99 : vector<8x8xf32>
    %106 = arith.truncf %105 : vector<8x8xf32> to vector<8x8xbf16>
    %c4_101 = arith.constant 4 : index
    %c0_102 = arith.constant 0 : index
    %c0_103 = arith.constant 0 : index
    %107 = vector.load %arg6[%c4_101, %c0_102, %c0_103] : memref<32x8x8xbf16, #tpu.memory_space<vmem>>, vector<1x8x8xbf16>
    %108 = vector.shape_cast %107 : vector<1x8x8xbf16> to vector<8x8xbf16>
    %109 = vector.shape_cast %106 : vector<8x8xbf16> to vector<1x8x8xbf16>
    tpu.vector_store %arg6[%c4_101, %c0_102, %c0_103], %109 {strides = array<i32>} : memref<32x8x8xbf16, #tpu.memory_space<vmem>>, vector<1x8x8xbf16>,
    %c5 = arith.constant 5 : index
    %c0_104 = arith.constant 0 : index
    %c0_105 = arith.constant 0 : index
    %110 = vector.load %arg1[%c5, %c0_104, %c0_105] : memref<32x8x8xbf16, #tpu.memory_space<vmem>>, vector<1x8x8xbf16>
    %111 = vector.shape_cast %110 : vector<1x8x8xbf16> to vector<8x8xbf16>
    %c5_106 = arith.constant 5 : index
    %c0_107 = arith.constant 0 : index
    %c0_108 = arith.constant 0 : index
    %112 = vector.load %arg2[%c5_106, %c0_107, %c0_108] : memref<32x8x8xbf16, #tpu.memory_space<vmem>>, vector<1x8x8xbf16>
    %113 = vector.shape_cast %112 : vector<1x8x8xbf16> to vector<8x8xbf16>
    %c5_109 = arith.constant 5 : index
    %c0_110 = arith.constant 0 : index
    %c0_111 = arith.constant 0 : index
    %114 = vector.load %arg3[%c5_109, %c0_110, %c0_111] : memref<32x8x8xbf16, #tpu.memory_space<vmem>>, vector<1x8x8xbf16>
    %115 = vector.shape_cast %114 : vector<1x8x8xbf16> to vector<8x8xbf16>
    %c5_112 = arith.constant 5 : index
    %c0_113 = arith.constant 0 : index
    %c0_114 = arith.constant 0 : index
    %116 = vector.load %arg4[%c5_112, %c0_113, %c0_114] : memref<32x8x8xbf16, #tpu.memory_space<vmem>>, vector<1x8x8xbf16>
    %117 = vector.shape_cast %116 : vector<1x8x8xbf16> to vector<8x8xbf16>
    %cst_115 = arith.constant dense<0.000000e+00> : vector<8x8xf32>
    %118 = tpu.matmul %111, %115, %cst_115 {dimension_numbers = #tpu.dot_dimension_numbers<[1], [0], [0], [1], [0, 0, 1, 1], [], []>} : vector<8x8xbf16>, vector<8x8xbf16>, vector<8x8xf32> -> vector<8x8xf32>
    %cst_116 = arith.constant dense<0.000000e+00> : vector<8x8xf32>
    %119 = tpu.matmul %113, %117, %cst_116 {dimension_numbers = #tpu.dot_dimension_numbers<[1], [0], [0], [1], [0, 0, 1, 1], [], []>} : vector<8x8xbf16>, vector<8x8xbf16>, vector<8x8xf32> -> vector<8x8xf32>
    %cst_117 = arith.constant dense<0.000000e+00> : vector<8x8xf32>
    %120 = tpu.matmul %111, %117, %cst_117 {dimension_numbers = #tpu.dot_dimension_numbers<[1], [0], [0], [1], [0, 0, 1, 1], [], []>} : vector<8x8xbf16>, vector<8x8xbf16>, vector<8x8xf32> -> vector<8x8xf32>
    %cst_118 = arith.constant dense<0.000000e+00> : vector<8x8xf32>
    %121 = tpu.matmul %113, %115, %cst_118 {dimension_numbers = #tpu.dot_dimension_numbers<[1], [0], [0], [1], [0, 0, 1, 1], [], []>} : vector<8x8xbf16>, vector<8x8xbf16>, vector<8x8xf32> -> vector<8x8xf32>
    %122 = arith.subf %118, %119 : vector<8x8xf32>
    %123 = arith.truncf %122 : vector<8x8xf32> to vector<8x8xbf16>
    %c5_119 = arith.constant 5 : index
    %c0_120 = arith.constant 0 : index
    %c0_121 = arith.constant 0 : index
    %124 = vector.load %arg5[%c5_119, %c0_120, %c0_121] : memref<32x8x8xbf16, #tpu.memory_space<vmem>>, vector<1x8x8xbf16>
    %125 = vector.shape_cast %124 : vector<1x8x8xbf16> to vector<8x8xbf16>
    %126 = vector.shape_cast %123 : vector<8x8xbf16> to vector<1x8x8xbf16>
    tpu.vector_store %arg5[%c5_119, %c0_120, %c0_121], %126 {strides = array<i32>} : memref<32x8x8xbf16, #tpu.memory_space<vmem>>, vector<1x8x8xbf16>,
    %127 = arith.addf %120, %121 : vector<8x8xf32>
    %128 = arith.truncf %127 : vector<8x8xf32> to vector<8x8xbf16>
    %c5_122 = arith.constant 5 : index
    %c0_123 = arith.constant 0 : index
    %c0_124 = arith.constant 0 : index
    %129 = vector.load %arg6[%c5_122, %c0_123, %c0_124] : memref<32x8x8xbf16, #tpu.memory_space<vmem>>, vector<1x8x8xbf16>
    %130 = vector.shape_cast %129 : vector<1x8x8xbf16> to vector<8x8xbf16>
    %131 = vector.shape_cast %128 : vector<8x8xbf16> to vector<1x8x8xbf16>
    tpu.vector_store %arg6[%c5_122, %c0_123, %c0_124], %131 {strides = array<i32>} : memref<32x8x8xbf16, #tpu.memory_space<vmem>>, vector<1x8x8xbf16>,
    %c6 = arith.constant 6 : index
    %c0_125 = arith.constant 0 : index
    %c0_126 = arith.constant 0 : index
    %132 = vector.load %arg1[%c6, %c0_125, %c0_126] : memref<32x8x8xbf16, #tpu.memory_space<vmem>>, vector<1x8x8xbf16>
    %133 = vector.shape_cast %132 : vector<1x8x8xbf16> to vector<8x8xbf16>
    %c6_127 = arith.constant 6 : index
    %c0_128 = arith.constant 0 : index
    %c0_129 = arith.constant 0 : index
    %134 = vector.load %arg2[%c6_127, %c0_128, %c0_129] : memref<32x8x8xbf16, #tpu.memory_space<vmem>>, vector<1x8x8xbf16>
    %135 = vector.shape_cast %134 : vector<1x8x8xbf16> to vector<8x8xbf16>
    %c6_130 = arith.constant 6 : index
    %c0_131 = arith.constant 0 : index
    %c0_132 = arith.constant 0 : index
    %136 = vector.load %arg3[%c6_130, %c0_131, %c0_132] : memref<32x8x8xbf16, #tpu.memory_space<vmem>>, vector<1x8x8xbf16>
    %137 = vector.shape_cast %136 : vector<1x8x8xbf16> to vector<8x8xbf16>
    %c6_133 = arith.constant 6 : index
    %c0_134 = arith.constant 0 : index
    %c0_135 = arith.constant 0 : index
    %138 = vector.load %arg4[%c6_133, %c0_134, %c0_135] : memref<32x8x8xbf16, #tpu.memory_space<vmem>>, vector<1x8x8xbf16>
    %139 = vector.shape_cast %138 : vector<1x8x8xbf16> to vector<8x8xbf16>
    %cst_136 = arith.constant dense<0.000000e+00> : vector<8x8xf32>
    %140 = tpu.matmul %133, %137, %cst_136 {dimension_numbers = #tpu.dot_dimension_numbers<[1], [0], [0], [1], [0, 0, 1, 1], [], []>} : vector<8x8xbf16>, vector<8x8xbf16>, vector<8x8xf32> -> vector<8x8xf32>
    %cst_137 = arith.constant dense<0.000000e+00> : vector<8x8xf32>
    %141 = tpu.matmul %135, %139, %cst_137 {dimension_numbers = #tpu.dot_dimension_numbers<[1], [0], [0], [1], [0, 0, 1, 1], [], []>} : vector<8x8xbf16>, vector<8x8xbf16>, vector<8x8xf32> -> vector<8x8xf32>
    %cst_138 = arith.constant dense<0.000000e+00> : vector<8x8xf32>
    %142 = tpu.matmul %133, %139, %cst_138 {dimension_numbers = #tpu.dot_dimension_numbers<[1], [0], [0], [1], [0, 0, 1, 1], [], []>} : vector<8x8xbf16>, vector<8x8xbf16>, vector<8x8xf32> -> vector<8x8xf32>
    %cst_139 = arith.constant dense<0.000000e+00> : vector<8x8xf32>
    %143 = tpu.matmul %135, %137, %cst_139 {dimension_numbers = #tpu.dot_dimension_numbers<[1], [0], [0], [1], [0, 0, 1, 1], [], []>} : vector<8x8xbf16>, vector<8x8xbf16>, vector<8x8xf32> -> vector<8x8xf32>
    %144 = arith.subf %140, %141 : vector<8x8xf32>
    %145 = arith.truncf %144 : vector<8x8xf32> to vector<8x8xbf16>
    %c6_140 = arith.constant 6 : index
    %c0_141 = arith.constant 0 : index
    %c0_142 = arith.constant 0 : index
    %146 = vector.load %arg5[%c6_140, %c0_141, %c0_142] : memref<32x8x8xbf16, #tpu.memory_space<vmem>>, vector<1x8x8xbf16>
    %147 = vector.shape_cast %146 : vector<1x8x8xbf16> to vector<8x8xbf16>
    %148 = vector.shape_cast %145 : vector<8x8xbf16> to vector<1x8x8xbf16>
    tpu.vector_store %arg5[%c6_140, %c0_141, %c0_142], %148 {strides = array<i32>} : memref<32x8x8xbf16, #tpu.memory_space<vmem>>, vector<1x8x8xbf16>,
    %149 = arith.addf %142, %143 : vector<8x8xf32>
    %150 = arith.truncf %149 : vector<8x8xf32> to vector<8x8xbf16>
    %c6_143 = arith.constant 6 : index
    %c0_144 = arith.constant 0 : index
    %c0_145 = arith.constant 0 : index
    %151 = vector.load %arg6[%c6_143, %c0_144, %c0_145] : memref<32x8x8xbf16, #tpu.memory_space<vmem>>, vector<1x8x8xbf16>
    %152 = vector.shape_cast %151 : vector<1x8x8xbf16> to vector<8x8xbf16>
    %153 = vector.shape_cast %150 : vector<8x8xbf16> to vector<1x8x8xbf16>
    tpu.vector_store %arg6[%c6_143, %c0_144, %c0_145], %153 {strides = array<i32>} : memref<32x8x8xbf16, #tpu.memory_space<vmem>>, vector<1x8x8xbf16>,
    %c7 = arith.constant 7 : index
    %c0_146 = arith.constant 0 : index
    %c0_147 = arith.constant 0 : index
    %154 = vector.load %arg1[%c7, %c0_146, %c0_147] : memref<32x8x8xbf16, #tpu.memory_space<vmem>>, vector<1x8x8xbf16>
    %155 = vector.shape_cast %154 : vector<1x8x8xbf16> to vector<8x8xbf16>
    %c7_148 = arith.constant 7 : index
    %c0_149 = arith.constant 0 : index
    %c0_150 = arith.constant 0 : index
    %156 = vector.load %arg2[%c7_148, %c0_149, %c0_150] : memref<32x8x8xbf16, #tpu.memory_space<vmem>>, vector<1x8x8xbf16>
    %157 = vector.shape_cast %156 : vector<1x8x8xbf16> to vector<8x8xbf16>
    %c7_151 = arith.constant 7 : index
    %c0_152 = arith.constant 0 : index
    %c0_153 = arith.constant 0 : index
    %158 = vector.load %arg3[%c7_151, %c0_152, %c0_153] : memref<32x8x8xbf16, #tpu.memory_space<vmem>>, vector<1x8x8xbf16>
    %159 = vector.shape_cast %158 : vector<1x8x8xbf16> to vector<8x8xbf16>
    %c7_154 = arith.constant 7 : index
    %c0_155 = arith.constant 0 : index
    %c0_156 = arith.constant 0 : index
    %160 = vector.load %arg4[%c7_154, %c0_155, %c0_156] : memref<32x8x8xbf16, #tpu.memory_space<vmem>>, vector<1x8x8xbf16>
    %161 = vector.shape_cast %160 : vector<1x8x8xbf16> to vector<8x8xbf16>
    %cst_157 = arith.constant dense<0.000000e+00> : vector<8x8xf32>
    %162 = tpu.matmul %155, %159, %cst_157 {dimension_numbers = #tpu.dot_dimension_numbers<[1], [0], [0], [1], [0, 0, 1, 1], [], []>} : vector<8x8xbf16>, vector<8x8xbf16>, vector<8x8xf32> -> vector<8x8xf32>
    %cst_158 = arith.constant dense<0.000000e+00> : vector<8x8xf32>
    %163 = tpu.matmul %157, %161, %cst_158 {dimension_numbers = #tpu.dot_dimension_numbers<[1], [0], [0], [1], [0, 0, 1, 1], [], []>} : vector<8x8xbf16>, vector<8x8xbf16>, vector<8x8xf32> -> vector<8x8xf32>
    %cst_159 = arith.constant dense<0.000000e+00> : vector<8x8xf32>
    %164 = tpu.matmul %155, %161, %cst_159 {dimension_numbers = #tpu.dot_dimension_numbers<[1], [0], [0], [1], [0, 0, 1, 1], [], []>} : vector<8x8xbf16>, vector<8x8xbf16>, vector<8x8xf32> -> vector<8x8xf32>
    %cst_160 = arith.constant dense<0.000000e+00> : vector<8x8xf32>
    %165 = tpu.matmul %157, %159, %cst_160 {dimension_numbers = #tpu.dot_dimension_numbers<[1], [0], [0], [1], [0, 0, 1, 1], [], []>} : vector<8x8xbf16>, vector<8x8xbf16>, vector<8x8xf32> -> vector<8x8xf32>
    %166 = arith.subf %162, %163 : vector<8x8xf32>
    %167 = arith.truncf %166 : vector<8x8xf32> to vector<8x8xbf16>
    %c7_161 = arith.constant 7 : index
    %c0_162 = arith.constant 0 : index
    %c0_163 = arith.constant 0 : index
    %168 = vector.load %arg5[%c7_161, %c0_162, %c0_163] : memref<32x8x8xbf16, #tpu.memory_space<vmem>>, vector<1x8x8xbf16>
    %169 = vector.shape_cast %168 : vector<1x8x8xbf16> to vector<8x8xbf16>
    %170 = vector.shape_cast %167 : vector<8x8xbf16> to vector<1x8x8xbf16>
    tpu.vector_store %arg5[%c7_161, %c0_162, %c0_163], %170 {strides = array<i32>} : memref<32x8x8xbf16, #tpu.memory_space<vmem>>, vector<1x8x8xbf16>,
    %171 = arith.addf %164, %165 : vector<8x8xf32>
    %172 = arith.truncf %171 : vector<8x8xf32> to vector<8x8xbf16>
    %c7_164 = arith.constant 7 : index
    %c0_165 = arith.constant 0 : index
    %c0_166 = arith.constant 0 : index
    %173 = vector.load %arg6[%c7_164, %c0_165, %c0_166] : memref<32x8x8xbf16, #tpu.memory_space<vmem>>, vector<1x8x8xbf16>
    %174 = vector.shape_cast %173 : vector<1x8x8xbf16> to vector<8x8xbf16>
    %175 = vector.shape_cast %172 : vector<8x8xbf16> to vector<1x8x8xbf16>
    tpu.vector_store %arg6[%c7_164, %c0_165, %c0_166], %175 {strides = array<i32>} : memref<32x8x8xbf16, #tpu.memory_space<vmem>>, vector<1x8x8xbf16>,
    %c8 = arith.constant 8 : index
    %c0_167 = arith.constant 0 : index
    %c0_168 = arith.constant 0 : index
    %176 = vector.load %arg1[%c8, %c0_167, %c0_168] : memref<32x8x8xbf16, #tpu.memory_space<vmem>>, vector<1x8x8xbf16>
    %177 = vector.shape_cast %176 : vector<1x8x8xbf16> to vector<8x8xbf16>
    %c8_169 = arith.constant 8 : index
    %c0_170 = arith.constant 0 : index
    %c0_171 = arith.constant 0 : index
    %178 = vector.load %arg2[%c8_169, %c0_170, %c0_171] : memref<32x8x8xbf16, #tpu.memory_space<vmem>>, vector<1x8x8xbf16>
    %179 = vector.shape_cast %178 : vector<1x8x8xbf16> to vector<8x8xbf16>
    %c8_172 = arith.constant 8 : index
    %c0_173 = arith.constant 0 : index
    %c0_174 = arith.constant 0 : index
    %180 = vector.load %arg3[%c8_172, %c0_173, %c0_174] : memref<32x8x8xbf16, #tpu.memory_space<vmem>>, vector<1x8x8xbf16>
    %181 = vector.shape_cast %180 : vector<1x8x8xbf16> to vector<8x8xbf16>
    %c8_175 = arith.constant 8 : index
    %c0_176 = arith.constant 0 : index
    %c0_177 = arith.constant 0 : index
    %182 = vector.load %arg4[%c8_175, %c0_176, %c0_177] : memref<32x8x8xbf16, #tpu.memory_space<vmem>>, vector<1x8x8xbf16>
    %183 = vector.shape_cast %182 : vector<1x8x8xbf16> to vector<8x8xbf16>
    %cst_178 = arith.constant dense<0.000000e+00> : vector<8x8xf32>
    %184 = tpu.matmul %177, %181, %cst_178 {dimension_numbers = #tpu.dot_dimension_numbers<[1], [0], [0], [1], [0, 0, 1, 1], [], []>} : vector<8x8xbf16>, vector<8x8xbf16>, vector<8x8xf32> -> vector<8x8xf32>
    %cst_179 = arith.constant dense<0.000000e+00> : vector<8x8xf32>
    %185 = tpu.matmul %179, %183, %cst_179 {dimension_numbers = #tpu.dot_dimension_numbers<[1], [0], [0], [1], [0, 0, 1, 1], [], []>} : vector<8x8xbf16>, vector<8x8xbf16>, vector<8x8xf32> -> vector<8x8xf32>
    %cst_180 = arith.constant dense<0.000000e+00> : vector<8x8xf32>
    %186 = tpu.matmul %177, %183, %cst_180 {dimension_numbers = #tpu.dot_dimension_numbers<[1], [0], [0], [1], [0, 0, 1, 1], [], []>} : vector<8x8xbf16>, vector<8x8xbf16>, vector<8x8xf32> -> vector<8x8xf32>
    %cst_181 = arith.constant dense<0.000000e+00> : vector<8x8xf32>
    %187 = tpu.matmul %179, %181, %cst_181 {dimension_numbers = #tpu.dot_dimension_numbers<[1], [0], [0], [1], [0, 0, 1, 1], [], []>} : vector<8x8xbf16>, vector<8x8xbf16>, vector<8x8xf32> -> vector<8x8xf32>
    %188 = arith.subf %184, %185 : vector<8x8xf32>
    %189 = arith.truncf %188 : vector<8x8xf32> to vector<8x8xbf16>
    %c8_182 = arith.constant 8 : index
    %c0_183 = arith.constant 0 : index
    %c0_184 = arith.constant 0 : index
    %190 = vector.load %arg5[%c8_182, %c0_183, %c0_184] : memref<32x8x8xbf16, #tpu.memory_space<vmem>>, vector<1x8x8xbf16>
    %191 = vector.shape_cast %190 : vector<1x8x8xbf16> to vector<8x8xbf16>
    %192 = vector.shape_cast %189 : vector<8x8xbf16> to vector<1x8x8xbf16>
    tpu.vector_store %arg5[%c8_182, %c0_183, %c0_184], %192 {strides = array<i32>} : memref<32x8x8xbf16, #tpu.memory_space<vmem>>, vector<1x8x8xbf16>,
    %193 = arith.addf %186, %187 : vector<8x8xf32>
    %194 = arith.truncf %193 : vector<8x8xf32> to vector<8x8xbf16>
    %c8_185 = arith.constant 8 : index
    %c0_186 = arith.constant 0 : index
    %c0_187 = arith.constant 0 : index
    %195 = vector.load %arg6[%c8_185, %c0_186, %c0_187] : memref<32x8x8xbf16, #tpu.memory_space<vmem>>, vector<1x8x8xbf16>
    %196 = vector.shape_cast %195 : vector<1x8x8xbf16> to vector<8x8xbf16>
    %197 = vector.shape_cast %194 : vector<8x8xbf16> to vector<1x8x8xbf16>
    tpu.vector_store %arg6[%c8_185, %c0_186, %c0_187], %197 {strides = array<i32>} : memref<32x8x8xbf16, #tpu.memory_space<vmem>>, vector<1x8x8xbf16>,
    %c9 = arith.constant 9 : index
    %c0_188 = arith.constant 0 : index
    %c0_189 = arith.constant 0 : index
    %198 = vector.load %arg1[%c9, %c0_188, %c0_189] : memref<32x8x8xbf16, #tpu.memory_space<vmem>>, vector<1x8x8xbf16>
    %199 = vector.shape_cast %198 : vector<1x8x8xbf16> to vector<8x8xbf16>
    %c9_190 = arith.constant 9 : index
    %c0_191 = arith.constant 0 : index
    %c0_192 = arith.constant 0 : index
    %200 = vector.load %arg2[%c9_190, %c0_191, %c0_192] : memref<32x8x8xbf16, #tpu.memory_space<vmem>>, vector<1x8x8xbf16>
    %201 = vector.shape_cast %200 : vector<1x8x8xbf16> to vector<8x8xbf16>
    %c9_193 = arith.constant 9 : index
    %c0_194 = arith.constant 0 : index
    %c0_195 = arith.constant 0 : index
    %202 = vector.load %arg3[%c9_193, %c0_194, %c0_195] : memref<32x8x8xbf16, #tpu.memory_space<vmem>>, vector<1x8x8xbf16>
    %203 = vector.shape_cast %202 : vector<1x8x8xbf16> to vector<8x8xbf16>
    %c9_196 = arith.constant 9 : index
    %c0_197 = arith.constant 0 : index
    %c0_198 = arith.constant 0 : index
    %204 = vector.load %arg4[%c9_196, %c0_197, %c0_198] : memref<32x8x8xbf16, #tpu.memory_space<vmem>>, vector<1x8x8xbf16>
    %205 = vector.shape_cast %204 : vector<1x8x8xbf16> to vector<8x8xbf16>
    %cst_199 = arith.constant dense<0.000000e+00> : vector<8x8xf32>
    %206 = tpu.matmul %199, %203, %cst_199 {dimension_numbers = #tpu.dot_dimension_numbers<[1], [0], [0], [1], [0, 0, 1, 1], [], []>} : vector<8x8xbf16>, vector<8x8xbf16>, vector<8x8xf32> -> vector<8x8xf32>
    %cst_200 = arith.constant dense<0.000000e+00> : vector<8x8xf32>
    %207 = tpu.matmul %201, %205, %cst_200 {dimension_numbers = #tpu.dot_dimension_numbers<[1], [0], [0], [1], [0, 0, 1, 1], [], []>} : vector<8x8xbf16>, vector<8x8xbf16>, vector<8x8xf32> -> vector<8x8xf32>
    %cst_201 = arith.constant dense<0.000000e+00> : vector<8x8xf32>
    %208 = tpu.matmul %199, %205, %cst_201 {dimension_numbers = #tpu.dot_dimension_numbers<[1], [0], [0], [1], [0, 0, 1, 1], [], []>} : vector<8x8xbf16>, vector<8x8xbf16>, vector<8x8xf32> -> vector<8x8xf32>
    %cst_202 = arith.constant dense<0.000000e+00> : vector<8x8xf32>
    %209 = tpu.matmul %201, %203, %cst_202 {dimension_numbers = #tpu.dot_dimension_numbers<[1], [0], [0], [1], [0, 0, 1, 1], [], []>} : vector<8x8xbf16>, vector<8x8xbf16>, vector<8x8xf32> -> vector<8x8xf32>
    %210 = arith.subf %206, %207 : vector<8x8xf32>
    %211 = arith.truncf %210 : vector<8x8xf32> to vector<8x8xbf16>
    %c9_203 = arith.constant 9 : index
    %c0_204 = arith.constant 0 : index
    %c0_205 = arith.constant 0 : index
    %212 = vector.load %arg5[%c9_203, %c0_204, %c0_205] : memref<32x8x8xbf16, #tpu.memory_space<vmem>>, vector<1x8x8xbf16>
    %213 = vector.shape_cast %212 : vector<1x8x8xbf16> to vector<8x8xbf16>
    %214 = vector.shape_cast %211 : vector<8x8xbf16> to vector<1x8x8xbf16>
    tpu.vector_store %arg5[%c9_203, %c0_204, %c0_205], %214 {strides = array<i32>} : memref<32x8x8xbf16, #tpu.memory_space<vmem>>, vector<1x8x8xbf16>,
    %215 = arith.addf %208, %209 : vector<8x8xf32>
    %216 = arith.truncf %215 : vector<8x8xf32> to vector<8x8xbf16>
    %c9_206 = arith.constant 9 : index
    %c0_207 = arith.constant 0 : index
    %c0_208 = arith.constant 0 : index
    %217 = vector.load %arg6[%c9_206, %c0_207, %c0_208] : memref<32x8x8xbf16, #tpu.memory_space<vmem>>, vector<1x8x8xbf16>
    %218 = vector.shape_cast %217 : vector<1x8x8xbf16> to vector<8x8xbf16>
    %219 = vector.shape_cast %216 : vector<8x8xbf16> to vector<1x8x8xbf16>
    tpu.vector_store %arg6[%c9_206, %c0_207, %c0_208], %219 {strides = array<i32>} : memref<32x8x8xbf16, #tpu.memory_space<vmem>>, vector<1x8x8xbf16>,
    %c10 = arith.constant 10 : index
    %c0_209 = arith.constant 0 : index
    %c0_210 = arith.constant 0 : index
    %220 = vector.load %arg1[%c10, %c0_209, %c0_210] : memref<32x8x8xbf16, #tpu.memory_space<vmem>>, vector<1x8x8xbf16>
    %221 = vector.shape_cast %220 : vector<1x8x8xbf16> to vector<8x8xbf16>
    %c10_211 = arith.constant 10 : index
    %c0_212 = arith.constant 0 : index
    %c0_213 = arith.constant 0 : index
    %222 = vector.load %arg2[%c10_211, %c0_212, %c0_213] : memref<32x8x8xbf16, #tpu.memory_space<vmem>>, vector<1x8x8xbf16>
    %223 = vector.shape_cast %222 : vector<1x8x8xbf16> to vector<8x8xbf16>
    %c10_214 = arith.constant 10 : index
    %c0_215 = arith.constant 0 : index
    %c0_216 = arith.constant 0 : index
    %224 = vector.load %arg3[%c10_214, %c0_215, %c0_216] : memref<32x8x8xbf16, #tpu.memory_space<vmem>>, vector<1x8x8xbf16>
    %225 = vector.shape_cast %224 : vector<1x8x8xbf16> to vector<8x8xbf16>
    %c10_217 = arith.constant 10 : index
    %c0_218 = arith.constant 0 : index
    %c0_219 = arith.constant 0 : index
    %226 = vector.load %arg4[%c10_217, %c0_218, %c0_219] : memref<32x8x8xbf16, #tpu.memory_space<vmem>>, vector<1x8x8xbf16>
    %227 = vector.shape_cast %226 : vector<1x8x8xbf16> to vector<8x8xbf16>
    %cst_220 = arith.constant dense<0.000000e+00> : vector<8x8xf32>
    %228 = tpu.matmul %221, %225, %cst_220 {dimension_numbers = #tpu.dot_dimension_numbers<[1], [0], [0], [1], [0, 0, 1, 1], [], []>} : vector<8x8xbf16>, vector<8x8xbf16>, vector<8x8xf32> -> vector<8x8xf32>
    %cst_221 = arith.constant dense<0.000000e+00> : vector<8x8xf32>
    %229 = tpu.matmul %223, %227, %cst_221 {dimension_numbers = #tpu.dot_dimension_numbers<[1], [0], [0], [1], [0, 0, 1, 1], [], []>} : vector<8x8xbf16>, vector<8x8xbf16>, vector<8x8xf32> -> vector<8x8xf32>
    %cst_222 = arith.constant dense<0.000000e+00> : vector<8x8xf32>
    %230 = tpu.matmul %221, %227, %cst_222 {dimension_numbers = #tpu.dot_dimension_numbers<[1], [0], [0], [1], [0, 0, 1, 1], [], []>} : vector<8x8xbf16>, vector<8x8xbf16>, vector<8x8xf32> -> vector<8x8xf32>
    %cst_223 = arith.constant dense<0.000000e+00> : vector<8x8xf32>
    %231 = tpu.matmul %223, %225, %cst_223 {dimension_numbers = #tpu.dot_dimension_numbers<[1], [0], [0], [1], [0, 0, 1, 1], [], []>} : vector<8x8xbf16>, vector<8x8xbf16>, vector<8x8xf32> -> vector<8x8xf32>
    %232 = arith.subf %228, %229 : vector<8x8xf32>
    %233 = arith.truncf %232 : vector<8x8xf32> to vector<8x8xbf16>
    %c10_224 = arith.constant 10 : index
    %c0_225 = arith.constant 0 : index
    %c0_226 = arith.constant 0 : index
    %234 = vector.load %arg5[%c10_224, %c0_225, %c0_226] : memref<32x8x8xbf16, #tpu.memory_space<vmem>>, vector<1x8x8xbf16>
    %235 = vector.shape_cast %234 : vector<1x8x8xbf16> to vector<8x8xbf16>
    %236 = vector.shape_cast %233 : vector<8x8xbf16> to vector<1x8x8xbf16>
    tpu.vector_store %arg5[%c10_224, %c0_225, %c0_226], %236 {strides = array<i32>} : memref<32x8x8xbf16, #tpu.memory_space<vmem>>, vector<1x8x8xbf16>,
    %237 = arith.addf %230, %231 : vector<8x8xf32>
    %238 = arith.truncf %237 : vector<8x8xf32> to vector<8x8xbf16>
    %c10_227 = arith.constant 10 : index
    %c0_228 = arith.constant 0 : index
    %c0_229 = arith.constant 0 : index
    %239 = vector.load %arg6[%c10_227, %c0_228, %c0_229] : memref<32x8x8xbf16, #tpu.memory_space<vmem>>, vector<1x8x8xbf16>
    %240 = vector.shape_cast %239 : vector<1x8x8xbf16> to vector<8x8xbf16>
    %241 = vector.shape_cast %238 : vector<8x8xbf16> to vector<1x8x8xbf16>
    tpu.vector_store %arg6[%c10_227, %c0_228, %c0_229], %241 {strides = array<i32>} : memref<32x8x8xbf16, #tpu.memory_space<vmem>>, vector<1x8x8xbf16>,
    %c11 = arith.constant 11 : index
    %c0_230 = arith.constant 0 : index
    %c0_231 = arith.constant 0 : index
    %242 = vector.load %arg1[%c11, %c0_230, %c0_231] : memref<32x8x8xbf16, #tpu.memory_space<vmem>>, vector<1x8x8xbf16>
    %243 = vector.shape_cast %242 : vector<1x8x8xbf16> to vector<8x8xbf16>
    %c11_232 = arith.constant 11 : index
    %c0_233 = arith.constant 0 : index
    %c0_234 = arith.constant 0 : index
    %244 = vector.load %arg2[%c11_232, %c0_233, %c0_234] : memref<32x8x8xbf16, #tpu.memory_space<vmem>>, vector<1x8x8xbf16>
    %245 = vector.shape_cast %244 : vector<1x8x8xbf16> to vector<8x8xbf16>
    %c11_235 = arith.constant 11 : index
    %c0_236 = arith.constant 0 : index
    %c0_237 = arith.constant 0 : index
    %246 = vector.load %arg3[%c11_235, %c0_236, %c0_237] : memref<32x8x8xbf16, #tpu.memory_space<vmem>>, vector<1x8x8xbf16>
    %247 = vector.shape_cast %246 : vector<1x8x8xbf16> to vector<8x8xbf16>
    %c11_238 = arith.constant 11 : index
    %c0_239 = arith.constant 0 : index
    %c0_240 = arith.constant 0 : index
    %248 = vector.load %arg4[%c11_238, %c0_239, %c0_240] : memref<32x8x8xbf16, #tpu.memory_space<vmem>>, vector<1x8x8xbf16>
    %249 = vector.shape_cast %248 : vector<1x8x8xbf16> to vector<8x8xbf16>
    %cst_241 = arith.constant dense<0.000000e+00> : vector<8x8xf32>
    %250 = tpu.matmul %243, %247, %cst_241 {dimension_numbers = #tpu.dot_dimension_numbers<[1], [0], [0], [1], [0, 0, 1, 1], [], []>} : vector<8x8xbf16>, vector<8x8xbf16>, vector<8x8xf32> -> vector<8x8xf32>
    %cst_242 = arith.constant dense<0.000000e+00> : vector<8x8xf32>
    %251 = tpu.matmul %245, %249, %cst_242 {dimension_numbers = #tpu.dot_dimension_numbers<[1], [0], [0], [1], [0, 0, 1, 1], [], []>} : vector<8x8xbf16>, vector<8x8xbf16>, vector<8x8xf32> -> vector<8x8xf32>
    %cst_243 = arith.constant dense<0.000000e+00> : vector<8x8xf32>
    %252 = tpu.matmul %243, %249, %cst_243 {dimension_numbers = #tpu.dot_dimension_numbers<[1], [0], [0], [1], [0, 0, 1, 1], [], []>} : vector<8x8xbf16>, vector<8x8xbf16>, vector<8x8xf32> -> vector<8x8xf32>
    %cst_244 = arith.constant dense<0.000000e+00> : vector<8x8xf32>
    %253 = tpu.matmul %245, %247, %cst_244 {dimension_numbers = #tpu.dot_dimension_numbers<[1], [0], [0], [1], [0, 0, 1, 1], [], []>} : vector<8x8xbf16>, vector<8x8xbf16>, vector<8x8xf32> -> vector<8x8xf32>
    %254 = arith.subf %250, %251 : vector<8x8xf32>
    %255 = arith.truncf %254 : vector<8x8xf32> to vector<8x8xbf16>
    %c11_245 = arith.constant 11 : index
    %c0_246 = arith.constant 0 : index
    %c0_247 = arith.constant 0 : index
    %256 = vector.load %arg5[%c11_245, %c0_246, %c0_247] : memref<32x8x8xbf16, #tpu.memory_space<vmem>>, vector<1x8x8xbf16>
    %257 = vector.shape_cast %256 : vector<1x8x8xbf16> to vector<8x8xbf16>
    %258 = vector.shape_cast %255 : vector<8x8xbf16> to vector<1x8x8xbf16>
    tpu.vector_store %arg5[%c11_245, %c0_246, %c0_247], %258 {strides = array<i32>} : memref<32x8x8xbf16, #tpu.memory_space<vmem>>, vector<1x8x8xbf16>,
    %259 = arith.addf %252, %253 : vector<8x8xf32>
    %260 = arith.truncf %259 : vector<8x8xf32> to vector<8x8xbf16>
    %c11_248 = arith.constant 11 : index
    %c0_249 = arith.constant 0 : index
    %c0_250 = arith.constant 0 : index
    %261 = vector.load %arg6[%c11_248, %c0_249, %c0_250] : memref<32x8x8xbf16, #tpu.memory_space<vmem>>, vector<1x8x8xbf16>
    %262 = vector.shape_cast %261 : vector<1x8x8xbf16> to vector<8x8xbf16>
    %263 = vector.shape_cast %260 : vector<8x8xbf16> to vector<1x8x8xbf16>
    tpu.vector_store %arg6[%c11_248, %c0_249, %c0_250], %263 {strides = array<i32>} : memref<32x8x8xbf16, #tpu.memory_space<vmem>>, vector<1x8x8xbf16>,
    %c12 = arith.constant 12 : index
    %c0_251 = arith.constant 0 : index
    %c0_252 = arith.constant 0 : index
    %264 = vector.load %arg1[%c12, %c0_251, %c0_252] : memref<32x8x8xbf16, #tpu.memory_space<vmem>>, vector<1x8x8xbf16>
    %265 = vector.shape_cast %264 : vector<1x8x8xbf16> to vector<8x8xbf16>
    %c12_253 = arith.constant 12 : index
    %c0_254 = arith.constant 0 : index
    %c0_255 = arith.constant 0 : index
    %266 = vector.load %arg2[%c12_253, %c0_254, %c0_255] : memref<32x8x8xbf16, #tpu.memory_space<vmem>>, vector<1x8x8xbf16>
    %267 = vector.shape_cast %266 : vector<1x8x8xbf16> to vector<8x8xbf16>
    %c12_256 = arith.constant 12 : index
    %c0_257 = arith.constant 0 : index
    %c0_258 = arith.constant 0 : index
    %268 = vector.load %arg3[%c12_256, %c0_257, %c0_258] : memref<32x8x8xbf16, #tpu.memory_space<vmem>>, vector<1x8x8xbf16>
    %269 = vector.shape_cast %268 : vector<1x8x8xbf16> to vector<8x8xbf16>
    %c12_259 = arith.constant 12 : index
    %c0_260 = arith.constant 0 : index
    %c0_261 = arith.constant 0 : index
    %270 = vector.load %arg4[%c12_259, %c0_260, %c0_261] : memref<32x8x8xbf16, #tpu.memory_space<vmem>>, vector<1x8x8xbf16>
    %271 = vector.shape_cast %270 : vector<1x8x8xbf16> to vector<8x8xbf16>
    %cst_262 = arith.constant dense<0.000000e+00> : vector<8x8xf32>
    %272 = tpu.matmul %265, %269, %cst_262 {dimension_numbers = #tpu.dot_dimension_numbers<[1], [0], [0], [1], [0, 0, 1, 1], [], []>} : vector<8x8xbf16>, vector<8x8xbf16>, vector<8x8xf32> -> vector<8x8xf32>
    %cst_263 = arith.constant dense<0.000000e+00> : vector<8x8xf32>
    %273 = tpu.matmul %267, %271, %cst_263 {dimension_numbers = #tpu.dot_dimension_numbers<[1], [0], [0], [1], [0, 0, 1, 1], [], []>} : vector<8x8xbf16>, vector<8x8xbf16>, vector<8x8xf32> -> vector<8x8xf32>
    %cst_264 = arith.constant dense<0.000000e+00> : vector<8x8xf32>
    %274 = tpu.matmul %265, %271, %cst_264 {dimension_numbers = #tpu.dot_dimension_numbers<[1], [0], [0], [1], [0, 0, 1, 1], [], []>} : vector<8x8xbf16>, vector<8x8xbf16>, vector<8x8xf32> -> vector<8x8xf32>
    %cst_265 = arith.constant dense<0.000000e+00> : vector<8x8xf32>
    %275 = tpu.matmul %267, %269, %cst_265 {dimension_numbers = #tpu.dot_dimension_numbers<[1], [0], [0], [1], [0, 0, 1, 1], [], []>} : vector<8x8xbf16>, vector<8x8xbf16>, vector<8x8xf32> -> vector<8x8xf32>
    %276 = arith.subf %272, %273 : vector<8x8xf32>
    %277 = arith.truncf %276 : vector<8x8xf32> to vector<8x8xbf16>
    %c12_266 = arith.constant 12 : index
    %c0_267 = arith.constant 0 : index
    %c0_268 = arith.constant 0 : index
    %278 = vector.load %arg5[%c12_266, %c0_267, %c0_268] : memref<32x8x8xbf16, #tpu.memory_space<vmem>>, vector<1x8x8xbf16>
    %279 = vector.shape_cast %278 : vector<1x8x8xbf16> to vector<8x8xbf16>
    %280 = vector.shape_cast %277 : vector<8x8xbf16> to vector<1x8x8xbf16>
    tpu.vector_store %arg5[%c12_266, %c0_267, %c0_268], %280 {strides = array<i32>} : memref<32x8x8xbf16, #tpu.memory_space<vmem>>, vector<1x8x8xbf16>,
    %281 = arith.addf %274, %275 : vector<8x8xf32>
    %282 = arith.truncf %281 : vector<8x8xf32> to vector<8x8xbf16>
    %c12_269 = arith.constant 12 : index
    %c0_270 = arith.constant 0 : index
    %c0_271 = arith.constant 0 : index
    %283 = vector.load %arg6[%c12_269, %c0_270, %c0_271] : memref<32x8x8xbf16, #tpu.memory_space<vmem>>, vector<1x8x8xbf16>
    %284 = vector.shape_cast %283 : vector<1x8x8xbf16> to vector<8x8xbf16>
    %285 = vector.shape_cast %282 : vector<8x8xbf16> to vector<1x8x8xbf16>
    tpu.vector_store %arg6[%c12_269, %c0_270, %c0_271], %285 {strides = array<i32>} : memref<32x8x8xbf16, #tpu.memory_space<vmem>>, vector<1x8x8xbf16>,
    %c13 = arith.constant 13 : index
    %c0_272 = arith.constant 0 : index
    %c0_273 = arith.constant 0 : index
    %286 = vector.load %arg1[%c13, %c0_272, %c0_273] : memref<32x8x8xbf16, #tpu.memory_space<vmem>>, vector<1x8x8xbf16>
    %287 = vector.shape_cast %286 : vector<1x8x8xbf16> to vector<8x8xbf16>
    %c13_274 = arith.constant 13 : index
    %c0_275 = arith.constant 0 : index
    %c0_276 = arith.constant 0 : index
    %288 = vector.load %arg2[%c13_274, %c0_275, %c0_276] : memref<32x8x8xbf16, #tpu.memory_space<vmem>>, vector<1x8x8xbf16>
    %289 = vector.shape_cast %288 : vector<1x8x8xbf16> to vector<8x8xbf16>
    %c13_277 = arith.constant 13 : index
    %c0_278 = arith.constant 0 : index
    %c0_279 = arith.constant 0 : index
    %290 = vector.load %arg3[%c13_277, %c0_278, %c0_279] : memref<32x8x8xbf16, #tpu.memory_space<vmem>>, vector<1x8x8xbf16>
    %291 = vector.shape_cast %290 : vector<1x8x8xbf16> to vector<8x8xbf16>
    %c13_280 = arith.constant 13 : index
    %c0_281 = arith.constant 0 : index
    %c0_282 = arith.constant 0 : index
    %292 = vector.load %arg4[%c13_280, %c0_281, %c0_282] : memref<32x8x8xbf16, #tpu.memory_space<vmem>>, vector<1x8x8xbf16>
    %293 = vector.shape_cast %292 : vector<1x8x8xbf16> to vector<8x8xbf16>
    %cst_283 = arith.constant dense<0.000000e+00> : vector<8x8xf32>
    %294 = tpu.matmul %287, %291, %cst_283 {dimension_numbers = #tpu.dot_dimension_numbers<[1], [0], [0], [1], [0, 0, 1, 1], [], []>} : vector<8x8xbf16>, vector<8x8xbf16>, vector<8x8xf32> -> vector<8x8xf32>
    %cst_284 = arith.constant dense<0.000000e+00> : vector<8x8xf32>
    %295 = tpu.matmul %289, %293, %cst_284 {dimension_numbers = #tpu.dot_dimension_numbers<[1], [0], [0], [1], [0, 0, 1, 1], [], []>} : vector<8x8xbf16>, vector<8x8xbf16>, vector<8x8xf32> -> vector<8x8xf32>
    %cst_285 = arith.constant dense<0.000000e+00> : vector<8x8xf32>
    %296 = tpu.matmul %287, %293, %cst_285 {dimension_numbers = #tpu.dot_dimension_numbers<[1], [0], [0], [1], [0, 0, 1, 1], [], []>} : vector<8x8xbf16>, vector<8x8xbf16>, vector<8x8xf32> -> vector<8x8xf32>
    %cst_286 = arith.constant dense<0.000000e+00> : vector<8x8xf32>
    %297 = tpu.matmul %289, %291, %cst_286 {dimension_numbers = #tpu.dot_dimension_numbers<[1], [0], [0], [1], [0, 0, 1, 1], [], []>} : vector<8x8xbf16>, vector<8x8xbf16>, vector<8x8xf32> -> vector<8x8xf32>
    %298 = arith.subf %294, %295 : vector<8x8xf32>
    %299 = arith.truncf %298 : vector<8x8xf32> to vector<8x8xbf16>
    %c13_287 = arith.constant 13 : index
    %c0_288 = arith.constant 0 : index
    %c0_289 = arith.constant 0 : index
    %300 = vector.load %arg5[%c13_287, %c0_288, %c0_289] : memref<32x8x8xbf16, #tpu.memory_space<vmem>>, vector<1x8x8xbf16>
    %301 = vector.shape_cast %300 : vector<1x8x8xbf16> to vector<8x8xbf16>
    %302 = vector.shape_cast %299 : vector<8x8xbf16> to vector<1x8x8xbf16>
    tpu.vector_store %arg5[%c13_287, %c0_288, %c0_289], %302 {strides = array<i32>} : memref<32x8x8xbf16, #tpu.memory_space<vmem>>, vector<1x8x8xbf16>,
    %303 = arith.addf %296, %297 : vector<8x8xf32>
    %304 = arith.truncf %303 : vector<8x8xf32> to vector<8x8xbf16>
    %c13_290 = arith.constant 13 : index
    %c0_291 = arith.constant 0 : index
    %c0_292 = arith.constant 0 : index
    %305 = vector.load %arg6[%c13_290, %c0_291, %c0_292] : memref<32x8x8xbf16, #tpu.memory_space<vmem>>, vector<1x8x8xbf16>
    %306 = vector.shape_cast %305 : vector<1x8x8xbf16> to vector<8x8xbf16>
    %307 = vector.shape_cast %304 : vector<8x8xbf16> to vector<1x8x8xbf16>
    tpu.vector_store %arg6[%c13_290, %c0_291, %c0_292], %307 {strides = array<i32>} : memref<32x8x8xbf16, #tpu.memory_space<vmem>>, vector<1x8x8xbf16>,
    %c14 = arith.constant 14 : index
    %c0_293 = arith.constant 0 : index
    %c0_294 = arith.constant 0 : index
    %308 = vector.load %arg1[%c14, %c0_293, %c0_294] : memref<32x8x8xbf16, #tpu.memory_space<vmem>>, vector<1x8x8xbf16>
    %309 = vector.shape_cast %308 : vector<1x8x8xbf16> to vector<8x8xbf16>
    %c14_295 = arith.constant 14 : index
    %c0_296 = arith.constant 0 : index
    %c0_297 = arith.constant 0 : index
    %310 = vector.load %arg2[%c14_295, %c0_296, %c0_297] : memref<32x8x8xbf16, #tpu.memory_space<vmem>>, vector<1x8x8xbf16>
    %311 = vector.shape_cast %310 : vector<1x8x8xbf16> to vector<8x8xbf16>
    %c14_298 = arith.constant 14 : index
    %c0_299 = arith.constant 0 : index
    %c0_300 = arith.constant 0 : index
    %312 = vector.load %arg3[%c14_298, %c0_299, %c0_300] : memref<32x8x8xbf16, #tpu.memory_space<vmem>>, vector<1x8x8xbf16>
    %313 = vector.shape_cast %312 : vector<1x8x8xbf16> to vector<8x8xbf16>
    %c14_301 = arith.constant 14 : index
    %c0_302 = arith.constant 0 : index
    %c0_303 = arith.constant 0 : index
    %314 = vector.load %arg4[%c14_301, %c0_302, %c0_303] : memref<32x8x8xbf16, #tpu.memory_space<vmem>>, vector<1x8x8xbf16>
    %315 = vector.shape_cast %314 : vector<1x8x8xbf16> to vector<8x8xbf16>
    %cst_304 = arith.constant dense<0.000000e+00> : vector<8x8xf32>
    %316 = tpu.matmul %309, %313, %cst_304 {dimension_numbers = #tpu.dot_dimension_numbers<[1], [0], [0], [1], [0, 0, 1, 1], [], []>} : vector<8x8xbf16>, vector<8x8xbf16>, vector<8x8xf32> -> vector<8x8xf32>
    %cst_305 = arith.constant dense<0.000000e+00> : vector<8x8xf32>
    %317 = tpu.matmul %311, %315, %cst_305 {dimension_numbers = #tpu.dot_dimension_numbers<[1], [0], [0], [1], [0, 0, 1, 1], [], []>} : vector<8x8xbf16>, vector<8x8xbf16>, vector<8x8xf32> -> vector<8x8xf32>
    %cst_306 = arith.constant dense<0.000000e+00> : vector<8x8xf32>
    %318 = tpu.matmul %309, %315, %cst_306 {dimension_numbers = #tpu.dot_dimension_numbers<[1], [0], [0], [1], [0, 0, 1, 1], [], []>} : vector<8x8xbf16>, vector<8x8xbf16>, vector<8x8xf32> -> vector<8x8xf32>
    %cst_307 = arith.constant dense<0.000000e+00> : vector<8x8xf32>
    %319 = tpu.matmul %311, %313, %cst_307 {dimension_numbers = #tpu.dot_dimension_numbers<[1], [0], [0], [1], [0, 0, 1, 1], [], []>} : vector<8x8xbf16>, vector<8x8xbf16>, vector<8x8xf32> -> vector<8x8xf32>
    %320 = arith.subf %316, %317 : vector<8x8xf32>
    %321 = arith.truncf %320 : vector<8x8xf32> to vector<8x8xbf16>
    %c14_308 = arith.constant 14 : index
    %c0_309 = arith.constant 0 : index
    %c0_310 = arith.constant 0 : index
    %322 = vector.load %arg5[%c14_308, %c0_309, %c0_310] : memref<32x8x8xbf16, #tpu.memory_space<vmem>>, vector<1x8x8xbf16>
    %323 = vector.shape_cast %322 : vector<1x8x8xbf16> to vector<8x8xbf16>
    %324 = vector.shape_cast %321 : vector<8x8xbf16> to vector<1x8x8xbf16>
    tpu.vector_store %arg5[%c14_308, %c0_309, %c0_310], %324 {strides = array<i32>} : memref<32x8x8xbf16, #tpu.memory_space<vmem>>, vector<1x8x8xbf16>,
    %325 = arith.addf %318, %319 : vector<8x8xf32>
    %326 = arith.truncf %325 : vector<8x8xf32> to vector<8x8xbf16>
    %c14_311 = arith.constant 14 : index
    %c0_312 = arith.constant 0 : index
    %c0_313 = arith.constant 0 : index
    %327 = vector.load %arg6[%c14_311, %c0_312, %c0_313] : memref<32x8x8xbf16, #tpu.memory_space<vmem>>, vector<1x8x8xbf16>
    %328 = vector.shape_cast %327 : vector<1x8x8xbf16> to vector<8x8xbf16>
    %329 = vector.shape_cast %326 : vector<8x8xbf16> to vector<1x8x8xbf16>
    tpu.vector_store %arg6[%c14_311, %c0_312, %c0_313], %329 {strides = array<i32>} : memref<32x8x8xbf16, #tpu.memory_space<vmem>>, vector<1x8x8xbf16>,
    %c15 = arith.constant 15 : index
    %c0_314 = arith.constant 0 : index
    %c0_315 = arith.constant 0 : index
    %330 = vector.load %arg1[%c15, %c0_314, %c0_315] : memref<32x8x8xbf16, #tpu.memory_space<vmem>>, vector<1x8x8xbf16>
    %331 = vector.shape_cast %330 : vector<1x8x8xbf16> to vector<8x8xbf16>
    %c15_316 = arith.constant 15 : index
    %c0_317 = arith.constant 0 : index
    %c0_318 = arith.constant 0 : index
    %332 = vector.load %arg2[%c15_316, %c0_317, %c0_318] : memref<32x8x8xbf16, #tpu.memory_space<vmem>>, vector<1x8x8xbf16>
    %333 = vector.shape_cast %332 : vector<1x8x8xbf16> to vector<8x8xbf16>
    %c15_319 = arith.constant 15 : index
    %c0_320 = arith.constant 0 : index
    %c0_321 = arith.constant 0 : index
    %334 = vector.load %arg3[%c15_319, %c0_320, %c0_321] : memref<32x8x8xbf16, #tpu.memory_space<vmem>>, vector<1x8x8xbf16>
    %335 = vector.shape_cast %334 : vector<1x8x8xbf16> to vector<8x8xbf16>
    %c15_322 = arith.constant 15 : index
    %c0_323 = arith.constant 0 : index
    %c0_324 = arith.constant 0 : index
    %336 = vector.load %arg4[%c15_322, %c0_323, %c0_324] : memref<32x8x8xbf16, #tpu.memory_space<vmem>>, vector<1x8x8xbf16>
    %337 = vector.shape_cast %336 : vector<1x8x8xbf16> to vector<8x8xbf16>
    %cst_325 = arith.constant dense<0.000000e+00> : vector<8x8xf32>
    %338 = tpu.matmul %331, %335, %cst_325 {dimension_numbers = #tpu.dot_dimension_numbers<[1], [0], [0], [1], [0, 0, 1, 1], [], []>} : vector<8x8xbf16>, vector<8x8xbf16>, vector<8x8xf32> -> vector<8x8xf32>
    %cst_326 = arith.constant dense<0.000000e+00> : vector<8x8xf32>
    %339 = tpu.matmul %333, %337, %cst_326 {dimension_numbers = #tpu.dot_dimension_numbers<[1], [0], [0], [1], [0, 0, 1, 1], [], []>} : vector<8x8xbf16>, vector<8x8xbf16>, vector<8x8xf32> -> vector<8x8xf32>
    %cst_327 = arith.constant dense<0.000000e+00> : vector<8x8xf32>
    %340 = tpu.matmul %331, %337, %cst_327 {dimension_numbers = #tpu.dot_dimension_numbers<[1], [0], [0], [1], [0, 0, 1, 1], [], []>} : vector<8x8xbf16>, vector<8x8xbf16>, vector<8x8xf32> -> vector<8x8xf32>
    %cst_328 = arith.constant dense<0.000000e+00> : vector<8x8xf32>
    %341 = tpu.matmul %333, %335, %cst_328 {dimension_numbers = #tpu.dot_dimension_numbers<[1], [0], [0], [1], [0, 0, 1, 1], [], []>} : vector<8x8xbf16>, vector<8x8xbf16>, vector<8x8xf32> -> vector<8x8xf32>
    %342 = arith.subf %338, %339 : vector<8x8xf32>
    %343 = arith.truncf %342 : vector<8x8xf32> to vector<8x8xbf16>
    %c15_329 = arith.constant 15 : index
    %c0_330 = arith.constant 0 : index
    %c0_331 = arith.constant 0 : index
    %344 = vector.load %arg5[%c15_329, %c0_330, %c0_331] : memref<32x8x8xbf16, #tpu.memory_space<vmem>>, vector<1x8x8xbf16>
    %345 = vector.shape_cast %344 : vector<1x8x8xbf16> to vector<8x8xbf16>
    %346 = vector.shape_cast %343 : vector<8x8xbf16> to vector<1x8x8xbf16>
    tpu.vector_store %arg5[%c15_329, %c0_330, %c0_331], %346 {strides = array<i32>} : memref<32x8x8xbf16, #tpu.memory_space<vmem>>, vector<1x8x8xbf16>,
    %347 = arith.addf %340, %341 : vector<8x8xf32>
    %348 = arith.truncf %347 : vector<8x8xf32> to vector<8x8xbf16>
    %c15_332 = arith.constant 15 : index
    %c0_333 = arith.constant 0 : index
    %c0_334 = arith.constant 0 : index
    %349 = vector.load %arg6[%c15_332, %c0_333, %c0_334] : memref<32x8x8xbf16, #tpu.memory_space<vmem>>, vector<1x8x8xbf16>
    %350 = vector.shape_cast %349 : vector<1x8x8xbf16> to vector<8x8xbf16>
    %351 = vector.shape_cast %348 : vector<8x8xbf16> to vector<1x8x8xbf16>
    tpu.vector_store %arg6[%c15_332, %c0_333, %c0_334], %351 {strides = array<i32>} : memref<32x8x8xbf16, #tpu.memory_space<vmem>>, vector<1x8x8xbf16>,
    %c16 = arith.constant 16 : index
    %c0_335 = arith.constant 0 : index
    %c0_336 = arith.constant 0 : index
    %352 = vector.load %arg1[%c16, %c0_335, %c0_336] : memref<32x8x8xbf16, #tpu.memory_space<vmem>>, vector<1x8x8xbf16>
    %353 = vector.shape_cast %352 : vector<1x8x8xbf16> to vector<8x8xbf16>
    %c16_337 = arith.constant 16 : index
    %c0_338 = arith.constant 0 : index
    %c0_339 = arith.constant 0 : index
    %354 = vector.load %arg2[%c16_337, %c0_338, %c0_339] : memref<32x8x8xbf16, #tpu.memory_space<vmem>>, vector<1x8x8xbf16>
    %355 = vector.shape_cast %354 : vector<1x8x8xbf16> to vector<8x8xbf16>
    %c16_340 = arith.constant 16 : index
    %c0_341 = arith.constant 0 : index
    %c0_342 = arith.constant 0 : index
    %356 = vector.load %arg3[%c16_340, %c0_341, %c0_342] : memref<32x8x8xbf16, #tpu.memory_space<vmem>>, vector<1x8x8xbf16>
    %357 = vector.shape_cast %356 : vector<1x8x8xbf16> to vector<8x8xbf16>
    %c16_343 = arith.constant 16 : index
    %c0_344 = arith.constant 0 : index
    %c0_345 = arith.constant 0 : index
    %358 = vector.load %arg4[%c16_343, %c0_344, %c0_345] : memref<32x8x8xbf16, #tpu.memory_space<vmem>>, vector<1x8x8xbf16>
    %359 = vector.shape_cast %358 : vector<1x8x8xbf16> to vector<8x8xbf16>
    %cst_346 = arith.constant dense<0.000000e+00> : vector<8x8xf32>
    %360 = tpu.matmul %353, %357, %cst_346 {dimension_numbers = #tpu.dot_dimension_numbers<[1], [0], [0], [1], [0, 0, 1, 1], [], []>} : vector<8x8xbf16>, vector<8x8xbf16>, vector<8x8xf32> -> vector<8x8xf32>
    %cst_347 = arith.constant dense<0.000000e+00> : vector<8x8xf32>
    %361 = tpu.matmul %355, %359, %cst_347 {dimension_numbers = #tpu.dot_dimension_numbers<[1], [0], [0], [1], [0, 0, 1, 1], [], []>} : vector<8x8xbf16>, vector<8x8xbf16>, vector<8x8xf32> -> vector<8x8xf32>
    %cst_348 = arith.constant dense<0.000000e+00> : vector<8x8xf32>
    %362 = tpu.matmul %353, %359, %cst_348 {dimension_numbers = #tpu.dot_dimension_numbers<[1], [0], [0], [1], [0, 0, 1, 1], [], []>} : vector<8x8xbf16>, vector<8x8xbf16>, vector<8x8xf32> -> vector<8x8xf32>
    %cst_349 = arith.constant dense<0.000000e+00> : vector<8x8xf32>
    %363 = tpu.matmul %355, %357, %cst_349 {dimension_numbers = #tpu.dot_dimension_numbers<[1], [0], [0], [1], [0, 0, 1, 1], [], []>} : vector<8x8xbf16>, vector<8x8xbf16>, vector<8x8xf32> -> vector<8x8xf32>
    %364 = arith.subf %360, %361 : vector<8x8xf32>
    %365 = arith.truncf %364 : vector<8x8xf32> to vector<8x8xbf16>
    %c16_350 = arith.constant 16 : index
    %c0_351 = arith.constant 0 : index
    %c0_352 = arith.constant 0 : index
    %366 = vector.load %arg5[%c16_350, %c0_351, %c0_352] : memref<32x8x8xbf16, #tpu.memory_space<vmem>>, vector<1x8x8xbf16>
    %367 = vector.shape_cast %366 : vector<1x8x8xbf16> to vector<8x8xbf16>
    %368 = vector.shape_cast %365 : vector<8x8xbf16> to vector<1x8x8xbf16>
    tpu.vector_store %arg5[%c16_350, %c0_351, %c0_352], %368 {strides = array<i32>} : memref<32x8x8xbf16, #tpu.memory_space<vmem>>, vector<1x8x8xbf16>,
    %369 = arith.addf %362, %363 : vector<8x8xf32>
    %370 = arith.truncf %369 : vector<8x8xf32> to vector<8x8xbf16>
    %c16_353 = arith.constant 16 : index
    %c0_354 = arith.constant 0 : index
    %c0_355 = arith.constant 0 : index
    %371 = vector.load %arg6[%c16_353, %c0_354, %c0_355] : memref<32x8x8xbf16, #tpu.memory_space<vmem>>, vector<1x8x8xbf16>
    %372 = vector.shape_cast %371 : vector<1x8x8xbf16> to vector<8x8xbf16>
    %373 = vector.shape_cast %370 : vector<8x8xbf16> to vector<1x8x8xbf16>
    tpu.vector_store %arg6[%c16_353, %c0_354, %c0_355], %373 {strides = array<i32>} : memref<32x8x8xbf16, #tpu.memory_space<vmem>>, vector<1x8x8xbf16>,
    %c17 = arith.constant 17 : index
    %c0_356 = arith.constant 0 : index
    %c0_357 = arith.constant 0 : index
    %374 = vector.load %arg1[%c17, %c0_356, %c0_357] : memref<32x8x8xbf16, #tpu.memory_space<vmem>>, vector<1x8x8xbf16>
    %375 = vector.shape_cast %374 : vector<1x8x8xbf16> to vector<8x8xbf16>
    %c17_358 = arith.constant 17 : index
    %c0_359 = arith.constant 0 : index
    %c0_360 = arith.constant 0 : index
    %376 = vector.load %arg2[%c17_358, %c0_359, %c0_360] : memref<32x8x8xbf16, #tpu.memory_space<vmem>>, vector<1x8x8xbf16>
    %377 = vector.shape_cast %376 : vector<1x8x8xbf16> to vector<8x8xbf16>
    %c17_361 = arith.constant 17 : index
    %c0_362 = arith.constant 0 : index
    %c0_363 = arith.constant 0 : index
    %378 = vector.load %arg3[%c17_361, %c0_362, %c0_363] : memref<32x8x8xbf16, #tpu.memory_space<vmem>>, vector<1x8x8xbf16>
    %379 = vector.shape_cast %378 : vector<1x8x8xbf16> to vector<8x8xbf16>
    %c17_364 = arith.constant 17 : index
    %c0_365 = arith.constant 0 : index
    %c0_366 = arith.constant 0 : index
    %380 = vector.load %arg4[%c17_364, %c0_365, %c0_366] : memref<32x8x8xbf16, #tpu.memory_space<vmem>>, vector<1x8x8xbf16>
    %381 = vector.shape_cast %380 : vector<1x8x8xbf16> to vector<8x8xbf16>
    %cst_367 = arith.constant dense<0.000000e+00> : vector<8x8xf32>
    %382 = tpu.matmul %375, %379, %cst_367 {dimension_numbers = #tpu.dot_dimension_numbers<[1], [0], [0], [1], [0, 0, 1, 1], [], []>} : vector<8x8xbf16>, vector<8x8xbf16>, vector<8x8xf32> -> vector<8x8xf32>
    %cst_368 = arith.constant dense<0.000000e+00> : vector<8x8xf32>
    %383 = tpu.matmul %377, %381, %cst_368 {dimension_numbers = #tpu.dot_dimension_numbers<[1], [0], [0], [1], [0, 0, 1, 1], [], []>} : vector<8x8xbf16>, vector<8x8xbf16>, vector<8x8xf32> -> vector<8x8xf32>
    %cst_369 = arith.constant dense<0.000000e+00> : vector<8x8xf32>
    %384 = tpu.matmul %375, %381, %cst_369 {dimension_numbers = #tpu.dot_dimension_numbers<[1], [0], [0], [1], [0, 0, 1, 1], [], []>} : vector<8x8xbf16>, vector<8x8xbf16>, vector<8x8xf32> -> vector<8x8xf32>
    %cst_370 = arith.constant dense<0.000000e+00> : vector<8x8xf32>
    %385 = tpu.matmul %377, %379, %cst_370 {dimension_numbers = #tpu.dot_dimension_numbers<[1], [0], [0], [1], [0, 0, 1, 1], [], []>} : vector<8x8xbf16>, vector<8x8xbf16>, vector<8x8xf32> -> vector<8x8xf32>
    %386 = arith.subf %382, %383 : vector<8x8xf32>
    %387 = arith.truncf %386 : vector<8x8xf32> to vector<8x8xbf16>
    %c17_371 = arith.constant 17 : index
    %c0_372 = arith.constant 0 : index
    %c0_373 = arith.constant 0 : index
    %388 = vector.load %arg5[%c17_371, %c0_372, %c0_373] : memref<32x8x8xbf16, #tpu.memory_space<vmem>>, vector<1x8x8xbf16>
    %389 = vector.shape_cast %388 : vector<1x8x8xbf16> to vector<8x8xbf16>
    %390 = vector.shape_cast %387 : vector<8x8xbf16> to vector<1x8x8xbf16>
    tpu.vector_store %arg5[%c17_371, %c0_372, %c0_373], %390 {strides = array<i32>} : memref<32x8x8xbf16, #tpu.memory_space<vmem>>, vector<1x8x8xbf16>,
    %391 = arith.addf %384, %385 : vector<8x8xf32>
    %392 = arith.truncf %391 : vector<8x8xf32> to vector<8x8xbf16>
    %c17_374 = arith.constant 17 : index
    %c0_375 = arith.constant 0 : index
    %c0_376 = arith.constant 0 : index
    %393 = vector.load %arg6[%c17_374, %c0_375, %c0_376] : memref<32x8x8xbf16, #tpu.memory_space<vmem>>, vector<1x8x8xbf16>
    %394 = vector.shape_cast %393 : vector<1x8x8xbf16> to vector<8x8xbf16>
    %395 = vector.shape_cast %392 : vector<8x8xbf16> to vector<1x8x8xbf16>
    tpu.vector_store %arg6[%c17_374, %c0_375, %c0_376], %395 {strides = array<i32>} : memref<32x8x8xbf16, #tpu.memory_space<vmem>>, vector<1x8x8xbf16>,
    %c18 = arith.constant 18 : index
    %c0_377 = arith.constant 0 : index
    %c0_378 = arith.constant 0 : index
    %396 = vector.load %arg1[%c18, %c0_377, %c0_378] : memref<32x8x8xbf16, #tpu.memory_space<vmem>>, vector<1x8x8xbf16>
    %397 = vector.shape_cast %396 : vector<1x8x8xbf16> to vector<8x8xbf16>
    %c18_379 = arith.constant 18 : index
    %c0_380 = arith.constant 0 : index
    %c0_381 = arith.constant 0 : index
    %398 = vector.load %arg2[%c18_379, %c0_380, %c0_381] : memref<32x8x8xbf16, #tpu.memory_space<vmem>>, vector<1x8x8xbf16>
    %399 = vector.shape_cast %398 : vector<1x8x8xbf16> to vector<8x8xbf16>
    %c18_382 = arith.constant 18 : index
    %c0_383 = arith.constant 0 : index
    %c0_384 = arith.constant 0 : index
    %400 = vector.load %arg3[%c18_382, %c0_383, %c0_384] : memref<32x8x8xbf16, #tpu.memory_space<vmem>>, vector<1x8x8xbf16>
    %401 = vector.shape_cast %400 : vector<1x8x8xbf16> to vector<8x8xbf16>
    %c18_385 = arith.constant 18 : index
    %c0_386 = arith.constant 0 : index
    %c0_387 = arith.constant 0 : index
    %402 = vector.load %arg4[%c18_385, %c0_386, %c0_387] : memref<32x8x8xbf16, #tpu.memory_space<vmem>>, vector<1x8x8xbf16>
    %403 = vector.shape_cast %402 : vector<1x8x8xbf16> to vector<8x8xbf16>
    %cst_388 = arith.constant dense<0.000000e+00> : vector<8x8xf32>
    %404 = tpu.matmul %397, %401, %cst_388 {dimension_numbers = #tpu.dot_dimension_numbers<[1], [0], [0], [1], [0, 0, 1, 1], [], []>} : vector<8x8xbf16>, vector<8x8xbf16>, vector<8x8xf32> -> vector<8x8xf32>
    %cst_389 = arith.constant dense<0.000000e+00> : vector<8x8xf32>
    %405 = tpu.matmul %399, %403, %cst_389 {dimension_numbers = #tpu.dot_dimension_numbers<[1], [0], [0], [1], [0, 0, 1, 1], [], []>} : vector<8x8xbf16>, vector<8x8xbf16>, vector<8x8xf32> -> vector<8x8xf32>
    %cst_390 = arith.constant dense<0.000000e+00> : vector<8x8xf32>
    %406 = tpu.matmul %397, %403, %cst_390 {dimension_numbers = #tpu.dot_dimension_numbers<[1], [0], [0], [1], [0, 0, 1, 1], [], []>} : vector<8x8xbf16>, vector<8x8xbf16>, vector<8x8xf32> -> vector<8x8xf32>
    %cst_391 = arith.constant dense<0.000000e+00> : vector<8x8xf32>
    %407 = tpu.matmul %399, %401, %cst_391 {dimension_numbers = #tpu.dot_dimension_numbers<[1], [0], [0], [1], [0, 0, 1, 1], [], []>} : vector<8x8xbf16>, vector<8x8xbf16>, vector<8x8xf32> -> vector<8x8xf32>
    %408 = arith.subf %404, %405 : vector<8x8xf32>
    %409 = arith.truncf %408 : vector<8x8xf32> to vector<8x8xbf16>
    %c18_392 = arith.constant 18 : index
    %c0_393 = arith.constant 0 : index
    %c0_394 = arith.constant 0 : index
    %410 = vector.load %arg5[%c18_392, %c0_393, %c0_394] : memref<32x8x8xbf16, #tpu.memory_space<vmem>>, vector<1x8x8xbf16>
    %411 = vector.shape_cast %410 : vector<1x8x8xbf16> to vector<8x8xbf16>
    %412 = vector.shape_cast %409 : vector<8x8xbf16> to vector<1x8x8xbf16>
    tpu.vector_store %arg5[%c18_392, %c0_393, %c0_394], %412 {strides = array<i32>} : memref<32x8x8xbf16, #tpu.memory_space<vmem>>, vector<1x8x8xbf16>,
    %413 = arith.addf %406, %407 : vector<8x8xf32>
    %414 = arith.truncf %413 : vector<8x8xf32> to vector<8x8xbf16>
    %c18_395 = arith.constant 18 : index
    %c0_396 = arith.constant 0 : index
    %c0_397 = arith.constant 0 : index
    %415 = vector.load %arg6[%c18_395, %c0_396, %c0_397] : memref<32x8x8xbf16, #tpu.memory_space<vmem>>, vector<1x8x8xbf16>
    %416 = vector.shape_cast %415 : vector<1x8x8xbf16> to vector<8x8xbf16>
    %417 = vector.shape_cast %414 : vector<8x8xbf16> to vector<1x8x8xbf16>
    tpu.vector_store %arg6[%c18_395, %c0_396, %c0_397], %417 {strides = array<i32>} : memref<32x8x8xbf16, #tpu.memory_space<vmem>>, vector<1x8x8xbf16>,
    %c19 = arith.constant 19 : index
    %c0_398 = arith.constant 0 : index
    %c0_399 = arith.constant 0 : index
    %418 = vector.load %arg1[%c19, %c0_398, %c0_399] : memref<32x8x8xbf16, #tpu.memory_space<vmem>>, vector<1x8x8xbf16>
    %419 = vector.shape_cast %418 : vector<1x8x8xbf16> to vector<8x8xbf16>
    %c19_400 = arith.constant 19 : index
    %c0_401 = arith.constant 0 : index
    %c0_402 = arith.constant 0 : index
    %420 = vector.load %arg2[%c19_400, %c0_401, %c0_402] : memref<32x8x8xbf16, #tpu.memory_space<vmem>>, vector<1x8x8xbf16>
    %421 = vector.shape_cast %420 : vector<1x8x8xbf16> to vector<8x8xbf16>
    %c19_403 = arith.constant 19 : index
    %c0_404 = arith.constant 0 : index
    %c0_405 = arith.constant 0 : index
    %422 = vector.load %arg3[%c19_403, %c0_404, %c0_405] : memref<32x8x8xbf16, #tpu.memory_space<vmem>>, vector<1x8x8xbf16>
    %423 = vector.shape_cast %422 : vector<1x8x8xbf16> to vector<8x8xbf16>
    %c19_406 = arith.constant 19 : index
    %c0_407 = arith.constant 0 : index
    %c0_408 = arith.constant 0 : index
    %424 = vector.load %arg4[%c19_406, %c0_407, %c0_408] : memref<32x8x8xbf16, #tpu.memory_space<vmem>>, vector<1x8x8xbf16>
    %425 = vector.shape_cast %424 : vector<1x8x8xbf16> to vector<8x8xbf16>
    %cst_409 = arith.constant dense<0.000000e+00> : vector<8x8xf32>
    %426 = tpu.matmul %419, %423, %cst_409 {dimension_numbers = #tpu.dot_dimension_numbers<[1], [0], [0], [1], [0, 0, 1, 1], [], []>} : vector<8x8xbf16>, vector<8x8xbf16>, vector<8x8xf32> -> vector<8x8xf32>
    %cst_410 = arith.constant dense<0.000000e+00> : vector<8x8xf32>
    %427 = tpu.matmul %421, %425, %cst_410 {dimension_numbers = #tpu.dot_dimension_numbers<[1], [0], [0], [1], [0, 0, 1, 1], [], []>} : vector<8x8xbf16>, vector<8x8xbf16>, vector<8x8xf32> -> vector<8x8xf32>
    %cst_411 = arith.constant dense<0.000000e+00> : vector<8x8xf32>
    %428 = tpu.matmul %419, %425, %cst_411 {dimension_numbers = #tpu.dot_dimension_numbers<[1], [0], [0], [1], [0, 0, 1, 1], [], []>} : vector<8x8xbf16>, vector<8x8xbf16>, vector<8x8xf32> -> vector<8x8xf32>
    %cst_412 = arith.constant dense<0.000000e+00> : vector<8x8xf32>
    %429 = tpu.matmul %421, %423, %cst_412 {dimension_numbers = #tpu.dot_dimension_numbers<[1], [0], [0], [1], [0, 0, 1, 1], [], []>} : vector<8x8xbf16>, vector<8x8xbf16>, vector<8x8xf32> -> vector<8x8xf32>
    %430 = arith.subf %426, %427 : vector<8x8xf32>
    %431 = arith.truncf %430 : vector<8x8xf32> to vector<8x8xbf16>
    %c19_413 = arith.constant 19 : index
    %c0_414 = arith.constant 0 : index
    %c0_415 = arith.constant 0 : index
    %432 = vector.load %arg5[%c19_413, %c0_414, %c0_415] : memref<32x8x8xbf16, #tpu.memory_space<vmem>>, vector<1x8x8xbf16>
    %433 = vector.shape_cast %432 : vector<1x8x8xbf16> to vector<8x8xbf16>
    %434 = vector.shape_cast %431 : vector<8x8xbf16> to vector<1x8x8xbf16>
    tpu.vector_store %arg5[%c19_413, %c0_414, %c0_415], %434 {strides = array<i32>} : memref<32x8x8xbf16, #tpu.memory_space<vmem>>, vector<1x8x8xbf16>,
    %435 = arith.addf %428, %429 : vector<8x8xf32>
    %436 = arith.truncf %435 : vector<8x8xf32> to vector<8x8xbf16>
    %c19_416 = arith.constant 19 : index
    %c0_417 = arith.constant 0 : index
    %c0_418 = arith.constant 0 : index
    %437 = vector.load %arg6[%c19_416, %c0_417, %c0_418] : memref<32x8x8xbf16, #tpu.memory_space<vmem>>, vector<1x8x8xbf16>
    %438 = vector.shape_cast %437 : vector<1x8x8xbf16> to vector<8x8xbf16>
    %439 = vector.shape_cast %436 : vector<8x8xbf16> to vector<1x8x8xbf16>
    tpu.vector_store %arg6[%c19_416, %c0_417, %c0_418], %439 {strides = array<i32>} : memref<32x8x8xbf16, #tpu.memory_space<vmem>>, vector<1x8x8xbf16>,
    %c20 = arith.constant 20 : index
    %c0_419 = arith.constant 0 : index
    %c0_420 = arith.constant 0 : index
    %440 = vector.load %arg1[%c20, %c0_419, %c0_420] : memref<32x8x8xbf16, #tpu.memory_space<vmem>>, vector<1x8x8xbf16>
    %441 = vector.shape_cast %440 : vector<1x8x8xbf16> to vector<8x8xbf16>
    %c20_421 = arith.constant 20 : index
    %c0_422 = arith.constant 0 : index
    %c0_423 = arith.constant 0 : index
    %442 = vector.load %arg2[%c20_421, %c0_422, %c0_423] : memref<32x8x8xbf16, #tpu.memory_space<vmem>>, vector<1x8x8xbf16>
    %443 = vector.shape_cast %442 : vector<1x8x8xbf16> to vector<8x8xbf16>
    %c20_424 = arith.constant 20 : index
    %c0_425 = arith.constant 0 : index
    %c0_426 = arith.constant 0 : index
    %444 = vector.load %arg3[%c20_424, %c0_425, %c0_426] : memref<32x8x8xbf16, #tpu.memory_space<vmem>>, vector<1x8x8xbf16>
    %445 = vector.shape_cast %444 : vector<1x8x8xbf16> to vector<8x8xbf16>
    %c20_427 = arith.constant 20 : index
    %c0_428 = arith.constant 0 : index
    %c0_429 = arith.constant 0 : index
    %446 = vector.load %arg4[%c20_427, %c0_428, %c0_429] : memref<32x8x8xbf16, #tpu.memory_space<vmem>>, vector<1x8x8xbf16>
    %447 = vector.shape_cast %446 : vector<1x8x8xbf16> to vector<8x8xbf16>
    %cst_430 = arith.constant dense<0.000000e+00> : vector<8x8xf32>
    %448 = tpu.matmul %441, %445, %cst_430 {dimension_numbers = #tpu.dot_dimension_numbers<[1], [0], [0], [1], [0, 0, 1, 1], [], []>} : vector<8x8xbf16>, vector<8x8xbf16>, vector<8x8xf32> -> vector<8x8xf32>
    %cst_431 = arith.constant dense<0.000000e+00> : vector<8x8xf32>
    %449 = tpu.matmul %443, %447, %cst_431 {dimension_numbers = #tpu.dot_dimension_numbers<[1], [0], [0], [1], [0, 0, 1, 1], [], []>} : vector<8x8xbf16>, vector<8x8xbf16>, vector<8x8xf32> -> vector<8x8xf32>
    %cst_432 = arith.constant dense<0.000000e+00> : vector<8x8xf32>
    %450 = tpu.matmul %441, %447, %cst_432 {dimension_numbers = #tpu.dot_dimension_numbers<[1], [0], [0], [1], [0, 0, 1, 1], [], []>} : vector<8x8xbf16>, vector<8x8xbf16>, vector<8x8xf32> -> vector<8x8xf32>
    %cst_433 = arith.constant dense<0.000000e+00> : vector<8x8xf32>
    %451 = tpu.matmul %443, %445, %cst_433 {dimension_numbers = #tpu.dot_dimension_numbers<[1], [0], [0], [1], [0, 0, 1, 1], [], []>} : vector<8x8xbf16>, vector<8x8xbf16>, vector<8x8xf32> -> vector<8x8xf32>
    %452 = arith.subf %448, %449 : vector<8x8xf32>
    %453 = arith.truncf %452 : vector<8x8xf32> to vector<8x8xbf16>
    %c20_434 = arith.constant 20 : index
    %c0_435 = arith.constant 0 : index
    %c0_436 = arith.constant 0 : index
    %454 = vector.load %arg5[%c20_434, %c0_435, %c0_436] : memref<32x8x8xbf16, #tpu.memory_space<vmem>>, vector<1x8x8xbf16>
    %455 = vector.shape_cast %454 : vector<1x8x8xbf16> to vector<8x8xbf16>
    %456 = vector.shape_cast %453 : vector<8x8xbf16> to vector<1x8x8xbf16>
    tpu.vector_store %arg5[%c20_434, %c0_435, %c0_436], %456 {strides = array<i32>} : memref<32x8x8xbf16, #tpu.memory_space<vmem>>, vector<1x8x8xbf16>,
    %457 = arith.addf %450, %451 : vector<8x8xf32>
    %458 = arith.truncf %457 : vector<8x8xf32> to vector<8x8xbf16>
    %c20_437 = arith.constant 20 : index
    %c0_438 = arith.constant 0 : index
    %c0_439 = arith.constant 0 : index
    %459 = vector.load %arg6[%c20_437, %c0_438, %c0_439] : memref<32x8x8xbf16, #tpu.memory_space<vmem>>, vector<1x8x8xbf16>
    %460 = vector.shape_cast %459 : vector<1x8x8xbf16> to vector<8x8xbf16>
    %461 = vector.shape_cast %458 : vector<8x8xbf16> to vector<1x8x8xbf16>
    tpu.vector_store %arg6[%c20_437, %c0_438, %c0_439], %461 {strides = array<i32>} : memref<32x8x8xbf16, #tpu.memory_space<vmem>>, vector<1x8x8xbf16>,
    %c21 = arith.constant 21 : index
    %c0_440 = arith.constant 0 : index
    %c0_441 = arith.constant 0 : index
    %462 = vector.load %arg1[%c21, %c0_440, %c0_441] : memref<32x8x8xbf16, #tpu.memory_space<vmem>>, vector<1x8x8xbf16>
    %463 = vector.shape_cast %462 : vector<1x8x8xbf16> to vector<8x8xbf16>
    %c21_442 = arith.constant 21 : index
    %c0_443 = arith.constant 0 : index
    %c0_444 = arith.constant 0 : index
    %464 = vector.load %arg2[%c21_442, %c0_443, %c0_444] : memref<32x8x8xbf16, #tpu.memory_space<vmem>>, vector<1x8x8xbf16>
    %465 = vector.shape_cast %464 : vector<1x8x8xbf16> to vector<8x8xbf16>
    %c21_445 = arith.constant 21 : index
    %c0_446 = arith.constant 0 : index
    %c0_447 = arith.constant 0 : index
    %466 = vector.load %arg3[%c21_445, %c0_446, %c0_447] : memref<32x8x8xbf16, #tpu.memory_space<vmem>>, vector<1x8x8xbf16>
    %467 = vector.shape_cast %466 : vector<1x8x8xbf16> to vector<8x8xbf16>
    %c21_448 = arith.constant 21 : index
    %c0_449 = arith.constant 0 : index
    %c0_450 = arith.constant 0 : index
    %468 = vector.load %arg4[%c21_448, %c0_449, %c0_450] : memref<32x8x8xbf16, #tpu.memory_space<vmem>>, vector<1x8x8xbf16>
    %469 = vector.shape_cast %468 : vector<1x8x8xbf16> to vector<8x8xbf16>
    %cst_451 = arith.constant dense<0.000000e+00> : vector<8x8xf32>
    %470 = tpu.matmul %463, %467, %cst_451 {dimension_numbers = #tpu.dot_dimension_numbers<[1], [0], [0], [1], [0, 0, 1, 1], [], []>} : vector<8x8xbf16>, vector<8x8xbf16>, vector<8x8xf32> -> vector<8x8xf32>
    %cst_452 = arith.constant dense<0.000000e+00> : vector<8x8xf32>
    %471 = tpu.matmul %465, %469, %cst_452 {dimension_numbers = #tpu.dot_dimension_numbers<[1], [0], [0], [1], [0, 0, 1, 1], [], []>} : vector<8x8xbf16>, vector<8x8xbf16>, vector<8x8xf32> -> vector<8x8xf32>
    %cst_453 = arith.constant dense<0.000000e+00> : vector<8x8xf32>
    %472 = tpu.matmul %463, %469, %cst_453 {dimension_numbers = #tpu.dot_dimension_numbers<[1], [0], [0], [1], [0, 0, 1, 1], [], []>} : vector<8x8xbf16>, vector<8x8xbf16>, vector<8x8xf32> -> vector<8x8xf32>
    %cst_454 = arith.constant dense<0.000000e+00> : vector<8x8xf32>
    %473 = tpu.matmul %465, %467, %cst_454 {dimension_numbers = #tpu.dot_dimension_numbers<[1], [0], [0], [1], [0, 0, 1, 1], [], []>} : vector<8x8xbf16>, vector<8x8xbf16>, vector<8x8xf32> -> vector<8x8xf32>
    %474 = arith.subf %470, %471 : vector<8x8xf32>
    %475 = arith.truncf %474 : vector<8x8xf32> to vector<8x8xbf16>
    %c21_455 = arith.constant 21 : index
    %c0_456 = arith.constant 0 : index
    %c0_457 = arith.constant 0 : index
    %476 = vector.load %arg5[%c21_455, %c0_456, %c0_457] : memref<32x8x8xbf16, #tpu.memory_space<vmem>>, vector<1x8x8xbf16>
    %477 = vector.shape_cast %476 : vector<1x8x8xbf16> to vector<8x8xbf16>
    %478 = vector.shape_cast %475 : vector<8x8xbf16> to vector<1x8x8xbf16>
    tpu.vector_store %arg5[%c21_455, %c0_456, %c0_457], %478 {strides = array<i32>} : memref<32x8x8xbf16, #tpu.memory_space<vmem>>, vector<1x8x8xbf16>,
    %479 = arith.addf %472, %473 : vector<8x8xf32>
    %480 = arith.truncf %479 : vector<8x8xf32> to vector<8x8xbf16>
    %c21_458 = arith.constant 21 : index
    %c0_459 = arith.constant 0 : index
    %c0_460 = arith.constant 0 : index
    %481 = vector.load %arg6[%c21_458, %c0_459, %c0_460] : memref<32x8x8xbf16, #tpu.memory_space<vmem>>, vector<1x8x8xbf16>
    %482 = vector.shape_cast %481 : vector<1x8x8xbf16> to vector<8x8xbf16>
    %483 = vector.shape_cast %480 : vector<8x8xbf16> to vector<1x8x8xbf16>
    tpu.vector_store %arg6[%c21_458, %c0_459, %c0_460], %483 {strides = array<i32>} : memref<32x8x8xbf16, #tpu.memory_space<vmem>>, vector<1x8x8xbf16>,
    %c22 = arith.constant 22 : index
    %c0_461 = arith.constant 0 : index
    %c0_462 = arith.constant 0 : index
    %484 = vector.load %arg1[%c22, %c0_461, %c0_462] : memref<32x8x8xbf16, #tpu.memory_space<vmem>>, vector<1x8x8xbf16>
    %485 = vector.shape_cast %484 : vector<1x8x8xbf16> to vector<8x8xbf16>
    %c22_463 = arith.constant 22 : index
    %c0_464 = arith.constant 0 : index
    %c0_465 = arith.constant 0 : index
    %486 = vector.load %arg2[%c22_463, %c0_464, %c0_465] : memref<32x8x8xbf16, #tpu.memory_space<vmem>>, vector<1x8x8xbf16>
    %487 = vector.shape_cast %486 : vector<1x8x8xbf16> to vector<8x8xbf16>
    %c22_466 = arith.constant 22 : index
    %c0_467 = arith.constant 0 : index
    %c0_468 = arith.constant 0 : index
    %488 = vector.load %arg3[%c22_466, %c0_467, %c0_468] : memref<32x8x8xbf16, #tpu.memory_space<vmem>>, vector<1x8x8xbf16>
    %489 = vector.shape_cast %488 : vector<1x8x8xbf16> to vector<8x8xbf16>
    %c22_469 = arith.constant 22 : index
    %c0_470 = arith.constant 0 : index
    %c0_471 = arith.constant 0 : index
    %490 = vector.load %arg4[%c22_469, %c0_470, %c0_471] : memref<32x8x8xbf16, #tpu.memory_space<vmem>>, vector<1x8x8xbf16>
    %491 = vector.shape_cast %490 : vector<1x8x8xbf16> to vector<8x8xbf16>
    %cst_472 = arith.constant dense<0.000000e+00> : vector<8x8xf32>
    %492 = tpu.matmul %485, %489, %cst_472 {dimension_numbers = #tpu.dot_dimension_numbers<[1], [0], [0], [1], [0, 0, 1, 1], [], []>} : vector<8x8xbf16>, vector<8x8xbf16>, vector<8x8xf32> -> vector<8x8xf32>
    %cst_473 = arith.constant dense<0.000000e+00> : vector<8x8xf32>
    %493 = tpu.matmul %487, %491, %cst_473 {dimension_numbers = #tpu.dot_dimension_numbers<[1], [0], [0], [1], [0, 0, 1, 1], [], []>} : vector<8x8xbf16>, vector<8x8xbf16>, vector<8x8xf32> -> vector<8x8xf32>
    %cst_474 = arith.constant dense<0.000000e+00> : vector<8x8xf32>
    %494 = tpu.matmul %485, %491, %cst_474 {dimension_numbers = #tpu.dot_dimension_numbers<[1], [0], [0], [1], [0, 0, 1, 1], [], []>} : vector<8x8xbf16>, vector<8x8xbf16>, vector<8x8xf32> -> vector<8x8xf32>
    %cst_475 = arith.constant dense<0.000000e+00> : vector<8x8xf32>
    %495 = tpu.matmul %487, %489, %cst_475 {dimension_numbers = #tpu.dot_dimension_numbers<[1], [0], [0], [1], [0, 0, 1, 1], [], []>} : vector<8x8xbf16>, vector<8x8xbf16>, vector<8x8xf32> -> vector<8x8xf32>
    %496 = arith.subf %492, %493 : vector<8x8xf32>
    %497 = arith.truncf %496 : vector<8x8xf32> to vector<8x8xbf16>
    %c22_476 = arith.constant 22 : index
    %c0_477 = arith.constant 0 : index
    %c0_478 = arith.constant 0 : index
    %498 = vector.load %arg5[%c22_476, %c0_477, %c0_478] : memref<32x8x8xbf16, #tpu.memory_space<vmem>>, vector<1x8x8xbf16>
    %499 = vector.shape_cast %498 : vector<1x8x8xbf16> to vector<8x8xbf16>
    %500 = vector.shape_cast %497 : vector<8x8xbf16> to vector<1x8x8xbf16>
    tpu.vector_store %arg5[%c22_476, %c0_477, %c0_478], %500 {strides = array<i32>} : memref<32x8x8xbf16, #tpu.memory_space<vmem>>, vector<1x8x8xbf16>,
    %501 = arith.addf %494, %495 : vector<8x8xf32>
    %502 = arith.truncf %501 : vector<8x8xf32> to vector<8x8xbf16>
    %c22_479 = arith.constant 22 : index
    %c0_480 = arith.constant 0 : index
    %c0_481 = arith.constant 0 : index
    %503 = vector.load %arg6[%c22_479, %c0_480, %c0_481] : memref<32x8x8xbf16, #tpu.memory_space<vmem>>, vector<1x8x8xbf16>
    %504 = vector.shape_cast %503 : vector<1x8x8xbf16> to vector<8x8xbf16>
    %505 = vector.shape_cast %502 : vector<8x8xbf16> to vector<1x8x8xbf16>
    tpu.vector_store %arg6[%c22_479, %c0_480, %c0_481], %505 {strides = array<i32>} : memref<32x8x8xbf16, #tpu.memory_space<vmem>>, vector<1x8x8xbf16>,
    %c23 = arith.constant 23 : index
    %c0_482 = arith.constant 0 : index
    %c0_483 = arith.constant 0 : index
    %506 = vector.load %arg1[%c23, %c0_482, %c0_483] : memref<32x8x8xbf16, #tpu.memory_space<vmem>>, vector<1x8x8xbf16>
    %507 = vector.shape_cast %506 : vector<1x8x8xbf16> to vector<8x8xbf16>
    %c23_484 = arith.constant 23 : index
    %c0_485 = arith.constant 0 : index
    %c0_486 = arith.constant 0 : index
    %508 = vector.load %arg2[%c23_484, %c0_485, %c0_486] : memref<32x8x8xbf16, #tpu.memory_space<vmem>>, vector<1x8x8xbf16>
    %509 = vector.shape_cast %508 : vector<1x8x8xbf16> to vector<8x8xbf16>
    %c23_487 = arith.constant 23 : index
    %c0_488 = arith.constant 0 : index
    %c0_489 = arith.constant 0 : index
    %510 = vector.load %arg3[%c23_487, %c0_488, %c0_489] : memref<32x8x8xbf16, #tpu.memory_space<vmem>>, vector<1x8x8xbf16>
    %511 = vector.shape_cast %510 : vector<1x8x8xbf16> to vector<8x8xbf16>
    %c23_490 = arith.constant 23 : index
    %c0_491 = arith.constant 0 : index
    %c0_492 = arith.constant 0 : index
    %512 = vector.load %arg4[%c23_490, %c0_491, %c0_492] : memref<32x8x8xbf16, #tpu.memory_space<vmem>>, vector<1x8x8xbf16>
    %513 = vector.shape_cast %512 : vector<1x8x8xbf16> to vector<8x8xbf16>
    %cst_493 = arith.constant dense<0.000000e+00> : vector<8x8xf32>
    %514 = tpu.matmul %507, %511, %cst_493 {dimension_numbers = #tpu.dot_dimension_numbers<[1], [0], [0], [1], [0, 0, 1, 1], [], []>} : vector<8x8xbf16>, vector<8x8xbf16>, vector<8x8xf32> -> vector<8x8xf32>
    %cst_494 = arith.constant dense<0.000000e+00> : vector<8x8xf32>
    %515 = tpu.matmul %509, %513, %cst_494 {dimension_numbers = #tpu.dot_dimension_numbers<[1], [0], [0], [1], [0, 0, 1, 1], [], []>} : vector<8x8xbf16>, vector<8x8xbf16>, vector<8x8xf32> -> vector<8x8xf32>
    %cst_495 = arith.constant dense<0.000000e+00> : vector<8x8xf32>
    %516 = tpu.matmul %507, %513, %cst_495 {dimension_numbers = #tpu.dot_dimension_numbers<[1], [0], [0], [1], [0, 0, 1, 1], [], []>} : vector<8x8xbf16>, vector<8x8xbf16>, vector<8x8xf32> -> vector<8x8xf32>
    %cst_496 = arith.constant dense<0.000000e+00> : vector<8x8xf32>
    %517 = tpu.matmul %509, %511, %cst_496 {dimension_numbers = #tpu.dot_dimension_numbers<[1], [0], [0], [1], [0, 0, 1, 1], [], []>} : vector<8x8xbf16>, vector<8x8xbf16>, vector<8x8xf32> -> vector<8x8xf32>
    %518 = arith.subf %514, %515 : vector<8x8xf32>
    %519 = arith.truncf %518 : vector<8x8xf32> to vector<8x8xbf16>
    %c23_497 = arith.constant 23 : index
    %c0_498 = arith.constant 0 : index
    %c0_499 = arith.constant 0 : index
    %520 = vector.load %arg5[%c23_497, %c0_498, %c0_499] : memref<32x8x8xbf16, #tpu.memory_space<vmem>>, vector<1x8x8xbf16>
    %521 = vector.shape_cast %520 : vector<1x8x8xbf16> to vector<8x8xbf16>
    %522 = vector.shape_cast %519 : vector<8x8xbf16> to vector<1x8x8xbf16>
    tpu.vector_store %arg5[%c23_497, %c0_498, %c0_499], %522 {strides = array<i32>} : memref<32x8x8xbf16, #tpu.memory_space<vmem>>, vector<1x8x8xbf16>,
    %523 = arith.addf %516, %517 : vector<8x8xf32>
    %524 = arith.truncf %523 : vector<8x8xf32> to vector<8x8xbf16>
    %c23_500 = arith.constant 23 : index
    %c0_501 = arith.constant 0 : index
    %c0_502 = arith.constant 0 : index
    %525 = vector.load %arg6[%c23_500, %c0_501, %c0_502] : memref<32x8x8xbf16, #tpu.memory_space<vmem>>, vector<1x8x8xbf16>
    %526 = vector.shape_cast %525 : vector<1x8x8xbf16> to vector<8x8xbf16>
    %527 = vector.shape_cast %524 : vector<8x8xbf16> to vector<1x8x8xbf16>
    tpu.vector_store %arg6[%c23_500, %c0_501, %c0_502], %527 {strides = array<i32>} : memref<32x8x8xbf16, #tpu.memory_space<vmem>>, vector<1x8x8xbf16>,
    %c24 = arith.constant 24 : index
    %c0_503 = arith.constant 0 : index
    %c0_504 = arith.constant 0 : index
    %528 = vector.load %arg1[%c24, %c0_503, %c0_504] : memref<32x8x8xbf16, #tpu.memory_space<vmem>>, vector<1x8x8xbf16>
    %529 = vector.shape_cast %528 : vector<1x8x8xbf16> to vector<8x8xbf16>
    %c24_505 = arith.constant 24 : index
    %c0_506 = arith.constant 0 : index
    %c0_507 = arith.constant 0 : index
    %530 = vector.load %arg2[%c24_505, %c0_506, %c0_507] : memref<32x8x8xbf16, #tpu.memory_space<vmem>>, vector<1x8x8xbf16>
    %531 = vector.shape_cast %530 : vector<1x8x8xbf16> to vector<8x8xbf16>
    %c24_508 = arith.constant 24 : index
    %c0_509 = arith.constant 0 : index
    %c0_510 = arith.constant 0 : index
    %532 = vector.load %arg3[%c24_508, %c0_509, %c0_510] : memref<32x8x8xbf16, #tpu.memory_space<vmem>>, vector<1x8x8xbf16>
    %533 = vector.shape_cast %532 : vector<1x8x8xbf16> to vector<8x8xbf16>
    %c24_511 = arith.constant 24 : index
    %c0_512 = arith.constant 0 : index
    %c0_513 = arith.constant 0 : index
    %534 = vector.load %arg4[%c24_511, %c0_512, %c0_513] : memref<32x8x8xbf16, #tpu.memory_space<vmem>>, vector<1x8x8xbf16>
    %535 = vector.shape_cast %534 : vector<1x8x8xbf16> to vector<8x8xbf16>
    %cst_514 = arith.constant dense<0.000000e+00> : vector<8x8xf32>
    %536 = tpu.matmul %529, %533, %cst_514 {dimension_numbers = #tpu.dot_dimension_numbers<[1], [0], [0], [1], [0, 0, 1, 1], [], []>} : vector<8x8xbf16>, vector<8x8xbf16>, vector<8x8xf32> -> vector<8x8xf32>
    %cst_515 = arith.constant dense<0.000000e+00> : vector<8x8xf32>
    %537 = tpu.matmul %531, %535, %cst_515 {dimension_numbers = #tpu.dot_dimension_numbers<[1], [0], [0], [1], [0, 0, 1, 1], [], []>} : vector<8x8xbf16>, vector<8x8xbf16>, vector<8x8xf32> -> vector<8x8xf32>
    %cst_516 = arith.constant dense<0.000000e+00> : vector<8x8xf32>
    %538 = tpu.matmul %529, %535, %cst_516 {dimension_numbers = #tpu.dot_dimension_numbers<[1], [0], [0], [1], [0, 0, 1, 1], [], []>} : vector<8x8xbf16>, vector<8x8xbf16>, vector<8x8xf32> -> vector<8x8xf32>
    %cst_517 = arith.constant dense<0.000000e+00> : vector<8x8xf32>
    %539 = tpu.matmul %531, %533, %cst_517 {dimension_numbers = #tpu.dot_dimension_numbers<[1], [0], [0], [1], [0, 0, 1, 1], [], []>} : vector<8x8xbf16>, vector<8x8xbf16>, vector<8x8xf32> -> vector<8x8xf32>
    %540 = arith.subf %536, %537 : vector<8x8xf32>
    %541 = arith.truncf %540 : vector<8x8xf32> to vector<8x8xbf16>
    %c24_518 = arith.constant 24 : index
    %c0_519 = arith.constant 0 : index
    %c0_520 = arith.constant 0 : index
    %542 = vector.load %arg5[%c24_518, %c0_519, %c0_520] : memref<32x8x8xbf16, #tpu.memory_space<vmem>>, vector<1x8x8xbf16>
    %543 = vector.shape_cast %542 : vector<1x8x8xbf16> to vector<8x8xbf16>
    %544 = vector.shape_cast %541 : vector<8x8xbf16> to vector<1x8x8xbf16>
    tpu.vector_store %arg5[%c24_518, %c0_519, %c0_520], %544 {strides = array<i32>} : memref<32x8x8xbf16, #tpu.memory_space<vmem>>, vector<1x8x8xbf16>,
    %545 = arith.addf %538, %539 : vector<8x8xf32>
    %546 = arith.truncf %545 : vector<8x8xf32> to vector<8x8xbf16>
    %c24_521 = arith.constant 24 : index
    %c0_522 = arith.constant 0 : index
    %c0_523 = arith.constant 0 : index
    %547 = vector.load %arg6[%c24_521, %c0_522, %c0_523] : memref<32x8x8xbf16, #tpu.memory_space<vmem>>, vector<1x8x8xbf16>
    %548 = vector.shape_cast %547 : vector<1x8x8xbf16> to vector<8x8xbf16>
    %549 = vector.shape_cast %546 : vector<8x8xbf16> to vector<1x8x8xbf16>
    tpu.vector_store %arg6[%c24_521, %c0_522, %c0_523], %549 {strides = array<i32>} : memref<32x8x8xbf16, #tpu.memory_space<vmem>>, vector<1x8x8xbf16>,
    %c25 = arith.constant 25 : index
    %c0_524 = arith.constant 0 : index
    %c0_525 = arith.constant 0 : index
    %550 = vector.load %arg1[%c25, %c0_524, %c0_525] : memref<32x8x8xbf16, #tpu.memory_space<vmem>>, vector<1x8x8xbf16>
    %551 = vector.shape_cast %550 : vector<1x8x8xbf16> to vector<8x8xbf16>
    %c25_526 = arith.constant 25 : index
    %c0_527 = arith.constant 0 : index
    %c0_528 = arith.constant 0 : index
    %552 = vector.load %arg2[%c25_526, %c0_527, %c0_528] : memref<32x8x8xbf16, #tpu.memory_space<vmem>>, vector<1x8x8xbf16>
    %553 = vector.shape_cast %552 : vector<1x8x8xbf16> to vector<8x8xbf16>
    %c25_529 = arith.constant 25 : index
    %c0_530 = arith.constant 0 : index
    %c0_531 = arith.constant 0 : index
    %554 = vector.load %arg3[%c25_529, %c0_530, %c0_531] : memref<32x8x8xbf16, #tpu.memory_space<vmem>>, vector<1x8x8xbf16>
    %555 = vector.shape_cast %554 : vector<1x8x8xbf16> to vector<8x8xbf16>
    %c25_532 = arith.constant 25 : index
    %c0_533 = arith.constant 0 : index
    %c0_534 = arith.constant 0 : index
    %556 = vector.load %arg4[%c25_532, %c0_533, %c0_534] : memref<32x8x8xbf16, #tpu.memory_space<vmem>>, vector<1x8x8xbf16>
    %557 = vector.shape_cast %556 : vector<1x8x8xbf16> to vector<8x8xbf16>
    %cst_535 = arith.constant dense<0.000000e+00> : vector<8x8xf32>
    %558 = tpu.matmul %551, %555, %cst_535 {dimension_numbers = #tpu.dot_dimension_numbers<[1], [0], [0], [1], [0, 0, 1, 1], [], []>} : vector<8x8xbf16>, vector<8x8xbf16>, vector<8x8xf32> -> vector<8x8xf32>
    %cst_536 = arith.constant dense<0.000000e+00> : vector<8x8xf32>
    %559 = tpu.matmul %553, %557, %cst_536 {dimension_numbers = #tpu.dot_dimension_numbers<[1], [0], [0], [1], [0, 0, 1, 1], [], []>} : vector<8x8xbf16>, vector<8x8xbf16>, vector<8x8xf32> -> vector<8x8xf32>
    %cst_537 = arith.constant dense<0.000000e+00> : vector<8x8xf32>
    %560 = tpu.matmul %551, %557, %cst_537 {dimension_numbers = #tpu.dot_dimension_numbers<[1], [0], [0], [1], [0, 0, 1, 1], [], []>} : vector<8x8xbf16>, vector<8x8xbf16>, vector<8x8xf32> -> vector<8x8xf32>
    %cst_538 = arith.constant dense<0.000000e+00> : vector<8x8xf32>
    %561 = tpu.matmul %553, %555, %cst_538 {dimension_numbers = #tpu.dot_dimension_numbers<[1], [0], [0], [1], [0, 0, 1, 1], [], []>} : vector<8x8xbf16>, vector<8x8xbf16>, vector<8x8xf32> -> vector<8x8xf32>
    %562 = arith.subf %558, %559 : vector<8x8xf32>
    %563 = arith.truncf %562 : vector<8x8xf32> to vector<8x8xbf16>
    %c25_539 = arith.constant 25 : index
    %c0_540 = arith.constant 0 : index
    %c0_541 = arith.constant 0 : index
    %564 = vector.load %arg5[%c25_539, %c0_540, %c0_541] : memref<32x8x8xbf16, #tpu.memory_space<vmem>>, vector<1x8x8xbf16>
    %565 = vector.shape_cast %564 : vector<1x8x8xbf16> to vector<8x8xbf16>
    %566 = vector.shape_cast %563 : vector<8x8xbf16> to vector<1x8x8xbf16>
    tpu.vector_store %arg5[%c25_539, %c0_540, %c0_541], %566 {strides = array<i32>} : memref<32x8x8xbf16, #tpu.memory_space<vmem>>, vector<1x8x8xbf16>,
    %567 = arith.addf %560, %561 : vector<8x8xf32>
    %568 = arith.truncf %567 : vector<8x8xf32> to vector<8x8xbf16>
    %c25_542 = arith.constant 25 : index
    %c0_543 = arith.constant 0 : index
    %c0_544 = arith.constant 0 : index
    %569 = vector.load %arg6[%c25_542, %c0_543, %c0_544] : memref<32x8x8xbf16, #tpu.memory_space<vmem>>, vector<1x8x8xbf16>
    %570 = vector.shape_cast %569 : vector<1x8x8xbf16> to vector<8x8xbf16>
    %571 = vector.shape_cast %568 : vector<8x8xbf16> to vector<1x8x8xbf16>
    tpu.vector_store %arg6[%c25_542, %c0_543, %c0_544], %571 {strides = array<i32>} : memref<32x8x8xbf16, #tpu.memory_space<vmem>>, vector<1x8x8xbf16>,
    %c26 = arith.constant 26 : index
    %c0_545 = arith.constant 0 : index
    %c0_546 = arith.constant 0 : index
    %572 = vector.load %arg1[%c26, %c0_545, %c0_546] : memref<32x8x8xbf16, #tpu.memory_space<vmem>>, vector<1x8x8xbf16>
    %573 = vector.shape_cast %572 : vector<1x8x8xbf16> to vector<8x8xbf16>
    %c26_547 = arith.constant 26 : index
    %c0_548 = arith.constant 0 : index
    %c0_549 = arith.constant 0 : index
    %574 = vector.load %arg2[%c26_547, %c0_548, %c0_549] : memref<32x8x8xbf16, #tpu.memory_space<vmem>>, vector<1x8x8xbf16>
    %575 = vector.shape_cast %574 : vector<1x8x8xbf16> to vector<8x8xbf16>
    %c26_550 = arith.constant 26 : index
    %c0_551 = arith.constant 0 : index
    %c0_552 = arith.constant 0 : index
    %576 = vector.load %arg3[%c26_550, %c0_551, %c0_552] : memref<32x8x8xbf16, #tpu.memory_space<vmem>>, vector<1x8x8xbf16>
    %577 = vector.shape_cast %576 : vector<1x8x8xbf16> to vector<8x8xbf16>
    %c26_553 = arith.constant 26 : index
    %c0_554 = arith.constant 0 : index
    %c0_555 = arith.constant 0 : index
    %578 = vector.load %arg4[%c26_553, %c0_554, %c0_555] : memref<32x8x8xbf16, #tpu.memory_space<vmem>>, vector<1x8x8xbf16>
    %579 = vector.shape_cast %578 : vector<1x8x8xbf16> to vector<8x8xbf16>
    %cst_556 = arith.constant dense<0.000000e+00> : vector<8x8xf32>
    %580 = tpu.matmul %573, %577, %cst_556 {dimension_numbers = #tpu.dot_dimension_numbers<[1], [0], [0], [1], [0, 0, 1, 1], [], []>} : vector<8x8xbf16>, vector<8x8xbf16>, vector<8x8xf32> -> vector<8x8xf32>
    %cst_557 = arith.constant dense<0.000000e+00> : vector<8x8xf32>
    %581 = tpu.matmul %575, %579, %cst_557 {dimension_numbers = #tpu.dot_dimension_numbers<[1], [0], [0], [1], [0, 0, 1, 1], [], []>} : vector<8x8xbf16>, vector<8x8xbf16>, vector<8x8xf32> -> vector<8x8xf32>
    %cst_558 = arith.constant dense<0.000000e+00> : vector<8x8xf32>
    %582 = tpu.matmul %573, %579, %cst_558 {dimension_numbers = #tpu.dot_dimension_numbers<[1], [0], [0], [1], [0, 0, 1, 1], [], []>} : vector<8x8xbf16>, vector<8x8xbf16>, vector<8x8xf32> -> vector<8x8xf32>
    %cst_559 = arith.constant dense<0.000000e+00> : vector<8x8xf32>
    %583 = tpu.matmul %575, %577, %cst_559 {dimension_numbers = #tpu.dot_dimension_numbers<[1], [0], [0], [1], [0, 0, 1, 1], [], []>} : vector<8x8xbf16>, vector<8x8xbf16>, vector<8x8xf32> -> vector<8x8xf32>
    %584 = arith.subf %580, %581 : vector<8x8xf32>
    %585 = arith.truncf %584 : vector<8x8xf32> to vector<8x8xbf16>
    %c26_560 = arith.constant 26 : index
    %c0_561 = arith.constant 0 : index
    %c0_562 = arith.constant 0 : index
    %586 = vector.load %arg5[%c26_560, %c0_561, %c0_562] : memref<32x8x8xbf16, #tpu.memory_space<vmem>>, vector<1x8x8xbf16>
    %587 = vector.shape_cast %586 : vector<1x8x8xbf16> to vector<8x8xbf16>
    %588 = vector.shape_cast %585 : vector<8x8xbf16> to vector<1x8x8xbf16>
    tpu.vector_store %arg5[%c26_560, %c0_561, %c0_562], %588 {strides = array<i32>} : memref<32x8x8xbf16, #tpu.memory_space<vmem>>, vector<1x8x8xbf16>,
    %589 = arith.addf %582, %583 : vector<8x8xf32>
    %590 = arith.truncf %589 : vector<8x8xf32> to vector<8x8xbf16>
    %c26_563 = arith.constant 26 : index
    %c0_564 = arith.constant 0 : index
    %c0_565 = arith.constant 0 : index
    %591 = vector.load %arg6[%c26_563, %c0_564, %c0_565] : memref<32x8x8xbf16, #tpu.memory_space<vmem>>, vector<1x8x8xbf16>
    %592 = vector.shape_cast %591 : vector<1x8x8xbf16> to vector<8x8xbf16>
    %593 = vector.shape_cast %590 : vector<8x8xbf16> to vector<1x8x8xbf16>
    tpu.vector_store %arg6[%c26_563, %c0_564, %c0_565], %593 {strides = array<i32>} : memref<32x8x8xbf16, #tpu.memory_space<vmem>>, vector<1x8x8xbf16>,
    %c27 = arith.constant 27 : index
    %c0_566 = arith.constant 0 : index
    %c0_567 = arith.constant 0 : index
    %594 = vector.load %arg1[%c27, %c0_566, %c0_567] : memref<32x8x8xbf16, #tpu.memory_space<vmem>>, vector<1x8x8xbf16>
    %595 = vector.shape_cast %594 : vector<1x8x8xbf16> to vector<8x8xbf16>
    %c27_568 = arith.constant 27 : index
    %c0_569 = arith.constant 0 : index
    %c0_570 = arith.constant 0 : index
    %596 = vector.load %arg2[%c27_568, %c0_569, %c0_570] : memref<32x8x8xbf16, #tpu.memory_space<vmem>>, vector<1x8x8xbf16>
    %597 = vector.shape_cast %596 : vector<1x8x8xbf16> to vector<8x8xbf16>
    %c27_571 = arith.constant 27 : index
    %c0_572 = arith.constant 0 : index
    %c0_573 = arith.constant 0 : index
    %598 = vector.load %arg3[%c27_571, %c0_572, %c0_573] : memref<32x8x8xbf16, #tpu.memory_space<vmem>>, vector<1x8x8xbf16>
    %599 = vector.shape_cast %598 : vector<1x8x8xbf16> to vector<8x8xbf16>
    %c27_574 = arith.constant 27 : index
    %c0_575 = arith.constant 0 : index
    %c0_576 = arith.constant 0 : index
    %600 = vector.load %arg4[%c27_574, %c0_575, %c0_576] : memref<32x8x8xbf16, #tpu.memory_space<vmem>>, vector<1x8x8xbf16>
    %601 = vector.shape_cast %600 : vector<1x8x8xbf16> to vector<8x8xbf16>
    %cst_577 = arith.constant dense<0.000000e+00> : vector<8x8xf32>
    %602 = tpu.matmul %595, %599, %cst_577 {dimension_numbers = #tpu.dot_dimension_numbers<[1], [0], [0], [1], [0, 0, 1, 1], [], []>} : vector<8x8xbf16>, vector<8x8xbf16>, vector<8x8xf32> -> vector<8x8xf32>
    %cst_578 = arith.constant dense<0.000000e+00> : vector<8x8xf32>
    %603 = tpu.matmul %597, %601, %cst_578 {dimension_numbers = #tpu.dot_dimension_numbers<[1], [0], [0], [1], [0, 0, 1, 1], [], []>} : vector<8x8xbf16>, vector<8x8xbf16>, vector<8x8xf32> -> vector<8x8xf32>
    %cst_579 = arith.constant dense<0.000000e+00> : vector<8x8xf32>
    %604 = tpu.matmul %595, %601, %cst_579 {dimension_numbers = #tpu.dot_dimension_numbers<[1], [0], [0], [1], [0, 0, 1, 1], [], []>} : vector<8x8xbf16>, vector<8x8xbf16>, vector<8x8xf32> -> vector<8x8xf32>
    %cst_580 = arith.constant dense<0.000000e+00> : vector<8x8xf32>
    %605 = tpu.matmul %597, %599, %cst_580 {dimension_numbers = #tpu.dot_dimension_numbers<[1], [0], [0], [1], [0, 0, 1, 1], [], []>} : vector<8x8xbf16>, vector<8x8xbf16>, vector<8x8xf32> -> vector<8x8xf32>
    %606 = arith.subf %602, %603 : vector<8x8xf32>
    %607 = arith.truncf %606 : vector<8x8xf32> to vector<8x8xbf16>
    %c27_581 = arith.constant 27 : index
    %c0_582 = arith.constant 0 : index
    %c0_583 = arith.constant 0 : index
    %608 = vector.load %arg5[%c27_581, %c0_582, %c0_583] : memref<32x8x8xbf16, #tpu.memory_space<vmem>>, vector<1x8x8xbf16>
    %609 = vector.shape_cast %608 : vector<1x8x8xbf16> to vector<8x8xbf16>
    %610 = vector.shape_cast %607 : vector<8x8xbf16> to vector<1x8x8xbf16>
    tpu.vector_store %arg5[%c27_581, %c0_582, %c0_583], %610 {strides = array<i32>} : memref<32x8x8xbf16, #tpu.memory_space<vmem>>, vector<1x8x8xbf16>,
    %611 = arith.addf %604, %605 : vector<8x8xf32>
    %612 = arith.truncf %611 : vector<8x8xf32> to vector<8x8xbf16>
    %c27_584 = arith.constant 27 : index
    %c0_585 = arith.constant 0 : index
    %c0_586 = arith.constant 0 : index
    %613 = vector.load %arg6[%c27_584, %c0_585, %c0_586] : memref<32x8x8xbf16, #tpu.memory_space<vmem>>, vector<1x8x8xbf16>
    %614 = vector.shape_cast %613 : vector<1x8x8xbf16> to vector<8x8xbf16>
    %615 = vector.shape_cast %612 : vector<8x8xbf16> to vector<1x8x8xbf16>
    tpu.vector_store %arg6[%c27_584, %c0_585, %c0_586], %615 {strides = array<i32>} : memref<32x8x8xbf16, #tpu.memory_space<vmem>>, vector<1x8x8xbf16>,
    %c28 = arith.constant 28 : index
    %c0_587 = arith.constant 0 : index
    %c0_588 = arith.constant 0 : index
    %616 = vector.load %arg1[%c28, %c0_587, %c0_588] : memref<32x8x8xbf16, #tpu.memory_space<vmem>>, vector<1x8x8xbf16>
    %617 = vector.shape_cast %616 : vector<1x8x8xbf16> to vector<8x8xbf16>
    %c28_589 = arith.constant 28 : index
    %c0_590 = arith.constant 0 : index
    %c0_591 = arith.constant 0 : index
    %618 = vector.load %arg2[%c28_589, %c0_590, %c0_591] : memref<32x8x8xbf16, #tpu.memory_space<vmem>>, vector<1x8x8xbf16>
    %619 = vector.shape_cast %618 : vector<1x8x8xbf16> to vector<8x8xbf16>
    %c28_592 = arith.constant 28 : index
    %c0_593 = arith.constant 0 : index
    %c0_594 = arith.constant 0 : index
    %620 = vector.load %arg3[%c28_592, %c0_593, %c0_594] : memref<32x8x8xbf16, #tpu.memory_space<vmem>>, vector<1x8x8xbf16>
    %621 = vector.shape_cast %620 : vector<1x8x8xbf16> to vector<8x8xbf16>
    %c28_595 = arith.constant 28 : index
    %c0_596 = arith.constant 0 : index
    %c0_597 = arith.constant 0 : index
    %622 = vector.load %arg4[%c28_595, %c0_596, %c0_597] : memref<32x8x8xbf16, #tpu.memory_space<vmem>>, vector<1x8x8xbf16>
    %623 = vector.shape_cast %622 : vector<1x8x8xbf16> to vector<8x8xbf16>
    %cst_598 = arith.constant dense<0.000000e+00> : vector<8x8xf32>
    %624 = tpu.matmul %617, %621, %cst_598 {dimension_numbers = #tpu.dot_dimension_numbers<[1], [0], [0], [1], [0, 0, 1, 1], [], []>} : vector<8x8xbf16>, vector<8x8xbf16>, vector<8x8xf32> -> vector<8x8xf32>
    %cst_599 = arith.constant dense<0.000000e+00> : vector<8x8xf32>
    %625 = tpu.matmul %619, %623, %cst_599 {dimension_numbers = #tpu.dot_dimension_numbers<[1], [0], [0], [1], [0, 0, 1, 1], [], []>} : vector<8x8xbf16>, vector<8x8xbf16>, vector<8x8xf32> -> vector<8x8xf32>
    %cst_600 = arith.constant dense<0.000000e+00> : vector<8x8xf32>
    %626 = tpu.matmul %617, %623, %cst_600 {dimension_numbers = #tpu.dot_dimension_numbers<[1], [0], [0], [1], [0, 0, 1, 1], [], []>} : vector<8x8xbf16>, vector<8x8xbf16>, vector<8x8xf32> -> vector<8x8xf32>
    %cst_601 = arith.constant dense<0.000000e+00> : vector<8x8xf32>
    %627 = tpu.matmul %619, %621, %cst_601 {dimension_numbers = #tpu.dot_dimension_numbers<[1], [0], [0], [1], [0, 0, 1, 1], [], []>} : vector<8x8xbf16>, vector<8x8xbf16>, vector<8x8xf32> -> vector<8x8xf32>
    %628 = arith.subf %624, %625 : vector<8x8xf32>
    %629 = arith.truncf %628 : vector<8x8xf32> to vector<8x8xbf16>
    %c28_602 = arith.constant 28 : index
    %c0_603 = arith.constant 0 : index
    %c0_604 = arith.constant 0 : index
    %630 = vector.load %arg5[%c28_602, %c0_603, %c0_604] : memref<32x8x8xbf16, #tpu.memory_space<vmem>>, vector<1x8x8xbf16>
    %631 = vector.shape_cast %630 : vector<1x8x8xbf16> to vector<8x8xbf16>
    %632 = vector.shape_cast %629 : vector<8x8xbf16> to vector<1x8x8xbf16>
    tpu.vector_store %arg5[%c28_602, %c0_603, %c0_604], %632 {strides = array<i32>} : memref<32x8x8xbf16, #tpu.memory_space<vmem>>, vector<1x8x8xbf16>,
    %633 = arith.addf %626, %627 : vector<8x8xf32>
    %634 = arith.truncf %633 : vector<8x8xf32> to vector<8x8xbf16>
    %c28_605 = arith.constant 28 : index
    %c0_606 = arith.constant 0 : index
    %c0_607 = arith.constant 0 : index
    %635 = vector.load %arg6[%c28_605, %c0_606, %c0_607] : memref<32x8x8xbf16, #tpu.memory_space<vmem>>, vector<1x8x8xbf16>
    %636 = vector.shape_cast %635 : vector<1x8x8xbf16> to vector<8x8xbf16>
    %637 = vector.shape_cast %634 : vector<8x8xbf16> to vector<1x8x8xbf16>
    tpu.vector_store %arg6[%c28_605, %c0_606, %c0_607], %637 {strides = array<i32>} : memref<32x8x8xbf16, #tpu.memory_space<vmem>>, vector<1x8x8xbf16>,
    %c29 = arith.constant 29 : index
    %c0_608 = arith.constant 0 : index
    %c0_609 = arith.constant 0 : index
    %638 = vector.load %arg1[%c29, %c0_608, %c0_609] : memref<32x8x8xbf16, #tpu.memory_space<vmem>>, vector<1x8x8xbf16>
    %639 = vector.shape_cast %638 : vector<1x8x8xbf16> to vector<8x8xbf16>
    %c29_610 = arith.constant 29 : index
    %c0_611 = arith.constant 0 : index
    %c0_612 = arith.constant 0 : index
    %640 = vector.load %arg2[%c29_610, %c0_611, %c0_612] : memref<32x8x8xbf16, #tpu.memory_space<vmem>>, vector<1x8x8xbf16>
    %641 = vector.shape_cast %640 : vector<1x8x8xbf16> to vector<8x8xbf16>
    %c29_613 = arith.constant 29 : index
    %c0_614 = arith.constant 0 : index
    %c0_615 = arith.constant 0 : index
    %642 = vector.load %arg3[%c29_613, %c0_614, %c0_615] : memref<32x8x8xbf16, #tpu.memory_space<vmem>>, vector<1x8x8xbf16>
    %643 = vector.shape_cast %642 : vector<1x8x8xbf16> to vector<8x8xbf16>
    %c29_616 = arith.constant 29 : index
    %c0_617 = arith.constant 0 : index
    %c0_618 = arith.constant 0 : index
    %644 = vector.load %arg4[%c29_616, %c0_617, %c0_618] : memref<32x8x8xbf16, #tpu.memory_space<vmem>>, vector<1x8x8xbf16>
    %645 = vector.shape_cast %644 : vector<1x8x8xbf16> to vector<8x8xbf16>
    %cst_619 = arith.constant dense<0.000000e+00> : vector<8x8xf32>
    %646 = tpu.matmul %639, %643, %cst_619 {dimension_numbers = #tpu.dot_dimension_numbers<[1], [0], [0], [1], [0, 0, 1, 1], [], []>} : vector<8x8xbf16>, vector<8x8xbf16>, vector<8x8xf32> -> vector<8x8xf32>
    %cst_620 = arith.constant dense<0.000000e+00> : vector<8x8xf32>
    %647 = tpu.matmul %641, %645, %cst_620 {dimension_numbers = #tpu.dot_dimension_numbers<[1], [0], [0], [1], [0, 0, 1, 1], [], []>} : vector<8x8xbf16>, vector<8x8xbf16>, vector<8x8xf32> -> vector<8x8xf32>
    %cst_621 = arith.constant dense<0.000000e+00> : vector<8x8xf32>
    %648 = tpu.matmul %639, %645, %cst_621 {dimension_numbers = #tpu.dot_dimension_numbers<[1], [0], [0], [1], [0, 0, 1, 1], [], []>} : vector<8x8xbf16>, vector<8x8xbf16>, vector<8x8xf32> -> vector<8x8xf32>
    %cst_622 = arith.constant dense<0.000000e+00> : vector<8x8xf32>
    %649 = tpu.matmul %641, %643, %cst_622 {dimension_numbers = #tpu.dot_dimension_numbers<[1], [0], [0], [1], [0, 0, 1, 1], [], []>} : vector<8x8xbf16>, vector<8x8xbf16>, vector<8x8xf32> -> vector<8x8xf32>
    %650 = arith.subf %646, %647 : vector<8x8xf32>
    %651 = arith.truncf %650 : vector<8x8xf32> to vector<8x8xbf16>
    %c29_623 = arith.constant 29 : index
    %c0_624 = arith.constant 0 : index
    %c0_625 = arith.constant 0 : index
    %652 = vector.load %arg5[%c29_623, %c0_624, %c0_625] : memref<32x8x8xbf16, #tpu.memory_space<vmem>>, vector<1x8x8xbf16>
    %653 = vector.shape_cast %652 : vector<1x8x8xbf16> to vector<8x8xbf16>
    %654 = vector.shape_cast %651 : vector<8x8xbf16> to vector<1x8x8xbf16>
    tpu.vector_store %arg5[%c29_623, %c0_624, %c0_625], %654 {strides = array<i32>} : memref<32x8x8xbf16, #tpu.memory_space<vmem>>, vector<1x8x8xbf16>,
    %655 = arith.addf %648, %649 : vector<8x8xf32>
    %656 = arith.truncf %655 : vector<8x8xf32> to vector<8x8xbf16>
    %c29_626 = arith.constant 29 : index
    %c0_627 = arith.constant 0 : index
    %c0_628 = arith.constant 0 : index
    %657 = vector.load %arg6[%c29_626, %c0_627, %c0_628] : memref<32x8x8xbf16, #tpu.memory_space<vmem>>, vector<1x8x8xbf16>
    %658 = vector.shape_cast %657 : vector<1x8x8xbf16> to vector<8x8xbf16>
    %659 = vector.shape_cast %656 : vector<8x8xbf16> to vector<1x8x8xbf16>
    tpu.vector_store %arg6[%c29_626, %c0_627, %c0_628], %659 {strides = array<i32>} : memref<32x8x8xbf16, #tpu.memory_space<vmem>>, vector<1x8x8xbf16>,
    %c30 = arith.constant 30 : index
    %c0_629 = arith.constant 0 : index
    %c0_630 = arith.constant 0 : index
    %660 = vector.load %arg1[%c30, %c0_629, %c0_630] : memref<32x8x8xbf16, #tpu.memory_space<vmem>>, vector<1x8x8xbf16>
    %661 = vector.shape_cast %660 : vector<1x8x8xbf16> to vector<8x8xbf16>
    %c30_631 = arith.constant 30 : index
    %c0_632 = arith.constant 0 : index
    %c0_633 = arith.constant 0 : index
    %662 = vector.load %arg2[%c30_631, %c0_632, %c0_633] : memref<32x8x8xbf16, #tpu.memory_space<vmem>>, vector<1x8x8xbf16>
    %663 = vector.shape_cast %662 : vector<1x8x8xbf16> to vector<8x8xbf16>
    %c30_634 = arith.constant 30 : index
    %c0_635 = arith.constant 0 : index
    %c0_636 = arith.constant 0 : index
    %664 = vector.load %arg3[%c30_634, %c0_635, %c0_636] : memref<32x8x8xbf16, #tpu.memory_space<vmem>>, vector<1x8x8xbf16>
    %665 = vector.shape_cast %664 : vector<1x8x8xbf16> to vector<8x8xbf16>
    %c30_637 = arith.constant 30 : index
    %c0_638 = arith.constant 0 : index
    %c0_639 = arith.constant 0 : index
    %666 = vector.load %arg4[%c30_637, %c0_638, %c0_639] : memref<32x8x8xbf16, #tpu.memory_space<vmem>>, vector<1x8x8xbf16>
    %667 = vector.shape_cast %666 : vector<1x8x8xbf16> to vector<8x8xbf16>
    %cst_640 = arith.constant dense<0.000000e+00> : vector<8x8xf32>
    %668 = tpu.matmul %661, %665, %cst_640 {dimension_numbers = #tpu.dot_dimension_numbers<[1], [0], [0], [1], [0, 0, 1, 1], [], []>} : vector<8x8xbf16>, vector<8x8xbf16>, vector<8x8xf32> -> vector<8x8xf32>
    %cst_641 = arith.constant dense<0.000000e+00> : vector<8x8xf32>
    %669 = tpu.matmul %663, %667, %cst_641 {dimension_numbers = #tpu.dot_dimension_numbers<[1], [0], [0], [1], [0, 0, 1, 1], [], []>} : vector<8x8xbf16>, vector<8x8xbf16>, vector<8x8xf32> -> vector<8x8xf32>
    %cst_642 = arith.constant dense<0.000000e+00> : vector<8x8xf32>
    %670 = tpu.matmul %661, %667, %cst_642 {dimension_numbers = #tpu.dot_dimension_numbers<[1], [0], [0], [1], [0, 0, 1, 1], [], []>} : vector<8x8xbf16>, vector<8x8xbf16>, vector<8x8xf32> -> vector<8x8xf32>
    %cst_643 = arith.constant dense<0.000000e+00> : vector<8x8xf32>
    %671 = tpu.matmul %663, %665, %cst_643 {dimension_numbers = #tpu.dot_dimension_numbers<[1], [0], [0], [1], [0, 0, 1, 1], [], []>} : vector<8x8xbf16>, vector<8x8xbf16>, vector<8x8xf32> -> vector<8x8xf32>
    %672 = arith.subf %668, %669 : vector<8x8xf32>
    %673 = arith.truncf %672 : vector<8x8xf32> to vector<8x8xbf16>
    %c30_644 = arith.constant 30 : index
    %c0_645 = arith.constant 0 : index
    %c0_646 = arith.constant 0 : index
    %674 = vector.load %arg5[%c30_644, %c0_645, %c0_646] : memref<32x8x8xbf16, #tpu.memory_space<vmem>>, vector<1x8x8xbf16>
    %675 = vector.shape_cast %674 : vector<1x8x8xbf16> to vector<8x8xbf16>
    %676 = vector.shape_cast %673 : vector<8x8xbf16> to vector<1x8x8xbf16>
    tpu.vector_store %arg5[%c30_644, %c0_645, %c0_646], %676 {strides = array<i32>} : memref<32x8x8xbf16, #tpu.memory_space<vmem>>, vector<1x8x8xbf16>,
    %677 = arith.addf %670, %671 : vector<8x8xf32>
    %678 = arith.truncf %677 : vector<8x8xf32> to vector<8x8xbf16>
    %c30_647 = arith.constant 30 : index
    %c0_648 = arith.constant 0 : index
    %c0_649 = arith.constant 0 : index
    %679 = vector.load %arg6[%c30_647, %c0_648, %c0_649] : memref<32x8x8xbf16, #tpu.memory_space<vmem>>, vector<1x8x8xbf16>
    %680 = vector.shape_cast %679 : vector<1x8x8xbf16> to vector<8x8xbf16>
    %681 = vector.shape_cast %678 : vector<8x8xbf16> to vector<1x8x8xbf16>
    tpu.vector_store %arg6[%c30_647, %c0_648, %c0_649], %681 {strides = array<i32>} : memref<32x8x8xbf16, #tpu.memory_space<vmem>>, vector<1x8x8xbf16>,
    %c31 = arith.constant 31 : index
    %c0_650 = arith.constant 0 : index
    %c0_651 = arith.constant 0 : index
    %682 = vector.load %arg1[%c31, %c0_650, %c0_651] : memref<32x8x8xbf16, #tpu.memory_space<vmem>>, vector<1x8x8xbf16>
    %683 = vector.shape_cast %682 : vector<1x8x8xbf16> to vector<8x8xbf16>
    %c31_652 = arith.constant 31 : index
    %c0_653 = arith.constant 0 : index
    %c0_654 = arith.constant 0 : index
    %684 = vector.load %arg2[%c31_652, %c0_653, %c0_654] : memref<32x8x8xbf16, #tpu.memory_space<vmem>>, vector<1x8x8xbf16>
    %685 = vector.shape_cast %684 : vector<1x8x8xbf16> to vector<8x8xbf16>
    %c31_655 = arith.constant 31 : index
    %c0_656 = arith.constant 0 : index
    %c0_657 = arith.constant 0 : index
    %686 = vector.load %arg3[%c31_655, %c0_656, %c0_657] : memref<32x8x8xbf16, #tpu.memory_space<vmem>>, vector<1x8x8xbf16>
    %687 = vector.shape_cast %686 : vector<1x8x8xbf16> to vector<8x8xbf16>
    %c31_658 = arith.constant 31 : index
    %c0_659 = arith.constant 0 : index
    %c0_660 = arith.constant 0 : index
    %688 = vector.load %arg4[%c31_658, %c0_659, %c0_660] : memref<32x8x8xbf16, #tpu.memory_space<vmem>>, vector<1x8x8xbf16>
    %689 = vector.shape_cast %688 : vector<1x8x8xbf16> to vector<8x8xbf16>
    %cst_661 = arith.constant dense<0.000000e+00> : vector<8x8xf32>
    %690 = tpu.matmul %683, %687, %cst_661 {dimension_numbers = #tpu.dot_dimension_numbers<[1], [0], [0], [1], [0, 0, 1, 1], [], []>} : vector<8x8xbf16>, vector<8x8xbf16>, vector<8x8xf32> -> vector<8x8xf32>
    %cst_662 = arith.constant dense<0.000000e+00> : vector<8x8xf32>
    %691 = tpu.matmul %685, %689, %cst_662 {dimension_numbers = #tpu.dot_dimension_numbers<[1], [0], [0], [1], [0, 0, 1, 1], [], []>} : vector<8x8xbf16>, vector<8x8xbf16>, vector<8x8xf32> -> vector<8x8xf32>
    %cst_663 = arith.constant dense<0.000000e+00> : vector<8x8xf32>
    %692 = tpu.matmul %683, %689, %cst_663 {dimension_numbers = #tpu.dot_dimension_numbers<[1], [0], [0], [1], [0, 0, 1, 1], [], []>} : vector<8x8xbf16>, vector<8x8xbf16>, vector<8x8xf32> -> vector<8x8xf32>
    %cst_664 = arith.constant dense<0.000000e+00> : vector<8x8xf32>
    %693 = tpu.matmul %685, %687, %cst_664 {dimension_numbers = #tpu.dot_dimension_numbers<[1], [0], [0], [1], [0, 0, 1, 1], [], []>} : vector<8x8xbf16>, vector<8x8xbf16>, vector<8x8xf32> -> vector<8x8xf32>
    %694 = arith.subf %690, %691 : vector<8x8xf32>
    %695 = arith.truncf %694 : vector<8x8xf32> to vector<8x8xbf16>
    %c31_665 = arith.constant 31 : index
    %c0_666 = arith.constant 0 : index
    %c0_667 = arith.constant 0 : index
    %696 = vector.load %arg5[%c31_665, %c0_666, %c0_667] : memref<32x8x8xbf16, #tpu.memory_space<vmem>>, vector<1x8x8xbf16>
    %697 = vector.shape_cast %696 : vector<1x8x8xbf16> to vector<8x8xbf16>
    %698 = vector.shape_cast %695 : vector<8x8xbf16> to vector<1x8x8xbf16>
    tpu.vector_store %arg5[%c31_665, %c0_666, %c0_667], %698 {strides = array<i32>} : memref<32x8x8xbf16, #tpu.memory_space<vmem>>, vector<1x8x8xbf16>,
    %699 = arith.addf %692, %693 : vector<8x8xf32>
    %700 = arith.truncf %699 : vector<8x8xf32> to vector<8x8xbf16>
    %c31_668 = arith.constant 31 : index
    %c0_669 = arith.constant 0 : index
    %c0_670 = arith.constant 0 : index
    %701 = vector.load %arg6[%c31_668, %c0_669, %c0_670] : memref<32x8x8xbf16, #tpu.memory_space<vmem>>, vector<1x8x8xbf16>
    %702 = vector.shape_cast %701 : vector<1x8x8xbf16> to vector<8x8xbf16>
    %703 = vector.shape_cast %700 : vector<8x8xbf16> to vector<1x8x8xbf16>
    tpu.vector_store %arg6[%c31_668, %c0_669, %c0_670], %703 {strides = array<i32>} : memref<32x8x8xbf16, #tpu.memory_space<vmem>>, vector<1x8x8xbf16>,
    return
  }
  func.func @transform_0(%arg0: i32) -> (i32, i32, i32) {
    %c0_i32 = arith.constant 0 : i32
    %c0_i32_0 = arith.constant 0 : i32
    %c0_i32_1 = arith.constant 0 : i32
    return %arg0, %c0_i32, %c0_i32_0 : i32, i32, i32
  }
  func.func @transform_1(%arg0: i32) -> (i32, i32, i32) {
    %c0_i32 = arith.constant 0 : i32
    %c0_i32_0 = arith.constant 0 : i32
    %c0_i32_1 = arith.constant 0 : i32
    return %arg0, %c0_i32, %c0_i32_0 : i32, i32, i32
  }
  func.func @transform_2(%arg0: i32) -> (i32, i32, i32) {
    %c0_i32 = arith.constant 0 : i32
    %c0_i32_0 = arith.constant 0 : i32
    %c0_i32_1 = arith.constant 0 : i32
    return %arg0, %c0_i32, %c0_i32_0 : i32, i32, i32
  }
  func.func @transform_3(%arg0: i32) -> (i32, i32, i32) {
    %c0_i32 = arith.constant 0 : i32
    %c0_i32_0 = arith.constant 0 : i32
    %c0_i32_1 = arith.constant 0 : i32
    return %arg0, %c0_i32, %c0_i32_0 : i32, i32, i32
  }
  func.func @transform_4(%arg0: i32) -> (i32, i32, i32) {
    %c0_i32 = arith.constant 0 : i32
    %c0_i32_0 = arith.constant 0 : i32
    %c0_i32_1 = arith.constant 0 : i32
    return %arg0, %c0_i32, %c0_i32_0 : i32, i32, i32
  }
  func.func @transform_5(%arg0: i32) -> (i32, i32, i32) {
    %c0_i32 = arith.constant 0 : i32
    %c0_i32_0 = arith.constant 0 : i32
    %c0_i32_1 = arith.constant 0 : i32
    return %arg0, %c0_i32, %c0_i32_0 : i32, i32, i32
  }
}

</mosaic_0001>

<llo_original>
// kernel: reverse.1
$region0: #{reverse.1}
  %s0 = inlined_call_operand.vmem [shape: f32[2,4,16,7], index: 0, kind: input, shape index: {}]
  %s1 = inlined_call_operand.vmem [shape: f32[2,4,16,7], index: 1, kind: output, shape index: {}]
  $region1: #{reverse.1} parent=0
    #allocation0 [shape = 'u8[65536]{0}', space=vmem, size = 0x10000, scoped, tag = 'operand span for operand 0']
    #allocation1 [shape = 'u8[32768]{0}', space=vmem, size = 0x8000, scoped, tag = 'operand span for operand 1']
    %s2 = scalar_lea.vmem [#allocation0], 8
    // Predicated region
    $region2: #{reverse.1} parent=1 // pred_check
      _
    $region3: #{reverse.1} parent=1 // pred_check_branch
      %4 = sbr.rel (0) target = $region5
    $region4: #{reverse.1} parent=1 // pred_region
      // Predicated region
      $region6: #{reverse.1} parent=4 // pred_check
        _
      $region7: #{reverse.1} parent=4 // pred_check_branch
        %6 = sbr.rel (0) target = $region9
      $region8: #{reverse.1} parent=4 // pred_region
        // Predicated region
        $region21: #{reverse.1} parent=8 // pred_check
          _
        $region22: #{reverse.1} parent=8 // pred_check_branch
          %35 = sbr.rel (0) target = $region24
        $region23: #{reverse.1} parent=8 // pred_region
          loop: start=0, step=1, limit=1
          $region25: #{reverse.1} parent=23 // loop_pre_header
            _
          $region26: #{reverse.1} parent=23 // loop_header
            %s37 = sphi 0, %s41
            %p38 = scmp.ge.s32.totalorder %s37, 1
            %s42 = sphi %s0, %s0
            %s43 = sphi %s2, %s2
          $region27: #{reverse.1} parent=23 // loop_header_branch
            %40 = sbr.rel (%p38) target = $region31
          $region28: #{reverse.1} parent=23 // loop_body
            %v44 = vld [vmem:[%s42] sm:$0xff]
            %45 = vst [vmem:[%s43] sm:$0xff] %v44
            %v46 = vld [vmem:[%s42 + $0x8] sm:$0xff]
            %47 = vst [vmem:[%s43 + $0x10] sm:$0xff] %v46
            %v48 = vld [vmem:[%s42 + $0x10] sm:$0xff]
            %49 = vst [vmem:[%s43 + $0x20] sm:$0xff] %v48
            %v50 = vld [vmem:[%s42 + $0x18] sm:$0xff]
            %51 = vst [vmem:[%s43 + $0x30] sm:$0xff] %v50
            %v52 = vld [vmem:[%s42 + $0x20] sm:$0xff]
            %53 = vst [vmem:[%s43 + $0x40] sm:$0xff] %v52
            %v54 = vld [vmem:[%s42 + $0x28] sm:$0xff]
            %55 = vst [vmem:[%s43 + $0x50] sm:$0xff] %v54
            %v56 = vld [vmem:[%s42 + $0x30] sm:$0xff]
            %57 = vst [vmem:[%s43 + $0x60] sm:$0xff] %v56
            %v58 = vld [vmem:[%s42 + $0x38] sm:$0xff]
            %59 = vst [vmem:[%s43 + $0x70] sm:$0xff] %v58
          $region29: #{reverse.1} parent=23 // loop_footer
            %s41 = sadd.s32 1, %s37
          $region30: #{reverse.1} parent=23 // loop_footer_branch
            %36 = sbr.rel target = $region26
          $region31: #{reverse.1} parent=23 // loop_exit
            _
        $region24: #{reverse.1} parent=8 // pred_fallthru
          _
        // Predicated region
        $region32: #{reverse.1} parent=8 // pred_check
          _
        $region33: #{reverse.1} parent=8 // pred_check_branch
          %61 = sbr.rel target = $region35
        $region34: #{reverse.1} parent=8 // pred_region
          _
        $region35: #{reverse.1} parent=8 // pred_fallthru
          _
      $region9: #{reverse.1} parent=4 // pred_fallthru
        _
      // Predicated region
      $region10: #{reverse.1} parent=4 // pred_check
        _
      $region11: #{reverse.1} parent=4 // pred_check_branch
        %8 = sbr.rel target = $region13
      $region12: #{reverse.1} parent=4 // pred_region
        loop: start=0, step=1, limit=1
        $region14: #{reverse.1} parent=12 // loop_pre_header
          _
        $region15: #{reverse.1} parent=12 // loop_header
          %s11 = sphi 0, %s15
          %p12 = scmp.ge.s32.totalorder %s11, 1
          %s16 = sphi %s0, %s0
          %s17 = sphi %s2, %s2
        $region16: #{reverse.1} parent=12 // loop_header_branch
          %14 = sbr.rel (%p12) target = $region20
        $region17: #{reverse.1} parent=12 // loop_body
          %v18 = vld [vmem:[%s16] sm:$0xff]
          %19 = vst [vmem:[%s17] sm:$0xff] %v18
          %v20 = vld [vmem:[%s16 + $0x8] sm:$0xff]
          %21 = vst [vmem:[%s17 + $0x10] sm:$0xff] %v20
          %v22 = vld [vmem:[%s16 + $0x10] sm:$0xff]
          %23 = vst [vmem:[%s17 + $0x20] sm:$0xff] %v22
          %v24 = vld [vmem:[%s16 + $0x18] sm:$0xff]
          %25 = vst [vmem:[%s17 + $0x30] sm:$0xff] %v24
          %v26 = vld [vmem:[%s16 + $0x20] sm:$0xff]
          %27 = vst [vmem:[%s17 + $0x40] sm:$0xff] %v26
          %v28 = vld [vmem:[%s16 + $0x28] sm:$0xff]
          %29 = vst [vmem:[%s17 + $0x50] sm:$0xff] %v28
          %v30 = vld [vmem:[%s16 + $0x30] sm:$0xff]
          %31 = vst [vmem:[%s17 + $0x60] sm:$0xff] %v30
          %v32 = vld [vmem:[%s16 + $0x38] sm:$0xff]
          %33 = vst [vmem:[%s17 + $0x70] sm:$0xff] %v32
        $region18: #{reverse.1} parent=12 // loop_footer
          %s15 = sadd.s32 1, %s11
        $region19: #{reverse.1} parent=12 // loop_footer_branch
          %10 = sbr.rel target = $region15
        $region20: #{reverse.1} parent=12 // loop_exit
          _
      $region13: #{reverse.1} parent=4 // pred_fallthru
        _
    $region5: #{reverse.1} parent=1 // pred_fallthru
      _
    %62 = vnop
    %s63 = scalar_lea.vmem [#allocation0], 7
    %v64 = vld [vmem:[%s63] ss:$-1 sm:$0xff]
    %v65 = vrot.slane %v64, 1
    %66 = vst [vmem:[#allocation1] sm:$0xff] %v65
    %s67 = scalar_lea.vmem [#allocation0], 8
    %s68 = scalar_lea.vmem %s67, 7 [#allocation0]
    %v69 = vld [vmem:[%s68] ss:$-1 sm:$0xff]
    %v70 = vrot.slane %v69, 1
    %v71 = vlaneseq
    %v72 = vshrl.u32 %v71, 7
    %vm73 = vcmp.lt.s32.totalorder %v72, 7
    %74 = vst.msk [vmem:[#allocation1] sm:$0xff] %vm73, %v70
    %s75 = scalar_lea.vmem [#allocation1], 8
    %s76 = scalar_lea.vmem [#allocation0], 16
    %s77 = scalar_lea.vmem %s76, 7 [#allocation0]
    %v78 = vld [vmem:[%s77] ss:$-1 sm:$0xff]
    %v79 = vrot.slane %v78, 1
    %80 = vst [vmem:[%s75] sm:$0xff] %v79
    %s81 = scalar_lea.vmem %s76, 8 [#allocation0]
    %s82 = scalar_lea.vmem %s81, 7 [#allocation0]
    %v83 = vld [vmem:[%s82] ss:$-1 sm:$0xff]
    %v84 = vrot.slane %v83, 1
    %v85 = vlaneseq
    %v86 = vshrl.u32 %v85, 7
    %vm87 = vcmp.lt.s32.totalorder %v86, 7
    %88 = vst.msk [vmem:[%s75] sm:$0xff] %vm87, %v84
    %s89 = scalar_lea.vmem [#allocation1], 16
    %s90 = scalar_lea.vmem [#allocation0], 32
    %s91 = scalar_lea.vmem %s90, 7 [#allocation0]
    %v92 = vld [vmem:[%s91] ss:$-1 sm:$0xff]
    %v93 = vrot.slane %v92, 1
    %94 = vst [vmem:[%s89] sm:$0xff] %v93
    %s95 = scalar_lea.vmem %s90, 8 [#allocation0]
    %s96 = scalar_lea.vmem %s95, 7 [#allocation0]
    %v97 = vld [vmem:[%s96] ss:$-1 sm:$0xff]
    %v98 = vrot.slane %v97, 1
    %v99 = vlaneseq
    %v100 = vshrl.u32 %v99, 7
    %vm101 = vcmp.lt.s32.totalorder %v100, 7
    %102 = vst.msk [vmem:[%s89] sm:$0xff] %vm101, %v98
    %s103 = scalar_lea.vmem [#allocation1], 24
    %s104 = scalar_lea.vmem [#allocation0], 48
    %s105 = scalar_lea.vmem %s104, 7 [#allocation0]
    %v106 = vld [vmem:[%s105] ss:$-1 sm:$0xff]
    %v107 = vrot.slane %v106, 1
    %108 = vst [vmem:[%s103] sm:$0xff] %v107
    %s109 = scalar_lea.vmem %s104, 8 [#allocation0]
    %s110 = scalar_lea.vmem %s109, 7 [#allocation0]
    %v111 = vld [vmem:[%s110] ss:$-1 sm:$0xff]
    %v112 = vrot.slane %v111, 1
    %v113 = vlaneseq
    %v114 = vshrl.u32 %v113, 7
    %vm115 = vcmp.lt.s32.totalorder %v114, 7
    %116 = vst.msk [vmem:[%s103] sm:$0xff] %vm115, %v112
    %s117 = scalar_lea.vmem [#allocation1], 32
    %s118 = scalar_lea.vmem [#allocation0], 64
    %s119 = scalar_lea.vmem %s118, 7 [#allocation0]
    %v120 = vld [vmem:[%s119] ss:$-1 sm:$0xff]
    %v121 = vrot.slane %v120, 1
    %122 = vst [vmem:[%s117] sm:$0xff] %v121
    %s123 = scalar_lea.vmem %s118, 8 [#allocation0]
    %s124 = scalar_lea.vmem %s123, 7 [#allocation0]
    %v125 = vld [vmem:[%s124] ss:$-1 sm:$0xff]
    %v126 = vrot.slane %v125, 1
    %v127 = vlaneseq
    %v128 = vshrl.u32 %v127, 7
    %vm129 = vcmp.lt.s32.totalorder %v128, 7
    %130 = vst.msk [vmem:[%s117] sm:$0xff] %vm129, %v126
    %s131 = scalar_lea.vmem [#allocation1], 40
    %s132 = scalar_lea.vmem [#allocation0], 80
    %s133 = scalar_lea.vmem %s132, 7 [#allocation0]
    %v134 = vld [vmem:[%s133] ss:$-1 sm:$0xff]
    %v135 = vrot.slane %v134, 1
    %136 = vst [vmem:[%s131] sm:$0xff] %v135
    %s137 = scalar_lea.vmem %s132, 8 [#allocation0]
    %s138 = scalar_lea.vmem %s137, 7 [#allocation0]
    %v139 = vld [vmem:[%s138] ss:$-1 sm:$0xff]
    %v140 = vrot.slane %v139, 1
    %v141 = vlaneseq
    %v142 = vshrl.u32 %v141, 7
    %vm143 = vcmp.lt.s32.totalorder %v142, 7
    %144 = vst.msk [vmem:[%s131] sm:$0xff] %vm143, %v140
    %s145 = scalar_lea.vmem [#allocation1], 48
    %s146 = scalar_lea.vmem [#allocation0], 96
    %s147 = scalar_lea.vmem %s146, 7 [#allocation0]
    %v148 = vld [vmem:[%s147] ss:$-1 sm:$0xff]
    %v149 = vrot.slane %v148, 1
    %150 = vst [vmem:[%s145] sm:$0xff] %v149
    %s151 = scalar_lea.vmem %s146, 8 [#allocation0]
    %s152 = scalar_lea.vmem %s151, 7 [#allocation0]
    %v153 = vld [vmem:[%s152] ss:$-1 sm:$0xff]
    %v154 = vrot.slane %v153, 1
    %v155 = vlaneseq
    %v156 = vshrl.u32 %v155, 7
    %vm157 = vcmp.lt.s32.totalorder %v156, 7
    %158 = vst.msk [vmem:[%s145] sm:$0xff] %vm157, %v154
    %s159 = scalar_lea.vmem [#allocation1], 56
    %s160 = scalar_lea.vmem [#allocation0], 112
    %s161 = scalar_lea.vmem %s160, 7 [#allocation0]
    %v162 = vld [vmem:[%s161] ss:$-1 sm:$0xff]
    %v163 = vrot.slane %v162, 1
    %164 = vst [vmem:[%s159] sm:$0xff] %v163
    %s165 = scalar_lea.vmem %s160, 8 [#allocation0]
    %s166 = scalar_lea.vmem %s165, 7 [#allocation0]
    %v167 = vld [vmem:[%s166] ss:$-1 sm:$0xff]
    %v168 = vrot.slane %v167, 1
    %v169 = vlaneseq
    %v170 = vshrl.u32 %v169, 7
    %vm171 = vcmp.lt.s32.totalorder %v170, 7
    %172 = vst.msk [vmem:[%s159] sm:$0xff] %vm171, %v168
    // Predicated region
    $region36: #{reverse.1} parent=1 // pred_check
      _
    $region37: #{reverse.1} parent=1 // pred_check_branch
      %174 = sbr.rel (0) target = $region39
    $region38: #{reverse.1} parent=1 // pred_region
      // Predicated region
      $region40: #{reverse.1} parent=38 // pred_check
        _
      $region41: #{reverse.1} parent=38 // pred_check_branch
        %176 = sbr.rel (0) target = $region43
      $region42: #{reverse.1} parent=38 // pred_region
        // Predicated region
        $region55: #{reverse.1} parent=42 // pred_check
          _
        $region56: #{reverse.1} parent=42 // pred_check_branch
          %205 = sbr.rel (0) target = $region58
        $region57: #{reverse.1} parent=42 // pred_region
          loop: start=0, step=1, limit=1
          $region59: #{reverse.1} parent=57 // loop_pre_header
            _
          $region60: #{reverse.1} parent=57 // loop_header
            %s207 = sphi 0, %s211
            %p208 = scmp.ge.s32.totalorder %s207, 1
            %s212 = sphi [#allocation1], [#allocation1]
            %s213 = sphi %s1, %s1
          $region61: #{reverse.1} parent=57 // loop_header_branch
            %210 = sbr.rel (%p208) target = $region65
          $region62: #{reverse.1} parent=57 // loop_body
            %v214 = vld [vmem:[%s212] sm:$0xff]
            %215 = vst [vmem:[%s213] sm:$0xff] %v214
            %v216 = vld [vmem:[%s212 + $0x8] sm:$0xff]
            %217 = vst [vmem:[%s213 + $0x8] sm:$0xff] %v216
            %v218 = vld [vmem:[%s212 + $0x10] sm:$0xff]
            %219 = vst [vmem:[%s213 + $0x10] sm:$0xff] %v218
            %v220 = vld [vmem:[%s212 + $0x18] sm:$0xff]
            %221 = vst [vmem:[%s213 + $0x18] sm:$0xff] %v220
            %v222 = vld [vmem:[%s212 + $0x20] sm:$0xff]
            %223 = vst [vmem:[%s213 + $0x20] sm:$0xff] %v222
            %v224 = vld [vmem:[%s212 + $0x28] sm:$0xff]
            %225 = vst [vmem:[%s213 + $0x28] sm:$0xff] %v224
            %v226 = vld [vmem:[%s212 + $0x30] sm:$0xff]
            %227 = vst [vmem:[%s213 + $0x30] sm:$0xff] %v226
            %v228 = vld [vmem:[%s212 + $0x38] sm:$0xff]
            %229 = vst [vmem:[%s213 + $0x38] sm:$0xff] %v228
          $region63: #{reverse.1} parent=57 // loop_footer
            %s211 = sadd.s32 1, %s207
          $region64: #{reverse.1} parent=57 // loop_footer_branch
            %206 = sbr.rel target = $region60
          $region65: #{reverse.1} parent=57 // loop_exit
            _
        $region58: #{reverse.1} parent=42 // pred_fallthru
          _
        // Predicated region
        $region66: #{reverse.1} parent=42 // pred_check
          _
        $region67: #{reverse.1} parent=42 // pred_check_branch
          %231 = sbr.rel target = $region69
        $region68: #{reverse.1} parent=42 // pred_region
          _
        $region69: #{reverse.1} parent=42 // pred_fallthru
          _
      $region43: #{reverse.1} parent=38 // pred_fallthru
        _
      // Predicated region
      $region44: #{reverse.1} parent=38 // pred_check
        _
      $region45: #{reverse.1} parent=38 // pred_check_branch
        %178 = sbr.rel target = $region47
      $region46: #{reverse.1} parent=38 // pred_region
        loop: start=0, step=1, limit=1
        $region48: #{reverse.1} parent=46 // loop_pre_header
          _
        $region49: #{reverse.1} parent=46 // loop_header
          %s181 = sphi 0, %s185
          %p182 = scmp.ge.s32.totalorder %s181, 1
          %s186 = sphi [#allocation1], [#allocation1]
          %s187 = sphi %s1, %s1
        $region50: #{reverse.1} parent=46 // loop_header_branch
          %184 = sbr.rel (%p182) target = $region54
        $region51: #{reverse.1} parent=46 // loop_body
          %v188 = vld [vmem:[%s186] sm:$0xff]
          %189 = vst [vmem:[%s187] sm:$0xff] %v188
          %v190 = vld [vmem:[%s186 + $0x8] sm:$0xff]
          %191 = vst [vmem:[%s187 + $0x8] sm:$0xff] %v190
          %v192 = vld [vmem:[%s186 + $0x10] sm:$0xff]
          %193 = vst [vmem:[%s187 + $0x10] sm:$0xff] %v192
          %v194 = vld [vmem:[%s186 + $0x18] sm:$0xff]
          %195 = vst [vmem:[%s187 + $0x18] sm:$0xff] %v194
          %v196 = vld [vmem:[%s186 + $0x20] sm:$0xff]
          %197 = vst [vmem:[%s187 + $0x20] sm:$0xff] %v196
          %v198 = vld [vmem:[%s186 + $0x28] sm:$0xff]
          %199 = vst [vmem:[%s187 + $0x28] sm:$0xff] %v198
          %v200 = vld [vmem:[%s186 + $0x30] sm:$0xff]
          %201 = vst [vmem:[%s187 + $0x30] sm:$0xff] %v200
          %v202 = vld [vmem:[%s186 + $0x38] sm:$0xff]
          %203 = vst [vmem:[%s187 + $0x38] sm:$0xff] %v202
        $region52: #{reverse.1} parent=46 // loop_footer
          %s185 = sadd.s32 1, %s181
        $region53: #{reverse.1} parent=46 // loop_footer_branch
          %180 = sbr.rel target = $region49
        $region54: #{reverse.1} parent=46 // loop_exit
          _
      $region47: #{reverse.1} parent=38 // pred_fallthru
        _
    $region39: #{reverse.1} parent=1 // pred_fallthru
      _
    %232 = vnop

// kernel: spectral_conv2d.1
$region0: #{spectral_conv2d.1}
  #allocation0 [shape = 'u32[]', space=smem, size = 0x4, offset = 0x4, fixed_abs, tag = 'smem constant byte address 0x4 - core index']
  #allocation1 [shape = 'u32[144,128]{1,0:T(1,128)}', space=vmem, size = 0x12000, scoped, tag = 'internal scratch']
  %s0 = inlined_call_operand.vmem [shape: bf16[96,8,8], index: 0, kind: input, shape index: {}]
  %s1 = inlined_call_operand.vmem [shape: bf16[96,8,8], index: 1, kind: input, shape index: {}]
  %s2 = inlined_call_operand.vmem [shape: bf16[96,8,8], index: 2, kind: input, shape index: {}]
  %s3 = inlined_call_operand.vmem [shape: bf16[96,8,8], index: 3, kind: input, shape index: {}]
  %s4 = inlined_call_operand.vmem [shape: bf16[96,8,8], index: 4, kind: output, shape index: {0}]
  %s5 = inlined_call_operand.vmem [shape: bf16[96,8,8], index: 5, kind: output, shape index: {1}]
  %6 = xla_tuple %s4, %s5
  %s7 = sld [smem:[#allocation0]]
  $region57: #{spectral_conv2d.1} parent=0
    _
  %s9 = ssub.s32 1, %s7
  %s10 = scalar_select 0, %s9, %s7
  loop: start=0, step=1, limit=5
  $region2: #{spectral_conv2d.1} parent=0 // loop_pre_header
    _
  $region3: #{spectral_conv2d.1} parent=0 // loop_header
    %s12 = sphi 0, %s16
    %p13 = scmp.ge.s32.totalorder %s12, 5
    %s22 = sphi 0, %s24
    %s25 = sphi 0, %s22
    %s26 = sphi 0, %s25
    %s42 = sphi 0, %s26
    %s48 = sphi 0, %s50
    %s51 = sphi 0, %s48
    %s52 = sphi 0, %s51
    %s68 = sphi 0, %s52
    %s74 = sphi 0, %s76
    %s77 = sphi 0, %s74
    %s78 = sphi 0, %s77
    %s94 = sphi 0, %s78
    %s100 = sphi 0, %s102
    %s103 = sphi 0, %s100
    %s104 = sphi 0, %s103
    %s120 = sphi 0, %s104
    %s126 = sphi 0, %s128
    %s129 = sphi 0, %s126
    %s130 = sphi 0, %s129
    %s146 = sphi 0, %s130
    %s152 = sphi 0, %s154
    %s155 = sphi 0, %s152
    %s156 = sphi 0, %s155
    %s172 = sphi 0, %s156
  $region4: #{spectral_conv2d.1} parent=0 // loop_header_branch
    %15 = sbr.rel (%p13) target = $region8
  $region5: #{spectral_conv2d.1} parent=0 // loop_body
    %s17 = ssub.s32 %s12, 1
    %s18 = ssub.s32 %s12, 2
    %s19 = sadd.s32 %s12, 1
    %s20 = ssub.s32 %s12, %s19
    %p21 = scmp.eq.s32.totalorder %s20, 0
    %s23 = sadd.s32 %s22, 1
    %s24 = scalar_select %p21, %s22, %s23
    %p27 = pneg %p21
    %p28 = scmp.eq.s32.totalorder %s12, 2
    %p29 = por %p27, %p28
    %p30 = scmp.ne.s32.totalorder %s22, %s25
    %p31 = scmp.eq.s32.totalorder %s12, 0
    %p32 = por %p30, %p31
    %p33 = scmp.ne.s32.totalorder %s22, %s25
    %p34 = scmp.eq.s32.totalorder %s17, 2
    %p35 = por %p33, %p34
    %p36 = scmp.ne.s32.totalorder %s25, %s26
    %p37 = scmp.eq.s32.totalorder %s17, 0
    %p38 = por %p36, %p37
    %p39 = scmp.ne.s32.totalorder %s25, %s26
    %p40 = scmp.eq.s32.totalorder %s18, 2
    %p41 = por %p39, %p40
    %p43 = scmp.ne.s32.totalorder %s26, %s42
    %p44 = scmp.eq.s32.totalorder %s18, 0
    %p45 = por %p43, %p44
    %s46 = ssub.s32 %s12, %s19
    %p47 = scmp.eq.s32.totalorder %s46, 0
    %s49 = sadd.s32 %s48, 1
    %s50 = scalar_select %p47, %s48, %s49
    %p53 = pneg %p47
    %p54 = scmp.eq.s32.totalorder %s12, 2
    %p55 = por %p53, %p54
    %p56 = scmp.ne.s32.totalorder %s48, %s51
    %p57 = scmp.eq.s32.totalorder %s12, 0
    %p58 = por %p56, %p57
    %p59 = scmp.ne.s32.totalorder %s48, %s51
    %p60 = scmp.eq.s32.totalorder %s17, 2
    %p61 = por %p59, %p60
    %p62 = scmp.ne.s32.totalorder %s51, %s52
    %p63 = scmp.eq.s32.totalorder %s17, 0
    %p64 = por %p62, %p63
    %p65 = scmp.ne.s32.totalorder %s51, %s52
    %p66 = scmp.eq.s32.totalorder %s18, 2
    %p67 = por %p65, %p66
    %p69 = scmp.ne.s32.totalorder %s52, %s68
    %p70 = scmp.eq.s32.totalorder %s18, 0
    %p71 = por %p69, %p70
    %s72 = ssub.s32 %s12, %s19
    %p73 = scmp.eq.s32.totalorder %s72, 0
    %s75 = sadd.s32 %s74, 1
    %s76 = scalar_select %p73, %s74, %s75
    %p79 = pneg %p73
    %p80 = scmp.eq.s32.totalorder %s12, 2
    %p81 = por %p79, %p80
    %p82 = scmp.ne.s32.totalorder %s74, %s77
    %p83 = scmp.eq.s32.totalorder %s12, 0
    %p84 = por %p82, %p83
    %p85 = scmp.ne.s32.totalorder %s74, %s77
    %p86 = scmp.eq.s32.totalorder %s17, 2
    %p87 = por %p85, %p86
    %p88 = scmp.ne.s32.totalorder %s77, %s78
    %p89 = scmp.eq.s32.totalorder %s17, 0
    %p90 = por %p88, %p89
    %p91 = scmp.ne.s32.totalorder %s77, %s78
    %p92 = scmp.eq.s32.totalorder %s18, 2
    %p93 = por %p91, %p92
    %p95 = scmp.ne.s32.totalorder %s78, %s94
    %p96 = scmp.eq.s32.totalorder %s18, 0
    %p97 = por %p95, %p96
    %s98 = ssub.s32 %s12, %s19
    %p99 = scmp.eq.s32.totalorder %s98, 0
    %s101 = sadd.s32 %s100, 1
    %s102 = scalar_select %p99, %s100, %s101
    %p105 = pneg %p99
    %p106 = scmp.eq.s32.totalorder %s12, 2
    %p107 = por %p105, %p106
    %p108 = scmp.ne.s32.totalorder %s100, %s103
    %p109 = scmp.eq.s32.totalorder %s12, 0
    %p110 = por %p108, %p109
    %p111 = scmp.ne.s32.totalorder %s100, %s103
    %p112 = scmp.eq.s32.totalorder %s17, 2
    %p113 = por %p111, %p112
    %p114 = scmp.ne.s32.totalorder %s103, %s104
    %p115 = scmp.eq.s32.totalorder %s17, 0
    %p116 = por %p114, %p115
    %p117 = scmp.ne.s32.totalorder %s103, %s104
    %p118 = scmp.eq.s32.totalorder %s18, 2
    %p119 = por %p117, %p118
    %p121 = scmp.ne.s32.totalorder %s104, %s120
    %p122 = scmp.eq.s32.totalorder %s18, 0
    %p123 = por %p121, %p122
    %s124 = ssub.s32 %s12, %s19
    %p125 = scmp.eq.s32.totalorder %s124, 0
    %s127 = sadd.s32 %s126, 1
    %s128 = scalar_select %p125, %s126, %s127
    %p131 = pneg %p125
    %p132 = scmp.eq.s32.totalorder %s12, 2
    %p133 = por %p131, %p132
    %p134 = scmp.ne.s32.totalorder %s126, %s129
    %p135 = scmp.eq.s32.totalorder %s12, 0
    %p136 = por %p134, %p135
    %p137 = scmp.ne.s32.totalorder %s126, %s129
    %p138 = scmp.eq.s32.totalorder %s17, 2
    %p139 = por %p137, %p138
    %p140 = scmp.ne.s32.totalorder %s129, %s130
    %p141 = scmp.eq.s32.totalorder %s17, 0
    %p142 = por %p140, %p141
    %p143 = scmp.ne.s32.totalorder %s129, %s130
    %p144 = scmp.eq.s32.totalorder %s18, 2
    %p145 = por %p143, %p144
    %p147 = scmp.ne.s32.totalorder %s130, %s146
    %p148 = scmp.eq.s32.totalorder %s18, 0
    %p149 = por %p147, %p148
    %s150 = ssub.s32 %s12, %s19
    %p151 = scmp.eq.s32.totalorder %s150, 0
    %s153 = sadd.s32 %s152, 1
    %s154 = scalar_select %p151, %s152, %s153
    %p157 = pneg %p151
    %p158 = scmp.eq.s32.totalorder %s12, 2
    %p159 = por %p157, %p158
    %p160 = scmp.ne.s32.totalorder %s152, %s155
    %p161 = scmp.eq.s32.totalorder %s12, 0
    %p162 = por %p160, %p161
    %p163 = scmp.ne.s32.totalorder %s152, %s155
    %p164 = scmp.eq.s32.totalorder %s17, 2
    %p165 = por %p163, %p164
    %p166 = scmp.ne.s32.totalorder %s155, %s156
    %p167 = scmp.eq.s32.totalorder %s17, 0
    %p168 = por %p166, %p167
    %p169 = scmp.ne.s32.totalorder %s155, %s156
    %p170 = scmp.eq.s32.totalorder %s18, 2
    %p171 = por %p169, %p170
    %p173 = scmp.ne.s32.totalorder %s156, %s172
    %p174 = scmp.eq.s32.totalorder %s18, 0
    %p175 = por %p173, %p174
    %p176 = scmp.le.s32.totalorder 1, %s12
    %p177 = scmp.lt.s32.totalorder %s12, 4
    %p178 = pnand %p176, %p177
    %p179 = pneg %p178
    // Predicated region
    $region9: #{spectral_conv2d.1} parent=5 // pred_check
      _
    $region10: #{spectral_conv2d.1} parent=5 // pred_check_branch
      %181 = sbr.rel (%p178) target = $region12
    $region11: #{spectral_conv2d.1} parent=5 // pred_region
      %s182 = ssub.s32 %s12, 1
    $region12: #{spectral_conv2d.1} parent=5 // pred_fallthru
      _
    %p183 = scmp.lt.s32.totalorder %s12, 3
    // Predicated region
    $region13: #{spectral_conv2d.1} parent=5 // pred_check
      %p184 = pneg %p183
    $region14: #{spectral_conv2d.1} parent=5 // pred_check_branch
      %186 = sbr.rel (%p184) target = $region16
    $region15: #{spectral_conv2d.1} parent=5 // pred_region
      // Predicated region
      $region17: #{spectral_conv2d.1} parent=15 // pred_check
        %p187 = pneg %p32
      $region18: #{spectral_conv2d.1} parent=15 // pred_check_branch
        %189 = sbr.rel (%p187) target = $region20
      $region19: #{spectral_conv2d.1} parent=15 // pred_region
        %s190 = smul.u32 32, %s12
        %p191 = scmp.lt.s32.totalorder %s190, 95
        %s192 = scalar_select %p191, %s190, 95
        %s193 = smul.addr %s192, 4
        %s194 = scalar_lea.vmem %s0, %s193
        %s195 = smul.u32 32, %s12
      $region20: #{spectral_conv2d.1} parent=15 // pred_fallthru
        _
      // Predicated region
      $region21: #{spectral_conv2d.1} parent=15 // pred_check
        %p196 = pneg %p58
      $region22: #{spectral_conv2d.1} parent=15 // pred_check_branch
        %198 = sbr.rel (%p196) target = $region24
      $region23: #{spectral_conv2d.1} parent=15 // pred_region
        %s199 = smul.u32 32, %s12
        %p200 = scmp.lt.s32.totalorder %s199, 95
        %s201 = scalar_select %p200, %s199, 95
        %s202 = smul.addr %s201, 4
        %s203 = scalar_lea.vmem %s1, %s202
        %s204 = smul.u32 32, %s12
      $region24: #{spectral_conv2d.1} parent=15 // pred_fallthru
        _
      // Predicated region
      $region25: #{spectral_conv2d.1} parent=15 // pred_check
        %p205 = pneg %p84
      $region26: #{spectral_conv2d.1} parent=15 // pred_check_branch
        %207 = sbr.rel (%p205) target = $region28
      $region27: #{spectral_conv2d.1} parent=15 // pred_region
        %s208 = smul.u32 32, %s12
        %p209 = scmp.lt.s32.totalorder %s208, 95
        %s210 = scalar_select %p209, %s208, 95
        %s211 = smul.addr %s210, 4
        %s212 = scalar_lea.vmem %s2, %s211
        %s213 = smul.u32 32, %s12
      $region28: #{spectral_conv2d.1} parent=15 // pred_fallthru
        _
      // Predicated region
      $region29: #{spectral_conv2d.1} parent=15 // pred_check
        %p214 = pneg %p110
      $region30: #{spectral_conv2d.1} parent=15 // pred_check_branch
        %216 = sbr.rel (%p214) target = $region32
      $region31: #{spectral_conv2d.1} parent=15 // pred_region
        %s217 = smul.u32 32, %s12
        %p218 = scmp.lt.s32.totalorder %s217, 95
        %s219 = scalar_select %p218, %s217, 95
        %s220 = smul.addr %s219, 4
        %s221 = scalar_lea.vmem %s3, %s220
        %s222 = smul.u32 32, %s12
      $region32: #{spectral_conv2d.1} parent=15 // pred_fallthru
        _
    $region16: #{spectral_conv2d.1} parent=5 // pred_fallthru
      _
    %p223 = scmp.le.s32.totalorder 1, %s12
    %p224 = scmp.lt.s32.totalorder %s12, 4
    %p225 = pnand %p223, %p224
    %p226 = pneg %p225
    // Predicated region
    $region33: #{spectral_conv2d.1} parent=5 // pred_check
      _
    $region34: #{spectral_conv2d.1} parent=5 // pred_check_branch
      %228 = sbr.rel (%p225) target = $region36
    $region35: #{spectral_conv2d.1} parent=5 // pred_region
      %s229 = ssub.s32 %s12, 1
      %s230 = smul.u32 32, %s17
      %p231 = scmp.lt.s32.totalorder %s230, 95
      %s232 = scalar_select %p231, %s230, 95
      %s233 = smul.addr %s232, 4
      %s234 = scalar_lea.vmem %s0, %s233
      %p235 = pneg %p38
      %p236 = pneg %p35
      %s237 = smul.u32 32, %s17
      %p238 = scmp.lt.s32.totalorder %s237, 95
      %s239 = scalar_select %p238, %s237, 95
      %s240 = smul.addr %s239, 4
      %s241 = scalar_lea.vmem %s1, %s240
      %p242 = pneg %p64
      %p243 = pneg %p61
      %s244 = smul.u32 32, %s17
      %p245 = scmp.lt.s32.totalorder %s244, 95
      %s246 = scalar_select %p245, %s244, 95
      %s247 = smul.addr %s246, 4
      %s248 = scalar_lea.vmem %s2, %s247
      %p249 = pneg %p90
      %p250 = pneg %p87
      %s251 = smul.u32 32, %s17
      %p252 = scmp.lt.s32.totalorder %s251, 95
      %s253 = scalar_select %p252, %s251, 95
      %s254 = smul.addr %s253, 4
      %s255 = scalar_lea.vmem %s3, %s254
      %p256 = pneg %p116
      %p257 = pneg %p113
      %p258 = pneg %p142
      %p259 = pneg %p139
      %s260 = smul.u32 32, %s17
      %p261 = scmp.lt.s32.totalorder %s260, 95
      %s262 = scalar_select %p261, %s260, 95
      %s263 = smul.addr %s262, 4
      %s264 = scalar_lea.vmem %s4, %s263
      %p265 = pneg %p168
      %p266 = pneg %p165
      %s267 = smul.u32 32, %s17
      %p268 = scmp.lt.s32.totalorder %s267, 95
      %s269 = scalar_select %p268, %s267, 95
      %s270 = smul.addr %s269, 4
      %s271 = scalar_lea.vmem %s5, %s270
      %s272 = smul.u32 32, %s17
      %p273 = scmp.lt.s32.totalorder %s272, 95
      %s274 = scalar_select %p273, %s272, 95
      %s275 = smul.addr %s274, 4
      %s276 = scalar_lea.vmem %s0, %s275
      %s277 = smul.u32 32, %s17
      %s278 = smul.u32 32, %s17
      %p279 = scmp.lt.s32.totalorder %s278, 95
      %s280 = scalar_select %p279, %s278, 95
      %s281 = smul.addr %s280, 4
      %s282 = scalar_lea.vmem %s1, %s281
      %s283 = smul.u32 32, %s17
      %s284 = smul.u32 32, %s17
      %p285 = scmp.lt.s32.totalorder %s284, 95
      %s286 = scalar_select %p285, %s284, 95
      %s287 = smul.addr %s286, 4
      %s288 = scalar_lea.vmem %s2, %s287
      %s289 = smul.u32 32, %s17
      %s290 = smul.u32 32, %s17
      %p291 = scmp.lt.s32.totalorder %s290, 95
      %s292 = scalar_select %p291, %s290, 95
      %s293 = smul.addr %s292, 4
      %s294 = scalar_lea.vmem %s3, %s293
      %s295 = smul.u32 32, %s17
      %s296 = smul.u32 32, %s17
      %p297 = scmp.lt.s32.totalorder %s296, 95
      %s298 = scalar_select %p297, %s296, 95
      %s299 = smul.addr %s298, 4
      %s300 = scalar_lea.vmem %s4, %s299
      %s301 = smul.u32 32, %s17
      %s302 = smul.u32 32, %s17
      %p303 = scmp.lt.s32.totalorder %s302, 95
      %s304 = scalar_select %p303, %s302, 95
      %s305 = smul.addr %s304, 4
      %s306 = scalar_lea.vmem %s5, %s305
      %s307 = smul.u32 32, %s17
      %v309 = vld [vmem:[%s276] sm:$0xf]
      %v310 = vld [vmem:[%s282] sm:$0xf]
      %v311 = vld [vmem:[%s288] sm:$0xf]
      %v312 = vld [vmem:[%s294] sm:$0xf]
      %vm313 = vcmask 64512
      %v315 = vsel %vm313, %v309, 0
      %vm317 = vcmask 1043456
      %v319 = vsel %vm317, %v311, 0
      %321 = vmatprep.subr.bf16.mxu0 0
      %322 = vmatpush1.bf16.msra.mxu0 %v319
      %323 = vmatprep.subr.bf16.mxu0 0
      %324 = vmatpush1.bf16.msra.mxu0 0
      %325 = vmatprep.subr.bf16.mxu0 0
      %326 = vmatpush1.bf16.msra.mxu0 0
      %327 = vmatprep.subr.bf16.mxu0 0
      %328 = vmatpush1.bf16.msra.mxu0 0
      %329 = vmatprep.subr.bf16.mxu0 0
      %330 = vmatpush1.bf16.msra.mxu0 0
      %331 = vmatprep.subr.bf16.mxu0 0
      %332 = vmatpush1.bf16.msra.mxu0 0
      %333 = vmatprep.subr.bf16.mxu0 0
      %334 = vmatpush1.bf16.msra.mxu0 0
      %335 = vmatprep.subr.bf16.mxu0 0
      %336 = vmatpush1.bf16.msra.mxu0 0
      %337 = vmatprep.subr.bf16.mxu0 0
      %338 = vmatpush1.bf16.msra.mxu0 0
      %339 = vmatprep.subr.bf16.mxu0 0
      %340 = vmatpush1.bf16.msra.mxu0 0
      %341 = vmatprep.subr.bf16.mxu0 0
      %342 = vmatpush1.bf16.msra.mxu0 0
      %343 = vmatprep.subr.bf16.mxu0 0
      %344 = vmatpush1.bf16.msra.mxu0 0
      %345 = vmatprep.subr.bf16.mxu0 0
      %346 = vmatpush1.bf16.msra.mxu0 0
      %347 = vmatprep.subr.bf16.mxu0 0
      %348 = vmatpush1.bf16.msra.mxu0 0
      %349 = vmatprep.subr.bf16.mxu0 0
      %350 = vmatpush1.bf16.msra.mxu0 0
      %351 = vmatprep.subr.bf16.mxu0 0
      %352 = vmatpush1.bf16.msra.mxu0 0
      %353 = vmatprep.mubr.bf16.mxu0 0
      %354 = vmatmul.mubr.bf16.gmra.mrb[0].mxu0 %v315
      %v355 = vpop.f32.mrb[0].mxu0
      %v356 = vadd.f32 0.0, %v355
      %v357 = vpop.f32.mrb[0].mxu0
      %v358 = vpop.f32.mrb[0].mxu0
      %v359 = vpop.f32.mrb[0].mxu0
      %360 = vdwg.mxu0
      %v362 = vsel %vm313, %v310, 0
      %v365 = vsel %vm317, %v312, 0
      %367 = vmatprep.subr.bf16.mxu0 0
      %368 = vmatpush1.bf16.msra.mxu0 %v365
      %369 = vmatprep.subr.bf16.mxu0 0
      %370 = vmatpush1.bf16.msra.mxu0 0
      %371 = vmatprep.subr.bf16.mxu0 0
      %372 = vmatpush1.bf16.msra.mxu0 0
      %373 = vmatprep.subr.bf16.mxu0 0
      %374 = vmatpush1.bf16.msra.mxu0 0
      %375 = vmatprep.subr.bf16.mxu0 0
      %376 = vmatpush1.bf16.msra.mxu0 0
      %377 = vmatprep.subr.bf16.mxu0 0
      %378 = vmatpush1.bf16.msra.mxu0 0
      %379 = vmatprep.subr.bf16.mxu0 0
      %380 = vmatpush1.bf16.msra.mxu0 0
      %381 = vmatprep.subr.bf16.mxu0 0
      %382 = vmatpush1.bf16.msra.mxu0 0
      %383 = vmatprep.subr.bf16.mxu0 0
      %384 = vmatpush1.bf16.msra.mxu0 0
      %385 = vmatprep.subr.bf16.mxu0 0
      %386 = vmatpush1.bf16.msra.mxu0 0
      %387 = vmatprep.subr.bf16.mxu0 0
      %388 = vmatpush1.bf16.msra.mxu0 0
      %389 = vmatprep.subr.bf16.mxu0 0
      %390 = vmatpush1.bf16.msra.mxu0 0
      %391 = vmatprep.subr.bf16.mxu0 0
      %392 = vmatpush1.bf16.msra.mxu0 0
      %393 = vmatprep.subr.bf16.mxu0 0
      %394 = vmatpush1.bf16.msra.mxu0 0
      %395 = vmatprep.subr.bf16.mxu0 0
      %396 = vmatpush1.bf16.msra.mxu0 0
      %397 = vmatprep.subr.bf16.mxu0 0
      %398 = vmatpush1.bf16.msra.mxu0 0
      %399 = vmatprep.mubr.bf16.mxu0 0
      %400 = vmatmul.mubr.bf16.gmra.mrb[0].mxu0 %v362
      %v401 = vpop.f32.mrb[0].mxu0
      %v402 = vadd.f32 0.0, %v401
      %v403 = vpop.f32.mrb[0].mxu0
      %v404 = vpop.f32.mrb[0].mxu0
      %v405 = vpop.f32.mrb[0].mxu0
      %406 = vdwg.mxu0
      %407 = vmatprep.subr.bf16.mxu0 0
      %408 = vmatpush1.bf16.msra.mxu0 %v319
      %409 = vmatprep.subr.bf16.mxu0 0
      %410 = vmatpush1.bf16.msra.mxu0 0
      %411 = vmatprep.subr.bf16.mxu0 0
      %412 = vmatpush1.bf16.msra.mxu0 0
      %413 = vmatprep.subr.bf16.mxu0 0
      %414 = vmatpush1.bf16.msra.mxu0 0
      %415 = vmatprep.subr.bf16.mxu0 0
      %416 = vmatpush1.bf16.msra.mxu0 0
      %417 = vmatprep.subr.bf16.mxu0 0
      %418 = vmatpush1.bf16.msra.mxu0 0
      %419 = vmatprep.subr.bf16.mxu0 0
      %420 = vmatpush1.bf16.msra.mxu0 0
      %421 = vmatprep.subr.bf16.mxu0 0
      %422 = vmatpush1.bf16.msra.mxu0 0
      %423 = vmatprep.subr.bf16.mxu0 0
      %424 = vmatpush1.bf16.msra.mxu0 0
      %425 = vmatprep.subr.bf16.mxu0 0
      %426 = vmatpush1.bf16.msra.mxu0 0
      %427 = vmatprep.subr.bf16.mxu0 0
      %428 = vmatpush1.bf16.msra.mxu0 0
      %429 = vmatprep.subr.bf16.mxu0 0
      %430 = vmatpush1.bf16.msra.mxu0 0
      %431 = vmatprep.subr.bf16.mxu0 0
      %432 = vmatpush1.bf16.msra.mxu0 0
      %433 = vmatprep.subr.bf16.mxu0 0
      %434 = vmatpush1.bf16.msra.mxu0 0
      %435 = vmatprep.subr.bf16.mxu0 0
      %436 = vmatpush1.bf16.msra.mxu0 0
      %437 = vmatprep.subr.bf16.mxu0 0
      %438 = vmatpush1.bf16.msra.mxu0 0
      %439 = vmatprep.mubr.bf16.mxu0 0
      %440 = vmatmul.mubr.bf16.gmra.mrb[0].mxu0 %v362
      %v441 = vpop.f32.mrb[0].mxu0
      %v442 = vadd.f32 0.0, %v441
      %v443 = vpop.f32.mrb[0].mxu0
      %v444 = vpop.f32.mrb[0].mxu0
      %v445 = vpop.f32.mrb[0].mxu0
      %446 = vdwg.mxu0
      %v447 = vsub.f32 %v356, %v402
      %v448 = vpack.c.bf16 %v447, %v447
      %vm449 = vcmask 60416
      %450 = vst.msk [vmem:[%s300] sm:$0xf] %vm449, %v448
      %451 = vmatprep.subr.bf16.mxu0 0
      %452 = vmatpush1.bf16.msra.mxu0 %v365
      %453 = vmatprep.subr.bf16.mxu0 0
      %454 = vmatpush1.bf16.msra.mxu0 0
      %455 = vmatprep.subr.bf16.mxu0 0
      %456 = vmatpush1.bf16.msra.mxu0 0
      %457 = vmatprep.subr.bf16.mxu0 0
      %458 = vmatpush1.bf16.msra.mxu0 0
      %459 = vmatprep.subr.bf16.mxu0 0
      %460 = vmatpush1.bf16.msra.mxu0 0
      %461 = vmatprep.subr.bf16.mxu0 0
      %462 = vmatpush1.bf16.msra.mxu0 0
      %463 = vmatprep.subr.bf16.mxu0 0
      %464 = vmatpush1.bf16.msra.mxu0 0
      %465 = vmatprep.subr.bf16.mxu0 0
      %466 = vmatpush1.bf16.msra.mxu0 0
      %467 = vmatprep.subr.bf16.mxu0 0
      %468 = vmatpush1.bf16.msra.mxu0 0
      %469 = vmatprep.subr.bf16.mxu0 0
      %470 = vmatpush1.bf16.msra.mxu0 0
      %471 = vmatprep.subr.bf16.mxu0 0
      %472 = vmatpush1.bf16.msra.mxu0 0
      %473 = vmatprep.subr.bf16.mxu0 0
      %474 = vmatpush1.bf16.msra.mxu0 0
      %475 = vmatprep.subr.bf16.mxu0 0
      %476 = vmatpush1.bf16.msra.mxu0 0
      %477 = vmatprep.subr.bf16.mxu0 0
      %478 = vmatpush1.bf16.msra.mxu0 0
      %479 = vmatprep.subr.bf16.mxu0 0
      %480 = vmatpush1.bf16.msra.mxu0 0
      %481 = vmatprep.subr.bf16.mxu0 0
      %482 = vmatpush1.bf16.msra.mxu0 0
      %483 = vmatprep.mubr.bf16.mxu0 0
      %484 = vmatmul.mubr.bf16.gmra.mrb[0].mxu0 %v315
      %v485 = vpop.f32.mrb[0].mxu0
      %v486 = vadd.f32 %v442, %v485
      %v487 = vpop.f32.mrb[0].mxu0
      %v488 = vpop.f32.mrb[0].mxu0
      %v489 = vpop.f32.mrb[0].mxu0
      %490 = vdwg.mxu0
      %v491 = vpack.c.bf16 %v486, %v486
      %492 = vst.msk [vmem:[%s306] sm:$0xf] %vm449, %v491
      %s493 = scalar_lea.vmem %s276, 4
      %v494 = vld [vmem:[%s493] sm:$0xf]
      %s495 = scalar_lea.vmem %s282, 4
      %v496 = vld [vmem:[%s495] sm:$0xf]
      %s497 = scalar_lea.vmem %s288, 4
      %v498 = vld [vmem:[%s497] sm:$0xf]
      %s499 = scalar_lea.vmem %s294, 4
      %v500 = vld [vmem:[%s499] sm:$0xf]
      %v502 = vsel %vm313, %v494, 0
      %v505 = vsel %vm317, %v498, 0
      %507 = vmatprep.subr.bf16.mxu0 0
      %508 = vmatpush1.bf16.msra.mxu0 %v505
      %509 = vmatprep.subr.bf16.mxu0 0
      %510 = vmatpush1.bf16.msra.mxu0 0
      %511 = vmatprep.subr.bf16.mxu0 0
      %512 = vmatpush1.bf16.msra.mxu0 0
      %513 = vmatprep.subr.bf16.mxu0 0
      %514 = vmatpush1.bf16.msra.mxu0 0
      %515 = vmatprep.subr.bf16.mxu0 0
      %516 = vmatpush1.bf16.msra.mxu0 0
      %517 = vmatprep.subr.bf16.mxu0 0
      %518 = vmatpush1.bf16.msra.mxu0 0
      %519 = vmatprep.subr.bf16.mxu0 0
      %520 = vmatpush1.bf16.msra.mxu0 0
      %521 = vmatprep.subr.bf16.mxu0 0
      %522 = vmatpush1.bf16.msra.mxu0 0
      %523 = vmatprep.subr.bf16.mxu0 0
      %524 = vmatpush1.bf16.msra.mxu0 0
      %525 = vmatprep.subr.bf16.mxu0 0
      %526 = vmatpush1.bf16.msra.mxu0 0
      %527 = vmatprep.subr.bf16.mxu0 0
      %528 = vmatpush1.bf16.msra.mxu0 0
      %529 = vmatprep.subr.bf16.mxu0 0
      %530 = vmatpush1.bf16.msra.mxu0 0
      %531 = vmatprep.subr.bf16.mxu0 0
      %532 = vmatpush1.bf16.msra.mxu0 0
      %533 = vmatprep.subr.bf16.mxu0 0
      %534 = vmatpush1.bf16.msra.mxu0 0
      %535 = vmatprep.subr.bf16.mxu0 0
      %536 = vmatpush1.bf16.msra.mxu0 0
      %537 = vmatprep.subr.bf16.mxu0 0
      %538 = vmatpush1.bf16.msra.mxu0 0
      %539 = vmatprep.mubr.bf16.mxu0 0
      %540 = vmatmul.mubr.bf16.gmra.mrb[0].mxu0 %v502
      %v541 = vpop.f32.mrb[0].mxu0
      %v542 = vadd.f32 0.0, %v541
      %v543 = vpop.f32.mrb[0].mxu0
      %v544 = vpop.f32.mrb[0].mxu0
      %v545 = vpop.f32.mrb[0].mxu0
      %546 = vdwg.mxu0
      %v548 = vsel %vm313, %v496, 0
      %v551 = vsel %vm317, %v500, 0
      %553 = vmatprep.subr.bf16.mxu0 0
      %554 = vmatpush1.bf16.msra.mxu0 %v551
      %555 = vmatprep.subr.bf16.mxu0 0
      %556 = vmatpush1.bf16.msra.mxu0 0
      %557 = vmatprep.subr.bf16.mxu0 0
      %558 = vmatpush1.bf16.msra.mxu0 0
      %559 = vmatprep.subr.bf16.mxu0 0
      %560 = vmatpush1.bf16.msra.mxu0 0
      %561 = vmatprep.subr.bf16.mxu0 0
      %562 = vmatpush1.bf16.msra.mxu0 0
      %563 = vmatprep.subr.bf16.mxu0 0
      %564 = vmatpush1.bf16.msra.mxu0 0
      %565 = vmatprep.subr.bf16.mxu0 0
      %566 = vmatpush1.bf16.msra.mxu0 0
      %567 = vmatprep.subr.bf16.mxu0 0
      %568 = vmatpush1.bf16.msra.mxu0 0
      %569 = vmatprep.subr.bf16.mxu0 0
      %570 = vmatpush1.bf16.msra.mxu0 0
      %571 = vmatprep.subr.bf16.mxu0 0
      %572 = vmatpush1.bf16.msra.mxu0 0
      %573 = vmatprep.subr.bf16.mxu0 0
      %574 = vmatpush1.bf16.msra.mxu0 0
      %575 = vmatprep.subr.bf16.mxu0 0
      %576 = vmatpush1.bf16.msra.mxu0 0
      %577 = vmatprep.subr.bf16.mxu0 0
      %578 = vmatpush1.bf16.msra.mxu0 0
      %579 = vmatprep.subr.bf16.mxu0 0
      %580 = vmatpush1.bf16.msra.mxu0 0
      %581 = vmatprep.subr.bf16.mxu0 0
      %582 = vmatpush1.bf16.msra.mxu0 0
      %583 = vmatprep.subr.bf16.mxu0 0
      %584 = vmatpush1.bf16.msra.mxu0 0
      %585 = vmatprep.mubr.bf16.mxu0 0
      %586 = vmatmul.mubr.bf16.gmra.mrb[0].mxu0 %v548
      %v587 = vpop.f32.mrb[0].mxu0
      %v588 = vadd.f32 0.0, %v587
      %v589 = vpop.f32.mrb[0].mxu0
      %v590 = vpop.f32.mrb[0].mxu0
      %v591 = vpop.f32.mrb[0].mxu0
      %592 = vdwg.mxu0
      %593 = vmatprep.subr.bf16.mxu0 0
      %594 = vmatpush1.bf16.msra.mxu0 %v505
      %595 = vmatprep.subr.bf16.mxu0 0
      %596 = vmatpush1.bf16.msra.mxu0 0
      %597 = vmatprep.subr.bf16.mxu0 0
      %598 = vmatpush1.bf16.msra.mxu0 0
      %599 = vmatprep.subr.bf16.mxu0 0
      %600 = vmatpush1.bf16.msra.mxu0 0
      %601 = vmatprep.subr.bf16.mxu0 0
      %602 = vmatpush1.bf16.msra.mxu0 0
      %603 = vmatprep.subr.bf16.mxu0 0
      %604 = vmatpush1.bf16.msra.mxu0 0
      %605 = vmatprep.subr.bf16.mxu0 0
      %606 = vmatpush1.bf16.msra.mxu0 0
      %607 = vmatprep.subr.bf16.mxu0 0
      %608 = vmatpush1.bf16.msra.mxu0 0
      %609 = vmatprep.subr.bf16.mxu0 0
      %610 = vmatpush1.bf16.msra.mxu0 0
      %611 = vmatprep.subr.bf16.mxu0 0
      %612 = vmatpush1.bf16.msra.mxu0 0
      %613 = vmatprep.subr.bf16.mxu0 0
      %614 = vmatpush1.bf16.msra.mxu0 0
      %615 = vmatprep.subr.bf16.mxu0 0
      %616 = vmatpush1.bf16.msra.mxu0 0
      %617 = vmatprep.subr.bf16.mxu0 0
      %618 = vmatpush1.bf16.msra.mxu0 0
      %619 = vmatprep.subr.bf16.mxu0 0
      %620 = vmatpush1.bf16.msra.mxu0 0
      %621 = vmatprep.subr.bf16.mxu0 0
      %622 = vmatpush1.bf16.msra.mxu0 0
      %623 = vmatprep.subr.bf16.mxu0 0
      %624 = vmatpush1.bf16.msra.mxu0 0
      %625 = vmatprep.mubr.bf16.mxu0 0
      %626 = vmatmul.mubr.bf16.gmra.mrb[0].mxu0 %v548
      %v627 = vpop.f32.mrb[0].mxu0
      %v628 = vadd.f32 0.0, %v627
      %v629 = vpop.f32.mrb[0].mxu0
      %v630 = vpop.f32.mrb[0].mxu0
      %v631 = vpop.f32.mrb[0].mxu0
      %632 = vdwg.mxu0
      %v633 = vsub.f32 %v542, %v588
      %v634 = vpack.c.bf16 %v633, %v633
      %s635 = scalar_lea.vmem %s300, 4
      %636 = vst.msk [vmem:[%s635] sm:$0xf] %vm449, %v634
      %637 = vmatprep.subr.bf16.mxu0 0
      %638 = vmatpush1.bf16.msra.mxu0 %v551
      %639 = vmatprep.subr.bf16.mxu0 0
      %640 = vmatpush1.bf16.msra.mxu0 0
      %641 = vmatprep.subr.bf16.mxu0 0
      %642 = vmatpush1.bf16.msra.mxu0 0
      %643 = vmatprep.subr.bf16.mxu0 0
      %644 = vmatpush1.bf16.msra.mxu0 0
      %645 = vmatprep.subr.bf16.mxu0 0
      %646 = vmatpush1.bf16.msra.mxu0 0
      %647 = vmatprep.subr.bf16.mxu0 0
      %648 = vmatpush1.bf16.msra.mxu0 0
      %649 = vmatprep.subr.bf16.mxu0 0
      %650 = vmatpush1.bf16.msra.mxu0 0
      %651 = vmatprep.subr.bf16.mxu0 0
      %652 = vmatpush1.bf16.msra.mxu0 0
      %653 = vmatprep.subr.bf16.mxu0 0
      %654 = vmatpush1.bf16.msra.mxu0 0
      %655 = vmatprep.subr.bf16.mxu0 0
      %656 = vmatpush1.bf16.msra.mxu0 0
      %657 = vmatprep.subr.bf16.mxu0 0
      %658 = vmatpush1.bf16.msra.mxu0 0
      %659 = vmatprep.subr.bf16.mxu0 0
      %660 = vmatpush1.bf16.msra.mxu0 0
      %661 = vmatprep.subr.bf16.mxu0 0
      %662 = vmatpush1.bf16.msra.mxu0 0
      %663 = vmatprep.subr.bf16.mxu0 0
      %664 = vmatpush1.bf16.msra.mxu0 0
      %665 = vmatprep.subr.bf16.mxu0 0
      %666 = vmatpush1.bf16.msra.mxu0 0
      %667 = vmatprep.subr.bf16.mxu0 0
      %668 = vmatpush1.bf16.msra.mxu0 0
      %669 = vmatprep.mubr.bf16.mxu0 0
      %670 = vmatmul.mubr.bf16.gmra.mrb[0].mxu0 %v502
      %v671 = vpop.f32.mrb[0].mxu0
      %v672 = vadd.f32 %v628, %v671
      %v673 = vpop.f32.mrb[0].mxu0
      %v674 = vpop.f32.mrb[0].mxu0
      %v675 = vpop.f32.mrb[0].mxu0
      %676 = vdwg.mxu0
      %v677 = vpack.c.bf16 %v672, %v672
      %s678 = scalar_lea.vmem %s306, 4
      %679 = vst.msk [vmem:[%s678] sm:$0xf] %vm449, %v677
      %s680 = scalar_lea.vmem %s276, 8
      %v681 = vld [vmem:[%s680] sm:$0xf]
      %s682 = scalar_lea.vmem %s282, 8
      %v683 = vld [vmem:[%s682] sm:$0xf]
      %s684 = scalar_lea.vmem %s288, 8
      %v685 = vld [vmem:[%s684] sm:$0xf]
      %s686 = scalar_lea.vmem %s294, 8
      %v687 = vld [vmem:[%s686] sm:$0xf]
      %v689 = vsel %vm313, %v681, 0
      %v692 = vsel %vm317, %v685, 0
      %694 = vmatprep.subr.bf16.mxu0 0
      %695 = vmatpush1.bf16.msra.mxu0 %v692
      %696 = vmatprep.subr.bf16.mxu0 0
      %697 = vmatpush1.bf16.msra.mxu0 0
      %698 = vmatprep.subr.bf16.mxu0 0
      %699 = vmatpush1.bf16.msra.mxu0 0
      %700 = vmatprep.subr.bf16.mxu0 0
      %701 = vmatpush1.bf16.msra.mxu0 0
      %702 = vmatprep.subr.bf16.mxu0 0
      %703 = vmatpush1.bf16.msra.mxu0 0
      %704 = vmatprep.subr.bf16.mxu0 0
      %705 = vmatpush1.bf16.msra.mxu0 0
      %706 = vmatprep.subr.bf16.mxu0 0
      %707 = vmatpush1.bf16.msra.mxu0 0
      %708 = vmatprep.subr.bf16.mxu0 0
      %709 = vmatpush1.bf16.msra.mxu0 0
      %710 = vmatprep.subr.bf16.mxu0 0
      %711 = vmatpush1.bf16.msra.mxu0 0
      %712 = vmatprep.subr.bf16.mxu0 0
      %713 = vmatpush1.bf16.msra.mxu0 0
      %714 = vmatprep.subr.bf16.mxu0 0
      %715 = vmatpush1.bf16.msra.mxu0 0
      %716 = vmatprep.subr.bf16.mxu0 0
      %717 = vmatpush1.bf16.msra.mxu0 0
      %718 = vmatprep.subr.bf16.mxu0 0
      %719 = vmatpush1.bf16.msra.mxu0 0
      %720 = vmatprep.subr.bf16.mxu0 0
      %721 = vmatpush1.bf16.msra.mxu0 0
      %722 = vmatprep.subr.bf16.mxu0 0
      %723 = vmatpush1.bf16.msra.mxu0 0
      %724 = vmatprep.subr.bf16.mxu0 0
      %725 = vmatpush1.bf16.msra.mxu0 0
      %726 = vmatprep.mubr.bf16.mxu0 0
      %727 = vmatmul.mubr.bf16.gmra.mrb[0].mxu0 %v689
      %v728 = vpop.f32.mrb[0].mxu0
      %v729 = vadd.f32 0.0, %v728
      %v730 = vpop.f32.mrb[0].mxu0
      %v731 = vpop.f32.mrb[0].mxu0
      %v732 = vpop.f32.mrb[0].mxu0
      %733 = vdwg.mxu0
      %v735 = vsel %vm313, %v683, 0
      %v738 = vsel %vm317, %v687, 0
      %740 = vmatprep.subr.bf16.mxu0 0
      %741 = vmatpush1.bf16.msra.mxu0 %v738
      %742 = vmatprep.subr.bf16.mxu0 0
      %743 = vmatpush1.bf16.msra.mxu0 0
      %744 = vmatprep.subr.bf16.mxu0 0
      %745 = vmatpush1.bf16.msra.mxu0 0
      %746 = vmatprep.subr.bf16.mxu0 0
      %747 = vmatpush1.bf16.msra.mxu0 0
      %748 = vmatprep.subr.bf16.mxu0 0
      %749 = vmatpush1.bf16.msra.mxu0 0
      %750 = vmatprep.subr.bf16.mxu0 0
      %751 = vmatpush1.bf16.msra.mxu0 0
      %752 = vmatprep.subr.bf16.mxu0 0
      %753 = vmatpush1.bf16.msra.mxu0 0
      %754 = vmatprep.subr.bf16.mxu0 0
      %755 = vmatpush1.bf16.msra.mxu0 0
      %756 = vmatprep.subr.bf16.mxu0 0
      %757 = vmatpush1.bf16.msra.mxu0 0
      %758 = vmatprep.subr.bf16.mxu0 0
      %759 = vmatpush1.bf16.msra.mxu0 0
      %760 = vmatprep.subr.bf16.mxu0 0
      %761 = vmatpush1.bf16.msra.mxu0 0
      %762 = vmatprep.subr.bf16.mxu0 0
      %763 = vmatpush1.bf16.msra.mxu0 0
      %764 = vmatprep.subr.bf16.mxu0 0
      %765 = vmatpush1.bf16.msra.mxu0 0
      %766 = vmatprep.subr.bf16.mxu0 0
      %767 = vmatpush1.bf16.msra.mxu0 0
      %768 = vmatprep.subr.bf16.mxu0 0
      %769 = vmatpush1.bf16.msra.mxu0 0
      %770 = vmatprep.subr.bf16.mxu0 0
      %771 = vmatpush1.bf16.msra.mxu0 0
      %772 = vmatprep.mubr.bf16.mxu0 0
      %773 = vmatmul.mubr.bf16.gmra.mrb[0].mxu0 %v735
      %v774 = vpop.f32.mrb[0].mxu0
      %v775 = vadd.f32 0.0, %v774
      %v776 = vpop.f32.mrb[0].mxu0
      %v777 = vpop.f32.mrb[0].mxu0
      %v778 = vpop.f32.mrb[0].mxu0
      %779 = vdwg.mxu0
      %780 = vmatprep.subr.bf16.mxu0 0
      %781 = vmatpush1.bf16.msra.mxu0 %v692
      %782 = vmatprep.subr.bf16.mxu0 0
      %783 = vmatpush1.bf16.msra.mxu0 0
      %784 = vmatprep.subr.bf16.mxu0 0
      %785 = vmatpush1.bf16.msra.mxu0 0
      %786 = vmatprep.subr.bf16.mxu0 0
      %787 = vmatpush1.bf16.msra.mxu0 0
      %788 = vmatprep.subr.bf16.mxu0 0
      %789 = vmatpush1.bf16.msra.mxu0 0
      %790 = vmatprep.subr.bf16.mxu0 0
      %791 = vmatpush1.bf16.msra.mxu0 0
      %792 = vmatprep.subr.bf16.mxu0 0
      %793 = vmatpush1.bf16.msra.mxu0 0
      %794 = vmatprep.subr.bf16.mxu0 0
      %795 = vmatpush1.bf16.msra.mxu0 0
      %796 = vmatprep.subr.bf16.mxu0 0
      %797 = vmatpush1.bf16.msra.mxu0 0
      %798 = vmatprep.subr.bf16.mxu0 0
      %799 = vmatpush1.bf16.msra.mxu0 0
      %800 = vmatprep.subr.bf16.mxu0 0
      %801 = vmatpush1.bf16.msra.mxu0 0
      %802 = vmatprep.subr.bf16.mxu0 0
      %803 = vmatpush1.bf16.msra.mxu0 0
      %804 = vmatprep.subr.bf16.mxu0 0
      %805 = vmatpush1.bf16.msra.mxu0 0
      %806 = vmatprep.subr.bf16.mxu0 0
      %807 = vmatpush1.bf16.msra.mxu0 0
      %808 = vmatprep.subr.bf16.mxu0 0
      %809 = vmatpush1.bf16.msra.mxu0 0
      %810 = vmatprep.subr.bf16.mxu0 0
      %811 = vmatpush1.bf16.msra.mxu0 0
      %812 = vmatprep.mubr.bf16.mxu0 0
      %813 = vmatmul.mubr.bf16.gmra.mrb[0].mxu0 %v735
      %v814 = vpop.f32.mrb[0].mxu0
      %v815 = vadd.f32 0.0, %v814
      %v816 = vpop.f32.mrb[0].mxu0
      %v817 = vpop.f32.mrb[0].mxu0
      %v818 = vpop.f32.mrb[0].mxu0
      %819 = vdwg.mxu0
      %v820 = vsub.f32 %v729, %v775
      %v821 = vpack.c.bf16 %v820, %v820
      %s822 = scalar_lea.vmem %s300, 8
      %823 = vst.msk [vmem:[%s822] sm:$0xf] %vm449, %v821
      %824 = vmatprep.subr.bf16.mxu0 0
      %825 = vmatpush1.bf16.msra.mxu0 %v738
      %826 = vmatprep.subr.bf16.mxu0 0
      %827 = vmatpush1.bf16.msra.mxu0 0
      %828 = vmatprep.subr.bf16.mxu0 0
      %829 = vmatpush1.bf16.msra.mxu0 0
      %830 = vmatprep.subr.bf16.mxu0 0
      %831 = vmatpush1.bf16.msra.mxu0 0
      %832 = vmatprep.subr.bf16.mxu0 0
      %833 = vmatpush1.bf16.msra.mxu0 0
      %834 = vmatprep.subr.bf16.mxu0 0
      %835 = vmatpush1.bf16.msra.mxu0 0
      %836 = vmatprep.subr.bf16.mxu0 0
      %837 = vmatpush1.bf16.msra.mxu0 0
      %838 = vmatprep.subr.bf16.mxu0 0
      %839 = vmatpush1.bf16.msra.mxu0 0
      %840 = vmatprep.subr.bf16.mxu0 0
      %841 = vmatpush1.bf16.msra.mxu0 0
      %842 = vmatprep.subr.bf16.mxu0 0
      %843 = vmatpush1.bf16.msra.mxu0 0
      %844 = vmatprep.subr.bf16.mxu0 0
      %845 = vmatpush1.bf16.msra.mxu0 0
      %846 = vmatprep.subr.bf16.mxu0 0
      %847 = vmatpush1.bf16.msra.mxu0 0
      %848 = vmatprep.subr.bf16.mxu0 0
      %849 = vmatpush1.bf16.msra.mxu0 0
      %850 = vmatprep.subr.bf16.mxu0 0
      %851 = vmatpush1.bf16.msra.mxu0 0
      %852 = vmatprep.subr.bf16.mxu0 0
      %853 = vmatpush1.bf16.msra.mxu0 0
      %854 = vmatprep.subr.bf16.mxu0 0
      %855 = vmatpush1.bf16.msra.mxu0 0
      %856 = vmatprep.mubr.bf16.mxu0 0
      %857 = vmatmul.mubr.bf16.gmra.mrb[0].mxu0 %v689
      %v858 = vpop.f32.mrb[0].mxu0
      %v859 = vadd.f32 %v815, %v858
      %v860 = vpop.f32.mrb[0].mxu0
      %v861 = vpop.f32.mrb[0].mxu0
      %v862 = vpop.f32.mrb[0].mxu0
      %863 = vdwg.mxu0
      %v864 = vpack.c.bf16 %v859, %v859
      %s865 = scalar_lea.vmem %s306, 8
      %866 = vst.msk [vmem:[%s865] sm:$0xf] %vm449, %v864
      %s867 = scalar_lea.vmem %s276, 12
      %v868 = vld [vmem:[%s867] sm:$0xf]
      %s869 = scalar_lea.vmem %s282, 12
      %v870 = vld [vmem:[%s869] sm:$0xf]
      %s871 = scalar_lea.vmem %s288, 12
      %v872 = vld [vmem:[%s871] sm:$0xf]
      %s873 = scalar_lea.vmem %s294, 12
      %v874 = vld [vmem:[%s873] sm:$0xf]
      %v876 = vsel %vm313, %v868, 0
      %v879 = vsel %vm317, %v872, 0
      %881 = vmatprep.subr.bf16.mxu0 0
      %882 = vmatpush1.bf16.msra.mxu0 %v879
      %883 = vmatprep.subr.bf16.mxu0 0
      %884 = vmatpush1.bf16.msra.mxu0 0
      %885 = vmatprep.subr.bf16.mxu0 0
      %886 = vmatpush1.bf16.msra.mxu0 0
      %887 = vmatprep.subr.bf16.mxu0 0
      %888 = vmatpush1.bf16.msra.mxu0 0
      %889 = vmatprep.subr.bf16.mxu0 0
      %890 = vmatpush1.bf16.msra.mxu0 0
      %891 = vmatprep.subr.bf16.mxu0 0
      %892 = vmatpush1.bf16.msra.mxu0 0
      %893 = vmatprep.subr.bf16.mxu0 0
      %894 = vmatpush1.bf16.msra.mxu0 0
      %895 = vmatprep.subr.bf16.mxu0 0
      %896 = vmatpush1.bf16.msra.mxu0 0
      %897 = vmatprep.subr.bf16.mxu0 0
      %898 = vmatpush1.bf16.msra.mxu0 0
      %899 = vmatprep.subr.bf16.mxu0 0
      %900 = vmatpush1.bf16.msra.mxu0 0
      %901 = vmatprep.subr.bf16.mxu0 0
      %902 = vmatpush1.bf16.msra.mxu0 0
      %903 = vmatprep.subr.bf16.mxu0 0
      %904 = vmatpush1.bf16.msra.mxu0 0
      %905 = vmatprep.subr.bf16.mxu0 0
      %906 = vmatpush1.bf16.msra.mxu0 0
      %907 = vmatprep.subr.bf16.mxu0 0
      %908 = vmatpush1.bf16.msra.mxu0 0
      %909 = vmatprep.subr.bf16.mxu0 0
      %910 = vmatpush1.bf16.msra.mxu0 0
      %911 = vmatprep.subr.bf16.mxu0 0
      %912 = vmatpush1.bf16.msra.mxu0 0
      %913 = vmatprep.mubr.bf16.mxu0 0
      %914 = vmatmul.mubr.bf16.gmra.mrb[0].mxu0 %v876
      %v915 = vpop.f32.mrb[0].mxu0
      %v916 = vadd.f32 0.0, %v915
      %v917 = vpop.f32.mrb[0].mxu0
      %v918 = vpop.f32.mrb[0].mxu0
      %v919 = vpop.f32.mrb[0].mxu0
      %920 = vdwg.mxu0
      %v922 = vsel %vm313, %v870, 0
      %v925 = vsel %vm317, %v874, 0
      %927 = vmatprep.subr.bf16.mxu0 0
      %928 = vmatpush1.bf16.msra.mxu0 %v925
      %929 = vmatprep.subr.bf16.mxu0 0
      %930 = vmatpush1.bf16.msra.mxu0 0
      %931 = vmatprep.subr.bf16.mxu0 0
      %932 = vmatpush1.bf16.msra.mxu0 0
      %933 = vmatprep.subr.bf16.mxu0 0
      %934 = vmatpush1.bf16.msra.mxu0 0
      %935 = vmatprep.subr.bf16.mxu0 0
      %936 = vmatpush1.bf16.msra.mxu0 0
      %937 = vmatprep.subr.bf16.mxu0 0
      %938 = vmatpush1.bf16.msra.mxu0 0
      %939 = vmatprep.subr.bf16.mxu0 0
      %940 = vmatpush1.bf16.msra.mxu0 0
      %941 = vmatprep.subr.bf16.mxu0 0
      %942 = vmatpush1.bf16.msra.mxu0 0
      %943 = vmatprep.subr.bf16.mxu0 0
      %944 = vmatpush1.bf16.msra.mxu0 0
      %945 = vmatprep.subr.bf16.mxu0 0
      %946 = vmatpush1.bf16.msra.mxu0 0
      %947 = vmatprep.subr.bf16.mxu0 0
      %948 = vmatpush1.bf16.msra.mxu0 0
      %949 = vmatprep.subr.bf16.mxu0 0
      %950 = vmatpush1.bf16.msra.mxu0 0
      %951 = vmatprep.subr.bf16.mxu0 0
      %952 = vmatpush1.bf16.msra.mxu0 0
      %953 = vmatprep.subr.bf16.mxu0 0
      %954 = vmatpush1.bf16.msra.mxu0 0
      %955 = vmatprep.subr.bf16.mxu0 0
      %956 = vmatpush1.bf16.msra.mxu0 0
      %957 = vmatprep.subr.bf16.mxu0 0
      %958 = vmatpush1.bf16.msra.mxu0 0
      %959 = vmatprep.mubr.bf16.mxu0 0
      %960 = vmatmul.mubr.bf16.gmra.mrb[0].mxu0 %v922
      %v961 = vpop.f32.mrb[0].mxu0
      %v962 = vadd.f32 0.0, %v961
      %v963 = vpop.f32.mrb[0].mxu0
      %v964 = vpop.f32.mrb[0].mxu0
      %v965 = vpop.f32.mrb[0].mxu0
      %966 = vdwg.mxu0
      %967 = vmatprep.subr.bf16.mxu0 0
      %968 = vmatpush1.bf16.msra.mxu0 %v879
      %969 = vmatprep.subr.bf16.mxu0 0
      %970 = vmatpush1.bf16.msra.mxu0 0
      %971 = vmatprep.subr.bf16.mxu0 0
      %972 = vmatpush1.bf16.msra.mxu0 0
      %973 = vmatprep.subr.bf16.mxu0 0
      %974 = vmatpush1.bf16.msra.mxu0 0
      %975 = vmatprep.subr.bf16.mxu0 0
      %976 = vmatpush1.bf16.msra.mxu0 0
      %977 = vmatprep.subr.bf16.mxu0 0
      %978 = vmatpush1.bf16.msra.mxu0 0
      %979 = vmatprep.subr.bf16.mxu0 0
      %980 = vmatpush1.bf16.msra.mxu0 0
      %981 = vmatprep.subr.bf16.mxu0 0
      %982 = vmatpush1.bf16.msra.mxu0 0
      %983 = vmatprep.subr.bf16.mxu0 0
      %984 = vmatpush1.bf16.msra.mxu0 0
      %985 = vmatprep.subr.bf16.mxu0 0
      %986 = vmatpush1.bf16.msra.mxu0 0
      %987 = vmatprep.subr.bf16.mxu0 0
      %988 = vmatpush1.bf16.msra.mxu0 0
      %989 = vmatprep.subr.bf16.mxu0 0
      %990 = vmatpush1.bf16.msra.mxu0 0
      %991 = vmatprep.subr.bf16.mxu0 0
      %992 = vmatpush1.bf16.msra.mxu0 0
      %993 = vmatprep.subr.bf16.mxu0 0
      %994 = vmatpush1.bf16.msra.mxu0 0
      %995 = vmatprep.subr.bf16.mxu0 0
      %996 = vmatpush1.bf16.msra.mxu0 0
      %997 = vmatprep.subr.bf16.mxu0 0
      %998 = vmatpush1.bf16.msra.mxu0 0
      %999 = vmatprep.mubr.bf16.mxu0 0
      %1000 = vmatmul.mubr.bf16.gmra.mrb[0].mxu0 %v922
      %v1001 = vpop.f32.mrb[0].mxu0
      %v1002 = vadd.f32 0.0, %v1001
      %v1003 = vpop.f32.mrb[0].mxu0
      %v1004 = vpop.f32.mrb[0].mxu0
      %v1005 = vpop.f32.mrb[0].mxu0
      %1006 = vdwg.mxu0
      %v1007 = vsub.f32 %v916, %v962
      %v1008 = vpack.c.bf16 %v1007, %v1007
      %s1009 = scalar_lea.vmem %s300, 12
      %1010 = vst.msk [vmem:[%s1009] sm:$0xf] %vm449, %v1008
      %1011 = vmatprep.subr.bf16.mxu0 0
      %1012 = vmatpush1.bf16.msra.mxu0 %v925
      %1013 = vmatprep.subr.bf16.mxu0 0
      %1014 = vmatpush1.bf16.msra.mxu0 0
      %1015 = vmatprep.subr.bf16.mxu0 0
      %1016 = vmatpush1.bf16.msra.mxu0 0
      %1017 = vmatprep.subr.bf16.mxu0 0
      %1018 = vmatpush1.bf16.msra.mxu0 0
      %1019 = vmatprep.subr.bf16.mxu0 0
      %1020 = vmatpush1.bf16.msra.mxu0 0
      %1021 = vmatprep.subr.bf16.mxu0 0
      %1022 = vmatpush1.bf16.msra.mxu0 0
      %1023 = vmatprep.subr.bf16.mxu0 0
      %1024 = vmatpush1.bf16.msra.mxu0 0
      %1025 = vmatprep.subr.bf16.mxu0 0
      %1026 = vmatpush1.bf16.msra.mxu0 0
      %1027 = vmatprep.subr.bf16.mxu0 0
      %1028 = vmatpush1.bf16.msra.mxu0 0
      %1029 = vmatprep.subr.bf16.mxu0 0
      %1030 = vmatpush1.bf16.msra.mxu0 0
      %1031 = vmatprep.subr.bf16.mxu0 0
      %1032 = vmatpush1.bf16.msra.mxu0 0
      %1033 = vmatprep.subr.bf16.mxu0 0
      %1034 = vmatpush1.bf16.msra.mxu0 0
      %1035 = vmatprep.subr.bf16.mxu0 0
      %1036 = vmatpush1.bf16.msra.mxu0 0
      %1037 = vmatprep.subr.bf16.mxu0 0
      %1038 = vmatpush1.bf16.msra.mxu0 0
      %1039 = vmatprep.subr.bf16.mxu0 0
      %1040 = vmatpush1.bf16.msra.mxu0 0
      %1041 = vmatprep.subr.bf16.mxu0 0
      %1042 = vmatpush1.bf16.msra.mxu0 0
      %1043 = vmatprep.mubr.bf16.mxu0 0
      %1044 = vmatmul.mubr.bf16.gmra.mrb[0].mxu0 %v876
      %v1045 = vpop.f32.mrb[0].mxu0
      %v1046 = vadd.f32 %v1002, %v1045
      %v1047 = vpop.f32.mrb[0].mxu0
      %v1048 = vpop.f32.mrb[0].mxu0
      %v1049 = vpop.f32.mrb[0].mxu0
      %1050 = vdwg.mxu0
      %v1051 = vpack.c.bf16 %v1046, %v1046
      %s1052 = scalar_lea.vmem %s306, 12
      %1053 = vst.msk [vmem:[%s1052] sm:$0xf] %vm449, %v1051
      %s1054 = scalar_lea.vmem %s276, 16
      %v1055 = vld [vmem:[%s1054] sm:$0xf]
      %s1056 = scalar_lea.vmem %s282, 16
      %v1057 = vld [vmem:[%s1056] sm:$0xf]
      %s1058 = scalar_lea.vmem %s288, 16
      %v1059 = vld [vmem:[%s1058] sm:$0xf]
      %s1060 = scalar_lea.vmem %s294, 16
      %v1061 = vld [vmem:[%s1060] sm:$0xf]
      %v1063 = vsel %vm313, %v1055, 0
      %v1066 = vsel %vm317, %v1059, 0
      %1068 = vmatprep.subr.bf16.mxu0 0
      %1069 = vmatpush1.bf16.msra.mxu0 %v1066
      %1070 = vmatprep.subr.bf16.mxu0 0
      %1071 = vmatpush1.bf16.msra.mxu0 0
      %1072 = vmatprep.subr.bf16.mxu0 0
      %1073 = vmatpush1.bf16.msra.mxu0 0
      %1074 = vmatprep.subr.bf16.mxu0 0
      %1075 = vmatpush1.bf16.msra.mxu0 0
      %1076 = vmatprep.subr.bf16.mxu0 0
      %1077 = vmatpush1.bf16.msra.mxu0 0
      %1078 = vmatprep.subr.bf16.mxu0 0
      %1079 = vmatpush1.bf16.msra.mxu0 0
      %1080 = vmatprep.subr.bf16.mxu0 0
      %1081 = vmatpush1.bf16.msra.mxu0 0
      %1082 = vmatprep.subr.bf16.mxu0 0
      %1083 = vmatpush1.bf16.msra.mxu0 0
      %1084 = vmatprep.subr.bf16.mxu0 0
      %1085 = vmatpush1.bf16.msra.mxu0 0
      %1086 = vmatprep.subr.bf16.mxu0 0
      %1087 = vmatpush1.bf16.msra.mxu0 0
      %1088 = vmatprep.subr.bf16.mxu0 0
      %1089 = vmatpush1.bf16.msra.mxu0 0
      %1090 = vmatprep.subr.bf16.mxu0 0
      %1091 = vmatpush1.bf16.msra.mxu0 0
      %1092 = vmatprep.subr.bf16.mxu0 0
      %1093 = vmatpush1.bf16.msra.mxu0 0
      %1094 = vmatprep.subr.bf16.mxu0 0
      %1095 = vmatpush1.bf16.msra.mxu0 0
      %1096 = vmatprep.subr.bf16.mxu0 0
      %1097 = vmatpush1.bf16.msra.mxu0 0
      %1098 = vmatprep.subr.bf16.mxu0 0
      %1099 = vmatpush1.bf16.msra.mxu0 0
      %1100 = vmatprep.mubr.bf16.mxu0 0
      %1101 = vmatmul.mubr.bf16.gmra.mrb[0].mxu0 %v1063
      %v1102 = vpop.f32.mrb[0].mxu0
      %v1103 = vadd.f32 0.0, %v1102
      %v1104 = vpop.f32.mrb[0].mxu0
      %v1105 = vpop.f32.mrb[0].mxu0
      %v1106 = vpop.f32.mrb[0].mxu0
      %1107 = vdwg.mxu0
      %v1109 = vsel %vm313, %v1057, 0
      %v1112 = vsel %vm317, %v1061, 0
      %1114 = vmatprep.subr.bf16.mxu0 0
      %1115 = vmatpush1.bf16.msra.mxu0 %v1112
      %1116 = vmatprep.subr.bf16.mxu0 0
      %1117 = vmatpush1.bf16.msra.mxu0 0
      %1118 = vmatprep.subr.bf16.mxu0 0
      %1119 = vmatpush1.bf16.msra.mxu0 0
      %1120 = vmatprep.subr.bf16.mxu0 0
      %1121 = vmatpush1.bf16.msra.mxu0 0
      %1122 = vmatprep.subr.bf16.mxu0 0
      %1123 = vmatpush1.bf16.msra.mxu0 0
      %1124 = vmatprep.subr.bf16.mxu0 0
      %1125 = vmatpush1.bf16.msra.mxu0 0
      %1126 = vmatprep.subr.bf16.mxu0 0
      %1127 = vmatpush1.bf16.msra.mxu0 0
      %1128 = vmatprep.subr.bf16.mxu0 0
      %1129 = vmatpush1.bf16.msra.mxu0 0
      %1130 = vmatprep.subr.bf16.mxu0 0
      %1131 = vmatpush1.bf16.msra.mxu0 0
      %1132 = vmatprep.subr.bf16.mxu0 0
      %1133 = vmatpush1.bf16.msra.mxu0 0
      %1134 = vmatprep.subr.bf16.mxu0 0
      %1135 = vmatpush1.bf16.msra.mxu0 0
      %1136 = vmatprep.subr.bf16.mxu0 0
      %1137 = vmatpush1.bf16.msra.mxu0 0
      %1138 = vmatprep.subr.bf16.mxu0 0
      %1139 = vmatpush1.bf16.msra.mxu0 0
      %1140 = vmatprep.subr.bf16.mxu0 0
      %1141 = vmatpush1.bf16.msra.mxu0 0
      %1142 = vmatprep.subr.bf16.mxu0 0
      %1143 = vmatpush1.bf16.msra.mxu0 0
      %1144 = vmatprep.subr.bf16.mxu0 0
      %1145 = vmatpush1.bf16.msra.mxu0 0
      %1146 = vmatprep.mubr.bf16.mxu0 0
      %1147 = vmatmul.mubr.bf16.gmra.mrb[0].mxu0 %v1109
      %v1148 = vpop.f32.mrb[0].mxu0
      %v1149 = vadd.f32 0.0, %v1148
      %v1150 = vpop.f32.mrb[0].mxu0
      %v1151 = vpop.f32.mrb[0].mxu0
      %v1152 = vpop.f32.mrb[0].mxu0
      %1153 = vdwg.mxu0
      %1154 = vmatprep.subr.bf16.mxu0 0
      %1155 = vmatpush1.bf16.msra.mxu0 %v1066
      %1156 = vmatprep.subr.bf16.mxu0 0
      %1157 = vmatpush1.bf16.msra.mxu0 0
      %1158 = vmatprep.subr.bf16.mxu0 0
      %1159 = vmatpush1.bf16.msra.mxu0 0
      %1160 = vmatprep.subr.bf16.mxu0 0
      %1161 = vmatpush1.bf16.msra.mxu0 0
      %1162 = vmatprep.subr.bf16.mxu0 0
      %1163 = vmatpush1.bf16.msra.mxu0 0
      %1164 = vmatprep.subr.bf16.mxu0 0
      %1165 = vmatpush1.bf16.msra.mxu0 0
      %1166 = vmatprep.subr.bf16.mxu0 0
      %1167 = vmatpush1.bf16.msra.mxu0 0
      %1168 = vmatprep.subr.bf16.mxu0 0
      %1169 = vmatpush1.bf16.msra.mxu0 0
      %1170 = vmatprep.subr.bf16.mxu0 0
      %1171 = vmatpush1.bf16.msra.mxu0 0
      %1172 = vmatprep.subr.bf16.mxu0 0
      %1173 = vmatpush1.bf16.msra.mxu0 0
      %1174 = vmatprep.subr.bf16.mxu0 0
      %1175 = vmatpush1.bf16.msra.mxu0 0
      %1176 = vmatprep.subr.bf16.mxu0 0
      %1177 = vmatpush1.bf16.msra.mxu0 0
      %1178 = vmatprep.subr.bf16.mxu0 0
      %1179 = vmatpush1.bf16.msra.mxu0 0
      %1180 = vmatprep.subr.bf16.mxu0 0
      %1181 = vmatpush1.bf16.msra.mxu0 0
      %1182 = vmatprep.subr.bf16.mxu0 0
      %1183 = vmatpush1.bf16.msra.mxu0 0
      %1184 = vmatprep.subr.bf16.mxu0 0
      %1185 = vmatpush1.bf16.msra.mxu0 0
      %1186 = vmatprep.mubr.bf16.mxu0 0
      %1187 = vmatmul.mubr.bf16.gmra.mrb[0].mxu0 %v1109
      %v1188 = vpop.f32.mrb[0].mxu0
      %v1189 = vadd.f32 0.0, %v1188
      %v1190 = vpop.f32.mrb[0].mxu0
      %v1191 = vpop.f32.mrb[0].mxu0
      %v1192 = vpop.f32.mrb[0].mxu0
      %1193 = vdwg.mxu0
      %v1194 = vsub.f32 %v1103, %v1149
      %v1195 = vpack.c.bf16 %v1194, %v1194
      %s1196 = scalar_lea.vmem %s300, 16
      %1197 = vst.msk [vmem:[%s1196] sm:$0xf] %vm449, %v1195
      %1198 = vmatprep.subr.bf16.mxu0 0
      %1199 = vmatpush1.bf16.msra.mxu0 %v1112
      %1200 = vmatprep.subr.bf16.mxu0 0
      %1201 = vmatpush1.bf16.msra.mxu0 0
      %1202 = vmatprep.subr.bf16.mxu0 0
      %1203 = vmatpush1.bf16.msra.mxu0 0
      %1204 = vmatprep.subr.bf16.mxu0 0
      %1205 = vmatpush1.bf16.msra.mxu0 0
      %1206 = vmatprep.subr.bf16.mxu0 0
      %1207 = vmatpush1.bf16.msra.mxu0 0
      %1208 = vmatprep.subr.bf16.mxu0 0
      %1209 = vmatpush1.bf16.msra.mxu0 0
      %1210 = vmatprep.subr.bf16.mxu0 0
      %1211 = vmatpush1.bf16.msra.mxu0 0
      %1212 = vmatprep.subr.bf16.mxu0 0
      %1213 = vmatpush1.bf16.msra.mxu0 0
      %1214 = vmatprep.subr.bf16.mxu0 0
      %1215 = vmatpush1.bf16.msra.mxu0 0
      %1216 = vmatprep.subr.bf16.mxu0 0
      %1217 = vmatpush1.bf16.msra.mxu0 0
      %1218 = vmatprep.subr.bf16.mxu0 0
      %1219 = vmatpush1.bf16.msra.mxu0 0
      %1220 = vmatprep.subr.bf16.mxu0 0
      %1221 = vmatpush1.bf16.msra.mxu0 0
      %1222 = vmatprep.subr.bf16.mxu0 0
      %1223 = vmatpush1.bf16.msra.mxu0 0
      %1224 = vmatprep.subr.bf16.mxu0 0
      %1225 = vmatpush1.bf16.msra.mxu0 0
      %1226 = vmatprep.subr.bf16.mxu0 0
      %1227 = vmatpush1.bf16.msra.mxu0 0
      %1228 = vmatprep.subr.bf16.mxu0 0
      %1229 = vmatpush1.bf16.msra.mxu0 0
      %1230 = vmatprep.mubr.bf16.mxu0 0
      %1231 = vmatmul.mubr.bf16.gmra.mrb[0].mxu0 %v1063
      %v1232 = vpop.f32.mrb[0].mxu0
      %v1233 = vadd.f32 %v1189, %v1232
      %v1234 = vpop.f32.mrb[0].mxu0
      %v1235 = vpop.f32.mrb[0].mxu0
      %v1236 = vpop.f32.mrb[0].mxu0
      %1237 = vdwg.mxu0
      %v1238 = vpack.c.bf16 %v1233, %v1233
      %s1239 = scalar_lea.vmem %s306, 16
      %1240 = vst.msk [vmem:[%s1239] sm:$0xf] %vm449, %v1238
      %s1241 = scalar_lea.vmem %s276, 20
      %v1242 = vld [vmem:[%s1241] sm:$0xf]
      %s1243 = scalar_lea.vmem %s282, 20
      %v1244 = vld [vmem:[%s1243] sm:$0xf]
      %s1245 = scalar_lea.vmem %s288, 20
      %v1246 = vld [vmem:[%s1245] sm:$0xf]
      %s1247 = scalar_lea.vmem %s294, 20
      %v1248 = vld [vmem:[%s1247] sm:$0xf]
      %v1250 = vsel %vm313, %v1242, 0
      %v1253 = vsel %vm317, %v1246, 0
      %1255 = vmatprep.subr.bf16.mxu0 0
      %1256 = vmatpush1.bf16.msra.mxu0 %v1253
      %1257 = vmatprep.subr.bf16.mxu0 0
      %1258 = vmatpush1.bf16.msra.mxu0 0
      %1259 = vmatprep.subr.bf16.mxu0 0
      %1260 = vmatpush1.bf16.msra.mxu0 0
      %1261 = vmatprep.subr.bf16.mxu0 0
      %1262 = vmatpush1.bf16.msra.mxu0 0
      %1263 = vmatprep.subr.bf16.mxu0 0
      %1264 = vmatpush1.bf16.msra.mxu0 0
      %1265 = vmatprep.subr.bf16.mxu0 0
      %1266 = vmatpush1.bf16.msra.mxu0 0
      %1267 = vmatprep.subr.bf16.mxu0 0
      %1268 = vmatpush1.bf16.msra.mxu0 0
      %1269 = vmatprep.subr.bf16.mxu0 0
      %1270 = vmatpush1.bf16.msra.mxu0 0
      %1271 = vmatprep.subr.bf16.mxu0 0
      %1272 = vmatpush1.bf16.msra.mxu0 0
      %1273 = vmatprep.subr.bf16.mxu0 0
      %1274 = vmatpush1.bf16.msra.mxu0 0
      %1275 = vmatprep.subr.bf16.mxu0 0
      %1276 = vmatpush1.bf16.msra.mxu0 0
      %1277 = vmatprep.subr.bf16.mxu0 0
      %1278 = vmatpush1.bf16.msra.mxu0 0
      %1279 = vmatprep.subr.bf16.mxu0 0
      %1280 = vmatpush1.bf16.msra.mxu0 0
      %1281 = vmatprep.subr.bf16.mxu0 0
      %1282 = vmatpush1.bf16.msra.mxu0 0
      %1283 = vmatprep.subr.bf16.mxu0 0
      %1284 = vmatpush1.bf16.msra.mxu0 0
      %1285 = vmatprep.subr.bf16.mxu0 0
      %1286 = vmatpush1.bf16.msra.mxu0 0
      %1287 = vmatprep.mubr.bf16.mxu0 0
      %1288 = vmatmul.mubr.bf16.gmra.mrb[0].mxu0 %v1250
      %v1289 = vpop.f32.mrb[0].mxu0
      %v1290 = vadd.f32 0.0, %v1289
      %v1291 = vpop.f32.mrb[0].mxu0
      %v1292 = vpop.f32.mrb[0].mxu0
      %v1293 = vpop.f32.mrb[0].mxu0
      %1294 = vdwg.mxu0
      %v1296 = vsel %vm313, %v1244, 0
      %v1299 = vsel %vm317, %v1248, 0
      %1301 = vmatprep.subr.bf16.mxu0 0
      %1302 = vmatpush1.bf16.msra.mxu0 %v1299
      %1303 = vmatprep.subr.bf16.mxu0 0
      %1304 = vmatpush1.bf16.msra.mxu0 0
      %1305 = vmatprep.subr.bf16.mxu0 0
      %1306 = vmatpush1.bf16.msra.mxu0 0
      %1307 = vmatprep.subr.bf16.mxu0 0
      %1308 = vmatpush1.bf16.msra.mxu0 0
      %1309 = vmatprep.subr.bf16.mxu0 0
      %1310 = vmatpush1.bf16.msra.mxu0 0
      %1311 = vmatprep.subr.bf16.mxu0 0
      %1312 = vmatpush1.bf16.msra.mxu0 0
      %1313 = vmatprep.subr.bf16.mxu0 0
      %1314 = vmatpush1.bf16.msra.mxu0 0
      %1315 = vmatprep.subr.bf16.mxu0 0
      %1316 = vmatpush1.bf16.msra.mxu0 0
      %1317 = vmatprep.subr.bf16.mxu0 0
      %1318 = vmatpush1.bf16.msra.mxu0 0
      %1319 = vmatprep.subr.bf16.mxu0 0
      %1320 = vmatpush1.bf16.msra.mxu0 0
      %1321 = vmatprep.subr.bf16.mxu0 0
      %1322 = vmatpush1.bf16.msra.mxu0 0
      %1323 = vmatprep.subr.bf16.mxu0 0
      %1324 = vmatpush1.bf16.msra.mxu0 0
      %1325 = vmatprep.subr.bf16.mxu0 0
      %1326 = vmatpush1.bf16.msra.mxu0 0
      %1327 = vmatprep.subr.bf16.mxu0 0
      %1328 = vmatpush1.bf16.msra.mxu0 0
      %1329 = vmatprep.subr.bf16.mxu0 0
      %1330 = vmatpush1.bf16.msra.mxu0 0
      %1331 = vmatprep.subr.bf16.mxu0 0
      %1332 = vmatpush1.bf16.msra.mxu0 0
      %1333 = vmatprep.mubr.bf16.mxu0 0
      %1334 = vmatmul.mubr.bf16.gmra.mrb[0].mxu0 %v1296
      %v1335 = vpop.f32.mrb[0].mxu0
      %v1336 = vadd.f32 0.0, %v1335
      %v1337 = vpop.f32.mrb[0].mxu0
      %v1338 = vpop.f32.mrb[0].mxu0
      %v1339 = vpop.f32.mrb[0].mxu0
      %1340 = vdwg.mxu0
      %1341 = vmatprep.subr.bf16.mxu0 0
      %1342 = vmatpush1.bf16.msra.mxu0 %v1253
      %1343 = vmatprep.subr.bf16.mxu0 0
      %1344 = vmatpush1.bf16.msra.mxu0 0
      %1345 = vmatprep.subr.bf16.mxu0 0
      %1346 = vmatpush1.bf16.msra.mxu0 0
      %1347 = vmatprep.subr.bf16.mxu0 0
      %1348 = vmatpush1.bf16.msra.mxu0 0
      %1349 = vmatprep.subr.bf16.mxu0 0
      %1350 = vmatpush1.bf16.msra.mxu0 0
      %1351 = vmatprep.subr.bf16.mxu0 0
      %1352 = vmatpush1.bf16.msra.mxu0 0
      %1353 = vmatprep.subr.bf16.mxu0 0
      %1354 = vmatpush1.bf16.msra.mxu0 0
      %1355 = vmatprep.subr.bf16.mxu0 0
      %1356 = vmatpush1.bf16.msra.mxu0 0
      %1357 = vmatprep.subr.bf16.mxu0 0
      %1358 = vmatpush1.bf16.msra.mxu0 0
      %1359 = vmatprep.subr.bf16.mxu0 0
      %1360 = vmatpush1.bf16.msra.mxu0 0
      %1361 = vmatprep.subr.bf16.mxu0 0
      %1362 = vmatpush1.bf16.msra.mxu0 0
      %1363 = vmatprep.subr.bf16.mxu0 0
      %1364 = vmatpush1.bf16.msra.mxu0 0
      %1365 = vmatprep.subr.bf16.mxu0 0
      %1366 = vmatpush1.bf16.msra.mxu0 0
      %1367 = vmatprep.subr.bf16.mxu0 0
      %1368 = vmatpush1.bf16.msra.mxu0 0
      %1369 = vmatprep.subr.bf16.mxu0 0
      %1370 = vmatpush1.bf16.msra.mxu0 0
      %1371 = vmatprep.subr.bf16.mxu0 0
      %1372 = vmatpush1.bf16.msra.mxu0 0
      %1373 = vmatprep.mubr.bf16.mxu0 0
      %1374 = vmatmul.mubr.bf16.gmra.mrb[0].mxu0 %v1296
      %v1375 = vpop.f32.mrb[0].mxu0
      %v1376 = vadd.f32 0.0, %v1375
      %v1377 = vpop.f32.mrb[0].mxu0
      %v1378 = vpop.f32.mrb[0].mxu0
      %v1379 = vpop.f32.mrb[0].mxu0
      %1380 = vdwg.mxu0
      %v1381 = vsub.f32 %v1290, %v1336
      %v1382 = vpack.c.bf16 %v1381, %v1381
      %s1383 = scalar_lea.vmem %s300, 20
      %1384 = vst.msk [vmem:[%s1383] sm:$0xf] %vm449, %v1382
      %1385 = vmatprep.subr.bf16.mxu0 0
      %1386 = vmatpush1.bf16.msra.mxu0 %v1299
      %1387 = vmatprep.subr.bf16.mxu0 0
      %1388 = vmatpush1.bf16.msra.mxu0 0
      %1389 = vmatprep.subr.bf16.mxu0 0
      %1390 = vmatpush1.bf16.msra.mxu0 0
      %1391 = vmatprep.subr.bf16.mxu0 0
      %1392 = vmatpush1.bf16.msra.mxu0 0
      %1393 = vmatprep.subr.bf16.mxu0 0
      %1394 = vmatpush1.bf16.msra.mxu0 0
      %1395 = vmatprep.subr.bf16.mxu0 0
      %1396 = vmatpush1.bf16.msra.mxu0 0
      %1397 = vmatprep.subr.bf16.mxu0 0
      %1398 = vmatpush1.bf16.msra.mxu0 0
      %1399 = vmatprep.subr.bf16.mxu0 0
      %1400 = vmatpush1.bf16.msra.mxu0 0
      %1401 = vmatprep.subr.bf16.mxu0 0
      %1402 = vmatpush1.bf16.msra.mxu0 0
      %1403 = vmatprep.subr.bf16.mxu0 0
      %1404 = vmatpush1.bf16.msra.mxu0 0
      %1405 = vmatprep.subr.bf16.mxu0 0
      %1406 = vmatpush1.bf16.msra.mxu0 0
      %1407 = vmatprep.subr.bf16.mxu0 0
      %1408 = vmatpush1.bf16.msra.mxu0 0
      %1409 = vmatprep.subr.bf16.mxu0 0
      %1410 = vmatpush1.bf16.msra.mxu0 0
      %1411 = vmatprep.subr.bf16.mxu0 0
      %1412 = vmatpush1.bf16.msra.mxu0 0
      %1413 = vmatprep.subr.bf16.mxu0 0
      %1414 = vmatpush1.bf16.msra.mxu0 0
      %1415 = vmatprep.subr.bf16.mxu0 0
      %1416 = vmatpush1.bf16.msra.mxu0 0
      %1417 = vmatprep.mubr.bf16.mxu0 0
      %1418 = vmatmul.mubr.bf16.gmra.mrb[0].mxu0 %v1250
      %v1419 = vpop.f32.mrb[0].mxu0
      %v1420 = vadd.f32 %v1376, %v1419
      %v1421 = vpop.f32.mrb[0].mxu0
      %v1422 = vpop.f32.mrb[0].mxu0
      %v1423 = vpop.f32.mrb[0].mxu0
      %1424 = vdwg.mxu0
      %v1425 = vpack.c.bf16 %v1420, %v1420
      %s1426 = scalar_lea.vmem %s306, 20
      %1427 = vst.msk [vmem:[%s1426] sm:$0xf] %vm449, %v1425
      %s1428 = scalar_lea.vmem %s276, 24
      %v1429 = vld [vmem:[%s1428] sm:$0xf]
      %s1430 = scalar_lea.vmem %s282, 24
      %v1431 = vld [vmem:[%s1430] sm:$0xf]
      %s1432 = scalar_lea.vmem %s288, 24
      %v1433 = vld [vmem:[%s1432] sm:$0xf]
      %s1434 = scalar_lea.vmem %s294, 24
      %v1435 = vld [vmem:[%s1434] sm:$0xf]
      %v1437 = vsel %vm313, %v1429, 0
      %v1440 = vsel %vm317, %v1433, 0
      %1442 = vmatprep.subr.bf16.mxu0 0
      %1443 = vmatpush1.bf16.msra.mxu0 %v1440
      %1444 = vmatprep.subr.bf16.mxu0 0
      %1445 = vmatpush1.bf16.msra.mxu0 0
      %1446 = vmatprep.subr.bf16.mxu0 0
      %1447 = vmatpush1.bf16.msra.mxu0 0
      %1448 = vmatprep.subr.bf16.mxu0 0
      %1449 = vmatpush1.bf16.msra.mxu0 0
      %1450 = vmatprep.subr.bf16.mxu0 0
      %1451 = vmatpush1.bf16.msra.mxu0 0
      %1452 = vmatprep.subr.bf16.mxu0 0
      %1453 = vmatpush1.bf16.msra.mxu0 0
      %1454 = vmatprep.subr.bf16.mxu0 0
      %1455 = vmatpush1.bf16.msra.mxu0 0
      %1456 = vmatprep.subr.bf16.mxu0 0
      %1457 = vmatpush1.bf16.msra.mxu0 0
      %1458 = vmatprep.subr.bf16.mxu0 0
      %1459 = vmatpush1.bf16.msra.mxu0 0
      %1460 = vmatprep.subr.bf16.mxu0 0
      %1461 = vmatpush1.bf16.msra.mxu0 0
      %1462 = vmatprep.subr.bf16.mxu0 0
      %1463 = vmatpush1.bf16.msra.mxu0 0
      %1464 = vmatprep.subr.bf16.mxu0 0
      %1465 = vmatpush1.bf16.msra.mxu0 0
      %1466 = vmatprep.subr.bf16.mxu0 0
      %1467 = vmatpush1.bf16.msra.mxu0 0
      %1468 = vmatprep.subr.bf16.mxu0 0
      %1469 = vmatpush1.bf16.msra.mxu0 0
      %1470 = vmatprep.subr.bf16.mxu0 0
      %1471 = vmatpush1.bf16.msra.mxu0 0
      %1472 = vmatprep.subr.bf16.mxu0 0
      %1473 = vmatpush1.bf16.msra.mxu0 0
      %1474 = vmatprep.mubr.bf16.mxu0 0
      %1475 = vmatmul.mubr.bf16.gmra.mrb[0].mxu0 %v1437
      %v1476 = vpop.f32.mrb[0].mxu0
      %v1477 = vadd.f32 0.0, %v1476
      %v1478 = vpop.f32.mrb[0].mxu0
      %v1479 = vpop.f32.mrb[0].mxu0
      %v1480 = vpop.f32.mrb[0].mxu0
      %1481 = vdwg.mxu0
      %v1483 = vsel %vm313, %v1431, 0
      %v1486 = vsel %vm317, %v1435, 0
      %1488 = vmatprep.subr.bf16.mxu0 0
      %1489 = vmatpush1.bf16.msra.mxu0 %v1486
      %1490 = vmatprep.subr.bf16.mxu0 0
      %1491 = vmatpush1.bf16.msra.mxu0 0
      %1492 = vmatprep.subr.bf16.mxu0 0
      %1493 = vmatpush1.bf16.msra.mxu0 0
      %1494 = vmatprep.subr.bf16.mxu0 0
      %1495 = vmatpush1.bf16.msra.mxu0 0
      %1496 = vmatprep.subr.bf16.mxu0 0
      %1497 = vmatpush1.bf16.msra.mxu0 0
      %1498 = vmatprep.subr.bf16.mxu0 0
      %1499 = vmatpush1.bf16.msra.mxu0 0
      %1500 = vmatprep.subr.bf16.mxu0 0
      %1501 = vmatpush1.bf16.msra.mxu0 0
      %1502 = vmatprep.subr.bf16.mxu0 0
      %1503 = vmatpush1.bf16.msra.mxu0 0
      %1504 = vmatprep.subr.bf16.mxu0 0
      %1505 = vmatpush1.bf16.msra.mxu0 0
      %1506 = vmatprep.subr.bf16.mxu0 0
      %1507 = vmatpush1.bf16.msra.mxu0 0
      %1508 = vmatprep.subr.bf16.mxu0 0
      %1509 = vmatpush1.bf16.msra.mxu0 0
      %1510 = vmatprep.subr.bf16.mxu0 0
      %1511 = vmatpush1.bf16.msra.mxu0 0
      %1512 = vmatprep.subr.bf16.mxu0 0
      %1513 = vmatpush1.bf16.msra.mxu0 0
      %1514 = vmatprep.subr.bf16.mxu0 0
      %1515 = vmatpush1.bf16.msra.mxu0 0
      %1516 = vmatprep.subr.bf16.mxu0 0
      %1517 = vmatpush1.bf16.msra.mxu0 0
      %1518 = vmatprep.subr.bf16.mxu0 0
      %1519 = vmatpush1.bf16.msra.mxu0 0
      %1520 = vmatprep.mubr.bf16.mxu0 0
      %1521 = vmatmul.mubr.bf16.gmra.mrb[0].mxu0 %v1483
      %v1522 = vpop.f32.mrb[0].mxu0
      %v1523 = vadd.f32 0.0, %v1522
      %v1524 = vpop.f32.mrb[0].mxu0
      %v1525 = vpop.f32.mrb[0].mxu0
      %v1526 = vpop.f32.mrb[0].mxu0
      %1527 = vdwg.mxu0
      %1528 = vmatprep.subr.bf16.mxu0 0
      %1529 = vmatpush1.bf16.msra.mxu0 %v1440
      %1530 = vmatprep.subr.bf16.mxu0 0
      %1531 = vmatpush1.bf16.msra.mxu0 0
      %1532 = vmatprep.subr.bf16.mxu0 0
      %1533 = vmatpush1.bf16.msra.mxu0 0
      %1534 = vmatprep.subr.bf16.mxu0 0
      %1535 = vmatpush1.bf16.msra.mxu0 0
      %1536 = vmatprep.subr.bf16.mxu0 0
      %1537 = vmatpush1.bf16.msra.mxu0 0
      %1538 = vmatprep.subr.bf16.mxu0 0
      %1539 = vmatpush1.bf16.msra.mxu0 0
      %1540 = vmatprep.subr.bf16.mxu0 0
      %1541 = vmatpush1.bf16.msra.mxu0 0
      %1542 = vmatprep.subr.bf16.mxu0 0
      %1543 = vmatpush1.bf16.msra.mxu0 0
      %1544 = vmatprep.subr.bf16.mxu0 0
      %1545 = vmatpush1.bf16.msra.mxu0 0
      %1546 = vmatprep.subr.bf16.mxu0 0
      %1547 = vmatpush1.bf16.msra.mxu0 0
      %1548 = vmatprep.subr.bf16.mxu0 0
      %1549 = vmatpush1.bf16.msra.mxu0 0
      %1550 = vmatprep.subr.bf16.mxu0 0
      %1551 = vmatpush1.bf16.msra.mxu0 0
      %1552 = vmatprep.subr.bf16.mxu0 0
      %1553 = vmatpush1.bf16.msra.mxu0 0
      %1554 = vmatprep.subr.bf16.mxu0 0
      %1555 = vmatpush1.bf16.msra.mxu0 0
      %1556 = vmatprep.subr.bf16.mxu0 0
      %1557 = vmatpush1.bf16.msra.mxu0 0
      %1558 = vmatprep.subr.bf16.mxu0 0
      %1559 = vmatpush1.bf16.msra.mxu0 0
      %1560 = vmatprep.mubr.bf16.mxu0 0
      %1561 = vmatmul.mubr.bf16.gmra.mrb[0].mxu0 %v1483
      %v1562 = vpop.f32.mrb[0].mxu0
      %v1563 = vadd.f32 0.0, %v1562
      %v1564 = vpop.f32.mrb[0].mxu0
      %v1565 = vpop.f32.mrb[0].mxu0
      %v1566 = vpop.f32.mrb[0].mxu0
      %1567 = vdwg.mxu0
      %v1568 = vsub.f32 %v1477, %v1523
      %v1569 = vpack.c.bf16 %v1568, %v1568
      %s1570 = scalar_lea.vmem %s300, 24
      %1571 = vst.msk [vmem:[%s1570] sm:$0xf] %vm449, %v1569
      %1572 = vmatprep.subr.bf16.mxu0 0
      %1573 = vmatpush1.bf16.msra.mxu0 %v1486
      %1574 = vmatprep.subr.bf16.mxu0 0
      %1575 = vmatpush1.bf16.msra.mxu0 0
      %1576 = vmatprep.subr.bf16.mxu0 0
      %1577 = vmatpush1.bf16.msra.mxu0 0
      %1578 = vmatprep.subr.bf16.mxu0 0
      %1579 = vmatpush1.bf16.msra.mxu0 0
      %1580 = vmatprep.subr.bf16.mxu0 0
      %1581 = vmatpush1.bf16.msra.mxu0 0
      %1582 = vmatprep.subr.bf16.mxu0 0
      %1583 = vmatpush1.bf16.msra.mxu0 0
      %1584 = vmatprep.subr.bf16.mxu0 0
      %1585 = vmatpush1.bf16.msra.mxu0 0
      %1586 = vmatprep.subr.bf16.mxu0 0
      %1587 = vmatpush1.bf16.msra.mxu0 0
      %1588 = vmatprep.subr.bf16.mxu0 0
      %1589 = vmatpush1.bf16.msra.mxu0 0
      %1590 = vmatprep.subr.bf16.mxu0 0
      %1591 = vmatpush1.bf16.msra.mxu0 0
      %1592 = vmatprep.subr.bf16.mxu0 0
      %1593 = vmatpush1.bf16.msra.mxu0 0
      %1594 = vmatprep.subr.bf16.mxu0 0
      %1595 = vmatpush1.bf16.msra.mxu0 0
      %1596 = vmatprep.subr.bf16.mxu0 0
      %1597 = vmatpush1.bf16.msra.mxu0 0
      %1598 = vmatprep.subr.bf16.mxu0 0
      %1599 = vmatpush1.bf16.msra.mxu0 0
      %1600 = vmatprep.subr.bf16.mxu0 0
      %1601 = vmatpush1.bf16.msra.mxu0 0
      %1602 = vmatprep.subr.bf16.mxu0 0
      %1603 = vmatpush1.bf16.msra.mxu0 0
      %1604 = vmatprep.mubr.bf16.mxu0 0
      %1605 = vmatmul.mubr.bf16.gmra.mrb[0].mxu0 %v1437
      %v1606 = vpop.f32.mrb[0].mxu0
      %v1607 = vadd.f32 %v1563, %v1606
      %v1608 = vpop.f32.mrb[0].mxu0
      %v1609 = vpop.f32.mrb[0].mxu0
      %v1610 = vpop.f32.mrb[0].mxu0
      %1611 = vdwg.mxu0
      %v1612 = vpack.c.bf16 %v1607, %v1607
      %s1613 = scalar_lea.vmem %s306, 24
      %1614 = vst.msk [vmem:[%s1613] sm:$0xf] %vm449, %v1612
      %s1615 = scalar_lea.vmem %s276, 28
      %v1616 = vld [vmem:[%s1615] sm:$0xf]
      %s1617 = scalar_lea.vmem %s282, 28
      %v1618 = vld [vmem:[%s1617] sm:$0xf]
      %s1619 = scalar_lea.vmem %s288, 28
      %v1620 = vld [vmem:[%s1619] sm:$0xf]
      %s1621 = scalar_lea.vmem %s294, 28
      %v1622 = vld [vmem:[%s1621] sm:$0xf]
      %v1624 = vsel %vm313, %v1616, 0
      %v1627 = vsel %vm317, %v1620, 0
      %1629 = vmatprep.subr.bf16.mxu0 0
      %1630 = vmatpush1.bf16.msra.mxu0 %v1627
      %1631 = vmatprep.subr.bf16.mxu0 0
      %1632 = vmatpush1.bf16.msra.mxu0 0
      %1633 = vmatprep.subr.bf16.mxu0 0
      %1634 = vmatpush1.bf16.msra.mxu0 0
      %1635 = vmatprep.subr.bf16.mxu0 0
      %1636 = vmatpush1.bf16.msra.mxu0 0
      %1637 = vmatprep.subr.bf16.mxu0 0
      %1638 = vmatpush1.bf16.msra.mxu0 0
      %1639 = vmatprep.subr.bf16.mxu0 0
      %1640 = vmatpush1.bf16.msra.mxu0 0
      %1641 = vmatprep.subr.bf16.mxu0 0
      %1642 = vmatpush1.bf16.msra.mxu0 0
      %1643 = vmatprep.subr.bf16.mxu0 0
      %1644 = vmatpush1.bf16.msra.mxu0 0
      %1645 = vmatprep.subr.bf16.mxu0 0
      %1646 = vmatpush1.bf16.msra.mxu0 0
      %1647 = vmatprep.subr.bf16.mxu0 0
      %1648 = vmatpush1.bf16.msra.mxu0 0
      %1649 = vmatprep.subr.bf16.mxu0 0
      %1650 = vmatpush1.bf16.msra.mxu0 0
      %1651 = vmatprep.subr.bf16.mxu0 0
      %1652 = vmatpush1.bf16.msra.mxu0 0
      %1653 = vmatprep.subr.bf16.mxu0 0
      %1654 = vmatpush1.bf16.msra.mxu0 0
      %1655 = vmatprep.subr.bf16.mxu0 0
      %1656 = vmatpush1.bf16.msra.mxu0 0
      %1657 = vmatprep.subr.bf16.mxu0 0
      %1658 = vmatpush1.bf16.msra.mxu0 0
      %1659 = vmatprep.subr.bf16.mxu0 0
      %1660 = vmatpush1.bf16.msra.mxu0 0
      %1661 = vmatprep.mubr.bf16.mxu0 0
      %1662 = vmatmul.mubr.bf16.gmra.mrb[0].mxu0 %v1624
      %v1663 = vpop.f32.mrb[0].mxu0
      %v1664 = vadd.f32 0.0, %v1663
      %v1665 = vpop.f32.mrb[0].mxu0
      %v1666 = vpop.f32.mrb[0].mxu0
      %v1667 = vpop.f32.mrb[0].mxu0
      %1668 = vdwg.mxu0
      %v1670 = vsel %vm313, %v1618, 0
      %v1673 = vsel %vm317, %v1622, 0
      %1675 = vmatprep.subr.bf16.mxu0 0
      %1676 = vmatpush1.bf16.msra.mxu0 %v1673
      %1677 = vmatprep.subr.bf16.mxu0 0
      %1678 = vmatpush1.bf16.msra.mxu0 0
      %1679 = vmatprep.subr.bf16.mxu0 0
      %1680 = vmatpush1.bf16.msra.mxu0 0
      %1681 = vmatprep.subr.bf16.mxu0 0
      %1682 = vmatpush1.bf16.msra.mxu0 0
      %1683 = vmatprep.subr.bf16.mxu0 0
      %1684 = vmatpush1.bf16.msra.mxu0 0
      %1685 = vmatprep.subr.bf16.mxu0 0
      %1686 = vmatpush1.bf16.msra.mxu0 0
      %1687 = vmatprep.subr.bf16.mxu0 0
      %1688 = vmatpush1.bf16.msra.mxu0 0
      %1689 = vmatprep.subr.bf16.mxu0 0
      %1690 = vmatpush1.bf16.msra.mxu0 0
      %1691 = vmatprep.subr.bf16.mxu0 0
      %1692 = vmatpush1.bf16.msra.mxu0 0
      %1693 = vmatprep.subr.bf16.mxu0 0
      %1694 = vmatpush1.bf16.msra.mxu0 0
      %1695 = vmatprep.subr.bf16.mxu0 0
      %1696 = vmatpush1.bf16.msra.mxu0 0
      %1697 = vmatprep.subr.bf16.mxu0 0
      %1698 = vmatpush1.bf16.msra.mxu0 0
      %1699 = vmatprep.subr.bf16.mxu0 0
      %1700 = vmatpush1.bf16.msra.mxu0 0
      %1701 = vmatprep.subr.bf16.mxu0 0
      %1702 = vmatpush1.bf16.msra.mxu0 0
      %1703 = vmatprep.subr.bf16.mxu0 0
      %1704 = vmatpush1.bf16.msra.mxu0 0
      %1705 = vmatprep.subr.bf16.mxu0 0
      %1706 = vmatpush1.bf16.msra.mxu0 0
      %1707 = vmatprep.mubr.bf16.mxu0 0
      %1708 = vmatmul.mubr.bf16.gmra.mrb[0].mxu0 %v1670
      %v1709 = vpop.f32.mrb[0].mxu0
      %v1710 = vadd.f32 0.0, %v1709
      %v1711 = vpop.f32.mrb[0].mxu0
      %v1712 = vpop.f32.mrb[0].mxu0
      %v1713 = vpop.f32.mrb[0].mxu0
      %1714 = vdwg.mxu0
      %1715 = vmatprep.subr.bf16.mxu0 0
      %1716 = vmatpush1.bf16.msra.mxu0 %v1627
      %1717 = vmatprep.subr.bf16.mxu0 0
      %1718 = vmatpush1.bf16.msra.mxu0 0
      %1719 = vmatprep.subr.bf16.mxu0 0
      %1720 = vmatpush1.bf16.msra.mxu0 0
      %1721 = vmatprep.subr.bf16.mxu0 0
      %1722 = vmatpush1.bf16.msra.mxu0 0
      %1723 = vmatprep.subr.bf16.mxu0 0
      %1724 = vmatpush1.bf16.msra.mxu0 0
      %1725 = vmatprep.subr.bf16.mxu0 0
      %1726 = vmatpush1.bf16.msra.mxu0 0
      %1727 = vmatprep.subr.bf16.mxu0 0
      %1728 = vmatpush1.bf16.msra.mxu0 0
      %1729 = vmatprep.subr.bf16.mxu0 0
      %1730 = vmatpush1.bf16.msra.mxu0 0
      %1731 = vmatprep.subr.bf16.mxu0 0
      %1732 = vmatpush1.bf16.msra.mxu0 0
      %1733 = vmatprep.subr.bf16.mxu0 0
      %1734 = vmatpush1.bf16.msra.mxu0 0
      %1735 = vmatprep.subr.bf16.mxu0 0
      %1736 = vmatpush1.bf16.msra.mxu0 0
      %1737 = vmatprep.subr.bf16.mxu0 0
      %1738 = vmatpush1.bf16.msra.mxu0 0
      %1739 = vmatprep.subr.bf16.mxu0 0
      %1740 = vmatpush1.bf16.msra.mxu0 0
      %1741 = vmatprep.subr.bf16.mxu0 0
      %1742 = vmatpush1.bf16.msra.mxu0 0
      %1743 = vmatprep.subr.bf16.mxu0 0
      %1744 = vmatpush1.bf16.msra.mxu0 0
      %1745 = vmatprep.subr.bf16.mxu0 0
      %1746 = vmatpush1.bf16.msra.mxu0 0
      %1747 = vmatprep.mubr.bf16.mxu0 0
      %1748 = vmatmul.mubr.bf16.gmra.mrb[0].mxu0 %v1670
      %v1749 = vpop.f32.mrb[0].mxu0
      %v1750 = vadd.f32 0.0, %v1749
      %v1751 = vpop.f32.mrb[0].mxu0
      %v1752 = vpop.f32.mrb[0].mxu0
      %v1753 = vpop.f32.mrb[0].mxu0
      %1754 = vdwg.mxu0
      %v1755 = vsub.f32 %v1664, %v1710
      %v1756 = vpack.c.bf16 %v1755, %v1755
      %s1757 = scalar_lea.vmem %s300, 28
      %1758 = vst.msk [vmem:[%s1757] sm:$0xf] %vm449, %v1756
      %1759 = vmatprep.subr.bf16.mxu0 0
      %1760 = vmatpush1.bf16.msra.mxu0 %v1673
      %1761 = vmatprep.subr.bf16.mxu0 0
      %1762 = vmatpush1.bf16.msra.mxu0 0
      %1763 = vmatprep.subr.bf16.mxu0 0
      %1764 = vmatpush1.bf16.msra.mxu0 0
      %1765 = vmatprep.subr.bf16.mxu0 0
      %1766 = vmatpush1.bf16.msra.mxu0 0
      %1767 = vmatprep.subr.bf16.mxu0 0
      %1768 = vmatpush1.bf16.msra.mxu0 0
      %1769 = vmatprep.subr.bf16.mxu0 0
      %1770 = vmatpush1.bf16.msra.mxu0 0
      %1771 = vmatprep.subr.bf16.mxu0 0
      %1772 = vmatpush1.bf16.msra.mxu0 0
      %1773 = vmatprep.subr.bf16.mxu0 0
      %1774 = vmatpush1.bf16.msra.mxu0 0
      %1775 = vmatprep.subr.bf16.mxu0 0
      %1776 = vmatpush1.bf16.msra.mxu0 0
      %1777 = vmatprep.subr.bf16.mxu0 0
      %1778 = vmatpush1.bf16.msra.mxu0 0
      %1779 = vmatprep.subr.bf16.mxu0 0
      %1780 = vmatpush1.bf16.msra.mxu0 0
      %1781 = vmatprep.subr.bf16.mxu0 0
      %1782 = vmatpush1.bf16.msra.mxu0 0
      %1783 = vmatprep.subr.bf16.mxu0 0
      %1784 = vmatpush1.bf16.msra.mxu0 0
      %1785 = vmatprep.subr.bf16.mxu0 0
      %1786 = vmatpush1.bf16.msra.mxu0 0
      %1787 = vmatprep.subr.bf16.mxu0 0
      %1788 = vmatpush1.bf16.msra.mxu0 0
      %1789 = vmatprep.subr.bf16.mxu0 0
      %1790 = vmatpush1.bf16.msra.mxu0 0
      %1791 = vmatprep.mubr.bf16.mxu0 0
      %1792 = vmatmul.mubr.bf16.gmra.mrb[0].mxu0 %v1624
      %v1793 = vpop.f32.mrb[0].mxu0
      %v1794 = vadd.f32 %v1750, %v1793
      %v1795 = vpop.f32.mrb[0].mxu0
      %v1796 = vpop.f32.mrb[0].mxu0
      %v1797 = vpop.f32.mrb[0].mxu0
      %1798 = vdwg.mxu0
      %v1799 = vpack.c.bf16 %v1794, %v1794
      %s1800 = scalar_lea.vmem %s306, 28
      %1801 = vst.msk [vmem:[%s1800] sm:$0xf] %vm449, %v1799
      %s1802 = scalar_lea.vmem %s276, 32
      %v1803 = vld [vmem:[%s1802] sm:$0xf]
      %s1804 = scalar_lea.vmem %s282, 32
      %v1805 = vld [vmem:[%s1804] sm:$0xf]
      %s1806 = scalar_lea.vmem %s288, 32
      %v1807 = vld [vmem:[%s1806] sm:$0xf]
      %s1808 = scalar_lea.vmem %s294, 32
      %v1809 = vld [vmem:[%s1808] sm:$0xf]
      %v1811 = vsel %vm313, %v1803, 0
      %v1814 = vsel %vm317, %v1807, 0
      %1816 = vmatprep.subr.bf16.mxu0 0
      %1817 = vmatpush1.bf16.msra.mxu0 %v1814
      %1818 = vmatprep.subr.bf16.mxu0 0
      %1819 = vmatpush1.bf16.msra.mxu0 0
      %1820 = vmatprep.subr.bf16.mxu0 0
      %1821 = vmatpush1.bf16.msra.mxu0 0
      %1822 = vmatprep.subr.bf16.mxu0 0
      %1823 = vmatpush1.bf16.msra.mxu0 0
      %1824 = vmatprep.subr.bf16.mxu0 0
      %1825 = vmatpush1.bf16.msra.mxu0 0
      %1826 = vmatprep.subr.bf16.mxu0 0
      %1827 = vmatpush1.bf16.msra.mxu0 0
      %1828 = vmatprep.subr.bf16.mxu0 0
      %1829 = vmatpush1.bf16.msra.mxu0 0
      %1830 = vmatprep.subr.bf16.mxu0 0
      %1831 = vmatpush1.bf16.msra.mxu0 0
      %1832 = vmatprep.subr.bf16.mxu0 0
      %1833 = vmatpush1.bf16.msra.mxu0 0
      %1834 = vmatprep.subr.bf16.mxu0 0
      %1835 = vmatpush1.bf16.msra.mxu0 0
      %1836 = vmatprep.subr.bf16.mxu0 0
      %1837 = vmatpush1.bf16.msra.mxu0 0
      %1838 = vmatprep.subr.bf16.mxu0 0
      %1839 = vmatpush1.bf16.msra.mxu0 0
      %1840 = vmatprep.subr.bf16.mxu0 0
      %1841 = vmatpush1.bf16.msra.mxu0 0
      %1842 = vmatprep.subr.bf16.mxu0 0
      %1843 = vmatpush1.bf16.msra.mxu0 0
      %1844 = vmatprep.subr.bf16.mxu0 0
      %1845 = vmatpush1.bf16.msra.mxu0 0
      %1846 = vmatprep.subr.bf16.mxu0 0
      %1847 = vmatpush1.bf16.msra.mxu0 0
      %1848 = vmatprep.mubr.bf16.mxu0 0
      %1849 = vmatmul.mubr.bf16.gmra.mrb[0].mxu0 %v1811
      %v1850 = vpop.f32.mrb[0].mxu0
      %v1851 = vadd.f32 0.0, %v1850
      %v1852 = vpop.f32.mrb[0].mxu0
      %v1853 = vpop.f32.mrb[0].mxu0
      %v1854 = vpop.f32.mrb[0].mxu0
      %1855 = vdwg.mxu0
      %v1857 = vsel %vm313, %v1805, 0
      %v1860 = vsel %vm317, %v1809, 0
      %1862 = vmatprep.subr.bf16.mxu0 0
      %1863 = vmatpush1.bf16.msra.mxu0 %v1860
      %1864 = vmatprep.subr.bf16.mxu0 0
      %1865 = vmatpush1.bf16.msra.mxu0 0
      %1866 = vmatprep.subr.bf16.mxu0 0
      %1867 = vmatpush1.bf16.msra.mxu0 0
      %1868 = vmatprep.subr.bf16.mxu0 0
      %1869 = vmatpush1.bf16.msra.mxu0 0
      %1870 = vmatprep.subr.bf16.mxu0 0
      %1871 = vmatpush1.bf16.msra.mxu0 0
      %1872 = vmatprep.subr.bf16.mxu0 0
      %1873 = vmatpush1.bf16.msra.mxu0 0
      %1874 = vmatprep.subr.bf16.mxu0 0
      %1875 = vmatpush1.bf16.msra.mxu0 0
      %1876 = vmatprep.subr.bf16.mxu0 0
      %1877 = vmatpush1.bf16.msra.mxu0 0
      %1878 = vmatprep.subr.bf16.mxu0 0
      %1879 = vmatpush1.bf16.msra.mxu0 0
      %1880 = vmatprep.subr.bf16.mxu0 0
      %1881 = vmatpush1.bf16.msra.mxu0 0
      %1882 = vmatprep.subr.bf16.mxu0 0
      %1883 = vmatpush1.bf16.msra.mxu0 0
      %1884 = vmatprep.subr.bf16.mxu0 0
      %1885 = vmatpush1.bf16.msra.mxu0 0
      %1886 = vmatprep.subr.bf16.mxu0 0
      %1887 = vmatpush1.bf16.msra.mxu0 0
      %1888 = vmatprep.subr.bf16.mxu0 0
      %1889 = vmatpush1.bf16.msra.mxu0 0
      %1890 = vmatprep.subr.bf16.mxu0 0
      %1891 = vmatpush1.bf16.msra.mxu0 0
      %1892 = vmatprep.subr.bf16.mxu0 0
      %1893 = vmatpush1.bf16.msra.mxu0 0
      %1894 = vmatprep.mubr.bf16.mxu0 0
      %1895 = vmatmul.mubr.bf16.gmra.mrb[0].mxu0 %v1857
      %v1896 = vpop.f32.mrb[0].mxu0
      %v1897 = vadd.f32 0.0, %v1896
      %v1898 = vpop.f32.mrb[0].mxu0
      %v1899 = vpop.f32.mrb[0].mxu0
      %v1900 = vpop.f32.mrb[0].mxu0
      %1901 = vdwg.mxu0
      %1902 = vmatprep.subr.bf16.mxu0 0
      %1903 = vmatpush1.bf16.msra.mxu0 %v1814
      %1904 = vmatprep.subr.bf16.mxu0 0
      %1905 = vmatpush1.bf16.msra.mxu0 0
      %1906 = vmatprep.subr.bf16.mxu0 0
      %1907 = vmatpush1.bf16.msra.mxu0 0
      %1908 = vmatprep.subr.bf16.mxu0 0
      %1909 = vmatpush1.bf16.msra.mxu0 0
      %1910 = vmatprep.subr.bf16.mxu0 0
      %1911 = vmatpush1.bf16.msra.mxu0 0
      %1912 = vmatprep.subr.bf16.mxu0 0
      %1913 = vmatpush1.bf16.msra.mxu0 0
      %1914 = vmatprep.subr.bf16.mxu0 0
      %1915 = vmatpush1.bf16.msra.mxu0 0
      %1916 = vmatprep.subr.bf16.mxu0 0
      %1917 = vmatpush1.bf16.msra.mxu0 0
      %1918 = vmatprep.subr.bf16.mxu0 0
      %1919 = vmatpush1.bf16.msra.mxu0 0
      %1920 = vmatprep.subr.bf16.mxu0 0
      %1921 = vmatpush1.bf16.msra.mxu0 0
      %1922 = vmatprep.subr.bf16.mxu0 0
      %1923 = vmatpush1.bf16.msra.mxu0 0
      %1924 = vmatprep.subr.bf16.mxu0 0
      %1925 = vmatpush1.bf16.msra.mxu0 0
      %1926 = vmatprep.subr.bf16.mxu0 0
      %1927 = vmatpush1.bf16.msra.mxu0 0
      %1928 = vmatprep.subr.bf16.mxu0 0
      %1929 = vmatpush1.bf16.msra.mxu0 0
      %1930 = vmatprep.subr.bf16.mxu0 0
      %1931 = vmatpush1.bf16.msra.mxu0 0
      %1932 = vmatprep.subr.bf16.mxu0 0
      %1933 = vmatpush1.bf16.msra.mxu0 0
      %1934 = vmatprep.mubr.bf16.mxu0 0
      %1935 = vmatmul.mubr.bf16.gmra.mrb[0].mxu0 %v1857
      %v1936 = vpop.f32.mrb[0].mxu0
      %v1937 = vadd.f32 0.0, %v1936
      %v1938 = vpop.f32.mrb[0].mxu0
      %v1939 = vpop.f32.mrb[0].mxu0
      %v1940 = vpop.f32.mrb[0].mxu0
      %1941 = vdwg.mxu0
      %v1942 = vsub.f32 %v1851, %v1897
      %v1943 = vpack.c.bf16 %v1942, %v1942
      %s1944 = scalar_lea.vmem %s300, 32
      %1945 = vst.msk [vmem:[%s1944] sm:$0xf] %vm449, %v1943
      %1946 = vmatprep.subr.bf16.mxu0 0
      %1947 = vmatpush1.bf16.msra.mxu0 %v1860
      %1948 = vmatprep.subr.bf16.mxu0 0
      %1949 = vmatpush1.bf16.msra.mxu0 0
      %1950 = vmatprep.subr.bf16.mxu0 0
      %1951 = vmatpush1.bf16.msra.mxu0 0
      %1952 = vmatprep.subr.bf16.mxu0 0
      %1953 = vmatpush1.bf16.msra.mxu0 0
      %1954 = vmatprep.subr.bf16.mxu0 0
      %1955 = vmatpush1.bf16.msra.mxu0 0
      %1956 = vmatprep.subr.bf16.mxu0 0
      %1957 = vmatpush1.bf16.msra.mxu0 0
      %1958 = vmatprep.subr.bf16.mxu0 0
      %1959 = vmatpush1.bf16.msra.mxu0 0
      %1960 = vmatprep.subr.bf16.mxu0 0
      %1961 = vmatpush1.bf16.msra.mxu0 0
      %1962 = vmatprep.subr.bf16.mxu0 0
      %1963 = vmatpush1.bf16.msra.mxu0 0
      %1964 = vmatprep.subr.bf16.mxu0 0
      %1965 = vmatpush1.bf16.msra.mxu0 0
      %1966 = vmatprep.subr.bf16.mxu0 0
      %1967 = vmatpush1.bf16.msra.mxu0 0
      %1968 = vmatprep.subr.bf16.mxu0 0
      %1969 = vmatpush1.bf16.msra.mxu0 0
      %1970 = vmatprep.subr.bf16.mxu0 0
      %1971 = vmatpush1.bf16.msra.mxu0 0
      %1972 = vmatprep.subr.bf16.mxu0 0
      %1973 = vmatpush1.bf16.msra.mxu0 0
      %1974 = vmatprep.subr.bf16.mxu0 0
      %1975 = vmatpush1.bf16.msra.mxu0 0
      %1976 = vmatprep.subr.bf16.mxu0 0
      %1977 = vmatpush1.bf16.msra.mxu0 0
      %1978 = vmatprep.mubr.bf16.mxu0 0
      %1979 = vmatmul.mubr.bf16.gmra.mrb[0].mxu0 %v1811
      %v1980 = vpop.f32.mrb[0].mxu0
      %v1981 = vadd.f32 %v1937, %v1980
      %v1982 = vpop.f32.mrb[0].mxu0
      %v1983 = vpop.f32.mrb[0].mxu0
      %v1984 = vpop.f32.mrb[0].mxu0
      %1985 = vdwg.mxu0
      %v1986 = vpack.c.bf16 %v1981, %v1981
      %s1987 = scalar_lea.vmem %s306, 32
      %1988 = vst.msk [vmem:[%s1987] sm:$0xf] %vm449, %v1986
      %s1989 = scalar_lea.vmem %s276, 36
      %v1990 = vld [vmem:[%s1989] sm:$0xf]
      %s1991 = scalar_lea.vmem %s282, 36
      %v1992 = vld [vmem:[%s1991] sm:$0xf]
      %s1993 = scalar_lea.vmem %s288, 36
      %v1994 = vld [vmem:[%s1993] sm:$0xf]
      %s1995 = scalar_lea.vmem %s294, 36
      %v1996 = vld [vmem:[%s1995] sm:$0xf]
      %v1998 = vsel %vm313, %v1990, 0
      %v2001 = vsel %vm317, %v1994, 0
      %2003 = vmatprep.subr.bf16.mxu0 0
      %2004 = vmatpush1.bf16.msra.mxu0 %v2001
      %2005 = vmatprep.subr.bf16.mxu0 0
      %2006 = vmatpush1.bf16.msra.mxu0 0
      %2007 = vmatprep.subr.bf16.mxu0 0
      %2008 = vmatpush1.bf16.msra.mxu0 0
      %2009 = vmatprep.subr.bf16.mxu0 0
      %2010 = vmatpush1.bf16.msra.mxu0 0
      %2011 = vmatprep.subr.bf16.mxu0 0
      %2012 = vmatpush1.bf16.msra.mxu0 0
      %2013 = vmatprep.subr.bf16.mxu0 0
      %2014 = vmatpush1.bf16.msra.mxu0 0
      %2015 = vmatprep.subr.bf16.mxu0 0
      %2016 = vmatpush1.bf16.msra.mxu0 0
      %2017 = vmatprep.subr.bf16.mxu0 0
      %2018 = vmatpush1.bf16.msra.mxu0 0
      %2019 = vmatprep.subr.bf16.mxu0 0
      %2020 = vmatpush1.bf16.msra.mxu0 0
      %2021 = vmatprep.subr.bf16.mxu0 0
      %2022 = vmatpush1.bf16.msra.mxu0 0
      %2023 = vmatprep.subr.bf16.mxu0 0
      %2024 = vmatpush1.bf16.msra.mxu0 0
      %2025 = vmatprep.subr.bf16.mxu0 0
      %2026 = vmatpush1.bf16.msra.mxu0 0
      %2027 = vmatprep.subr.bf16.mxu0 0
      %2028 = vmatpush1.bf16.msra.mxu0 0
      %2029 = vmatprep.subr.bf16.mxu0 0
      %2030 = vmatpush1.bf16.msra.mxu0 0
      %2031 = vmatprep.subr.bf16.mxu0 0
      %2032 = vmatpush1.bf16.msra.mxu0 0
      %2033 = vmatprep.subr.bf16.mxu0 0
      %2034 = vmatpush1.bf16.msra.mxu0 0
      %2035 = vmatprep.mubr.bf16.mxu0 0
      %2036 = vmatmul.mubr.bf16.gmra.mrb[0].mxu0 %v1998
      %v2037 = vpop.f32.mrb[0].mxu0
      %v2038 = vadd.f32 0.0, %v2037
      %v2039 = vpop.f32.mrb[0].mxu0
      %v2040 = vpop.f32.mrb[0].mxu0
      %v2041 = vpop.f32.mrb[0].mxu0
      %2042 = vdwg.mxu0
      %v2044 = vsel %vm313, %v1992, 0
      %v2047 = vsel %vm317, %v1996, 0
      %2049 = vmatprep.subr.bf16.mxu0 0
      %2050 = vmatpush1.bf16.msra.mxu0 %v2047
      %2051 = vmatprep.subr.bf16.mxu0 0
      %2052 = vmatpush1.bf16.msra.mxu0 0
      %2053 = vmatprep.subr.bf16.mxu0 0
      %2054 = vmatpush1.bf16.msra.mxu0 0
      %2055 = vmatprep.subr.bf16.mxu0 0
      %2056 = vmatpush1.bf16.msra.mxu0 0
      %2057 = vmatprep.subr.bf16.mxu0 0
      %2058 = vmatpush1.bf16.msra.mxu0 0
      %2059 = vmatprep.subr.bf16.mxu0 0
      %2060 = vmatpush1.bf16.msra.mxu0 0
      %2061 = vmatprep.subr.bf16.mxu0 0
      %2062 = vmatpush1.bf16.msra.mxu0 0
      %2063 = vmatprep.subr.bf16.mxu0 0
      %2064 = vmatpush1.bf16.msra.mxu0 0
      %2065 = vmatprep.subr.bf16.mxu0 0
      %2066 = vmatpush1.bf16.msra.mxu0 0
      %2067 = vmatprep.subr.bf16.mxu0 0
      %2068 = vmatpush1.bf16.msra.mxu0 0
      %2069 = vmatprep.subr.bf16.mxu0 0
      %2070 = vmatpush1.bf16.msra.mxu0 0
      %2071 = vmatprep.subr.bf16.mxu0 0
      %2072 = vmatpush1.bf16.msra.mxu0 0
      %2073 = vmatprep.subr.bf16.mxu0 0
      %2074 = vmatpush1.bf16.msra.mxu0 0
      %2075 = vmatprep.subr.bf16.mxu0 0
      %2076 = vmatpush1.bf16.msra.mxu0 0
      %2077 = vmatprep.subr.bf16.mxu0 0
      %2078 = vmatpush1.bf16.msra.mxu0 0
      %2079 = vmatprep.subr.bf16.mxu0 0
      %2080 = vmatpush1.bf16.msra.mxu0 0
      %2081 = vmatprep.mubr.bf16.mxu0 0
      %2082 = vmatmul.mubr.bf16.gmra.mrb[0].mxu0 %v2044
      %v2083 = vpop.f32.mrb[0].mxu0
      %v2084 = vadd.f32 0.0, %v2083
      %v2085 = vpop.f32.mrb[0].mxu0
      %v2086 = vpop.f32.mrb[0].mxu0
      %v2087 = vpop.f32.mrb[0].mxu0
      %2088 = vdwg.mxu0
      %2089 = vmatprep.subr.bf16.mxu0 0
      %2090 = vmatpush1.bf16.msra.mxu0 %v2001
      %2091 = vmatprep.subr.bf16.mxu0 0
      %2092 = vmatpush1.bf16.msra.mxu0 0
      %2093 = vmatprep.subr.bf16.mxu0 0
      %2094 = vmatpush1.bf16.msra.mxu0 0
      %2095 = vmatprep.subr.bf16.mxu0 0
      %2096 = vmatpush1.bf16.msra.mxu0 0
      %2097 = vmatprep.subr.bf16.mxu0 0
      %2098 = vmatpush1.bf16.msra.mxu0 0
      %2099 = vmatprep.subr.bf16.mxu0 0
      %2100 = vmatpush1.bf16.msra.mxu0 0
      %2101 = vmatprep.subr.bf16.mxu0 0
      %2102 = vmatpush1.bf16.msra.mxu0 0
      %2103 = vmatprep.subr.bf16.mxu0 0
      %2104 = vmatpush1.bf16.msra.mxu0 0
      %2105 = vmatprep.subr.bf16.mxu0 0
      %2106 = vmatpush1.bf16.msra.mxu0 0
      %2107 = vmatprep.subr.bf16.mxu0 0
      %2108 = vmatpush1.bf16.msra.mxu0 0
      %2109 = vmatprep.subr.bf16.mxu0 0
      %2110 = vmatpush1.bf16.msra.mxu0 0
      %2111 = vmatprep.subr.bf16.mxu0 0
      %2112 = vmatpush1.bf16.msra.mxu0 0
      %2113 = vmatprep.subr.bf16.mxu0 0
      %2114 = vmatpush1.bf16.msra.mxu0 0
      %2115 = vmatprep.subr.bf16.mxu0 0
      %2116 = vmatpush1.bf16.msra.mxu0 0
      %2117 = vmatprep.subr.bf16.mxu0 0
      %2118 = vmatpush1.bf16.msra.mxu0 0
      %2119 = vmatprep.subr.bf16.mxu0 0
      %2120 = vmatpush1.bf16.msra.mxu0 0
      %2121 = vmatprep.mubr.bf16.mxu0 0
      %2122 = vmatmul.mubr.bf16.gmra.mrb[0].mxu0 %v2044
      %v2123 = vpop.f32.mrb[0].mxu0
      %v2124 = vadd.f32 0.0, %v2123
      %v2125 = vpop.f32.mrb[0].mxu0
      %v2126 = vpop.f32.mrb[0].mxu0
      %v2127 = vpop.f32.mrb[0].mxu0
      %2128 = vdwg.mxu0
      %v2129 = vsub.f32 %v2038, %v2084
      %v2130 = vpack.c.bf16 %v2129, %v2129
      %s2131 = scalar_lea.vmem %s300, 36
      %2132 = vst.msk [vmem:[%s2131] sm:$0xf] %vm449, %v2130
      %2133 = vmatprep.subr.bf16.mxu0 0
      %2134 = vmatpush1.bf16.msra.mxu0 %v2047
      %2135 = vmatprep.subr.bf16.mxu0 0
      %2136 = vmatpush1.bf16.msra.mxu0 0
      %2137 = vmatprep.subr.bf16.mxu0 0
      %2138 = vmatpush1.bf16.msra.mxu0 0
      %2139 = vmatprep.subr.bf16.mxu0 0
      %2140 = vmatpush1.bf16.msra.mxu0 0
      %2141 = vmatprep.subr.bf16.mxu0 0
      %2142 = vmatpush1.bf16.msra.mxu0 0
      %2143 = vmatprep.subr.bf16.mxu0 0
      %2144 = vmatpush1.bf16.msra.mxu0 0
      %2145 = vmatprep.subr.bf16.mxu0 0
      %2146 = vmatpush1.bf16.msra.mxu0 0
      %2147 = vmatprep.subr.bf16.mxu0 0
      %2148 = vmatpush1.bf16.msra.mxu0 0
      %2149 = vmatprep.subr.bf16.mxu0 0
      %2150 = vmatpush1.bf16.msra.mxu0 0
      %2151 = vmatprep.subr.bf16.mxu0 0
      %2152 = vmatpush1.bf16.msra.mxu0 0
      %2153 = vmatprep.subr.bf16.mxu0 0
      %2154 = vmatpush1.bf16.msra.mxu0 0
      %2155 = vmatprep.subr.bf16.mxu0 0
      %2156 = vmatpush1.bf16.msra.mxu0 0
      %2157 = vmatprep.subr.bf16.mxu0 0
      %2158 = vmatpush1.bf16.msra.mxu0 0
      %2159 = vmatprep.subr.bf16.mxu0 0
      %2160 = vmatpush1.bf16.msra.mxu0 0
      %2161 = vmatprep.subr.bf16.mxu0 0
      %2162 = vmatpush1.bf16.msra.mxu0 0
      %2163 = vmatprep.subr.bf16.mxu0 0
      %2164 = vmatpush1.bf16.msra.mxu0 0
      %2165 = vmatprep.mubr.bf16.mxu0 0
      %2166 = vmatmul.mubr.bf16.gmra.mrb[0].mxu0 %v1998
      %v2167 = vpop.f32.mrb[0].mxu0
      %v2168 = vadd.f32 %v2124, %v2167
      %v2169 = vpop.f32.mrb[0].mxu0
      %v2170 = vpop.f32.mrb[0].mxu0
      %v2171 = vpop.f32.mrb[0].mxu0
      %2172 = vdwg.mxu0
      %v2173 = vpack.c.bf16 %v2168, %v2168
      %s2174 = scalar_lea.vmem %s306, 36
      %2175 = vst.msk [vmem:[%s2174] sm:$0xf] %vm449, %v2173
      %s2176 = scalar_lea.vmem %s276, 40
      %v2177 = vld [vmem:[%s2176] sm:$0xf]
      %s2178 = scalar_lea.vmem %s282, 40
      %v2179 = vld [vmem:[%s2178] sm:$0xf]
      %s2180 = scalar_lea.vmem %s288, 40
      %v2181 = vld [vmem:[%s2180] sm:$0xf]
      %s2182 = scalar_lea.vmem %s294, 40
      %v2183 = vld [vmem:[%s2182] sm:$0xf]
      %v2185 = vsel %vm313, %v2177, 0
      %v2188 = vsel %vm317, %v2181, 0
      %2190 = vmatprep.subr.bf16.mxu0 0
      %2191 = vmatpush1.bf16.msra.mxu0 %v2188
      %2192 = vmatprep.subr.bf16.mxu0 0
      %2193 = vmatpush1.bf16.msra.mxu0 0
      %2194 = vmatprep.subr.bf16.mxu0 0
      %2195 = vmatpush1.bf16.msra.mxu0 0
      %2196 = vmatprep.subr.bf16.mxu0 0
      %2197 = vmatpush1.bf16.msra.mxu0 0
      %2198 = vmatprep.subr.bf16.mxu0 0
      %2199 = vmatpush1.bf16.msra.mxu0 0
      %2200 = vmatprep.subr.bf16.mxu0 0
      %2201 = vmatpush1.bf16.msra.mxu0 0
      %2202 = vmatprep.subr.bf16.mxu0 0
      %2203 = vmatpush1.bf16.msra.mxu0 0
      %2204 = vmatprep.subr.bf16.mxu0 0
      %2205 = vmatpush1.bf16.msra.mxu0 0
      %2206 = vmatprep.subr.bf16.mxu0 0
      %2207 = vmatpush1.bf16.msra.mxu0 0
      %2208 = vmatprep.subr.bf16.mxu0 0
      %2209 = vmatpush1.bf16.msra.mxu0 0
      %2210 = vmatprep.subr.bf16.mxu0 0
      %2211 = vmatpush1.bf16.msra.mxu0 0
      %2212 = vmatprep.subr.bf16.mxu0 0
      %2213 = vmatpush1.bf16.msra.mxu0 0
      %2214 = vmatprep.subr.bf16.mxu0 0
      %2215 = vmatpush1.bf16.msra.mxu0 0
      %2216 = vmatprep.subr.bf16.mxu0 0
      %2217 = vmatpush1.bf16.msra.mxu0 0
      %2218 = vmatprep.subr.bf16.mxu0 0
      %2219 = vmatpush1.bf16.msra.mxu0 0
      %2220 = vmatprep.subr.bf16.mxu0 0
      %2221 = vmatpush1.bf16.msra.mxu0 0
      %2222 = vmatprep.mubr.bf16.mxu0 0
      %2223 = vmatmul.mubr.bf16.gmra.mrb[0].mxu0 %v2185
      %v2224 = vpop.f32.mrb[0].mxu0
      %v2225 = vadd.f32 0.0, %v2224
      %v2226 = vpop.f32.mrb[0].mxu0
      %v2227 = vpop.f32.mrb[0].mxu0
      %v2228 = vpop.f32.mrb[0].mxu0
      %2229 = vdwg.mxu0
      %v2231 = vsel %vm313, %v2179, 0
      %v2234 = vsel %vm317, %v2183, 0
      %2236 = vmatprep.subr.bf16.mxu0 0
      %2237 = vmatpush1.bf16.msra.mxu0 %v2234
      %2238 = vmatprep.subr.bf16.mxu0 0
      %2239 = vmatpush1.bf16.msra.mxu0 0
      %2240 = vmatprep.subr.bf16.mxu0 0
      %2241 = vmatpush1.bf16.msra.mxu0 0
      %2242 = vmatprep.subr.bf16.mxu0 0
      %2243 = vmatpush1.bf16.msra.mxu0 0
      %2244 = vmatprep.subr.bf16.mxu0 0
      %2245 = vmatpush1.bf16.msra.mxu0 0
      %2246 = vmatprep.subr.bf16.mxu0 0
      %2247 = vmatpush1.bf16.msra.mxu0 0
      %2248 = vmatprep.subr.bf16.mxu0 0
      %2249 = vmatpush1.bf16.msra.mxu0 0
      %2250 = vmatprep.subr.bf16.mxu0 0
      %2251 = vmatpush1.bf16.msra.mxu0 0
      %2252 = vmatprep.subr.bf16.mxu0 0
      %2253 = vmatpush1.bf16.msra.mxu0 0
      %2254 = vmatprep.subr.bf16.mxu0 0
      %2255 = vmatpush1.bf16.msra.mxu0 0
      %2256 = vmatprep.subr.bf16.mxu0 0
      %2257 = vmatpush1.bf16.msra.mxu0 0
      %2258 = vmatprep.subr.bf16.mxu0 0
      %2259 = vmatpush1.bf16.msra.mxu0 0
      %2260 = vmatprep.subr.bf16.mxu0 0
      %2261 = vmatpush1.bf16.msra.mxu0 0
      %2262 = vmatprep.subr.bf16.mxu0 0
      %2263 = vmatpush1.bf16.msra.mxu0 0
      %2264 = vmatprep.subr.bf16.mxu0 0
      %2265 = vmatpush1.bf16.msra.mxu0 0
      %2266 = vmatprep.subr.bf16.mxu0 0
      %2267 = vmatpush1.bf16.msra.mxu0 0
      %2268 = vmatprep.mubr.bf16.mxu0 0
      %2269 = vmatmul.mubr.bf16.gmra.mrb[0].mxu0 %v2231
      %v2270 = vpop.f32.mrb[0].mxu0
      %v2271 = vadd.f32 0.0, %v2270
      %v2272 = vpop.f32.mrb[0].mxu0
      %v2273 = vpop.f32.mrb[0].mxu0
      %v2274 = vpop.f32.mrb[0].mxu0
      %2275 = vdwg.mxu0
      %2276 = vmatprep.subr.bf16.mxu0 0
      %2277 = vmatpush1.bf16.msra.mxu0 %v2188
      %2278 = vmatprep.subr.bf16.mxu0 0
      %2279 = vmatpush1.bf16.msra.mxu0 0
      %2280 = vmatprep.subr.bf16.mxu0 0
      %2281 = vmatpush1.bf16.msra.mxu0 0
      %2282 = vmatprep.subr.bf16.mxu0 0
      %2283 = vmatpush1.bf16.msra.mxu0 0
      %2284 = vmatprep.subr.bf16.mxu0 0
      %2285 = vmatpush1.bf16.msra.mxu0 0
      %2286 = vmatprep.subr.bf16.mxu0 0
      %2287 = vmatpush1.bf16.msra.mxu0 0
      %2288 = vmatprep.subr.bf16.mxu0 0
      %2289 = vmatpush1.bf16.msra.mxu0 0
      %2290 = vmatprep.subr.bf16.mxu0 0
      %2291 = vmatpush1.bf16.msra.mxu0 0
      %2292 = vmatprep.subr.bf16.mxu0 0
      %2293 = vmatpush1.bf16.msra.mxu0 0
      %2294 = vmatprep.subr.bf16.mxu0 0
      %2295 = vmatpush1.bf16.msra.mxu0 0
      %2296 = vmatprep.subr.bf16.mxu0 0
      %2297 = vmatpush1.bf16.msra.mxu0 0
      %2298 = vmatprep.subr.bf16.mxu0 0
      %2299 = vmatpush1.bf16.msra.mxu0 0
      %2300 = vmatprep.subr.bf16.mxu0 0
      %2301 = vmatpush1.bf16.msra.mxu0 0
      %2302 = vmatprep.subr.bf16.mxu0 0
      %2303 = vmatpush1.bf16.msra.mxu0 0
      %2304 = vmatprep.subr.bf16.mxu0 0
      %2305 = vmatpush1.bf16.msra.mxu0 0
      %2306 = vmatprep.subr.bf16.mxu0 0
      %2307 = vmatpush1.bf16.msra.mxu0 0
      %2308 = vmatprep.mubr.bf16.mxu0 0
      %2309 = vmatmul.mubr.bf16.gmra.mrb[0].mxu0 %v2231
      %v2310 = vpop.f32.mrb[0].mxu0
      %v2311 = vadd.f32 0.0, %v2310
      %v2312 = vpop.f32.mrb[0].mxu0
      %v2313 = vpop.f32.mrb[0].mxu0
      %v2314 = vpop.f32.mrb[0].mxu0
      %2315 = vdwg.mxu0
      %v2316 = vsub.f32 %v2225, %v2271
      %v2317 = vpack.c.bf16 %v2316, %v2316
      %s2318 = scalar_lea.vmem %s300, 40
      %2319 = vst.msk [vmem:[%s2318] sm:$0xf] %vm449, %v2317
      %2320 = vmatprep.subr.bf16.mxu0 0
      %2321 = vmatpush1.bf16.msra.mxu0 %v2234
      %2322 = vmatprep.subr.bf16.mxu0 0
      %2323 = vmatpush1.bf16.msra.mxu0 0
      %2324 = vmatprep.subr.bf16.mxu0 0
      %2325 = vmatpush1.bf16.msra.mxu0 0
      %2326 = vmatprep.subr.bf16.mxu0 0
      %2327 = vmatpush1.bf16.msra.mxu0 0
      %2328 = vmatprep.subr.bf16.mxu0 0
      %2329 = vmatpush1.bf16.msra.mxu0 0
      %2330 = vmatprep.subr.bf16.mxu0 0
      %2331 = vmatpush1.bf16.msra.mxu0 0
      %2332 = vmatprep.subr.bf16.mxu0 0
      %2333 = vmatpush1.bf16.msra.mxu0 0
      %2334 = vmatprep.subr.bf16.mxu0 0
      %2335 = vmatpush1.bf16.msra.mxu0 0
      %2336 = vmatprep.subr.bf16.mxu0 0
      %2337 = vmatpush1.bf16.msra.mxu0 0
      %2338 = vmatprep.subr.bf16.mxu0 0
      %2339 = vmatpush1.bf16.msra.mxu0 0
      %2340 = vmatprep.subr.bf16.mxu0 0
      %2341 = vmatpush1.bf16.msra.mxu0 0
      %2342 = vmatprep.subr.bf16.mxu0 0
      %2343 = vmatpush1.bf16.msra.mxu0 0
      %2344 = vmatprep.subr.bf16.mxu0 0
      %2345 = vmatpush1.bf16.msra.mxu0 0
      %2346 = vmatprep.subr.bf16.mxu0 0
      %2347 = vmatpush1.bf16.msra.mxu0 0
      %2348 = vmatprep.subr.bf16.mxu0 0
      %2349 = vmatpush1.bf16.msra.mxu0 0
      %2350 = vmatprep.subr.bf16.mxu0 0
      %2351 = vmatpush1.bf16.msra.mxu0 0
      %2352 = vmatprep.mubr.bf16.mxu0 0
      %2353 = vmatmul.mubr.bf16.gmra.mrb[0].mxu0 %v2185
      %v2354 = vpop.f32.mrb[0].mxu0
      %v2355 = vadd.f32 %v2311, %v2354
      %v2356 = vpop.f32.mrb[0].mxu0
      %v2357 = vpop.f32.mrb[0].mxu0
      %v2358 = vpop.f32.mrb[0].mxu0
      %2359 = vdwg.mxu0
      %v2360 = vpack.c.bf16 %v2355, %v2355
      %s2361 = scalar_lea.vmem %s306, 40
      %2362 = vst.msk [vmem:[%s2361] sm:$0xf] %vm449, %v2360
      %s2363 = scalar_lea.vmem %s276, 44
      %v2364 = vld [vmem:[%s2363] sm:$0xf]
      %s2365 = scalar_lea.vmem %s282, 44
      %v2366 = vld [vmem:[%s2365] sm:$0xf]
      %s2367 = scalar_lea.vmem %s288, 44
      %v2368 = vld [vmem:[%s2367] sm:$0xf]
      %s2369 = scalar_lea.vmem %s294, 44
      %v2370 = vld [vmem:[%s2369] sm:$0xf]
      %v2372 = vsel %vm313, %v2364, 0
      %v2375 = vsel %vm317, %v2368, 0
      %2377 = vmatprep.subr.bf16.mxu0 0
      %2378 = vmatpush1.bf16.msra.mxu0 %v2375
      %2379 = vmatprep.subr.bf16.mxu0 0
      %2380 = vmatpush1.bf16.msra.mxu0 0
      %2381 = vmatprep.subr.bf16.mxu0 0
      %2382 = vmatpush1.bf16.msra.mxu0 0
      %2383 = vmatprep.subr.bf16.mxu0 0
      %2384 = vmatpush1.bf16.msra.mxu0 0
      %2385 = vmatprep.subr.bf16.mxu0 0
      %2386 = vmatpush1.bf16.msra.mxu0 0
      %2387 = vmatprep.subr.bf16.mxu0 0
      %2388 = vmatpush1.bf16.msra.mxu0 0
      %2389 = vmatprep.subr.bf16.mxu0 0
      %2390 = vmatpush1.bf16.msra.mxu0 0
      %2391 = vmatprep.subr.bf16.mxu0 0
      %2392 = vmatpush1.bf16.msra.mxu0 0
      %2393 = vmatprep.subr.bf16.mxu0 0
      %2394 = vmatpush1.bf16.msra.mxu0 0
      %2395 = vmatprep.subr.bf16.mxu0 0
      %2396 = vmatpush1.bf16.msra.mxu0 0
      %2397 = vmatprep.subr.bf16.mxu0 0
      %2398 = vmatpush1.bf16.msra.mxu0 0
      %2399 = vmatprep.subr.bf16.mxu0 0
      %2400 = vmatpush1.bf16.msra.mxu0 0
      %2401 = vmatprep.subr.bf16.mxu0 0
      %2402 = vmatpush1.bf16.msra.mxu0 0
      %2403 = vmatprep.subr.bf16.mxu0 0
      %2404 = vmatpush1.bf16.msra.mxu0 0
      %2405 = vmatprep.subr.bf16.mxu0 0
      %2406 = vmatpush1.bf16.msra.mxu0 0
      %2407 = vmatprep.subr.bf16.mxu0 0
      %2408 = vmatpush1.bf16.msra.mxu0 0
      %2409 = vmatprep.mubr.bf16.mxu0 0
      %2410 = vmatmul.mubr.bf16.gmra.mrb[0].mxu0 %v2372
      %v2411 = vpop.f32.mrb[0].mxu0
      %v2412 = vadd.f32 0.0, %v2411
      %v2413 = vpop.f32.mrb[0].mxu0
      %v2414 = vpop.f32.mrb[0].mxu0
      %v2415 = vpop.f32.mrb[0].mxu0
      %2416 = vdwg.mxu0
      %v2418 = vsel %vm313, %v2366, 0
      %v2421 = vsel %vm317, %v2370, 0
      %2423 = vmatprep.subr.bf16.mxu0 0
      %2424 = vmatpush1.bf16.msra.mxu0 %v2421
      %2425 = vmatprep.subr.bf16.mxu0 0
      %2426 = vmatpush1.bf16.msra.mxu0 0
      %2427 = vmatprep.subr.bf16.mxu0 0
      %2428 = vmatpush1.bf16.msra.mxu0 0
      %2429 = vmatprep.subr.bf16.mxu0 0
      %2430 = vmatpush1.bf16.msra.mxu0 0
      %2431 = vmatprep.subr.bf16.mxu0 0
      %2432 = vmatpush1.bf16.msra.mxu0 0
      %2433 = vmatprep.subr.bf16.mxu0 0
      %2434 = vmatpush1.bf16.msra.mxu0 0
      %2435 = vmatprep.subr.bf16.mxu0 0
      %2436 = vmatpush1.bf16.msra.mxu0 0
      %2437 = vmatprep.subr.bf16.mxu0 0
      %2438 = vmatpush1.bf16.msra.mxu0 0
      %2439 = vmatprep.subr.bf16.mxu0 0
      %2440 = vmatpush1.bf16.msra.mxu0 0
      %2441 = vmatprep.subr.bf16.mxu0 0
      %2442 = vmatpush1.bf16.msra.mxu0 0
      %2443 = vmatprep.subr.bf16.mxu0 0
      %2444 = vmatpush1.bf16.msra.mxu0 0
      %2445 = vmatprep.subr.bf16.mxu0 0
      %2446 = vmatpush1.bf16.msra.mxu0 0
      %2447 = vmatprep.subr.bf16.mxu0 0
      %2448 = vmatpush1.bf16.msra.mxu0 0
      %2449 = vmatprep.subr.bf16.mxu0 0
      %2450 = vmatpush1.bf16.msra.mxu0 0
      %2451 = vmatprep.subr.bf16.mxu0 0
      %2452 = vmatpush1.bf16.msra.mxu0 0
      %2453 = vmatprep.subr.bf16.mxu0 0
      %2454 = vmatpush1.bf16.msra.mxu0 0
      %2455 = vmatprep.mubr.bf16.mxu0 0
      %2456 = vmatmul.mubr.bf16.gmra.mrb[0].mxu0 %v2418
      %v2457 = vpop.f32.mrb[0].mxu0
      %v2458 = vadd.f32 0.0, %v2457
      %v2459 = vpop.f32.mrb[0].mxu0
      %v2460 = vpop.f32.mrb[0].mxu0
      %v2461 = vpop.f32.mrb[0].mxu0
      %2462 = vdwg.mxu0
      %2463 = vmatprep.subr.bf16.mxu0 0
      %2464 = vmatpush1.bf16.msra.mxu0 %v2375
      %2465 = vmatprep.subr.bf16.mxu0 0
      %2466 = vmatpush1.bf16.msra.mxu0 0
      %2467 = vmatprep.subr.bf16.mxu0 0
      %2468 = vmatpush1.bf16.msra.mxu0 0
      %2469 = vmatprep.subr.bf16.mxu0 0
      %2470 = vmatpush1.bf16.msra.mxu0 0
      %2471 = vmatprep.subr.bf16.mxu0 0
      %2472 = vmatpush1.bf16.msra.mxu0 0
      %2473 = vmatprep.subr.bf16.mxu0 0
      %2474 = vmatpush1.bf16.msra.mxu0 0
      %2475 = vmatprep.subr.bf16.mxu0 0
      %2476 = vmatpush1.bf16.msra.mxu0 0
      %2477 = vmatprep.subr.bf16.mxu0 0
      %2478 = vmatpush1.bf16.msra.mxu0 0
      %2479 = vmatprep.subr.bf16.mxu0 0
      %2480 = vmatpush1.bf16.msra.mxu0 0
      %2481 = vmatprep.subr.bf16.mxu0 0
      %2482 = vmatpush1.bf16.msra.mxu0 0
      %2483 = vmatprep.subr.bf16.mxu0 0
      %2484 = vmatpush1.bf16.msra.mxu0 0
      %2485 = vmatprep.subr.bf16.mxu0 0
      %2486 = vmatpush1.bf16.msra.mxu0 0
      %2487 = vmatprep.subr.bf16.mxu0 0
      %2488 = vmatpush1.bf16.msra.mxu0 0
      %2489 = vmatprep.subr.bf16.mxu0 0
      %2490 = vmatpush1.bf16.msra.mxu0 0
      %2491 = vmatprep.subr.bf16.mxu0 0
      %2492 = vmatpush1.bf16.msra.mxu0 0
      %2493 = vmatprep.subr.bf16.mxu0 0
      %2494 = vmatpush1.bf16.msra.mxu0 0
      %2495 = vmatprep.mubr.bf16.mxu0 0
      %2496 = vmatmul.mubr.bf16.gmra.mrb[0].mxu0 %v2418
      %v2497 = vpop.f32.mrb[0].mxu0
      %v2498 = vadd.f32 0.0, %v2497
      %v2499 = vpop.f32.mrb[0].mxu0
      %v2500 = vpop.f32.mrb[0].mxu0
      %v2501 = vpop.f32.mrb[0].mxu0
      %2502 = vdwg.mxu0
      %v2503 = vsub.f32 %v2412, %v2458
      %v2504 = vpack.c.bf16 %v2503, %v2503
      %s2505 = scalar_lea.vmem %s300, 44
      %2506 = vst.msk [vmem:[%s2505] sm:$0xf] %vm449, %v2504
      %2507 = vmatprep.subr.bf16.mxu0 0
      %2508 = vmatpush1.bf16.msra.mxu0 %v2421
      %2509 = vmatprep.subr.bf16.mxu0 0
      %2510 = vmatpush1.bf16.msra.mxu0 0
      %2511 = vmatprep.subr.bf16.mxu0 0
      %2512 = vmatpush1.bf16.msra.mxu0 0
      %2513 = vmatprep.subr.bf16.mxu0 0
      %2514 = vmatpush1.bf16.msra.mxu0 0
      %2515 = vmatprep.subr.bf16.mxu0 0
      %2516 = vmatpush1.bf16.msra.mxu0 0
      %2517 = vmatprep.subr.bf16.mxu0 0
      %2518 = vmatpush1.bf16.msra.mxu0 0
      %2519 = vmatprep.subr.bf16.mxu0 0
      %2520 = vmatpush1.bf16.msra.mxu0 0
      %2521 = vmatprep.subr.bf16.mxu0 0
      %2522 = vmatpush1.bf16.msra.mxu0 0
      %2523 = vmatprep.subr.bf16.mxu0 0
      %2524 = vmatpush1.bf16.msra.mxu0 0
      %2525 = vmatprep.subr.bf16.mxu0 0
      %2526 = vmatpush1.bf16.msra.mxu0 0
      %2527 = vmatprep.subr.bf16.mxu0 0
      %2528 = vmatpush1.bf16.msra.mxu0 0
      %2529 = vmatprep.subr.bf16.mxu0 0
      %2530 = vmatpush1.bf16.msra.mxu0 0
      %2531 = vmatprep.subr.bf16.mxu0 0
      %2532 = vmatpush1.bf16.msra.mxu0 0
      %2533 = vmatprep.subr.bf16.mxu0 0
      %2534 = vmatpush1.bf16.msra.mxu0 0
      %2535 = vmatprep.subr.bf16.mxu0 0
      %2536 = vmatpush1.bf16.msra.mxu0 0
      %2537 = vmatprep.subr.bf16.mxu0 0
      %2538 = vmatpush1.bf16.msra.mxu0 0
      %2539 = vmatprep.mubr.bf16.mxu0 0
      %2540 = vmatmul.mubr.bf16.gmra.mrb[0].mxu0 %v2372
      %v2541 = vpop.f32.mrb[0].mxu0
      %v2542 = vadd.f32 %v2498, %v2541
      %v2543 = vpop.f32.mrb[0].mxu0
      %v2544 = vpop.f32.mrb[0].mxu0
      %v2545 = vpop.f32.mrb[0].mxu0
      %2546 = vdwg.mxu0
      %v2547 = vpack.c.bf16 %v2542, %v2542
      %s2548 = scalar_lea.vmem %s306, 44
      %2549 = vst.msk [vmem:[%s2548] sm:$0xf] %vm449, %v2547
      %s2550 = scalar_lea.vmem %s276, 48
      %v2551 = vld [vmem:[%s2550] sm:$0xf]
      %s2552 = scalar_lea.vmem %s282, 48
      %v2553 = vld [vmem:[%s2552] sm:$0xf]
      %s2554 = scalar_lea.vmem %s288, 48
      %v2555 = vld [vmem:[%s2554] sm:$0xf]
      %s2556 = scalar_lea.vmem %s294, 48
      %v2557 = vld [vmem:[%s2556] sm:$0xf]
      %v2559 = vsel %vm313, %v2551, 0
      %v2562 = vsel %vm317, %v2555, 0
      %2564 = vmatprep.subr.bf16.mxu0 0
      %2565 = vmatpush1.bf16.msra.mxu0 %v2562
      %2566 = vmatprep.subr.bf16.mxu0 0
      %2567 = vmatpush1.bf16.msra.mxu0 0
      %2568 = vmatprep.subr.bf16.mxu0 0
      %2569 = vmatpush1.bf16.msra.mxu0 0
      %2570 = vmatprep.subr.bf16.mxu0 0
      %2571 = vmatpush1.bf16.msra.mxu0 0
      %2572 = vmatprep.subr.bf16.mxu0 0
      %2573 = vmatpush1.bf16.msra.mxu0 0
      %2574 = vmatprep.subr.bf16.mxu0 0
      %2575 = vmatpush1.bf16.msra.mxu0 0
      %2576 = vmatprep.subr.bf16.mxu0 0
      %2577 = vmatpush1.bf16.msra.mxu0 0
      %2578 = vmatprep.subr.bf16.mxu0 0
      %2579 = vmatpush1.bf16.msra.mxu0 0
      %2580 = vmatprep.subr.bf16.mxu0 0
      %2581 = vmatpush1.bf16.msra.mxu0 0
      %2582 = vmatprep.subr.bf16.mxu0 0
      %2583 = vmatpush1.bf16.msra.mxu0 0
      %2584 = vmatprep.subr.bf16.mxu0 0
      %2585 = vmatpush1.bf16.msra.mxu0 0
      %2586 = vmatprep.subr.bf16.mxu0 0
      %2587 = vmatpush1.bf16.msra.mxu0 0
      %2588 = vmatprep.subr.bf16.mxu0 0
      %2589 = vmatpush1.bf16.msra.mxu0 0
      %2590 = vmatprep.subr.bf16.mxu0 0
      %2591 = vmatpush1.bf16.msra.mxu0 0
      %2592 = vmatprep.subr.bf16.mxu0 0
      %2593 = vmatpush1.bf16.msra.mxu0 0
      %2594 = vmatprep.subr.bf16.mxu0 0
      %2595 = vmatpush1.bf16.msra.mxu0 0
      %2596 = vmatprep.mubr.bf16.mxu0 0
      %2597 = vmatmul.mubr.bf16.gmra.mrb[0].mxu0 %v2559
      %v2598 = vpop.f32.mrb[0].mxu0
      %v2599 = vadd.f32 0.0, %v2598
      %v2600 = vpop.f32.mrb[0].mxu0
      %v2601 = vpop.f32.mrb[0].mxu0
      %v2602 = vpop.f32.mrb[0].mxu0
      %2603 = vdwg.mxu0
      %v2605 = vsel %vm313, %v2553, 0
      %v2608 = vsel %vm317, %v2557, 0
      %2610 = vmatprep.subr.bf16.mxu0 0
      %2611 = vmatpush1.bf16.msra.mxu0 %v2608
      %2612 = vmatprep.subr.bf16.mxu0 0
      %2613 = vmatpush1.bf16.msra.mxu0 0
      %2614 = vmatprep.subr.bf16.mxu0 0
      %2615 = vmatpush1.bf16.msra.mxu0 0
      %2616 = vmatprep.subr.bf16.mxu0 0
      %2617 = vmatpush1.bf16.msra.mxu0 0
      %2618 = vmatprep.subr.bf16.mxu0 0
      %2619 = vmatpush1.bf16.msra.mxu0 0
      %2620 = vmatprep.subr.bf16.mxu0 0
      %2621 = vmatpush1.bf16.msra.mxu0 0
      %2622 = vmatprep.subr.bf16.mxu0 0
      %2623 = vmatpush1.bf16.msra.mxu0 0
      %2624 = vmatprep.subr.bf16.mxu0 0
      %2625 = vmatpush1.bf16.msra.mxu0 0
      %2626 = vmatprep.subr.bf16.mxu0 0
      %2627 = vmatpush1.bf16.msra.mxu0 0
      %2628 = vmatprep.subr.bf16.mxu0 0
      %2629 = vmatpush1.bf16.msra.mxu0 0
      %2630 = vmatprep.subr.bf16.mxu0 0
      %2631 = vmatpush1.bf16.msra.mxu0 0
      %2632 = vmatprep.subr.bf16.mxu0 0
      %2633 = vmatpush1.bf16.msra.mxu0 0
      %2634 = vmatprep.subr.bf16.mxu0 0
      %2635 = vmatpush1.bf16.msra.mxu0 0
      %2636 = vmatprep.subr.bf16.mxu0 0
      %2637 = vmatpush1.bf16.msra.mxu0 0
      %2638 = vmatprep.subr.bf16.mxu0 0
      %2639 = vmatpush1.bf16.msra.mxu0 0
      %2640 = vmatprep.subr.bf16.mxu0 0
      %2641 = vmatpush1.bf16.msra.mxu0 0
      %2642 = vmatprep.mubr.bf16.mxu0 0
      %2643 = vmatmul.mubr.bf16.gmra.mrb[0].mxu0 %v2605
      %v2644 = vpop.f32.mrb[0].mxu0
      %v2645 = vadd.f32 0.0, %v2644
      %v2646 = vpop.f32.mrb[0].mxu0
      %v2647 = vpop.f32.mrb[0].mxu0
      %v2648 = vpop.f32.mrb[0].mxu0
      %2649 = vdwg.mxu0
      %2650 = vmatprep.subr.bf16.mxu0 0
      %2651 = vmatpush1.bf16.msra.mxu0 %v2562
      %2652 = vmatprep.subr.bf16.mxu0 0
      %2653 = vmatpush1.bf16.msra.mxu0 0
      %2654 = vmatprep.subr.bf16.mxu0 0
      %2655 = vmatpush1.bf16.msra.mxu0 0
      %2656 = vmatprep.subr.bf16.mxu0 0
      %2657 = vmatpush1.bf16.msra.mxu0 0
      %2658 = vmatprep.subr.bf16.mxu0 0
      %2659 = vmatpush1.bf16.msra.mxu0 0
      %2660 = vmatprep.subr.bf16.mxu0 0
      %2661 = vmatpush1.bf16.msra.mxu0 0
      %2662 = vmatprep.subr.bf16.mxu0 0
      %2663 = vmatpush1.bf16.msra.mxu0 0
      %2664 = vmatprep.subr.bf16.mxu0 0
      %2665 = vmatpush1.bf16.msra.mxu0 0
      %2666 = vmatprep.subr.bf16.mxu0 0
      %2667 = vmatpush1.bf16.msra.mxu0 0
      %2668 = vmatprep.subr.bf16.mxu0 0
      %2669 = vmatpush1.bf16.msra.mxu0 0
      %2670 = vmatprep.subr.bf16.mxu0 0
      %2671 = vmatpush1.bf16.msra.mxu0 0
      %2672 = vmatprep.subr.bf16.mxu0 0
      %2673 = vmatpush1.bf16.msra.mxu0 0
      %2674 = vmatprep.subr.bf16.mxu0 0
      %2675 = vmatpush1.bf16.msra.mxu0 0
      %2676 = vmatprep.subr.bf16.mxu0 0
      %2677 = vmatpush1.bf16.msra.mxu0 0
      %2678 = vmatprep.subr.bf16.mxu0 0
      %2679 = vmatpush1.bf16.msra.mxu0 0
      %2680 = vmatprep.subr.bf16.mxu0 0
      %2681 = vmatpush1.bf16.msra.mxu0 0
      %2682 = vmatprep.mubr.bf16.mxu0 0
      %2683 = vmatmul.mubr.bf16.gmra.mrb[0].mxu0 %v2605
      %v2684 = vpop.f32.mrb[0].mxu0
      %v2685 = vadd.f32 0.0, %v2684
      %v2686 = vpop.f32.mrb[0].mxu0
      %v2687 = vpop.f32.mrb[0].mxu0
      %v2688 = vpop.f32.mrb[0].mxu0
      %2689 = vdwg.mxu0
      %v2690 = vsub.f32 %v2599, %v2645
      %v2691 = vpack.c.bf16 %v2690, %v2690
      %s2692 = scalar_lea.vmem %s300, 48
      %2693 = vst.msk [vmem:[%s2692] sm:$0xf] %vm449, %v2691
      %2694 = vmatprep.subr.bf16.mxu0 0
      %2695 = vmatpush1.bf16.msra.mxu0 %v2608
      %2696 = vmatprep.subr.bf16.mxu0 0
      %2697 = vmatpush1.bf16.msra.mxu0 0
      %2698 = vmatprep.subr.bf16.mxu0 0
      %2699 = vmatpush1.bf16.msra.mxu0 0
      %2700 = vmatprep.subr.bf16.mxu0 0
      %2701 = vmatpush1.bf16.msra.mxu0 0
      %2702 = vmatprep.subr.bf16.mxu0 0
      %2703 = vmatpush1.bf16.msra.mxu0 0
      %2704 = vmatprep.subr.bf16.mxu0 0
      %2705 = vmatpush1.bf16.msra.mxu0 0
      %2706 = vmatprep.subr.bf16.mxu0 0
      %2707 = vmatpush1.bf16.msra.mxu0 0
      %2708 = vmatprep.subr.bf16.mxu0 0
      %2709 = vmatpush1.bf16.msra.mxu0 0
      %2710 = vmatprep.subr.bf16.mxu0 0
      %2711 = vmatpush1.bf16.msra.mxu0 0
      %2712 = vmatprep.subr.bf16.mxu0 0
      %2713 = vmatpush1.bf16.msra.mxu0 0
      %2714 = vmatprep.subr.bf16.mxu0 0
      %2715 = vmatpush1.bf16.msra.mxu0 0
      %2716 = vmatprep.subr.bf16.mxu0 0
      %2717 = vmatpush1.bf16.msra.mxu0 0
      %2718 = vmatprep.subr.bf16.mxu0 0
      %2719 = vmatpush1.bf16.msra.mxu0 0
      %2720 = vmatprep.subr.bf16.mxu0 0
      %2721 = vmatpush1.bf16.msra.mxu0 0
      %2722 = vmatprep.subr.bf16.mxu0 0
      %2723 = vmatpush1.bf16.msra.mxu0 0
      %2724 = vmatprep.subr.bf16.mxu0 0
      %2725 = vmatpush1.bf16.msra.mxu0 0
      %2726 = vmatprep.mubr.bf16.mxu0 0
      %2727 = vmatmul.mubr.bf16.gmra.mrb[0].mxu0 %v2559
      %v2728 = vpop.f32.mrb[0].mxu0
      %v2729 = vadd.f32 %v2685, %v2728
      %v2730 = vpop.f32.mrb[0].mxu0
      %v2731 = vpop.f32.mrb[0].mxu0
      %v2732 = vpop.f32.mrb[0].mxu0
      %2733 = vdwg.mxu0
      %v2734 = vpack.c.bf16 %v2729, %v2729
      %s2735 = scalar_lea.vmem %s306, 48
      %2736 = vst.msk [vmem:[%s2735] sm:$0xf] %vm449, %v2734
      %s2737 = scalar_lea.vmem %s276, 52
      %v2738 = vld [vmem:[%s2737] sm:$0xf]
      %s2739 = scalar_lea.vmem %s282, 52
      %v2740 = vld [vmem:[%s2739] sm:$0xf]
      %s2741 = scalar_lea.vmem %s288, 52
      %v2742 = vld [vmem:[%s2741] sm:$0xf]
      %s2743 = scalar_lea.vmem %s294, 52
      %v2744 = vld [vmem:[%s2743] sm:$0xf]
      %v2746 = vsel %vm313, %v2738, 0
      %v2749 = vsel %vm317, %v2742, 0
      %2751 = vmatprep.subr.bf16.mxu0 0
      %2752 = vmatpush1.bf16.msra.mxu0 %v2749
      %2753 = vmatprep.subr.bf16.mxu0 0
      %2754 = vmatpush1.bf16.msra.mxu0 0
      %2755 = vmatprep.subr.bf16.mxu0 0
      %2756 = vmatpush1.bf16.msra.mxu0 0
      %2757 = vmatprep.subr.bf16.mxu0 0
      %2758 = vmatpush1.bf16.msra.mxu0 0
      %2759 = vmatprep.subr.bf16.mxu0 0
      %2760 = vmatpush1.bf16.msra.mxu0 0
      %2761 = vmatprep.subr.bf16.mxu0 0
      %2762 = vmatpush1.bf16.msra.mxu0 0
      %2763 = vmatprep.subr.bf16.mxu0 0
      %2764 = vmatpush1.bf16.msra.mxu0 0
      %2765 = vmatprep.subr.bf16.mxu0 0
      %2766 = vmatpush1.bf16.msra.mxu0 0
      %2767 = vmatprep.subr.bf16.mxu0 0
      %2768 = vmatpush1.bf16.msra.mxu0 0
      %2769 = vmatprep.subr.bf16.mxu0 0
      %2770 = vmatpush1.bf16.msra.mxu0 0
      %2771 = vmatprep.subr.bf16.mxu0 0
      %2772 = vmatpush1.bf16.msra.mxu0 0
      %2773 = vmatprep.subr.bf16.mxu0 0
      %2774 = vmatpush1.bf16.msra.mxu0 0
      %2775 = vmatprep.subr.bf16.mxu0 0
      %2776 = vmatpush1.bf16.msra.mxu0 0
      %2777 = vmatprep.subr.bf16.mxu0 0
      %2778 = vmatpush1.bf16.msra.mxu0 0
      %2779 = vmatprep.subr.bf16.mxu0 0
      %2780 = vmatpush1.bf16.msra.mxu0 0
      %2781 = vmatprep.subr.bf16.mxu0 0
      %2782 = vmatpush1.bf16.msra.mxu0 0
      %2783 = vmatprep.mubr.bf16.mxu0 0
      %2784 = vmatmul.mubr.bf16.gmra.mrb[0].mxu0 %v2746
      %v2785 = vpop.f32.mrb[0].mxu0
      %v2786 = vadd.f32 0.0, %v2785
      %v2787 = vpop.f32.mrb[0].mxu0
      %v2788 = vpop.f32.mrb[0].mxu0
      %v2789 = vpop.f32.mrb[0].mxu0
      %2790 = vdwg.mxu0
      %v2792 = vsel %vm313, %v2740, 0
      %v2795 = vsel %vm317, %v2744, 0
      %2797 = vmatprep.subr.bf16.mxu0 0
      %2798 = vmatpush1.bf16.msra.mxu0 %v2795
      %2799 = vmatprep.subr.bf16.mxu0 0
      %2800 = vmatpush1.bf16.msra.mxu0 0
      %2801 = vmatprep.subr.bf16.mxu0 0
      %2802 = vmatpush1.bf16.msra.mxu0 0
      %2803 = vmatprep.subr.bf16.mxu0 0
      %2804 = vmatpush1.bf16.msra.mxu0 0
      %2805 = vmatprep.subr.bf16.mxu0 0
      %2806 = vmatpush1.bf16.msra.mxu0 0
      %2807 = vmatprep.subr.bf16.mxu0 0
      %2808 = vmatpush1.bf16.msra.mxu0 0
      %2809 = vmatprep.subr.bf16.mxu0 0
      %2810 = vmatpush1.bf16.msra.mxu0 0
      %2811 = vmatprep.subr.bf16.mxu0 0
      %2812 = vmatpush1.bf16.msra.mxu0 0
      %2813 = vmatprep.subr.bf16.mxu0 0
      %2814 = vmatpush1.bf16.msra.mxu0 0
      %2815 = vmatprep.subr.bf16.mxu0 0
      %2816 = vmatpush1.bf16.msra.mxu0 0
      %2817 = vmatprep.subr.bf16.mxu0 0
      %2818 = vmatpush1.bf16.msra.mxu0 0
      %2819 = vmatprep.subr.bf16.mxu0 0
      %2820 = vmatpush1.bf16.msra.mxu0 0
      %2821 = vmatprep.subr.bf16.mxu0 0
      %2822 = vmatpush1.bf16.msra.mxu0 0
      %2823 = vmatprep.subr.bf16.mxu0 0
      %2824 = vmatpush1.bf16.msra.mxu0 0
      %2825 = vmatprep.subr.bf16.mxu0 0
      %2826 = vmatpush1.bf16.msra.mxu0 0
      %2827 = vmatprep.subr.bf16.mxu0 0
      %2828 = vmatpush1.bf16.msra.mxu0 0
      %2829 = vmatprep.mubr.bf16.mxu0 0
      %2830 = vmatmul.mubr.bf16.gmra.mrb[0].mxu0 %v2792
      %v2831 = vpop.f32.mrb[0].mxu0
      %v2832 = vadd.f32 0.0, %v2831
      %v2833 = vpop.f32.mrb[0].mxu0
      %v2834 = vpop.f32.mrb[0].mxu0
      %v2835 = vpop.f32.mrb[0].mxu0
      %2836 = vdwg.mxu0
      %2837 = vmatprep.subr.bf16.mxu0 0
      %2838 = vmatpush1.bf16.msra.mxu0 %v2749
      %2839 = vmatprep.subr.bf16.mxu0 0
      %2840 = vmatpush1.bf16.msra.mxu0 0
      %2841 = vmatprep.subr.bf16.mxu0 0
      %2842 = vmatpush1.bf16.msra.mxu0 0
      %2843 = vmatprep.subr.bf16.mxu0 0
      %2844 = vmatpush1.bf16.msra.mxu0 0
      %2845 = vmatprep.subr.bf16.mxu0 0
      %2846 = vmatpush1.bf16.msra.mxu0 0
      %2847 = vmatprep.subr.bf16.mxu0 0
      %2848 = vmatpush1.bf16.msra.mxu0 0
      %2849 = vmatprep.subr.bf16.mxu0 0
      %2850 = vmatpush1.bf16.msra.mxu0 0
      %2851 = vmatprep.subr.bf16.mxu0 0
      %2852 = vmatpush1.bf16.msra.mxu0 0
      %2853 = vmatprep.subr.bf16.mxu0 0
      %2854 = vmatpush1.bf16.msra.mxu0 0
      %2855 = vmatprep.subr.bf16.mxu0 0
      %2856 = vmatpush1.bf16.msra.mxu0 0
      %2857 = vmatprep.subr.bf16.mxu0 0
      %2858 = vmatpush1.bf16.msra.mxu0 0
      %2859 = vmatprep.subr.bf16.mxu0 0
      %2860 = vmatpush1.bf16.msra.mxu0 0
      %2861 = vmatprep.subr.bf16.mxu0 0
      %2862 = vmatpush1.bf16.msra.mxu0 0
      %2863 = vmatprep.subr.bf16.mxu0 0
      %2864 = vmatpush1.bf16.msra.mxu0 0
      %2865 = vmatprep.subr.bf16.mxu0 0
      %2866 = vmatpush1.bf16.msra.mxu0 0
      %2867 = vmatprep.subr.bf16.mxu0 0
      %2868 = vmatpush1.bf16.msra.mxu0 0
      %2869 = vmatprep.mubr.bf16.mxu0 0
      %2870 = vmatmul.mubr.bf16.gmra.mrb[0].mxu0 %v2792
      %v2871 = vpop.f32.mrb[0].mxu0
      %v2872 = vadd.f32 0.0, %v2871
      %v2873 = vpop.f32.mrb[0].mxu0
      %v2874 = vpop.f32.mrb[0].mxu0
      %v2875 = vpop.f32.mrb[0].mxu0
      %2876 = vdwg.mxu0
      %v2877 = vsub.f32 %v2786, %v2832
      %v2878 = vpack.c.bf16 %v2877, %v2877
      %s2879 = scalar_lea.vmem %s300, 52
      %2880 = vst.msk [vmem:[%s2879] sm:$0xf] %vm449, %v2878
      %2881 = vmatprep.subr.bf16.mxu0 0
      %2882 = vmatpush1.bf16.msra.mxu0 %v2795
      %2883 = vmatprep.subr.bf16.mxu0 0
      %2884 = vmatpush1.bf16.msra.mxu0 0
      %2885 = vmatprep.subr.bf16.mxu0 0
      %2886 = vmatpush1.bf16.msra.mxu0 0
      %2887 = vmatprep.subr.bf16.mxu0 0
      %2888 = vmatpush1.bf16.msra.mxu0 0
      %2889 = vmatprep.subr.bf16.mxu0 0
      %2890 = vmatpush1.bf16.msra.mxu0 0
      %2891 = vmatprep.subr.bf16.mxu0 0
      %2892 = vmatpush1.bf16.msra.mxu0 0
      %2893 = vmatprep.subr.bf16.mxu0 0
      %2894 = vmatpush1.bf16.msra.mxu0 0
      %2895 = vmatprep.subr.bf16.mxu0 0
      %2896 = vmatpush1.bf16.msra.mxu0 0
      %2897 = vmatprep.subr.bf16.mxu0 0
      %2898 = vmatpush1.bf16.msra.mxu0 0
      %2899 = vmatprep.subr.bf16.mxu0 0
      %2900 = vmatpush1.bf16.msra.mxu0 0
      %2901 = vmatprep.subr.bf16.mxu0 0
      %2902 = vmatpush1.bf16.msra.mxu0 0
      %2903 = vmatprep.subr.bf16.mxu0 0
      %2904 = vmatpush1.bf16.msra.mxu0 0
      %2905 = vmatprep.subr.bf16.mxu0 0
      %2906 = vmatpush1.bf16.msra.mxu0 0
      %2907 = vmatprep.subr.bf16.mxu0 0
      %2908 = vmatpush1.bf16.msra.mxu0 0
      %2909 = vmatprep.subr.bf16.mxu0 0
      %2910 = vmatpush1.bf16.msra.mxu0 0
      %2911 = vmatprep.subr.bf16.mxu0 0
      %2912 = vmatpush1.bf16.msra.mxu0 0
      %2913 = vmatprep.mubr.bf16.mxu0 0
      %2914 = vmatmul.mubr.bf16.gmra.mrb[0].mxu0 %v2746
      %v2915 = vpop.f32.mrb[0].mxu0
      %v2916 = vadd.f32 %v2872, %v2915
      %v2917 = vpop.f32.mrb[0].mxu0
      %v2918 = vpop.f32.mrb[0].mxu0
      %v2919 = vpop.f32.mrb[0].mxu0
      %2920 = vdwg.mxu0
      %v2921 = vpack.c.bf16 %v2916, %v2916
      %s2922 = scalar_lea.vmem %s306, 52
      %2923 = vst.msk [vmem:[%s2922] sm:$0xf] %vm449, %v2921
      %s2924 = scalar_lea.vmem %s276, 56
      %v2925 = vld [vmem:[%s2924] sm:$0xf]
      %s2926 = scalar_lea.vmem %s282, 56
      %v2927 = vld [vmem:[%s2926] sm:$0xf]
      %s2928 = scalar_lea.vmem %s288, 56
      %v2929 = vld [vmem:[%s2928] sm:$0xf]
      %s2930 = scalar_lea.vmem %s294, 56
      %v2931 = vld [vmem:[%s2930] sm:$0xf]
      %v2933 = vsel %vm313, %v2925, 0
      %v2936 = vsel %vm317, %v2929, 0
      %2938 = vmatprep.subr.bf16.mxu0 0
      %2939 = vmatpush1.bf16.msra.mxu0 %v2936
      %2940 = vmatprep.subr.bf16.mxu0 0
      %2941 = vmatpush1.bf16.msra.mxu0 0
      %2942 = vmatprep.subr.bf16.mxu0 0
      %2943 = vmatpush1.bf16.msra.mxu0 0
      %2944 = vmatprep.subr.bf16.mxu0 0
      %2945 = vmatpush1.bf16.msra.mxu0 0
      %2946 = vmatprep.subr.bf16.mxu0 0
      %2947 = vmatpush1.bf16.msra.mxu0 0
      %2948 = vmatprep.subr.bf16.mxu0 0
      %2949 = vmatpush1.bf16.msra.mxu0 0
      %2950 = vmatprep.subr.bf16.mxu0 0
      %2951 = vmatpush1.bf16.msra.mxu0 0
      %2952 = vmatprep.subr.bf16.mxu0 0
      %2953 = vmatpush1.bf16.msra.mxu0 0
      %2954 = vmatprep.subr.bf16.mxu0 0
      %2955 = vmatpush1.bf16.msra.mxu0 0
      %2956 = vmatprep.subr.bf16.mxu0 0
      %2957 = vmatpush1.bf16.msra.mxu0 0
      %2958 = vmatprep.subr.bf16.mxu0 0
      %2959 = vmatpush1.bf16.msra.mxu0 0
      %2960 = vmatprep.subr.bf16.mxu0 0
      %2961 = vmatpush1.bf16.msra.mxu0 0
      %2962 = vmatprep.subr.bf16.mxu0 0
      %2963 = vmatpush1.bf16.msra.mxu0 0
      %2964 = vmatprep.subr.bf16.mxu0 0
      %2965 = vmatpush1.bf16.msra.mxu0 0
      %2966 = vmatprep.subr.bf16.mxu0 0
      %2967 = vmatpush1.bf16.msra.mxu0 0
      %2968 = vmatprep.subr.bf16.mxu0 0
      %2969 = vmatpush1.bf16.msra.mxu0 0
      %2970 = vmatprep.mubr.bf16.mxu0 0
      %2971 = vmatmul.mubr.bf16.gmra.mrb[0].mxu0 %v2933
      %v2972 = vpop.f32.mrb[0].mxu0
      %v2973 = vadd.f32 0.0, %v2972
      %v2974 = vpop.f32.mrb[0].mxu0
      %v2975 = vpop.f32.mrb[0].mxu0
      %v2976 = vpop.f32.mrb[0].mxu0
      %2977 = vdwg.mxu0
      %v2979 = vsel %vm313, %v2927, 0
      %v2982 = vsel %vm317, %v2931, 0
      %2984 = vmatprep.subr.bf16.mxu0 0
      %2985 = vmatpush1.bf16.msra.mxu0 %v2982
      %2986 = vmatprep.subr.bf16.mxu0 0
      %2987 = vmatpush1.bf16.msra.mxu0 0
      %2988 = vmatprep.subr.bf16.mxu0 0
      %2989 = vmatpush1.bf16.msra.mxu0 0
      %2990 = vmatprep.subr.bf16.mxu0 0
      %2991 = vmatpush1.bf16.msra.mxu0 0
      %2992 = vmatprep.subr.bf16.mxu0 0
      %2993 = vmatpush1.bf16.msra.mxu0 0
      %2994 = vmatprep.subr.bf16.mxu0 0
      %2995 = vmatpush1.bf16.msra.mxu0 0
      %2996 = vmatprep.subr.bf16.mxu0 0
      %2997 = vmatpush1.bf16.msra.mxu0 0
      %2998 = vmatprep.subr.bf16.mxu0 0
      %2999 = vmatpush1.bf16.msra.mxu0 0
      %3000 = vmatprep.subr.bf16.mxu0 0
      %3001 = vmatpush1.bf16.msra.mxu0 0
      %3002 = vmatprep.subr.bf16.mxu0 0
      %3003 = vmatpush1.bf16.msra.mxu0 0
      %3004 = vmatprep.subr.bf16.mxu0 0
      %3005 = vmatpush1.bf16.msra.mxu0 0
      %3006 = vmatprep.subr.bf16.mxu0 0
      %3007 = vmatpush1.bf16.msra.mxu0 0
      %3008 = vmatprep.subr.bf16.mxu0 0
      %3009 = vmatpush1.bf16.msra.mxu0 0
      %3010 = vmatprep.subr.bf16.mxu0 0
      %3011 = vmatpush1.bf16.msra.mxu0 0
      %3012 = vmatprep.subr.bf16.mxu0 0
      %3013 = vmatpush1.bf16.msra.mxu0 0
      %3014 = vmatprep.subr.bf16.mxu0 0
      %3015 = vmatpush1.bf16.msra.mxu0 0
      %3016 = vmatprep.mubr.bf16.mxu0 0
      %3017 = vmatmul.mubr.bf16.gmra.mrb[0].mxu0 %v2979
      %v3018 = vpop.f32.mrb[0].mxu0
      %v3019 = vadd.f32 0.0, %v3018
      %v3020 = vpop.f32.mrb[0].mxu0
      %v3021 = vpop.f32.mrb[0].mxu0
      %v3022 = vpop.f32.mrb[0].mxu0
      %3023 = vdwg.mxu0
      %3024 = vmatprep.subr.bf16.mxu0 0
      %3025 = vmatpush1.bf16.msra.mxu0 %v2936
      %3026 = vmatprep.subr.bf16.mxu0 0
      %3027 = vmatpush1.bf16.msra.mxu0 0
      %3028 = vmatprep.subr.bf16.mxu0 0
      %3029 = vmatpush1.bf16.msra.mxu0 0
      %3030 = vmatprep.subr.bf16.mxu0 0
      %3031 = vmatpush1.bf16.msra.mxu0 0
      %3032 = vmatprep.subr.bf16.mxu0 0
      %3033 = vmatpush1.bf16.msra.mxu0 0
      %3034 = vmatprep.subr.bf16.mxu0 0
      %3035 = vmatpush1.bf16.msra.mxu0 0
      %3036 = vmatprep.subr.bf16.mxu0 0
      %3037 = vmatpush1.bf16.msra.mxu0 0
      %3038 = vmatprep.subr.bf16.mxu0 0
      %3039 = vmatpush1.bf16.msra.mxu0 0
      %3040 = vmatprep.subr.bf16.mxu0 0
      %3041 = vmatpush1.bf16.msra.mxu0 0
      %3042 = vmatprep.subr.bf16.mxu0 0
      %3043 = vmatpush1.bf16.msra.mxu0 0
      %3044 = vmatprep.subr.bf16.mxu0 0
      %3045 = vmatpush1.bf16.msra.mxu0 0
      %3046 = vmatprep.subr.bf16.mxu0 0
      %3047 = vmatpush1.bf16.msra.mxu0 0
      %3048 = vmatprep.subr.bf16.mxu0 0
      %3049 = vmatpush1.bf16.msra.mxu0 0
      %3050 = vmatprep.subr.bf16.mxu0 0
      %3051 = vmatpush1.bf16.msra.mxu0 0
      %3052 = vmatprep.subr.bf16.mxu0 0
      %3053 = vmatpush1.bf16.msra.mxu0 0
      %3054 = vmatprep.subr.bf16.mxu0 0
      %3055 = vmatpush1.bf16.msra.mxu0 0
      %3056 = vmatprep.mubr.bf16.mxu0 0
      %3057 = vmatmul.mubr.bf16.gmra.mrb[0].mxu0 %v2979
      %v3058 = vpop.f32.mrb[0].mxu0
      %v3059 = vadd.f32 0.0, %v3058
      %v3060 = vpop.f32.mrb[0].mxu0
      %v3061 = vpop.f32.mrb[0].mxu0
      %v3062 = vpop.f32.mrb[0].mxu0
      %3063 = vdwg.mxu0
      %v3064 = vsub.f32 %v2973, %v3019
      %v3065 = vpack.c.bf16 %v3064, %v3064
      %s3066 = scalar_lea.vmem %s300, 56
      %3067 = vst.msk [vmem:[%s3066] sm:$0xf] %vm449, %v3065
      %3068 = vmatprep.subr.bf16.mxu0 0
      %3069 = vmatpush1.bf16.msra.mxu0 %v2982
      %3070 = vmatprep.subr.bf16.mxu0 0
      %3071 = vmatpush1.bf16.msra.mxu0 0
      %3072 = vmatprep.subr.bf16.mxu0 0
      %3073 = vmatpush1.bf16.msra.mxu0 0
      %3074 = vmatprep.subr.bf16.mxu0 0
      %3075 = vmatpush1.bf16.msra.mxu0 0
      %3076 = vmatprep.subr.bf16.mxu0 0
      %3077 = vmatpush1.bf16.msra.mxu0 0
      %3078 = vmatprep.subr.bf16.mxu0 0
      %3079 = vmatpush1.bf16.msra.mxu0 0
      %3080 = vmatprep.subr.bf16.mxu0 0
      %3081 = vmatpush1.bf16.msra.mxu0 0
      %3082 = vmatprep.subr.bf16.mxu0 0
      %3083 = vmatpush1.bf16.msra.mxu0 0
      %3084 = vmatprep.subr.bf16.mxu0 0
      %3085 = vmatpush1.bf16.msra.mxu0 0
      %3086 = vmatprep.subr.bf16.mxu0 0
      %3087 = vmatpush1.bf16.msra.mxu0 0
      %3088 = vmatprep.subr.bf16.mxu0 0
      %3089 = vmatpush1.bf16.msra.mxu0 0
      %3090 = vmatprep.subr.bf16.mxu0 0
      %3091 = vmatpush1.bf16.msra.mxu0 0
      %3092 = vmatprep.subr.bf16.mxu0 0
      %3093 = vmatpush1.bf16.msra.mxu0 0
      %3094 = vmatprep.subr.bf16.mxu0 0
      %3095 = vmatpush1.bf16.msra.mxu0 0
      %3096 = vmatprep.subr.bf16.mxu0 0
      %3097 = vmatpush1.bf16.msra.mxu0 0
      %3098 = vmatprep.subr.bf16.mxu0 0
      %3099 = vmatpush1.bf16.msra.mxu0 0
      %3100 = vmatprep.mubr.bf16.mxu0 0
      %3101 = vmatmul.mubr.bf16.gmra.mrb[0].mxu0 %v2933
      %v3102 = vpop.f32.mrb[0].mxu0
      %v3103 = vadd.f32 %v3059, %v3102
      %v3104 = vpop.f32.mrb[0].mxu0
      %v3105 = vpop.f32.mrb[0].mxu0
      %v3106 = vpop.f32.mrb[0].mxu0
      %3107 = vdwg.mxu0
      %v3108 = vpack.c.bf16 %v3103, %v3103
      %s3109 = scalar_lea.vmem %s306, 56
      %3110 = vst.msk [vmem:[%s3109] sm:$0xf] %vm449, %v3108
      %s3111 = scalar_lea.vmem %s276, 60
      %v3112 = vld [vmem:[%s3111] sm:$0xf]
      %s3113 = scalar_lea.vmem %s282, 60
      %v3114 = vld [vmem:[%s3113] sm:$0xf]
      %s3115 = scalar_lea.vmem %s288, 60
      %v3116 = vld [vmem:[%s3115] sm:$0xf]
      %s3117 = scalar_lea.vmem %s294, 60
      %v3118 = vld [vmem:[%s3117] sm:$0xf]
      %v3120 = vsel %vm313, %v3112, 0
      %v3123 = vsel %vm317, %v3116, 0
      %3125 = vmatprep.subr.bf16.mxu0 0
      %3126 = vmatpush1.bf16.msra.mxu0 %v3123
      %3127 = vmatprep.subr.bf16.mxu0 0
      %3128 = vmatpush1.bf16.msra.mxu0 0
      %3129 = vmatprep.subr.bf16.mxu0 0
      %3130 = vmatpush1.bf16.msra.mxu0 0
      %3131 = vmatprep.subr.bf16.mxu0 0
      %3132 = vmatpush1.bf16.msra.mxu0 0
      %3133 = vmatprep.subr.bf16.mxu0 0
      %3134 = vmatpush1.bf16.msra.mxu0 0
      %3135 = vmatprep.subr.bf16.mxu0 0
      %3136 = vmatpush1.bf16.msra.mxu0 0
      %3137 = vmatprep.subr.bf16.mxu0 0
      %3138 = vmatpush1.bf16.msra.mxu0 0
      %3139 = vmatprep.subr.bf16.mxu0 0
      %3140 = vmatpush1.bf16.msra.mxu0 0
      %3141 = vmatprep.subr.bf16.mxu0 0
      %3142 = vmatpush1.bf16.msra.mxu0 0
      %3143 = vmatprep.subr.bf16.mxu0 0
      %3144 = vmatpush1.bf16.msra.mxu0 0
      %3145 = vmatprep.subr.bf16.mxu0 0
      %3146 = vmatpush1.bf16.msra.mxu0 0
      %3147 = vmatprep.subr.bf16.mxu0 0
      %3148 = vmatpush1.bf16.msra.mxu0 0
      %3149 = vmatprep.subr.bf16.mxu0 0
      %3150 = vmatpush1.bf16.msra.mxu0 0
      %3151 = vmatprep.subr.bf16.mxu0 0
      %3152 = vmatpush1.bf16.msra.mxu0 0
      %3153 = vmatprep.subr.bf16.mxu0 0
      %3154 = vmatpush1.bf16.msra.mxu0 0
      %3155 = vmatprep.subr.bf16.mxu0 0
      %3156 = vmatpush1.bf16.msra.mxu0 0
      %3157 = vmatprep.mubr.bf16.mxu0 0
      %3158 = vmatmul.mubr.bf16.gmra.mrb[0].mxu0 %v3120
      %v3159 = vpop.f32.mrb[0].mxu0
      %v3160 = vadd.f32 0.0, %v3159
      %v3161 = vpop.f32.mrb[0].mxu0
      %v3162 = vpop.f32.mrb[0].mxu0
      %v3163 = vpop.f32.mrb[0].mxu0
      %3164 = vdwg.mxu0
      %v3166 = vsel %vm313, %v3114, 0
      %v3169 = vsel %vm317, %v3118, 0
      %3171 = vmatprep.subr.bf16.mxu0 0
      %3172 = vmatpush1.bf16.msra.mxu0 %v3169
      %3173 = vmatprep.subr.bf16.mxu0 0
      %3174 = vmatpush1.bf16.msra.mxu0 0
      %3175 = vmatprep.subr.bf16.mxu0 0
      %3176 = vmatpush1.bf16.msra.mxu0 0
      %3177 = vmatprep.subr.bf16.mxu0 0
      %3178 = vmatpush1.bf16.msra.mxu0 0
      %3179 = vmatprep.subr.bf16.mxu0 0
      %3180 = vmatpush1.bf16.msra.mxu0 0
      %3181 = vmatprep.subr.bf16.mxu0 0
      %3182 = vmatpush1.bf16.msra.mxu0 0
      %3183 = vmatprep.subr.bf16.mxu0 0
      %3184 = vmatpush1.bf16.msra.mxu0 0
      %3185 = vmatprep.subr.bf16.mxu0 0
      %3186 = vmatpush1.bf16.msra.mxu0 0
      %3187 = vmatprep.subr.bf16.mxu0 0
      %3188 = vmatpush1.bf16.msra.mxu0 0
      %3189 = vmatprep.subr.bf16.mxu0 0
      %3190 = vmatpush1.bf16.msra.mxu0 0
      %3191 = vmatprep.subr.bf16.mxu0 0
      %3192 = vmatpush1.bf16.msra.mxu0 0
      %3193 = vmatprep.subr.bf16.mxu0 0
      %3194 = vmatpush1.bf16.msra.mxu0 0
      %3195 = vmatprep.subr.bf16.mxu0 0
      %3196 = vmatpush1.bf16.msra.mxu0 0
      %3197 = vmatprep.subr.bf16.mxu0 0
      %3198 = vmatpush1.bf16.msra.mxu0 0
      %3199 = vmatprep.subr.bf16.mxu0 0
      %3200 = vmatpush1.bf16.msra.mxu0 0
      %3201 = vmatprep.subr.bf16.mxu0 0
      %3202 = vmatpush1.bf16.msra.mxu0 0
      %3203 = vmatprep.mubr.bf16.mxu0 0
      %3204 = vmatmul.mubr.bf16.gmra.mrb[0].mxu0 %v3166
      %v3205 = vpop.f32.mrb[0].mxu0
      %v3206 = vadd.f32 0.0, %v3205
      %v3207 = vpop.f32.mrb[0].mxu0
      %v3208 = vpop.f32.mrb[0].mxu0
      %v3209 = vpop.f32.mrb[0].mxu0
      %3210 = vdwg.mxu0
      %3211 = vmatprep.subr.bf16.mxu0 0
      %3212 = vmatpush1.bf16.msra.mxu0 %v3123
      %3213 = vmatprep.subr.bf16.mxu0 0
      %3214 = vmatpush1.bf16.msra.mxu0 0
      %3215 = vmatprep.subr.bf16.mxu0 0
      %3216 = vmatpush1.bf16.msra.mxu0 0
      %3217 = vmatprep.subr.bf16.mxu0 0
      %3218 = vmatpush1.bf16.msra.mxu0 0
      %3219 = vmatprep.subr.bf16.mxu0 0
      %3220 = vmatpush1.bf16.msra.mxu0 0
      %3221 = vmatprep.subr.bf16.mxu0 0
      %3222 = vmatpush1.bf16.msra.mxu0 0
      %3223 = vmatprep.subr.bf16.mxu0 0
      %3224 = vmatpush1.bf16.msra.mxu0 0
      %3225 = vmatprep.subr.bf16.mxu0 0
      %3226 = vmatpush1.bf16.msra.mxu0 0
      %3227 = vmatprep.subr.bf16.mxu0 0
      %3228 = vmatpush1.bf16.msra.mxu0 0
      %3229 = vmatprep.subr.bf16.mxu0 0
      %3230 = vmatpush1.bf16.msra.mxu0 0
      %3231 = vmatprep.subr.bf16.mxu0 0
      %3232 = vmatpush1.bf16.msra.mxu0 0
      %3233 = vmatprep.subr.bf16.mxu0 0
      %3234 = vmatpush1.bf16.msra.mxu0 0
      %3235 = vmatprep.subr.bf16.mxu0 0
      %3236 = vmatpush1.bf16.msra.mxu0 0
      %3237 = vmatprep.subr.bf16.mxu0 0
      %3238 = vmatpush1.bf16.msra.mxu0 0
      %3239 = vmatprep.subr.bf16.mxu0 0
      %3240 = vmatpush1.bf16.msra.mxu0 0
      %3241 = vmatprep.subr.bf16.mxu0 0
      %3242 = vmatpush1.bf16.msra.mxu0 0
      %3243 = vmatprep.mubr.bf16.mxu0 0
      %3244 = vmatmul.mubr.bf16.gmra.mrb[0].mxu0 %v3166
      %v3245 = vpop.f32.mrb[0].mxu0
      %v3246 = vadd.f32 0.0, %v3245
      %v3247 = vpop.f32.mrb[0].mxu0
      %v3248 = vpop.f32.mrb[0].mxu0
      %v3249 = vpop.f32.mrb[0].mxu0
      %3250 = vdwg.mxu0
      %v3251 = vsub.f32 %v3160, %v3206
      %v3252 = vpack.c.bf16 %v3251, %v3251
      %s3253 = scalar_lea.vmem %s300, 60
      %3254 = vst.msk [vmem:[%s3253] sm:$0xf] %vm449, %v3252
      %3255 = vmatprep.subr.bf16.mxu0 0
      %3256 = vmatpush1.bf16.msra.mxu0 %v3169
      %3257 = vmatprep.subr.bf16.mxu0 0
      %3258 = vmatpush1.bf16.msra.mxu0 0
      %3259 = vmatprep.subr.bf16.mxu0 0
      %3260 = vmatpush1.bf16.msra.mxu0 0
      %3261 = vmatprep.subr.bf16.mxu0 0
      %3262 = vmatpush1.bf16.msra.mxu0 0
      %3263 = vmatprep.subr.bf16.mxu0 0
      %3264 = vmatpush1.bf16.msra.mxu0 0
      %3265 = vmatprep.subr.bf16.mxu0 0
      %3266 = vmatpush1.bf16.msra.mxu0 0
      %3267 = vmatprep.subr.bf16.mxu0 0
      %3268 = vmatpush1.bf16.msra.mxu0 0
      %3269 = vmatprep.subr.bf16.mxu0 0
      %3270 = vmatpush1.bf16.msra.mxu0 0
      %3271 = vmatprep.subr.bf16.mxu0 0
      %3272 = vmatpush1.bf16.msra.mxu0 0
      %3273 = vmatprep.subr.bf16.mxu0 0
      %3274 = vmatpush1.bf16.msra.mxu0 0
      %3275 = vmatprep.subr.bf16.mxu0 0
      %3276 = vmatpush1.bf16.msra.mxu0 0
      %3277 = vmatprep.subr.bf16.mxu0 0
      %3278 = vmatpush1.bf16.msra.mxu0 0
      %3279 = vmatprep.subr.bf16.mxu0 0
      %3280 = vmatpush1.bf16.msra.mxu0 0
      %3281 = vmatprep.subr.bf16.mxu0 0
      %3282 = vmatpush1.bf16.msra.mxu0 0
      %3283 = vmatprep.subr.bf16.mxu0 0
      %3284 = vmatpush1.bf16.msra.mxu0 0
      %3285 = vmatprep.subr.bf16.mxu0 0
      %3286 = vmatpush1.bf16.msra.mxu0 0
      %3287 = vmatprep.mubr.bf16.mxu0 0
      %3288 = vmatmul.mubr.bf16.gmra.mrb[0].mxu0 %v3120
      %v3289 = vpop.f32.mrb[0].mxu0
      %v3290 = vadd.f32 %v3246, %v3289
      %v3291 = vpop.f32.mrb[0].mxu0
      %v3292 = vpop.f32.mrb[0].mxu0
      %v3293 = vpop.f32.mrb[0].mxu0
      %3294 = vdwg.mxu0
      %v3295 = vpack.c.bf16 %v3290, %v3290
      %s3296 = scalar_lea.vmem %s306, 60
      %3297 = vst.msk [vmem:[%s3296] sm:$0xf] %vm449, %v3295
      %s3298 = scalar_lea.vmem %s276, 64
      %v3299 = vld [vmem:[%s3298] sm:$0xf]
      %s3300 = scalar_lea.vmem %s282, 64
      %v3301 = vld [vmem:[%s3300] sm:$0xf]
      %s3302 = scalar_lea.vmem %s288, 64
      %v3303 = vld [vmem:[%s3302] sm:$0xf]
      %s3304 = scalar_lea.vmem %s294, 64
      %v3305 = vld [vmem:[%s3304] sm:$0xf]
      %v3307 = vsel %vm313, %v3299, 0
      %v3310 = vsel %vm317, %v3303, 0
      %3312 = vmatprep.subr.bf16.mxu0 0
      %3313 = vmatpush1.bf16.msra.mxu0 %v3310
      %3314 = vmatprep.subr.bf16.mxu0 0
      %3315 = vmatpush1.bf16.msra.mxu0 0
      %3316 = vmatprep.subr.bf16.mxu0 0
      %3317 = vmatpush1.bf16.msra.mxu0 0
      %3318 = vmatprep.subr.bf16.mxu0 0
      %3319 = vmatpush1.bf16.msra.mxu0 0
      %3320 = vmatprep.subr.bf16.mxu0 0
      %3321 = vmatpush1.bf16.msra.mxu0 0
      %3322 = vmatprep.subr.bf16.mxu0 0
      %3323 = vmatpush1.bf16.msra.mxu0 0
      %3324 = vmatprep.subr.bf16.mxu0 0
      %3325 = vmatpush1.bf16.msra.mxu0 0
      %3326 = vmatprep.subr.bf16.mxu0 0
      %3327 = vmatpush1.bf16.msra.mxu0 0
      %3328 = vmatprep.subr.bf16.mxu0 0
      %3329 = vmatpush1.bf16.msra.mxu0 0
      %3330 = vmatprep.subr.bf16.mxu0 0
      %3331 = vmatpush1.bf16.msra.mxu0 0
      %3332 = vmatprep.subr.bf16.mxu0 0
      %3333 = vmatpush1.bf16.msra.mxu0 0
      %3334 = vmatprep.subr.bf16.mxu0 0
      %3335 = vmatpush1.bf16.msra.mxu0 0
      %3336 = vmatprep.subr.bf16.mxu0 0
      %3337 = vmatpush1.bf16.msra.mxu0 0
      %3338 = vmatprep.subr.bf16.mxu0 0
      %3339 = vmatpush1.bf16.msra.mxu0 0
      %3340 = vmatprep.subr.bf16.mxu0 0
      %3341 = vmatpush1.bf16.msra.mxu0 0
      %3342 = vmatprep.subr.bf16.mxu0 0
      %3343 = vmatpush1.bf16.msra.mxu0 0
      %3344 = vmatprep.mubr.bf16.mxu0 0
      %3345 = vmatmul.mubr.bf16.gmra.mrb[0].mxu0 %v3307
      %v3346 = vpop.f32.mrb[0].mxu0
      %v3347 = vadd.f32 0.0, %v3346
      %v3348 = vpop.f32.mrb[0].mxu0
      %v3349 = vpop.f32.mrb[0].mxu0
      %v3350 = vpop.f32.mrb[0].mxu0
      %3351 = vdwg.mxu0
      %v3353 = vsel %vm313, %v3301, 0
      %v3356 = vsel %vm317, %v3305, 0
      %3358 = vmatprep.subr.bf16.mxu0 0
      %3359 = vmatpush1.bf16.msra.mxu0 %v3356
      %3360 = vmatprep.subr.bf16.mxu0 0
      %3361 = vmatpush1.bf16.msra.mxu0 0
      %3362 = vmatprep.subr.bf16.mxu0 0
      %3363 = vmatpush1.bf16.msra.mxu0 0
      %3364 = vmatprep.subr.bf16.mxu0 0
      %3365 = vmatpush1.bf16.msra.mxu0 0
      %3366 = vmatprep.subr.bf16.mxu0 0
      %3367 = vmatpush1.bf16.msra.mxu0 0
      %3368 = vmatprep.subr.bf16.mxu0 0
      %3369 = vmatpush1.bf16.msra.mxu0 0
      %3370 = vmatprep.subr.bf16.mxu0 0
      %3371 = vmatpush1.bf16.msra.mxu0 0
      %3372 = vmatprep.subr.bf16.mxu0 0
      %3373 = vmatpush1.bf16.msra.mxu0 0
      %3374 = vmatprep.subr.bf16.mxu0 0
      %3375 = vmatpush1.bf16.msra.mxu0 0
      %3376 = vmatprep.subr.bf16.mxu0 0
      %3377 = vmatpush1.bf16.msra.mxu0 0
      %3378 = vmatprep.subr.bf16.mxu0 0
      %3379 = vmatpush1.bf16.msra.mxu0 0
      %3380 = vmatprep.subr.bf16.mxu0 0
      %3381 = vmatpush1.bf16.msra.mxu0 0
      %3382 = vmatprep.subr.bf16.mxu0 0
      %3383 = vmatpush1.bf16.msra.mxu0 0
      %3384 = vmatprep.subr.bf16.mxu0 0
      %3385 = vmatpush1.bf16.msra.mxu0 0
      %3386 = vmatprep.subr.bf16.mxu0 0
      %3387 = vmatpush1.bf16.msra.mxu0 0
      %3388 = vmatprep.subr.bf16.mxu0 0
      %3389 = vmatpush1.bf16.msra.mxu0 0
      %3390 = vmatprep.mubr.bf16.mxu0 0
      %3391 = vmatmul.mubr.bf16.gmra.mrb[0].mxu0 %v3353
      %v3392 = vpop.f32.mrb[0].mxu0
      %v3393 = vadd.f32 0.0, %v3392
      %v3394 = vpop.f32.mrb[0].mxu0
      %v3395 = vpop.f32.mrb[0].mxu0
      %v3396 = vpop.f32.mrb[0].mxu0
      %3397 = vdwg.mxu0
      %3398 = vmatprep.subr.bf16.mxu0 0
      %3399 = vmatpush1.bf16.msra.mxu0 %v3310
      %3400 = vmatprep.subr.bf16.mxu0 0
      %3401 = vmatpush1.bf16.msra.mxu0 0
      %3402 = vmatprep.subr.bf16.mxu0 0
      %3403 = vmatpush1.bf16.msra.mxu0 0
      %3404 = vmatprep.subr.bf16.mxu0 0
      %3405 = vmatpush1.bf16.msra.mxu0 0
      %3406 = vmatprep.subr.bf16.mxu0 0
      %3407 = vmatpush1.bf16.msra.mxu0 0
      %3408 = vmatprep.subr.bf16.mxu0 0
      %3409 = vmatpush1.bf16.msra.mxu0 0
      %3410 = vmatprep.subr.bf16.mxu0 0
      %3411 = vmatpush1.bf16.msra.mxu0 0
      %3412 = vmatprep.subr.bf16.mxu0 0
      %3413 = vmatpush1.bf16.msra.mxu0 0
      %3414 = vmatprep.subr.bf16.mxu0 0
      %3415 = vmatpush1.bf16.msra.mxu0 0
      %3416 = vmatprep.subr.bf16.mxu0 0
      %3417 = vmatpush1.bf16.msra.mxu0 0
      %3418 = vmatprep.subr.bf16.mxu0 0
      %3419 = vmatpush1.bf16.msra.mxu0 0
      %3420 = vmatprep.subr.bf16.mxu0 0
      %3421 = vmatpush1.bf16.msra.mxu0 0
      %3422 = vmatprep.subr.bf16.mxu0 0
      %3423 = vmatpush1.bf16.msra.mxu0 0
      %3424 = vmatprep.subr.bf16.mxu0 0
      %3425 = vmatpush1.bf16.msra.mxu0 0
      %3426 = vmatprep.subr.bf16.mxu0 0
      %3427 = vmatpush1.bf16.msra.mxu0 0
      %3428 = vmatprep.subr.bf16.mxu0 0
      %3429 = vmatpush1.bf16.msra.mxu0 0
      %3430 = vmatprep.mubr.bf16.mxu0 0
      %3431 = vmatmul.mubr.bf16.gmra.mrb[0].mxu0 %v3353
      %v3432 = vpop.f32.mrb[0].mxu0
      %v3433 = vadd.f32 0.0, %v3432
      %v3434 = vpop.f32.mrb[0].mxu0
      %v3435 = vpop.f32.mrb[0].mxu0
      %v3436 = vpop.f32.mrb[0].mxu0
      %3437 = vdwg.mxu0
      %v3438 = vsub.f32 %v3347, %v3393
      %v3439 = vpack.c.bf16 %v3438, %v3438
      %s3440 = scalar_lea.vmem %s300, 64
      %3441 = vst.msk [vmem:[%s3440] sm:$0xf] %vm449, %v3439
      %3442 = vmatprep.subr.bf16.mxu0 0
      %3443 = vmatpush1.bf16.msra.mxu0 %v3356
      %3444 = vmatprep.subr.bf16.mxu0 0
      %3445 = vmatpush1.bf16.msra.mxu0 0
      %3446 = vmatprep.subr.bf16.mxu0 0
      %3447 = vmatpush1.bf16.msra.mxu0 0
      %3448 = vmatprep.subr.bf16.mxu0 0
      %3449 = vmatpush1.bf16.msra.mxu0 0
      %3450 = vmatprep.subr.bf16.mxu0 0
      %3451 = vmatpush1.bf16.msra.mxu0 0
      %3452 = vmatprep.subr.bf16.mxu0 0
      %3453 = vmatpush1.bf16.msra.mxu0 0
      %3454 = vmatprep.subr.bf16.mxu0 0
      %3455 = vmatpush1.bf16.msra.mxu0 0
      %3456 = vmatprep.subr.bf16.mxu0 0
      %3457 = vmatpush1.bf16.msra.mxu0 0
      %3458 = vmatprep.subr.bf16.mxu0 0
      %3459 = vmatpush1.bf16.msra.mxu0 0
      %3460 = vmatprep.subr.bf16.mxu0 0
      %3461 = vmatpush1.bf16.msra.mxu0 0
      %3462 = vmatprep.subr.bf16.mxu0 0
      %3463 = vmatpush1.bf16.msra.mxu0 0
      %3464 = vmatprep.subr.bf16.mxu0 0
      %3465 = vmatpush1.bf16.msra.mxu0 0
      %3466 = vmatprep.subr.bf16.mxu0 0
      %3467 = vmatpush1.bf16.msra.mxu0 0
      %3468 = vmatprep.subr.bf16.mxu0 0
      %3469 = vmatpush1.bf16.msra.mxu0 0
      %3470 = vmatprep.subr.bf16.mxu0 0
      %3471 = vmatpush1.bf16.msra.mxu0 0
      %3472 = vmatprep.subr.bf16.mxu0 0
      %3473 = vmatpush1.bf16.msra.mxu0 0
      %3474 = vmatprep.mubr.bf16.mxu0 0
      %3475 = vmatmul.mubr.bf16.gmra.mrb[0].mxu0 %v3307
      %v3476 = vpop.f32.mrb[0].mxu0
      %v3477 = vadd.f32 %v3433, %v3476
      %v3478 = vpop.f32.mrb[0].mxu0
      %v3479 = vpop.f32.mrb[0].mxu0
      %v3480 = vpop.f32.mrb[0].mxu0
      %3481 = vdwg.mxu0
      %v3482 = vpack.c.bf16 %v3477, %v3477
      %s3483 = scalar_lea.vmem %s306, 64
      %3484 = vst.msk [vmem:[%s3483] sm:$0xf] %vm449, %v3482
      %s3485 = scalar_lea.vmem %s276, 68
      %v3486 = vld [vmem:[%s3485] sm:$0xf]
      %s3487 = scalar_lea.vmem %s282, 68
      %v3488 = vld [vmem:[%s3487] sm:$0xf]
      %s3489 = scalar_lea.vmem %s288, 68
      %v3490 = vld [vmem:[%s3489] sm:$0xf]
      %s3491 = scalar_lea.vmem %s294, 68
      %v3492 = vld [vmem:[%s3491] sm:$0xf]
      %v3494 = vsel %vm313, %v3486, 0
      %v3497 = vsel %vm317, %v3490, 0
      %3499 = vmatprep.subr.bf16.mxu0 0
      %3500 = vmatpush1.bf16.msra.mxu0 %v3497
      %3501 = vmatprep.subr.bf16.mxu0 0
      %3502 = vmatpush1.bf16.msra.mxu0 0
      %3503 = vmatprep.subr.bf16.mxu0 0
      %3504 = vmatpush1.bf16.msra.mxu0 0
      %3505 = vmatprep.subr.bf16.mxu0 0
      %3506 = vmatpush1.bf16.msra.mxu0 0
      %3507 = vmatprep.subr.bf16.mxu0 0
      %3508 = vmatpush1.bf16.msra.mxu0 0
      %3509 = vmatprep.subr.bf16.mxu0 0
      %3510 = vmatpush1.bf16.msra.mxu0 0
      %3511 = vmatprep.subr.bf16.mxu0 0
      %3512 = vmatpush1.bf16.msra.mxu0 0
      %3513 = vmatprep.subr.bf16.mxu0 0
      %3514 = vmatpush1.bf16.msra.mxu0 0
      %3515 = vmatprep.subr.bf16.mxu0 0
      %3516 = vmatpush1.bf16.msra.mxu0 0
      %3517 = vmatprep.subr.bf16.mxu0 0
      %3518 = vmatpush1.bf16.msra.mxu0 0
      %3519 = vmatprep.subr.bf16.mxu0 0
      %3520 = vmatpush1.bf16.msra.mxu0 0
      %3521 = vmatprep.subr.bf16.mxu0 0
      %3522 = vmatpush1.bf16.msra.mxu0 0
      %3523 = vmatprep.subr.bf16.mxu0 0
      %3524 = vmatpush1.bf16.msra.mxu0 0
      %3525 = vmatprep.subr.bf16.mxu0 0
      %3526 = vmatpush1.bf16.msra.mxu0 0
      %3527 = vmatprep.subr.bf16.mxu0 0
      %3528 = vmatpush1.bf16.msra.mxu0 0
      %3529 = vmatprep.subr.bf16.mxu0 0
      %3530 = vmatpush1.bf16.msra.mxu0 0
      %3531 = vmatprep.mubr.bf16.mxu0 0
      %3532 = vmatmul.mubr.bf16.gmra.mrb[0].mxu0 %v3494
      %v3533 = vpop.f32.mrb[0].mxu0
      %v3534 = vadd.f32 0.0, %v3533
      %v3535 = vpop.f32.mrb[0].mxu0
      %v3536 = vpop.f32.mrb[0].mxu0
      %v3537 = vpop.f32.mrb[0].mxu0
      %3538 = vdwg.mxu0
      %v3540 = vsel %vm313, %v3488, 0
      %v3543 = vsel %vm317, %v3492, 0
      %3545 = vmatprep.subr.bf16.mxu0 0
      %3546 = vmatpush1.bf16.msra.mxu0 %v3543
      %3547 = vmatprep.subr.bf16.mxu0 0
      %3548 = vmatpush1.bf16.msra.mxu0 0
      %3549 = vmatprep.subr.bf16.mxu0 0
      %3550 = vmatpush1.bf16.msra.mxu0 0
      %3551 = vmatprep.subr.bf16.mxu0 0
      %3552 = vmatpush1.bf16.msra.mxu0 0
      %3553 = vmatprep.subr.bf16.mxu0 0
      %3554 = vmatpush1.bf16.msra.mxu0 0
      %3555 = vmatprep.subr.bf16.mxu0 0
      %3556 = vmatpush1.bf16.msra.mxu0 0
      %3557 = vmatprep.subr.bf16.mxu0 0
      %3558 = vmatpush1.bf16.msra.mxu0 0
      %3559 = vmatprep.subr.bf16.mxu0 0
      %3560 = vmatpush1.bf16.msra.mxu0 0
      %3561 = vmatprep.subr.bf16.mxu0 0
      %3562 = vmatpush1.bf16.msra.mxu0 0
      %3563 = vmatprep.subr.bf16.mxu0 0
      %3564 = vmatpush1.bf16.msra.mxu0 0
      %3565 = vmatprep.subr.bf16.mxu0 0
      %3566 = vmatpush1.bf16.msra.mxu0 0
      %3567 = vmatprep.subr.bf16.mxu0 0
      %3568 = vmatpush1.bf16.msra.mxu0 0
      %3569 = vmatprep.subr.bf16.mxu0 0
      %3570 = vmatpush1.bf16.msra.mxu0 0
      %3571 = vmatprep.subr.bf16.mxu0 0
      %3572 = vmatpush1.bf16.msra.mxu0 0
      %3573 = vmatprep.subr.bf16.mxu0 0
      %3574 = vmatpush1.bf16.msra.mxu0 0
      %3575 = vmatprep.subr.bf16.mxu0 0
      %3576 = vmatpush1.bf16.msra.mxu0 0
      %3577 = vmatprep.mubr.bf16.mxu0 0
      %3578 = vmatmul.mubr.bf16.gmra.mrb[0].mxu0 %v3540
      %v3579 = vpop.f32.mrb[0].mxu0
      %v3580 = vadd.f32 0.0, %v3579
      %v3581 = vpop.f32.mrb[0].mxu0
      %v3582 = vpop.f32.mrb[0].mxu0
      %v3583 = vpop.f32.mrb[0].mxu0
      %3584 = vdwg.mxu0
      %3585 = vmatprep.subr.bf16.mxu0 0
      %3586 = vmatpush1.bf16.msra.mxu0 %v3497
      %3587 = vmatprep.subr.bf16.mxu0 0
      %3588 = vmatpush1.bf16.msra.mxu0 0
      %3589 = vmatprep.subr.bf16.mxu0 0
      %3590 = vmatpush1.bf16.msra.mxu0 0
      %3591 = vmatprep.subr.bf16.mxu0 0
      %3592 = vmatpush1.bf16.msra.mxu0 0
      %3593 = vmatprep.subr.bf16.mxu0 0
      %3594 = vmatpush1.bf16.msra.mxu0 0
      %3595 = vmatprep.subr.bf16.mxu0 0
      %3596 = vmatpush1.bf16.msra.mxu0 0
      %3597 = vmatprep.subr.bf16.mxu0 0
      %3598 = vmatpush1.bf16.msra.mxu0 0
      %3599 = vmatprep.subr.bf16.mxu0 0
      %3600 = vmatpush1.bf16.msra.mxu0 0
      %3601 = vmatprep.subr.bf16.mxu0 0
      %3602 = vmatpush1.bf16.msra.mxu0 0
      %3603 = vmatprep.subr.bf16.mxu0 0
      %3604 = vmatpush1.bf16.msra.mxu0 0
      %3605 = vmatprep.subr.bf16.mxu0 0
      %3606 = vmatpush1.bf16.msra.mxu0 0
      %3607 = vmatprep.subr.bf16.mxu0 0
      %3608 = vmatpush1.bf16.msra.mxu0 0
      %3609 = vmatprep.subr.bf16.mxu0 0
      %3610 = vmatpush1.bf16.msra.mxu0 0
      %3611 = vmatprep.subr.bf16.mxu0 0
      %3612 = vmatpush1.bf16.msra.mxu0 0
      %3613 = vmatprep.subr.bf16.mxu0 0
      %3614 = vmatpush1.bf16.msra.mxu0 0
      %3615 = vmatprep.subr.bf16.mxu0 0
      %3616 = vmatpush1.bf16.msra.mxu0 0
      %3617 = vmatprep.mubr.bf16.mxu0 0
      %3618 = vmatmul.mubr.bf16.gmra.mrb[0].mxu0 %v3540
      %v3619 = vpop.f32.mrb[0].mxu0
      %v3620 = vadd.f32 0.0, %v3619
      %v3621 = vpop.f32.mrb[0].mxu0
      %v3622 = vpop.f32.mrb[0].mxu0
      %v3623 = vpop.f32.mrb[0].mxu0
      %3624 = vdwg.mxu0
      %v3625 = vsub.f32 %v3534, %v3580
      %v3626 = vpack.c.bf16 %v3625, %v3625
      %s3627 = scalar_lea.vmem %s300, 68
      %3628 = vst.msk [vmem:[%s3627] sm:$0xf] %vm449, %v3626
      %3629 = vmatprep.subr.bf16.mxu0 0
      %3630 = vmatpush1.bf16.msra.mxu0 %v3543
      %3631 = vmatprep.subr.bf16.mxu0 0
      %3632 = vmatpush1.bf16.msra.mxu0 0
      %3633 = vmatprep.subr.bf16.mxu0 0
      %3634 = vmatpush1.bf16.msra.mxu0 0
      %3635 = vmatprep.subr.bf16.mxu0 0
      %3636 = vmatpush1.bf16.msra.mxu0 0
      %3637 = vmatprep.subr.bf16.mxu0 0
      %3638 = vmatpush1.bf16.msra.mxu0 0
      %3639 = vmatprep.subr.bf16.mxu0 0
      %3640 = vmatpush1.bf16.msra.mxu0 0
      %3641 = vmatprep.subr.bf16.mxu0 0
      %3642 = vmatpush1.bf16.msra.mxu0 0
      %3643 = vmatprep.subr.bf16.mxu0 0
      %3644 = vmatpush1.bf16.msra.mxu0 0
      %3645 = vmatprep.subr.bf16.mxu0 0
      %3646 = vmatpush1.bf16.msra.mxu0 0
      %3647 = vmatprep.subr.bf16.mxu0 0
      %3648 = vmatpush1.bf16.msra.mxu0 0
      %3649 = vmatprep.subr.bf16.mxu0 0
      %3650 = vmatpush1.bf16.msra.mxu0 0
      %3651 = vmatprep.subr.bf16.mxu0 0
      %3652 = vmatpush1.bf16.msra.mxu0 0
      %3653 = vmatprep.subr.bf16.mxu0 0
      %3654 = vmatpush1.bf16.msra.mxu0 0
      %3655 = vmatprep.subr.bf16.mxu0 0
      %3656 = vmatpush1.bf16.msra.mxu0 0
      %3657 = vmatprep.subr.bf16.mxu0 0
      %3658 = vmatpush1.bf16.msra.mxu0 0
      %3659 = vmatprep.subr.bf16.mxu0 0
      %3660 = vmatpush1.bf16.msra.mxu0 0
      %3661 = vmatprep.mubr.bf16.mxu0 0
      %3662 = vmatmul.mubr.bf16.gmra.mrb[0].mxu0 %v3494
      %v3663 = vpop.f32.mrb[0].mxu0
      %v3664 = vadd.f32 %v3620, %v3663
      %v3665 = vpop.f32.mrb[0].mxu0
      %v3666 = vpop.f32.mrb[0].mxu0
      %v3667 = vpop.f32.mrb[0].mxu0
      %3668 = vdwg.mxu0
      %v3669 = vpack.c.bf16 %v3664, %v3664
      %s3670 = scalar_lea.vmem %s306, 68
      %3671 = vst.msk [vmem:[%s3670] sm:$0xf] %vm449, %v3669
      %s3672 = scalar_lea.vmem %s276, 72
      %v3673 = vld [vmem:[%s3672] sm:$0xf]
      %s3674 = scalar_lea.vmem %s282, 72
      %v3675 = vld [vmem:[%s3674] sm:$0xf]
      %s3676 = scalar_lea.vmem %s288, 72
      %v3677 = vld [vmem:[%s3676] sm:$0xf]
      %s3678 = scalar_lea.vmem %s294, 72
      %v3679 = vld [vmem:[%s3678] sm:$0xf]
      %v3681 = vsel %vm313, %v3673, 0
      %v3684 = vsel %vm317, %v3677, 0
      %3686 = vmatprep.subr.bf16.mxu0 0
      %3687 = vmatpush1.bf16.msra.mxu0 %v3684
      %3688 = vmatprep.subr.bf16.mxu0 0
      %3689 = vmatpush1.bf16.msra.mxu0 0
      %3690 = vmatprep.subr.bf16.mxu0 0
      %3691 = vmatpush1.bf16.msra.mxu0 0
      %3692 = vmatprep.subr.bf16.mxu0 0
      %3693 = vmatpush1.bf16.msra.mxu0 0
      %3694 = vmatprep.subr.bf16.mxu0 0
      %3695 = vmatpush1.bf16.msra.mxu0 0
      %3696 = vmatprep.subr.bf16.mxu0 0
      %3697 = vmatpush1.bf16.msra.mxu0 0
      %3698 = vmatprep.subr.bf16.mxu0 0
      %3699 = vmatpush1.bf16.msra.mxu0 0
      %3700 = vmatprep.subr.bf16.mxu0 0
      %3701 = vmatpush1.bf16.msra.mxu0 0
      %3702 = vmatprep.subr.bf16.mxu0 0
      %3703 = vmatpush1.bf16.msra.mxu0 0
      %3704 = vmatprep.subr.bf16.mxu0 0
      %3705 = vmatpush1.bf16.msra.mxu0 0
      %3706 = vmatprep.subr.bf16.mxu0 0
      %3707 = vmatpush1.bf16.msra.mxu0 0
      %3708 = vmatprep.subr.bf16.mxu0 0
      %3709 = vmatpush1.bf16.msra.mxu0 0
      %3710 = vmatprep.subr.bf16.mxu0 0
      %3711 = vmatpush1.bf16.msra.mxu0 0
      %3712 = vmatprep.subr.bf16.mxu0 0
      %3713 = vmatpush1.bf16.msra.mxu0 0
      %3714 = vmatprep.subr.bf16.mxu0 0
      %3715 = vmatpush1.bf16.msra.mxu0 0
      %3716 = vmatprep.subr.bf16.mxu0 0
      %3717 = vmatpush1.bf16.msra.mxu0 0
      %3718 = vmatprep.mubr.bf16.mxu0 0
      %3719 = vmatmul.mubr.bf16.gmra.mrb[0].mxu0 %v3681
      %v3720 = vpop.f32.mrb[0].mxu0
      %v3721 = vadd.f32 0.0, %v3720
      %v3722 = vpop.f32.mrb[0].mxu0
      %v3723 = vpop.f32.mrb[0].mxu0
      %v3724 = vpop.f32.mrb[0].mxu0
      %3725 = vdwg.mxu0
      %v3727 = vsel %vm313, %v3675, 0
      %v3730 = vsel %vm317, %v3679, 0
      %3732 = vmatprep.subr.bf16.mxu0 0
      %3733 = vmatpush1.bf16.msra.mxu0 %v3730
      %3734 = vmatprep.subr.bf16.mxu0 0
      %3735 = vmatpush1.bf16.msra.mxu0 0
      %3736 = vmatprep.subr.bf16.mxu0 0
      %3737 = vmatpush1.bf16.msra.mxu0 0
      %3738 = vmatprep.subr.bf16.mxu0 0
      %3739 = vmatpush1.bf16.msra.mxu0 0
      %3740 = vmatprep.subr.bf16.mxu0 0
      %3741 = vmatpush1.bf16.msra.mxu0 0
      %3742 = vmatprep.subr.bf16.mxu0 0
      %3743 = vmatpush1.bf16.msra.mxu0 0
      %3744 = vmatprep.subr.bf16.mxu0 0
      %3745 = vmatpush1.bf16.msra.mxu0 0
      %3746 = vmatprep.subr.bf16.mxu0 0
      %3747 = vmatpush1.bf16.msra.mxu0 0
      %3748 = vmatprep.subr.bf16.mxu0 0
      %3749 = vmatpush1.bf16.msra.mxu0 0
      %3750 = vmatprep.subr.bf16.mxu0 0
      %3751 = vmatpush1.bf16.msra.mxu0 0
      %3752 = vmatprep.subr.bf16.mxu0 0
      %3753 = vmatpush1.bf16.msra.mxu0 0
      %3754 = vmatprep.subr.bf16.mxu0 0
      %3755 = vmatpush1.bf16.msra.mxu0 0
      %3756 = vmatprep.subr.bf16.mxu0 0
      %3757 = vmatpush1.bf16.msra.mxu0 0
      %3758 = vmatprep.subr.bf16.mxu0 0
      %3759 = vmatpush1.bf16.msra.mxu0 0
      %3760 = vmatprep.subr.bf16.mxu0 0
      %3761 = vmatpush1.bf16.msra.mxu0 0
      %3762 = vmatprep.subr.bf16.mxu0 0
      %3763 = vmatpush1.bf16.msra.mxu0 0
      %3764 = vmatprep.mubr.bf16.mxu0 0
      %3765 = vmatmul.mubr.bf16.gmra.mrb[0].mxu0 %v3727
      %v3766 = vpop.f32.mrb[0].mxu0
      %v3767 = vadd.f32 0.0, %v3766
      %v3768 = vpop.f32.mrb[0].mxu0
      %v3769 = vpop.f32.mrb[0].mxu0
      %v3770 = vpop.f32.mrb[0].mxu0
      %3771 = vdwg.mxu0
      %3772 = vmatprep.subr.bf16.mxu0 0
      %3773 = vmatpush1.bf16.msra.mxu0 %v3684
      %3774 = vmatprep.subr.bf16.mxu0 0
      %3775 = vmatpush1.bf16.msra.mxu0 0
      %3776 = vmatprep.subr.bf16.mxu0 0
      %3777 = vmatpush1.bf16.msra.mxu0 0
      %3778 = vmatprep.subr.bf16.mxu0 0
      %3779 = vmatpush1.bf16.msra.mxu0 0
      %3780 = vmatprep.subr.bf16.mxu0 0
      %3781 = vmatpush1.bf16.msra.mxu0 0
      %3782 = vmatprep.subr.bf16.mxu0 0
      %3783 = vmatpush1.bf16.msra.mxu0 0
      %3784 = vmatprep.subr.bf16.mxu0 0
      %3785 = vmatpush1.bf16.msra.mxu0 0
      %3786 = vmatprep.subr.bf16.mxu0 0
      %3787 = vmatpush1.bf16.msra.mxu0 0
      %3788 = vmatprep.subr.bf16.mxu0 0
      %3789 = vmatpush1.bf16.msra.mxu0 0
      %3790 = vmatprep.subr.bf16.mxu0 0
      %3791 = vmatpush1.bf16.msra.mxu0 0
      %3792 = vmatprep.subr.bf16.mxu0 0
      %3793 = vmatpush1.bf16.msra.mxu0 0
      %3794 = vmatprep.subr.bf16.mxu0 0
      %3795 = vmatpush1.bf16.msra.mxu0 0
      %3796 = vmatprep.subr.bf16.mxu0 0
      %3797 = vmatpush1.bf16.msra.mxu0 0
      %3798 = vmatprep.subr.bf16.mxu0 0
      %3799 = vmatpush1.bf16.msra.mxu0 0
      %3800 = vmatprep.subr.bf16.mxu0 0
      %3801 = vmatpush1.bf16.msra.mxu0 0
      %3802 = vmatprep.subr.bf16.mxu0 0
      %3803 = vmatpush1.bf16.msra.mxu0 0
      %3804 = vmatprep.mubr.bf16.mxu0 0
      %3805 = vmatmul.mubr.bf16.gmra.mrb[0].mxu0 %v3727
      %v3806 = vpop.f32.mrb[0].mxu0
      %v3807 = vadd.f32 0.0, %v3806
      %v3808 = vpop.f32.mrb[0].mxu0
      %v3809 = vpop.f32.mrb[0].mxu0
      %v3810 = vpop.f32.mrb[0].mxu0
      %3811 = vdwg.mxu0
      %v3812 = vsub.f32 %v3721, %v3767
      %v3813 = vpack.c.bf16 %v3812, %v3812
      %s3814 = scalar_lea.vmem %s300, 72
      %3815 = vst.msk [vmem:[%s3814] sm:$0xf] %vm449, %v3813
      %3816 = vmatprep.subr.bf16.mxu0 0
      %3817 = vmatpush1.bf16.msra.mxu0 %v3730
      %3818 = vmatprep.subr.bf16.mxu0 0
      %3819 = vmatpush1.bf16.msra.mxu0 0
      %3820 = vmatprep.subr.bf16.mxu0 0
      %3821 = vmatpush1.bf16.msra.mxu0 0
      %3822 = vmatprep.subr.bf16.mxu0 0
      %3823 = vmatpush1.bf16.msra.mxu0 0
      %3824 = vmatprep.subr.bf16.mxu0 0
      %3825 = vmatpush1.bf16.msra.mxu0 0
      %3826 = vmatprep.subr.bf16.mxu0 0
      %3827 = vmatpush1.bf16.msra.mxu0 0
      %3828 = vmatprep.subr.bf16.mxu0 0
      %3829 = vmatpush1.bf16.msra.mxu0 0
      %3830 = vmatprep.subr.bf16.mxu0 0
      %3831 = vmatpush1.bf16.msra.mxu0 0
      %3832 = vmatprep.subr.bf16.mxu0 0
      %3833 = vmatpush1.bf16.msra.mxu0 0
      %3834 = vmatprep.subr.bf16.mxu0 0
      %3835 = vmatpush1.bf16.msra.mxu0 0
      %3836 = vmatprep.subr.bf16.mxu0 0
      %3837 = vmatpush1.bf16.msra.mxu0 0
      %3838 = vmatprep.subr.bf16.mxu0 0
      %3839 = vmatpush1.bf16.msra.mxu0 0
      %3840 = vmatprep.subr.bf16.mxu0 0
      %3841 = vmatpush1.bf16.msra.mxu0 0
      %3842 = vmatprep.subr.bf16.mxu0 0
      %3843 = vmatpush1.bf16.msra.mxu0 0
      %3844 = vmatprep.subr.bf16.mxu0 0
      %3845 = vmatpush1.bf16.msra.mxu0 0
      %3846 = vmatprep.subr.bf16.mxu0 0
      %3847 = vmatpush1.bf16.msra.mxu0 0
      %3848 = vmatprep.mubr.bf16.mxu0 0
      %3849 = vmatmul.mubr.bf16.gmra.mrb[0].mxu0 %v3681
      %v3850 = vpop.f32.mrb[0].mxu0
      %v3851 = vadd.f32 %v3807, %v3850
      %v3852 = vpop.f32.mrb[0].mxu0
      %v3853 = vpop.f32.mrb[0].mxu0
      %v3854 = vpop.f32.mrb[0].mxu0
      %3855 = vdwg.mxu0
      %v3856 = vpack.c.bf16 %v3851, %v3851
      %s3857 = scalar_lea.vmem %s306, 72
      %3858 = vst.msk [vmem:[%s3857] sm:$0xf] %vm449, %v3856
      %s3859 = scalar_lea.vmem %s276, 76
      %v3860 = vld [vmem:[%s3859] sm:$0xf]
      %s3861 = scalar_lea.vmem %s282, 76
      %v3862 = vld [vmem:[%s3861] sm:$0xf]
      %s3863 = scalar_lea.vmem %s288, 76
      %v3864 = vld [vmem:[%s3863] sm:$0xf]
      %s3865 = scalar_lea.vmem %s294, 76
      %v3866 = vld [vmem:[%s3865] sm:$0xf]
      %v3868 = vsel %vm313, %v3860, 0
      %v3871 = vsel %vm317, %v3864, 0
      %3873 = vmatprep.subr.bf16.mxu0 0
      %3874 = vmatpush1.bf16.msra.mxu0 %v3871
      %3875 = vmatprep.subr.bf16.mxu0 0
      %3876 = vmatpush1.bf16.msra.mxu0 0
      %3877 = vmatprep.subr.bf16.mxu0 0
      %3878 = vmatpush1.bf16.msra.mxu0 0
      %3879 = vmatprep.subr.bf16.mxu0 0
      %3880 = vmatpush1.bf16.msra.mxu0 0
      %3881 = vmatprep.subr.bf16.mxu0 0
      %3882 = vmatpush1.bf16.msra.mxu0 0
      %3883 = vmatprep.subr.bf16.mxu0 0
      %3884 = vmatpush1.bf16.msra.mxu0 0
      %3885 = vmatprep.subr.bf16.mxu0 0
      %3886 = vmatpush1.bf16.msra.mxu0 0
      %3887 = vmatprep.subr.bf16.mxu0 0
      %3888 = vmatpush1.bf16.msra.mxu0 0
      %3889 = vmatprep.subr.bf16.mxu0 0
      %3890 = vmatpush1.bf16.msra.mxu0 0
      %3891 = vmatprep.subr.bf16.mxu0 0
      %3892 = vmatpush1.bf16.msra.mxu0 0
      %3893 = vmatprep.subr.bf16.mxu0 0
      %3894 = vmatpush1.bf16.msra.mxu0 0
      %3895 = vmatprep.subr.bf16.mxu0 0
      %3896 = vmatpush1.bf16.msra.mxu0 0
      %3897 = vmatprep.subr.bf16.mxu0 0
      %3898 = vmatpush1.bf16.msra.mxu0 0
      %3899 = vmatprep.subr.bf16.mxu0 0
      %3900 = vmatpush1.bf16.msra.mxu0 0
      %3901 = vmatprep.subr.bf16.mxu0 0
      %3902 = vmatpush1.bf16.msra.mxu0 0
      %3903 = vmatprep.subr.bf16.mxu0 0
      %3904 = vmatpush1.bf16.msra.mxu0 0
      %3905 = vmatprep.mubr.bf16.mxu0 0
      %3906 = vmatmul.mubr.bf16.gmra.mrb[0].mxu0 %v3868
      %v3907 = vpop.f32.mrb[0].mxu0
      %v3908 = vadd.f32 0.0, %v3907
      %v3909 = vpop.f32.mrb[0].mxu0
      %v3910 = vpop.f32.mrb[0].mxu0
      %v3911 = vpop.f32.mrb[0].mxu0
      %3912 = vdwg.mxu0
      %v3914 = vsel %vm313, %v3862, 0
      %v3917 = vsel %vm317, %v3866, 0
      %3919 = vmatprep.subr.bf16.mxu0 0
      %3920 = vmatpush1.bf16.msra.mxu0 %v3917
      %3921 = vmatprep.subr.bf16.mxu0 0
      %3922 = vmatpush1.bf16.msra.mxu0 0
      %3923 = vmatprep.subr.bf16.mxu0 0
      %3924 = vmatpush1.bf16.msra.mxu0 0
      %3925 = vmatprep.subr.bf16.mxu0 0
      %3926 = vmatpush1.bf16.msra.mxu0 0
      %3927 = vmatprep.subr.bf16.mxu0 0
      %3928 = vmatpush1.bf16.msra.mxu0 0
      %3929 = vmatprep.subr.bf16.mxu0 0
      %3930 = vmatpush1.bf16.msra.mxu0 0
      %3931 = vmatprep.subr.bf16.mxu0 0
      %3932 = vmatpush1.bf16.msra.mxu0 0
      %3933 = vmatprep.subr.bf16.mxu0 0
      %3934 = vmatpush1.bf16.msra.mxu0 0
      %3935 = vmatprep.subr.bf16.mxu0 0
      %3936 = vmatpush1.bf16.msra.mxu0 0
      %3937 = vmatprep.subr.bf16.mxu0 0
      %3938 = vmatpush1.bf16.msra.mxu0 0
      %3939 = vmatprep.subr.bf16.mxu0 0
      %3940 = vmatpush1.bf16.msra.mxu0 0
      %3941 = vmatprep.subr.bf16.mxu0 0
      %3942 = vmatpush1.bf16.msra.mxu0 0
      %3943 = vmatprep.subr.bf16.mxu0 0
      %3944 = vmatpush1.bf16.msra.mxu0 0
      %3945 = vmatprep.subr.bf16.mxu0 0
      %3946 = vmatpush1.bf16.msra.mxu0 0
      %3947 = vmatprep.subr.bf16.mxu0 0
      %3948 = vmatpush1.bf16.msra.mxu0 0
      %3949 = vmatprep.subr.bf16.mxu0 0
      %3950 = vmatpush1.bf16.msra.mxu0 0
      %3951 = vmatprep.mubr.bf16.mxu0 0
      %3952 = vmatmul.mubr.bf16.gmra.mrb[0].mxu0 %v3914
      %v3953 = vpop.f32.mrb[0].mxu0
      %v3954 = vadd.f32 0.0, %v3953
      %v3955 = vpop.f32.mrb[0].mxu0
      %v3956 = vpop.f32.mrb[0].mxu0
      %v3957 = vpop.f32.mrb[0].mxu0
      %3958 = vdwg.mxu0
      %3959 = vmatprep.subr.bf16.mxu0 0
      %3960 = vmatpush1.bf16.msra.mxu0 %v3871
      %3961 = vmatprep.subr.bf16.mxu0 0
      %3962 = vmatpush1.bf16.msra.mxu0 0
      %3963 = vmatprep.subr.bf16.mxu0 0
      %3964 = vmatpush1.bf16.msra.mxu0 0
      %3965 = vmatprep.subr.bf16.mxu0 0
      %3966 = vmatpush1.bf16.msra.mxu0 0
      %3967 = vmatprep.subr.bf16.mxu0 0
      %3968 = vmatpush1.bf16.msra.mxu0 0
      %3969 = vmatprep.subr.bf16.mxu0 0
      %3970 = vmatpush1.bf16.msra.mxu0 0
      %3971 = vmatprep.subr.bf16.mxu0 0
      %3972 = vmatpush1.bf16.msra.mxu0 0
      %3973 = vmatprep.subr.bf16.mxu0 0
      %3974 = vmatpush1.bf16.msra.mxu0 0
      %3975 = vmatprep.subr.bf16.mxu0 0
      %3976 = vmatpush1.bf16.msra.mxu0 0
      %3977 = vmatprep.subr.bf16.mxu0 0
      %3978 = vmatpush1.bf16.msra.mxu0 0
      %3979 = vmatprep.subr.bf16.mxu0 0
      %3980 = vmatpush1.bf16.msra.mxu0 0
      %3981 = vmatprep.subr.bf16.mxu0 0
      %3982 = vmatpush1.bf16.msra.mxu0 0
      %3983 = vmatprep.subr.bf16.mxu0 0
      %3984 = vmatpush1.bf16.msra.mxu0 0
      %3985 = vmatprep.subr.bf16.mxu0 0
      %3986 = vmatpush1.bf16.msra.mxu0 0
      %3987 = vmatprep.subr.bf16.mxu0 0
      %3988 = vmatpush1.bf16.msra.mxu0 0
      %3989 = vmatprep.subr.bf16.mxu0 0
      %3990 = vmatpush1.bf16.msra.mxu0 0
      %3991 = vmatprep.mubr.bf16.mxu0 0
      %3992 = vmatmul.mubr.bf16.gmra.mrb[0].mxu0 %v3914
      %v3993 = vpop.f32.mrb[0].mxu0
      %v3994 = vadd.f32 0.0, %v3993
      %v3995 = vpop.f32.mrb[0].mxu0
      %v3996 = vpop.f32.mrb[0].mxu0
      %v3997 = vpop.f32.mrb[0].mxu0
      %3998 = vdwg.mxu0
      %v3999 = vsub.f32 %v3908, %v3954
      %v4000 = vpack.c.bf16 %v3999, %v3999
      %s4001 = scalar_lea.vmem %s300, 76
      %4002 = vst.msk [vmem:[%s4001] sm:$0xf] %vm449, %v4000
      %4003 = vmatprep.subr.bf16.mxu0 0
      %4004 = vmatpush1.bf16.msra.mxu0 %v3917
      %4005 = vmatprep.subr.bf16.mxu0 0
      %4006 = vmatpush1.bf16.msra.mxu0 0
      %4007 = vmatprep.subr.bf16.mxu0 0
      %4008 = vmatpush1.bf16.msra.mxu0 0
      %4009 = vmatprep.subr.bf16.mxu0 0
      %4010 = vmatpush1.bf16.msra.mxu0 0
      %4011 = vmatprep.subr.bf16.mxu0 0
      %4012 = vmatpush1.bf16.msra.mxu0 0
      %4013 = vmatprep.subr.bf16.mxu0 0
      %4014 = vmatpush1.bf16.msra.mxu0 0
      %4015 = vmatprep.subr.bf16.mxu0 0
      %4016 = vmatpush1.bf16.msra.mxu0 0
      %4017 = vmatprep.subr.bf16.mxu0 0
      %4018 = vmatpush1.bf16.msra.mxu0 0
      %4019 = vmatprep.subr.bf16.mxu0 0
      %4020 = vmatpush1.bf16.msra.mxu0 0
      %4021 = vmatprep.subr.bf16.mxu0 0
      %4022 = vmatpush1.bf16.msra.mxu0 0
      %4023 = vmatprep.subr.bf16.mxu0 0
      %4024 = vmatpush1.bf16.msra.mxu0 0
      %4025 = vmatprep.subr.bf16.mxu0 0
      %4026 = vmatpush1.bf16.msra.mxu0 0
      %4027 = vmatprep.subr.bf16.mxu0 0
      %4028 = vmatpush1.bf16.msra.mxu0 0
      %4029 = vmatprep.subr.bf16.mxu0 0
      %4030 = vmatpush1.bf16.msra.mxu0 0
      %4031 = vmatprep.subr.bf16.mxu0 0
      %4032 = vmatpush1.bf16.msra.mxu0 0
      %4033 = vmatprep.subr.bf16.mxu0 0
      %4034 = vmatpush1.bf16.msra.mxu0 0
      %4035 = vmatprep.mubr.bf16.mxu0 0
      %4036 = vmatmul.mubr.bf16.gmra.mrb[0].mxu0 %v3868
      %v4037 = vpop.f32.mrb[0].mxu0
      %v4038 = vadd.f32 %v3994, %v4037
      %v4039 = vpop.f32.mrb[0].mxu0
      %v4040 = vpop.f32.mrb[0].mxu0
      %v4041 = vpop.f32.mrb[0].mxu0
      %4042 = vdwg.mxu0
      %v4043 = vpack.c.bf16 %v4038, %v4038
      %s4044 = scalar_lea.vmem %s306, 76
      %4045 = vst.msk [vmem:[%s4044] sm:$0xf] %vm449, %v4043
      %s4046 = scalar_lea.vmem %s276, 80
      %v4047 = vld [vmem:[%s4046] sm:$0xf]
      %s4048 = scalar_lea.vmem %s282, 80
      %v4049 = vld [vmem:[%s4048] sm:$0xf]
      %s4050 = scalar_lea.vmem %s288, 80
      %v4051 = vld [vmem:[%s4050] sm:$0xf]
      %s4052 = scalar_lea.vmem %s294, 80
      %v4053 = vld [vmem:[%s4052] sm:$0xf]
      %v4055 = vsel %vm313, %v4047, 0
      %v4058 = vsel %vm317, %v4051, 0
      %4060 = vmatprep.subr.bf16.mxu0 0
      %4061 = vmatpush1.bf16.msra.mxu0 %v4058
      %4062 = vmatprep.subr.bf16.mxu0 0
      %4063 = vmatpush1.bf16.msra.mxu0 0
      %4064 = vmatprep.subr.bf16.mxu0 0
      %4065 = vmatpush1.bf16.msra.mxu0 0
      %4066 = vmatprep.subr.bf16.mxu0 0
      %4067 = vmatpush1.bf16.msra.mxu0 0
      %4068 = vmatprep.subr.bf16.mxu0 0
      %4069 = vmatpush1.bf16.msra.mxu0 0
      %4070 = vmatprep.subr.bf16.mxu0 0
      %4071 = vmatpush1.bf16.msra.mxu0 0
      %4072 = vmatprep.subr.bf16.mxu0 0
      %4073 = vmatpush1.bf16.msra.mxu0 0
      %4074 = vmatprep.subr.bf16.mxu0 0
      %4075 = vmatpush1.bf16.msra.mxu0 0
      %4076 = vmatprep.subr.bf16.mxu0 0
      %4077 = vmatpush1.bf16.msra.mxu0 0
      %4078 = vmatprep.subr.bf16.mxu0 0
      %4079 = vmatpush1.bf16.msra.mxu0 0
      %4080 = vmatprep.subr.bf16.mxu0 0
      %4081 = vmatpush1.bf16.msra.mxu0 0
      %4082 = vmatprep.subr.bf16.mxu0 0
      %4083 = vmatpush1.bf16.msra.mxu0 0
      %4084 = vmatprep.subr.bf16.mxu0 0
      %4085 = vmatpush1.bf16.msra.mxu0 0
      %4086 = vmatprep.subr.bf16.mxu0 0
      %4087 = vmatpush1.bf16.msra.mxu0 0
      %4088 = vmatprep.subr.bf16.mxu0 0
      %4089 = vmatpush1.bf16.msra.mxu0 0
      %4090 = vmatprep.subr.bf16.mxu0 0
      %4091 = vmatpush1.bf16.msra.mxu0 0
      %4092 = vmatprep.mubr.bf16.mxu0 0
      %4093 = vmatmul.mubr.bf16.gmra.mrb[0].mxu0 %v4055
      %v4094 = vpop.f32.mrb[0].mxu0
      %v4095 = vadd.f32 0.0, %v4094
      %v4096 = vpop.f32.mrb[0].mxu0
      %v4097 = vpop.f32.mrb[0].mxu0
      %v4098 = vpop.f32.mrb[0].mxu0
      %4099 = vdwg.mxu0
      %v4101 = vsel %vm313, %v4049, 0
      %v4104 = vsel %vm317, %v4053, 0
      %4106 = vmatprep.subr.bf16.mxu0 0
      %4107 = vmatpush1.bf16.msra.mxu0 %v4104
      %4108 = vmatprep.subr.bf16.mxu0 0
      %4109 = vmatpush1.bf16.msra.mxu0 0
      %4110 = vmatprep.subr.bf16.mxu0 0
      %4111 = vmatpush1.bf16.msra.mxu0 0
      %4112 = vmatprep.subr.bf16.mxu0 0
      %4113 = vmatpush1.bf16.msra.mxu0 0
      %4114 = vmatprep.subr.bf16.mxu0 0
      %4115 = vmatpush1.bf16.msra.mxu0 0
      %4116 = vmatprep.subr.bf16.mxu0 0
      %4117 = vmatpush1.bf16.msra.mxu0 0
      %4118 = vmatprep.subr.bf16.mxu0 0
      %4119 = vmatpush1.bf16.msra.mxu0 0
      %4120 = vmatprep.subr.bf16.mxu0 0
      %4121 = vmatpush1.bf16.msra.mxu0 0
      %4122 = vmatprep.subr.bf16.mxu0 0
      %4123 = vmatpush1.bf16.msra.mxu0 0
      %4124 = vmatprep.subr.bf16.mxu0 0
      %4125 = vmatpush1.bf16.msra.mxu0 0
      %4126 = vmatprep.subr.bf16.mxu0 0
      %4127 = vmatpush1.bf16.msra.mxu0 0
      %4128 = vmatprep.subr.bf16.mxu0 0
      %4129 = vmatpush1.bf16.msra.mxu0 0
      %4130 = vmatprep.subr.bf16.mxu0 0
      %4131 = vmatpush1.bf16.msra.mxu0 0
      %4132 = vmatprep.subr.bf16.mxu0 0
      %4133 = vmatpush1.bf16.msra.mxu0 0
      %4134 = vmatprep.subr.bf16.mxu0 0
      %4135 = vmatpush1.bf16.msra.mxu0 0
      %4136 = vmatprep.subr.bf16.mxu0 0
      %4137 = vmatpush1.bf16.msra.mxu0 0
      %4138 = vmatprep.mubr.bf16.mxu0 0
      %4139 = vmatmul.mubr.bf16.gmra.mrb[0].mxu0 %v4101
      %v4140 = vpop.f32.mrb[0].mxu0
      %v4141 = vadd.f32 0.0, %v4140
      %v4142 = vpop.f32.mrb[0].mxu0
      %v4143 = vpop.f32.mrb[0].mxu0
      %v4144 = vpop.f32.mrb[0].mxu0
      %4145 = vdwg.mxu0
      %4146 = vmatprep.subr.bf16.mxu0 0
      %4147 = vmatpush1.bf16.msra.mxu0 %v4058
      %4148 = vmatprep.subr.bf16.mxu0 0
      %4149 = vmatpush1.bf16.msra.mxu0 0
      %4150 = vmatprep.subr.bf16.mxu0 0
      %4151 = vmatpush1.bf16.msra.mxu0 0
      %4152 = vmatprep.subr.bf16.mxu0 0
      %4153 = vmatpush1.bf16.msra.mxu0 0
      %4154 = vmatprep.subr.bf16.mxu0 0
      %4155 = vmatpush1.bf16.msra.mxu0 0
      %4156 = vmatprep.subr.bf16.mxu0 0
      %4157 = vmatpush1.bf16.msra.mxu0 0
      %4158 = vmatprep.subr.bf16.mxu0 0
      %4159 = vmatpush1.bf16.msra.mxu0 0
      %4160 = vmatprep.subr.bf16.mxu0 0
      %4161 = vmatpush1.bf16.msra.mxu0 0
      %4162 = vmatprep.subr.bf16.mxu0 0
      %4163 = vmatpush1.bf16.msra.mxu0 0
      %4164 = vmatprep.subr.bf16.mxu0 0
      %4165 = vmatpush1.bf16.msra.mxu0 0
      %4166 = vmatprep.subr.bf16.mxu0 0
      %4167 = vmatpush1.bf16.msra.mxu0 0
      %4168 = vmatprep.subr.bf16.mxu0 0
      %4169 = vmatpush1.bf16.msra.mxu0 0
      %4170 = vmatprep.subr.bf16.mxu0 0
      %4171 = vmatpush1.bf16.msra.mxu0 0
      %4172 = vmatprep.subr.bf16.mxu0 0
      %4173 = vmatpush1.bf16.msra.mxu0 0
      %4174 = vmatprep.subr.bf16.mxu0 0
      %4175 = vmatpush1.bf16.msra.mxu0 0
      %4176 = vmatprep.subr.bf16.mxu0 0
      %4177 = vmatpush1.bf16.msra.mxu0 0
      %4178 = vmatprep.mubr.bf16.mxu0 0
      %4179 = vmatmul.mubr.bf16.gmra.mrb[0].mxu0 %v4101
      %v4180 = vpop.f32.mrb[0].mxu0
      %v4181 = vadd.f32 0.0, %v4180
      %v4182 = vpop.f32.mrb[0].mxu0
      %v4183 = vpop.f32.mrb[0].mxu0
      %v4184 = vpop.f32.mrb[0].mxu0
      %4185 = vdwg.mxu0
      %v4186 = vsub.f32 %v4095, %v4141
      %v4187 = vpack.c.bf16 %v4186, %v4186
      %s4188 = scalar_lea.vmem %s300, 80
      %4189 = vst.msk [vmem:[%s4188] sm:$0xf] %vm449, %v4187
      %4190 = vmatprep.subr.bf16.mxu0 0
      %4191 = vmatpush1.bf16.msra.mxu0 %v4104
      %4192 = vmatprep.subr.bf16.mxu0 0
      %4193 = vmatpush1.bf16.msra.mxu0 0
      %4194 = vmatprep.subr.bf16.mxu0 0
      %4195 = vmatpush1.bf16.msra.mxu0 0
      %4196 = vmatprep.subr.bf16.mxu0 0
      %4197 = vmatpush1.bf16.msra.mxu0 0
      %4198 = vmatprep.subr.bf16.mxu0 0
      %4199 = vmatpush1.bf16.msra.mxu0 0
      %4200 = vmatprep.subr.bf16.mxu0 0
      %4201 = vmatpush1.bf16.msra.mxu0 0
      %4202 = vmatprep.subr.bf16.mxu0 0
      %4203 = vmatpush1.bf16.msra.mxu0 0
      %4204 = vmatprep.subr.bf16.mxu0 0
      %4205 = vmatpush1.bf16.msra.mxu0 0
      %4206 = vmatprep.subr.bf16.mxu0 0
      %4207 = vmatpush1.bf16.msra.mxu0 0
      %4208 = vmatprep.subr.bf16.mxu0 0
      %4209 = vmatpush1.bf16.msra.mxu0 0
      %4210 = vmatprep.subr.bf16.mxu0 0
      %4211 = vmatpush1.bf16.msra.mxu0 0
      %4212 = vmatprep.subr.bf16.mxu0 0
      %4213 = vmatpush1.bf16.msra.mxu0 0
      %4214 = vmatprep.subr.bf16.mxu0 0
      %4215 = vmatpush1.bf16.msra.mxu0 0
      %4216 = vmatprep.subr.bf16.mxu0 0
      %4217 = vmatpush1.bf16.msra.mxu0 0
      %4218 = vmatprep.subr.bf16.mxu0 0
      %4219 = vmatpush1.bf16.msra.mxu0 0
      %4220 = vmatprep.subr.bf16.mxu0 0
      %4221 = vmatpush1.bf16.msra.mxu0 0
      %4222 = vmatprep.mubr.bf16.mxu0 0
      %4223 = vmatmul.mubr.bf16.gmra.mrb[0].mxu0 %v4055
      %v4224 = vpop.f32.mrb[0].mxu0
      %v4225 = vadd.f32 %v4181, %v4224
      %v4226 = vpop.f32.mrb[0].mxu0
      %v4227 = vpop.f32.mrb[0].mxu0
      %v4228 = vpop.f32.mrb[0].mxu0
      %4229 = vdwg.mxu0
      %v4230 = vpack.c.bf16 %v4225, %v4225
      %s4231 = scalar_lea.vmem %s306, 80
      %4232 = vst.msk [vmem:[%s4231] sm:$0xf] %vm449, %v4230
      %s4233 = scalar_lea.vmem %s276, 84
      %v4234 = vld [vmem:[%s4233] sm:$0xf]
      %s4235 = scalar_lea.vmem %s282, 84
      %v4236 = vld [vmem:[%s4235] sm:$0xf]
      %s4237 = scalar_lea.vmem %s288, 84
      %v4238 = vld [vmem:[%s4237] sm:$0xf]
      %s4239 = scalar_lea.vmem %s294, 84
      %v4240 = vld [vmem:[%s4239] sm:$0xf]
      %v4242 = vsel %vm313, %v4234, 0
      %v4245 = vsel %vm317, %v4238, 0
      %4247 = vmatprep.subr.bf16.mxu0 0
      %4248 = vmatpush1.bf16.msra.mxu0 %v4245
      %4249 = vmatprep.subr.bf16.mxu0 0
      %4250 = vmatpush1.bf16.msra.mxu0 0
      %4251 = vmatprep.subr.bf16.mxu0 0
      %4252 = vmatpush1.bf16.msra.mxu0 0
      %4253 = vmatprep.subr.bf16.mxu0 0
      %4254 = vmatpush1.bf16.msra.mxu0 0
      %4255 = vmatprep.subr.bf16.mxu0 0
      %4256 = vmatpush1.bf16.msra.mxu0 0
      %4257 = vmatprep.subr.bf16.mxu0 0
      %4258 = vmatpush1.bf16.msra.mxu0 0
      %4259 = vmatprep.subr.bf16.mxu0 0
      %4260 = vmatpush1.bf16.msra.mxu0 0
      %4261 = vmatprep.subr.bf16.mxu0 0
      %4262 = vmatpush1.bf16.msra.mxu0 0
      %4263 = vmatprep.subr.bf16.mxu0 0
      %4264 = vmatpush1.bf16.msra.mxu0 0
      %4265 = vmatprep.subr.bf16.mxu0 0
      %4266 = vmatpush1.bf16.msra.mxu0 0
      %4267 = vmatprep.subr.bf16.mxu0 0
      %4268 = vmatpush1.bf16.msra.mxu0 0
      %4269 = vmatprep.subr.bf16.mxu0 0
      %4270 = vmatpush1.bf16.msra.mxu0 0
      %4271 = vmatprep.subr.bf16.mxu0 0
      %4272 = vmatpush1.bf16.msra.mxu0 0
      %4273 = vmatprep.subr.bf16.mxu0 0
      %4274 = vmatpush1.bf16.msra.mxu0 0
      %4275 = vmatprep.subr.bf16.mxu0 0
      %4276 = vmatpush1.bf16.msra.mxu0 0
      %4277 = vmatprep.subr.bf16.mxu0 0
      %4278 = vmatpush1.bf16.msra.mxu0 0
      %4279 = vmatprep.mubr.bf16.mxu0 0
      %4280 = vmatmul.mubr.bf16.gmra.mrb[0].mxu0 %v4242
      %v4281 = vpop.f32.mrb[0].mxu0
      %v4282 = vadd.f32 0.0, %v4281
      %v4283 = vpop.f32.mrb[0].mxu0
      %v4284 = vpop.f32.mrb[0].mxu0
      %v4285 = vpop.f32.mrb[0].mxu0
      %4286 = vdwg.mxu0
      %v4288 = vsel %vm313, %v4236, 0
      %v4291 = vsel %vm317, %v4240, 0
      %4293 = vmatprep.subr.bf16.mxu0 0
      %4294 = vmatpush1.bf16.msra.mxu0 %v4291
      %4295 = vmatprep.subr.bf16.mxu0 0
      %4296 = vmatpush1.bf16.msra.mxu0 0
      %4297 = vmatprep.subr.bf16.mxu0 0
      %4298 = vmatpush1.bf16.msra.mxu0 0
      %4299 = vmatprep.subr.bf16.mxu0 0
      %4300 = vmatpush1.bf16.msra.mxu0 0
      %4301 = vmatprep.subr.bf16.mxu0 0
      %4302 = vmatpush1.bf16.msra.mxu0 0
      %4303 = vmatprep.subr.bf16.mxu0 0
      %4304 = vmatpush1.bf16.msra.mxu0 0
      %4305 = vmatprep.subr.bf16.mxu0 0
      %4306 = vmatpush1.bf16.msra.mxu0 0
      %4307 = vmatprep.subr.bf16.mxu0 0
      %4308 = vmatpush1.bf16.msra.mxu0 0
      %4309 = vmatprep.subr.bf16.mxu0 0
      %4310 = vmatpush1.bf16.msra.mxu0 0
      %4311 = vmatprep.subr.bf16.mxu0 0
      %4312 = vmatpush1.bf16.msra.mxu0 0
      %4313 = vmatprep.subr.bf16.mxu0 0
      %4314 = vmatpush1.bf16.msra.mxu0 0
      %4315 = vmatprep.subr.bf16.mxu0 0
      %4316 = vmatpush1.bf16.msra.mxu0 0
      %4317 = vmatprep.subr.bf16.mxu0 0
      %4318 = vmatpush1.bf16.msra.mxu0 0
      %4319 = vmatprep.subr.bf16.mxu0 0
      %4320 = vmatpush1.bf16.msra.mxu0 0
      %4321 = vmatprep.subr.bf16.mxu0 0
      %4322 = vmatpush1.bf16.msra.mxu0 0
      %4323 = vmatprep.subr.bf16.mxu0 0
      %4324 = vmatpush1.bf16.msra.mxu0 0
      %4325 = vmatprep.mubr.bf16.mxu0 0
      %4326 = vmatmul.mubr.bf16.gmra.mrb[0].mxu0 %v4288
      %v4327 = vpop.f32.mrb[0].mxu0
      %v4328 = vadd.f32 0.0, %v4327
      %v4329 = vpop.f32.mrb[0].mxu0
      %v4330 = vpop.f32.mrb[0].mxu0
      %v4331 = vpop.f32.mrb[0].mxu0
      %4332 = vdwg.mxu0
      %4333 = vmatprep.subr.bf16.mxu0 0
      %4334 = vmatpush1.bf16.msra.mxu0 %v4245
      %4335 = vmatprep.subr.bf16.mxu0 0
      %4336 = vmatpush1.bf16.msra.mxu0 0
      %4337 = vmatprep.subr.bf16.mxu0 0
      %4338 = vmatpush1.bf16.msra.mxu0 0
      %4339 = vmatprep.subr.bf16.mxu0 0
      %4340 = vmatpush1.bf16.msra.mxu0 0
      %4341 = vmatprep.subr.bf16.mxu0 0
      %4342 = vmatpush1.bf16.msra.mxu0 0
      %4343 = vmatprep.subr.bf16.mxu0 0
      %4344 = vmatpush1.bf16.msra.mxu0 0
      %4345 = vmatprep.subr.bf16.mxu0 0
      %4346 = vmatpush1.bf16.msra.mxu0 0
      %4347 = vmatprep.subr.bf16.mxu0 0
      %4348 = vmatpush1.bf16.msra.mxu0 0
      %4349 = vmatprep.subr.bf16.mxu0 0
      %4350 = vmatpush1.bf16.msra.mxu0 0
      %4351 = vmatprep.subr.bf16.mxu0 0
      %4352 = vmatpush1.bf16.msra.mxu0 0
      %4353 = vmatprep.subr.bf16.mxu0 0
      %4354 = vmatpush1.bf16.msra.mxu0 0
      %4355 = vmatprep.subr.bf16.mxu0 0
      %4356 = vmatpush1.bf16.msra.mxu0 0
      %4357 = vmatprep.subr.bf16.mxu0 0
      %4358 = vmatpush1.bf16.msra.mxu0 0
      %4359 = vmatprep.subr.bf16.mxu0 0
      %4360 = vmatpush1.bf16.msra.mxu0 0
      %4361 = vmatprep.subr.bf16.mxu0 0
      %4362 = vmatpush1.bf16.msra.mxu0 0
      %4363 = vmatprep.subr.bf16.mxu0 0
      %4364 = vmatpush1.bf16.msra.mxu0 0
      %4365 = vmatprep.mubr.bf16.mxu0 0
      %4366 = vmatmul.mubr.bf16.gmra.mrb[0].mxu0 %v4288
      %v4367 = vpop.f32.mrb[0].mxu0
      %v4368 = vadd.f32 0.0, %v4367
      %v4369 = vpop.f32.mrb[0].mxu0
      %v4370 = vpop.f32.mrb[0].mxu0
      %v4371 = vpop.f32.mrb[0].mxu0
      %4372 = vdwg.mxu0
      %v4373 = vsub.f32 %v4282, %v4328
      %v4374 = vpack.c.bf16 %v4373, %v4373
      %s4375 = scalar_lea.vmem %s300, 84
      %4376 = vst.msk [vmem:[%s4375] sm:$0xf] %vm449, %v4374
      %4377 = vmatprep.subr.bf16.mxu0 0
      %4378 = vmatpush1.bf16.msra.mxu0 %v4291
      %4379 = vmatprep.subr.bf16.mxu0 0
      %4380 = vmatpush1.bf16.msra.mxu0 0
      %4381 = vmatprep.subr.bf16.mxu0 0
      %4382 = vmatpush1.bf16.msra.mxu0 0
      %4383 = vmatprep.subr.bf16.mxu0 0
      %4384 = vmatpush1.bf16.msra.mxu0 0
      %4385 = vmatprep.subr.bf16.mxu0 0
      %4386 = vmatpush1.bf16.msra.mxu0 0
      %4387 = vmatprep.subr.bf16.mxu0 0
      %4388 = vmatpush1.bf16.msra.mxu0 0
      %4389 = vmatprep.subr.bf16.mxu0 0
      %4390 = vmatpush1.bf16.msra.mxu0 0
      %4391 = vmatprep.subr.bf16.mxu0 0
      %4392 = vmatpush1.bf16.msra.mxu0 0
      %4393 = vmatprep.subr.bf16.mxu0 0
      %4394 = vmatpush1.bf16.msra.mxu0 0
      %4395 = vmatprep.subr.bf16.mxu0 0
      %4396 = vmatpush1.bf16.msra.mxu0 0
      %4397 = vmatprep.subr.bf16.mxu0 0
      %4398 = vmatpush1.bf16.msra.mxu0 0
      %4399 = vmatprep.subr.bf16.mxu0 0
      %4400 = vmatpush1.bf16.msra.mxu0 0
      %4401 = vmatprep.subr.bf16.mxu0 0
      %4402 = vmatpush1.bf16.msra.mxu0 0
      %4403 = vmatprep.subr.bf16.mxu0 0
      %4404 = vmatpush1.bf16.msra.mxu0 0
      %4405 = vmatprep.subr.bf16.mxu0 0
      %4406 = vmatpush1.bf16.msra.mxu0 0
      %4407 = vmatprep.subr.bf16.mxu0 0
      %4408 = vmatpush1.bf16.msra.mxu0 0
      %4409 = vmatprep.mubr.bf16.mxu0 0
      %4410 = vmatmul.mubr.bf16.gmra.mrb[0].mxu0 %v4242
      %v4411 = vpop.f32.mrb[0].mxu0
      %v4412 = vadd.f32 %v4368, %v4411
      %v4413 = vpop.f32.mrb[0].mxu0
      %v4414 = vpop.f32.mrb[0].mxu0
      %v4415 = vpop.f32.mrb[0].mxu0
      %4416 = vdwg.mxu0
      %v4417 = vpack.c.bf16 %v4412, %v4412
      %s4418 = scalar_lea.vmem %s306, 84
      %4419 = vst.msk [vmem:[%s4418] sm:$0xf] %vm449, %v4417
      %s4420 = scalar_lea.vmem %s276, 88
      %v4421 = vld [vmem:[%s4420] sm:$0xf]
      %s4422 = scalar_lea.vmem %s282, 88
      %v4423 = vld [vmem:[%s4422] sm:$0xf]
      %s4424 = scalar_lea.vmem %s288, 88
      %v4425 = vld [vmem:[%s4424] sm:$0xf]
      %s4426 = scalar_lea.vmem %s294, 88
      %v4427 = vld [vmem:[%s4426] sm:$0xf]
      %v4429 = vsel %vm313, %v4421, 0
      %v4432 = vsel %vm317, %v4425, 0
      %4434 = vmatprep.subr.bf16.mxu0 0
      %4435 = vmatpush1.bf16.msra.mxu0 %v4432
      %4436 = vmatprep.subr.bf16.mxu0 0
      %4437 = vmatpush1.bf16.msra.mxu0 0
      %4438 = vmatprep.subr.bf16.mxu0 0
      %4439 = vmatpush1.bf16.msra.mxu0 0
      %4440 = vmatprep.subr.bf16.mxu0 0
      %4441 = vmatpush1.bf16.msra.mxu0 0
      %4442 = vmatprep.subr.bf16.mxu0 0
      %4443 = vmatpush1.bf16.msra.mxu0 0
      %4444 = vmatprep.subr.bf16.mxu0 0
      %4445 = vmatpush1.bf16.msra.mxu0 0
      %4446 = vmatprep.subr.bf16.mxu0 0
      %4447 = vmatpush1.bf16.msra.mxu0 0
      %4448 = vmatprep.subr.bf16.mxu0 0
      %4449 = vmatpush1.bf16.msra.mxu0 0
      %4450 = vmatprep.subr.bf16.mxu0 0
      %4451 = vmatpush1.bf16.msra.mxu0 0
      %4452 = vmatprep.subr.bf16.mxu0 0
      %4453 = vmatpush1.bf16.msra.mxu0 0
      %4454 = vmatprep.subr.bf16.mxu0 0
      %4455 = vmatpush1.bf16.msra.mxu0 0
      %4456 = vmatprep.subr.bf16.mxu0 0
      %4457 = vmatpush1.bf16.msra.mxu0 0
      %4458 = vmatprep.subr.bf16.mxu0 0
      %4459 = vmatpush1.bf16.msra.mxu0 0
      %4460 = vmatprep.subr.bf16.mxu0 0
      %4461 = vmatpush1.bf16.msra.mxu0 0
      %4462 = vmatprep.subr.bf16.mxu0 0
      %4463 = vmatpush1.bf16.msra.mxu0 0
      %4464 = vmatprep.subr.bf16.mxu0 0
      %4465 = vmatpush1.bf16.msra.mxu0 0
      %4466 = vmatprep.mubr.bf16.mxu0 0
      %4467 = vmatmul.mubr.bf16.gmra.mrb[0].mxu0 %v4429
      %v4468 = vpop.f32.mrb[0].mxu0
      %v4469 = vadd.f32 0.0, %v4468
      %v4470 = vpop.f32.mrb[0].mxu0
      %v4471 = vpop.f32.mrb[0].mxu0
      %v4472 = vpop.f32.mrb[0].mxu0
      %4473 = vdwg.mxu0
      %v4475 = vsel %vm313, %v4423, 0
      %v4478 = vsel %vm317, %v4427, 0
      %4480 = vmatprep.subr.bf16.mxu0 0
      %4481 = vmatpush1.bf16.msra.mxu0 %v4478
      %4482 = vmatprep.subr.bf16.mxu0 0
      %4483 = vmatpush1.bf16.msra.mxu0 0
      %4484 = vmatprep.subr.bf16.mxu0 0
      %4485 = vmatpush1.bf16.msra.mxu0 0
      %4486 = vmatprep.subr.bf16.mxu0 0
      %4487 = vmatpush1.bf16.msra.mxu0 0
      %4488 = vmatprep.subr.bf16.mxu0 0
      %4489 = vmatpush1.bf16.msra.mxu0 0
      %4490 = vmatprep.subr.bf16.mxu0 0
      %4491 = vmatpush1.bf16.msra.mxu0 0
      %4492 = vmatprep.subr.bf16.mxu0 0
      %4493 = vmatpush1.bf16.msra.mxu0 0
      %4494 = vmatprep.subr.bf16.mxu0 0
      %4495 = vmatpush1.bf16.msra.mxu0 0
      %4496 = vmatprep.subr.bf16.mxu0 0
      %4497 = vmatpush1.bf16.msra.mxu0 0
      %4498 = vmatprep.subr.bf16.mxu0 0
      %4499 = vmatpush1.bf16.msra.mxu0 0
      %4500 = vmatprep.subr.bf16.mxu0 0
      %4501 = vmatpush1.bf16.msra.mxu0 0
      %4502 = vmatprep.subr.bf16.mxu0 0
      %4503 = vmatpush1.bf16.msra.mxu0 0
      %4504 = vmatprep.subr.bf16.mxu0 0
      %4505 = vmatpush1.bf16.msra.mxu0 0
      %4506 = vmatprep.subr.bf16.mxu0 0
      %4507 = vmatpush1.bf16.msra.mxu0 0
      %4508 = vmatprep.subr.bf16.mxu0 0
      %4509 = vmatpush1.bf16.msra.mxu0 0
      %4510 = vmatprep.subr.bf16.mxu0 0
      %4511 = vmatpush1.bf16.msra.mxu0 0
      %4512 = vmatprep.mubr.bf16.mxu0 0
      %4513 = vmatmul.mubr.bf16.gmra.mrb[0].mxu0 %v4475
      %v4514 = vpop.f32.mrb[0].mxu0
      %v4515 = vadd.f32 0.0, %v4514
      %v4516 = vpop.f32.mrb[0].mxu0
      %v4517 = vpop.f32.mrb[0].mxu0
      %v4518 = vpop.f32.mrb[0].mxu0
      %4519 = vdwg.mxu0
      %4520 = vmatprep.subr.bf16.mxu0 0
      %4521 = vmatpush1.bf16.msra.mxu0 %v4432
      %4522 = vmatprep.subr.bf16.mxu0 0
      %4523 = vmatpush1.bf16.msra.mxu0 0
      %4524 = vmatprep.subr.bf16.mxu0 0
      %4525 = vmatpush1.bf16.msra.mxu0 0
      %4526 = vmatprep.subr.bf16.mxu0 0
      %4527 = vmatpush1.bf16.msra.mxu0 0
      %4528 = vmatprep.subr.bf16.mxu0 0
      %4529 = vmatpush1.bf16.msra.mxu0 0
      %4530 = vmatprep.subr.bf16.mxu0 0
      %4531 = vmatpush1.bf16.msra.mxu0 0
      %4532 = vmatprep.subr.bf16.mxu0 0
      %4533 = vmatpush1.bf16.msra.mxu0 0
      %4534 = vmatprep.subr.bf16.mxu0 0
      %4535 = vmatpush1.bf16.msra.mxu0 0
      %4536 = vmatprep.subr.bf16.mxu0 0
      %4537 = vmatpush1.bf16.msra.mxu0 0
      %4538 = vmatprep.subr.bf16.mxu0 0
      %4539 = vmatpush1.bf16.msra.mxu0 0
      %4540 = vmatprep.subr.bf16.mxu0 0
      %4541 = vmatpush1.bf16.msra.mxu0 0
      %4542 = vmatprep.subr.bf16.mxu0 0
      %4543 = vmatpush1.bf16.msra.mxu0 0
      %4544 = vmatprep.subr.bf16.mxu0 0
      %4545 = vmatpush1.bf16.msra.mxu0 0
      %4546 = vmatprep.subr.bf16.mxu0 0
      %4547 = vmatpush1.bf16.msra.mxu0 0
      %4548 = vmatprep.subr.bf16.mxu0 0
      %4549 = vmatpush1.bf16.msra.mxu0 0
      %4550 = vmatprep.subr.bf16.mxu0 0
      %4551 = vmatpush1.bf16.msra.mxu0 0
      %4552 = vmatprep.mubr.bf16.mxu0 0
      %4553 = vmatmul.mubr.bf16.gmra.mrb[0].mxu0 %v4475
      %v4554 = vpop.f32.mrb[0].mxu0
      %v4555 = vadd.f32 0.0, %v4554
      %v4556 = vpop.f32.mrb[0].mxu0
      %v4557 = vpop.f32.mrb[0].mxu0
      %v4558 = vpop.f32.mrb[0].mxu0
      %4559 = vdwg.mxu0
      %v4560 = vsub.f32 %v4469, %v4515
      %v4561 = vpack.c.bf16 %v4560, %v4560
      %s4562 = scalar_lea.vmem %s300, 88
      %4563 = vst.msk [vmem:[%s4562] sm:$0xf] %vm449, %v4561
      %4564 = vmatprep.subr.bf16.mxu0 0
      %4565 = vmatpush1.bf16.msra.mxu0 %v4478
      %4566 = vmatprep.subr.bf16.mxu0 0
      %4567 = vmatpush1.bf16.msra.mxu0 0
      %4568 = vmatprep.subr.bf16.mxu0 0
      %4569 = vmatpush1.bf16.msra.mxu0 0
      %4570 = vmatprep.subr.bf16.mxu0 0
      %4571 = vmatpush1.bf16.msra.mxu0 0
      %4572 = vmatprep.subr.bf16.mxu0 0
      %4573 = vmatpush1.bf16.msra.mxu0 0
      %4574 = vmatprep.subr.bf16.mxu0 0
      %4575 = vmatpush1.bf16.msra.mxu0 0
      %4576 = vmatprep.subr.bf16.mxu0 0
      %4577 = vmatpush1.bf16.msra.mxu0 0
      %4578 = vmatprep.subr.bf16.mxu0 0
      %4579 = vmatpush1.bf16.msra.mxu0 0
      %4580 = vmatprep.subr.bf16.mxu0 0
      %4581 = vmatpush1.bf16.msra.mxu0 0
      %4582 = vmatprep.subr.bf16.mxu0 0
      %4583 = vmatpush1.bf16.msra.mxu0 0
      %4584 = vmatprep.subr.bf16.mxu0 0
      %4585 = vmatpush1.bf16.msra.mxu0 0
      %4586 = vmatprep.subr.bf16.mxu0 0
      %4587 = vmatpush1.bf16.msra.mxu0 0
      %4588 = vmatprep.subr.bf16.mxu0 0
      %4589 = vmatpush1.bf16.msra.mxu0 0
      %4590 = vmatprep.subr.bf16.mxu0 0
      %4591 = vmatpush1.bf16.msra.mxu0 0
      %4592 = vmatprep.subr.bf16.mxu0 0
      %4593 = vmatpush1.bf16.msra.mxu0 0
      %4594 = vmatprep.subr.bf16.mxu0 0
      %4595 = vmatpush1.bf16.msra.mxu0 0
      %4596 = vmatprep.mubr.bf16.mxu0 0
      %4597 = vmatmul.mubr.bf16.gmra.mrb[0].mxu0 %v4429
      %v4598 = vpop.f32.mrb[0].mxu0
      %v4599 = vadd.f32 %v4555, %v4598
      %v4600 = vpop.f32.mrb[0].mxu0
      %v4601 = vpop.f32.mrb[0].mxu0
      %v4602 = vpop.f32.mrb[0].mxu0
      %4603 = vdwg.mxu0
      %v4604 = vpack.c.bf16 %v4599, %v4599
      %s4605 = scalar_lea.vmem %s306, 88
      %4606 = vst.msk [vmem:[%s4605] sm:$0xf] %vm449, %v4604
      %s4607 = scalar_lea.vmem %s276, 92
      %v4608 = vld [vmem:[%s4607] sm:$0xf]
      %s4609 = scalar_lea.vmem %s282, 92
      %v4610 = vld [vmem:[%s4609] sm:$0xf]
      %s4611 = scalar_lea.vmem %s288, 92
      %v4612 = vld [vmem:[%s4611] sm:$0xf]
      %s4613 = scalar_lea.vmem %s294, 92
      %v4614 = vld [vmem:[%s4613] sm:$0xf]
      %v4616 = vsel %vm313, %v4608, 0
      %v4619 = vsel %vm317, %v4612, 0
      %4621 = vmatprep.subr.bf16.mxu0 0
      %4622 = vmatpush1.bf16.msra.mxu0 %v4619
      %4623 = vmatprep.subr.bf16.mxu0 0
      %4624 = vmatpush1.bf16.msra.mxu0 0
      %4625 = vmatprep.subr.bf16.mxu0 0
      %4626 = vmatpush1.bf16.msra.mxu0 0
      %4627 = vmatprep.subr.bf16.mxu0 0
      %4628 = vmatpush1.bf16.msra.mxu0 0
      %4629 = vmatprep.subr.bf16.mxu0 0
      %4630 = vmatpush1.bf16.msra.mxu0 0
      %4631 = vmatprep.subr.bf16.mxu0 0
      %4632 = vmatpush1.bf16.msra.mxu0 0
      %4633 = vmatprep.subr.bf16.mxu0 0
      %4634 = vmatpush1.bf16.msra.mxu0 0
      %4635 = vmatprep.subr.bf16.mxu0 0
      %4636 = vmatpush1.bf16.msra.mxu0 0
      %4637 = vmatprep.subr.bf16.mxu0 0
      %4638 = vmatpush1.bf16.msra.mxu0 0
      %4639 = vmatprep.subr.bf16.mxu0 0
      %4640 = vmatpush1.bf16.msra.mxu0 0
      %4641 = vmatprep.subr.bf16.mxu0 0
      %4642 = vmatpush1.bf16.msra.mxu0 0
      %4643 = vmatprep.subr.bf16.mxu0 0
      %4644 = vmatpush1.bf16.msra.mxu0 0
      %4645 = vmatprep.subr.bf16.mxu0 0
      %4646 = vmatpush1.bf16.msra.mxu0 0
      %4647 = vmatprep.subr.bf16.mxu0 0
      %4648 = vmatpush1.bf16.msra.mxu0 0
      %4649 = vmatprep.subr.bf16.mxu0 0
      %4650 = vmatpush1.bf16.msra.mxu0 0
      %4651 = vmatprep.subr.bf16.mxu0 0
      %4652 = vmatpush1.bf16.msra.mxu0 0
      %4653 = vmatprep.mubr.bf16.mxu0 0
      %4654 = vmatmul.mubr.bf16.gmra.mrb[0].mxu0 %v4616
      %v4655 = vpop.f32.mrb[0].mxu0
      %v4656 = vadd.f32 0.0, %v4655
      %v4657 = vpop.f32.mrb[0].mxu0
      %v4658 = vpop.f32.mrb[0].mxu0
      %v4659 = vpop.f32.mrb[0].mxu0
      %4660 = vdwg.mxu0
      %v4662 = vsel %vm313, %v4610, 0
      %v4665 = vsel %vm317, %v4614, 0
      %4667 = vmatprep.subr.bf16.mxu0 0
      %4668 = vmatpush1.bf16.msra.mxu0 %v4665
      %4669 = vmatprep.subr.bf16.mxu0 0
      %4670 = vmatpush1.bf16.msra.mxu0 0
      %4671 = vmatprep.subr.bf16.mxu0 0
      %4672 = vmatpush1.bf16.msra.mxu0 0
      %4673 = vmatprep.subr.bf16.mxu0 0
      %4674 = vmatpush1.bf16.msra.mxu0 0
      %4675 = vmatprep.subr.bf16.mxu0 0
      %4676 = vmatpush1.bf16.msra.mxu0 0
      %4677 = vmatprep.subr.bf16.mxu0 0
      %4678 = vmatpush1.bf16.msra.mxu0 0
      %4679 = vmatprep.subr.bf16.mxu0 0
      %4680 = vmatpush1.bf16.msra.mxu0 0
      %4681 = vmatprep.subr.bf16.mxu0 0
      %4682 = vmatpush1.bf16.msra.mxu0 0
      %4683 = vmatprep.subr.bf16.mxu0 0
      %4684 = vmatpush1.bf16.msra.mxu0 0
      %4685 = vmatprep.subr.bf16.mxu0 0
      %4686 = vmatpush1.bf16.msra.mxu0 0
      %4687 = vmatprep.subr.bf16.mxu0 0
      %4688 = vmatpush1.bf16.msra.mxu0 0
      %4689 = vmatprep.subr.bf16.mxu0 0
      %4690 = vmatpush1.bf16.msra.mxu0 0
      %4691 = vmatprep.subr.bf16.mxu0 0
      %4692 = vmatpush1.bf16.msra.mxu0 0
      %4693 = vmatprep.subr.bf16.mxu0 0
      %4694 = vmatpush1.bf16.msra.mxu0 0
      %4695 = vmatprep.subr.bf16.mxu0 0
      %4696 = vmatpush1.bf16.msra.mxu0 0
      %4697 = vmatprep.subr.bf16.mxu0 0
      %4698 = vmatpush1.bf16.msra.mxu0 0
      %4699 = vmatprep.mubr.bf16.mxu0 0
      %4700 = vmatmul.mubr.bf16.gmra.mrb[0].mxu0 %v4662
      %v4701 = vpop.f32.mrb[0].mxu0
      %v4702 = vadd.f32 0.0, %v4701
      %v4703 = vpop.f32.mrb[0].mxu0
      %v4704 = vpop.f32.mrb[0].mxu0
      %v4705 = vpop.f32.mrb[0].mxu0
      %4706 = vdwg.mxu0
      %4707 = vmatprep.subr.bf16.mxu0 0
      %4708 = vmatpush1.bf16.msra.mxu0 %v4619
      %4709 = vmatprep.subr.bf16.mxu0 0
      %4710 = vmatpush1.bf16.msra.mxu0 0
      %4711 = vmatprep.subr.bf16.mxu0 0
      %4712 = vmatpush1.bf16.msra.mxu0 0
      %4713 = vmatprep.subr.bf16.mxu0 0
      %4714 = vmatpush1.bf16.msra.mxu0 0
      %4715 = vmatprep.subr.bf16.mxu0 0
      %4716 = vmatpush1.bf16.msra.mxu0 0
      %4717 = vmatprep.subr.bf16.mxu0 0
      %4718 = vmatpush1.bf16.msra.mxu0 0
      %4719 = vmatprep.subr.bf16.mxu0 0
      %4720 = vmatpush1.bf16.msra.mxu0 0
      %4721 = vmatprep.subr.bf16.mxu0 0
      %4722 = vmatpush1.bf16.msra.mxu0 0
      %4723 = vmatprep.subr.bf16.mxu0 0
      %4724 = vmatpush1.bf16.msra.mxu0 0
      %4725 = vmatprep.subr.bf16.mxu0 0
      %4726 = vmatpush1.bf16.msra.mxu0 0
      %4727 = vmatprep.subr.bf16.mxu0 0
      %4728 = vmatpush1.bf16.msra.mxu0 0
      %4729 = vmatprep.subr.bf16.mxu0 0
      %4730 = vmatpush1.bf16.msra.mxu0 0
      %4731 = vmatprep.subr.bf16.mxu0 0
      %4732 = vmatpush1.bf16.msra.mxu0 0
      %4733 = vmatprep.subr.bf16.mxu0 0
      %4734 = vmatpush1.bf16.msra.mxu0 0
      %4735 = vmatprep.subr.bf16.mxu0 0
      %4736 = vmatpush1.bf16.msra.mxu0 0
      %4737 = vmatprep.subr.bf16.mxu0 0
      %4738 = vmatpush1.bf16.msra.mxu0 0
      %4739 = vmatprep.mubr.bf16.mxu0 0
      %4740 = vmatmul.mubr.bf16.gmra.mrb[0].mxu0 %v4662
      %v4741 = vpop.f32.mrb[0].mxu0
      %v4742 = vadd.f32 0.0, %v4741
      %v4743 = vpop.f32.mrb[0].mxu0
      %v4744 = vpop.f32.mrb[0].mxu0
      %v4745 = vpop.f32.mrb[0].mxu0
      %4746 = vdwg.mxu0
      %v4747 = vsub.f32 %v4656, %v4702
      %v4748 = vpack.c.bf16 %v4747, %v4747
      %s4749 = scalar_lea.vmem %s300, 92
      %4750 = vst.msk [vmem:[%s4749] sm:$0xf] %vm449, %v4748
      %4751 = vmatprep.subr.bf16.mxu0 0
      %4752 = vmatpush1.bf16.msra.mxu0 %v4665
      %4753 = vmatprep.subr.bf16.mxu0 0
      %4754 = vmatpush1.bf16.msra.mxu0 0
      %4755 = vmatprep.subr.bf16.mxu0 0
      %4756 = vmatpush1.bf16.msra.mxu0 0
      %4757 = vmatprep.subr.bf16.mxu0 0
      %4758 = vmatpush1.bf16.msra.mxu0 0
      %4759 = vmatprep.subr.bf16.mxu0 0
      %4760 = vmatpush1.bf16.msra.mxu0 0
      %4761 = vmatprep.subr.bf16.mxu0 0
      %4762 = vmatpush1.bf16.msra.mxu0 0
      %4763 = vmatprep.subr.bf16.mxu0 0
      %4764 = vmatpush1.bf16.msra.mxu0 0
      %4765 = vmatprep.subr.bf16.mxu0 0
      %4766 = vmatpush1.bf16.msra.mxu0 0
      %4767 = vmatprep.subr.bf16.mxu0 0
      %4768 = vmatpush1.bf16.msra.mxu0 0
      %4769 = vmatprep.subr.bf16.mxu0 0
      %4770 = vmatpush1.bf16.msra.mxu0 0
      %4771 = vmatprep.subr.bf16.mxu0 0
      %4772 = vmatpush1.bf16.msra.mxu0 0
      %4773 = vmatprep.subr.bf16.mxu0 0
      %4774 = vmatpush1.bf16.msra.mxu0 0
      %4775 = vmatprep.subr.bf16.mxu0 0
      %4776 = vmatpush1.bf16.msra.mxu0 0
      %4777 = vmatprep.subr.bf16.mxu0 0
      %4778 = vmatpush1.bf16.msra.mxu0 0
      %4779 = vmatprep.subr.bf16.mxu0 0
      %4780 = vmatpush1.bf16.msra.mxu0 0
      %4781 = vmatprep.subr.bf16.mxu0 0
      %4782 = vmatpush1.bf16.msra.mxu0 0
      %4783 = vmatprep.mubr.bf16.mxu0 0
      %4784 = vmatmul.mubr.bf16.gmra.mrb[0].mxu0 %v4616
      %v4785 = vpop.f32.mrb[0].mxu0
      %v4786 = vadd.f32 %v4742, %v4785
      %v4787 = vpop.f32.mrb[0].mxu0
      %v4788 = vpop.f32.mrb[0].mxu0
      %v4789 = vpop.f32.mrb[0].mxu0
      %4790 = vdwg.mxu0
      %v4791 = vpack.c.bf16 %v4786, %v4786
      %s4792 = scalar_lea.vmem %s306, 92
      %4793 = vst.msk [vmem:[%s4792] sm:$0xf] %vm449, %v4791
      %s4794 = scalar_lea.vmem %s276, 96
      %v4795 = vld [vmem:[%s4794] sm:$0xf]
      %s4796 = scalar_lea.vmem %s282, 96
      %v4797 = vld [vmem:[%s4796] sm:$0xf]
      %s4798 = scalar_lea.vmem %s288, 96
      %v4799 = vld [vmem:[%s4798] sm:$0xf]
      %s4800 = scalar_lea.vmem %s294, 96
      %v4801 = vld [vmem:[%s4800] sm:$0xf]
      %v4803 = vsel %vm313, %v4795, 0
      %v4806 = vsel %vm317, %v4799, 0
      %4808 = vmatprep.subr.bf16.mxu0 0
      %4809 = vmatpush1.bf16.msra.mxu0 %v4806
      %4810 = vmatprep.subr.bf16.mxu0 0
      %4811 = vmatpush1.bf16.msra.mxu0 0
      %4812 = vmatprep.subr.bf16.mxu0 0
      %4813 = vmatpush1.bf16.msra.mxu0 0
      %4814 = vmatprep.subr.bf16.mxu0 0
      %4815 = vmatpush1.bf16.msra.mxu0 0
      %4816 = vmatprep.subr.bf16.mxu0 0
      %4817 = vmatpush1.bf16.msra.mxu0 0
      %4818 = vmatprep.subr.bf16.mxu0 0
      %4819 = vmatpush1.bf16.msra.mxu0 0
      %4820 = vmatprep.subr.bf16.mxu0 0
      %4821 = vmatpush1.bf16.msra.mxu0 0
      %4822 = vmatprep.subr.bf16.mxu0 0
      %4823 = vmatpush1.bf16.msra.mxu0 0
      %4824 = vmatprep.subr.bf16.mxu0 0
      %4825 = vmatpush1.bf16.msra.mxu0 0
      %4826 = vmatprep.subr.bf16.mxu0 0
      %4827 = vmatpush1.bf16.msra.mxu0 0
      %4828 = vmatprep.subr.bf16.mxu0 0
      %4829 = vmatpush1.bf16.msra.mxu0 0
      %4830 = vmatprep.subr.bf16.mxu0 0
      %4831 = vmatpush1.bf16.msra.mxu0 0
      %4832 = vmatprep.subr.bf16.mxu0 0
      %4833 = vmatpush1.bf16.msra.mxu0 0
      %4834 = vmatprep.subr.bf16.mxu0 0
      %4835 = vmatpush1.bf16.msra.mxu0 0
      %4836 = vmatprep.subr.bf16.mxu0 0
      %4837 = vmatpush1.bf16.msra.mxu0 0
      %4838 = vmatprep.subr.bf16.mxu0 0
      %4839 = vmatpush1.bf16.msra.mxu0 0
      %4840 = vmatprep.mubr.bf16.mxu0 0
      %4841 = vmatmul.mubr.bf16.gmra.mrb[0].mxu0 %v4803
      %v4842 = vpop.f32.mrb[0].mxu0
      %v4843 = vadd.f32 0.0, %v4842
      %v4844 = vpop.f32.mrb[0].mxu0
      %v4845 = vpop.f32.mrb[0].mxu0
      %v4846 = vpop.f32.mrb[0].mxu0
      %4847 = vdwg.mxu0
      %v4849 = vsel %vm313, %v4797, 0
      %v4852 = vsel %vm317, %v4801, 0
      %4854 = vmatprep.subr.bf16.mxu0 0
      %4855 = vmatpush1.bf16.msra.mxu0 %v4852
      %4856 = vmatprep.subr.bf16.mxu0 0
      %4857 = vmatpush1.bf16.msra.mxu0 0
      %4858 = vmatprep.subr.bf16.mxu0 0
      %4859 = vmatpush1.bf16.msra.mxu0 0
      %4860 = vmatprep.subr.bf16.mxu0 0
      %4861 = vmatpush1.bf16.msra.mxu0 0
      %4862 = vmatprep.subr.bf16.mxu0 0
      %4863 = vmatpush1.bf16.msra.mxu0 0
      %4864 = vmatprep.subr.bf16.mxu0 0
      %4865 = vmatpush1.bf16.msra.mxu0 0
      %4866 = vmatprep.subr.bf16.mxu0 0
      %4867 = vmatpush1.bf16.msra.mxu0 0
      %4868 = vmatprep.subr.bf16.mxu0 0
      %4869 = vmatpush1.bf16.msra.mxu0 0
      %4870 = vmatprep.subr.bf16.mxu0 0
      %4871 = vmatpush1.bf16.msra.mxu0 0
      %4872 = vmatprep.subr.bf16.mxu0 0
      %4873 = vmatpush1.bf16.msra.mxu0 0
      %4874 = vmatprep.subr.bf16.mxu0 0
      %4875 = vmatpush1.bf16.msra.mxu0 0
      %4876 = vmatprep.subr.bf16.mxu0 0
      %4877 = vmatpush1.bf16.msra.mxu0 0
      %4878 = vmatprep.subr.bf16.mxu0 0
      %4879 = vmatpush1.bf16.msra.mxu0 0
      %4880 = vmatprep.subr.bf16.mxu0 0
      %4881 = vmatpush1.bf16.msra.mxu0 0
      %4882 = vmatprep.subr.bf16.mxu0 0
      %4883 = vmatpush1.bf16.msra.mxu0 0
      %4884 = vmatprep.subr.bf16.mxu0 0
      %4885 = vmatpush1.bf16.msra.mxu0 0
      %4886 = vmatprep.mubr.bf16.mxu0 0
      %4887 = vmatmul.mubr.bf16.gmra.mrb[0].mxu0 %v4849
      %v4888 = vpop.f32.mrb[0].mxu0
      %v4889 = vadd.f32 0.0, %v4888
      %v4890 = vpop.f32.mrb[0].mxu0
      %v4891 = vpop.f32.mrb[0].mxu0
      %v4892 = vpop.f32.mrb[0].mxu0
      %4893 = vdwg.mxu0
      %4894 = vmatprep.subr.bf16.mxu0 0
      %4895 = vmatpush1.bf16.msra.mxu0 %v4806
      %4896 = vmatprep.subr.bf16.mxu0 0
      %4897 = vmatpush1.bf16.msra.mxu0 0
      %4898 = vmatprep.subr.bf16.mxu0 0
      %4899 = vmatpush1.bf16.msra.mxu0 0
      %4900 = vmatprep.subr.bf16.mxu0 0
      %4901 = vmatpush1.bf16.msra.mxu0 0
      %4902 = vmatprep.subr.bf16.mxu0 0
      %4903 = vmatpush1.bf16.msra.mxu0 0
      %4904 = vmatprep.subr.bf16.mxu0 0
      %4905 = vmatpush1.bf16.msra.mxu0 0
      %4906 = vmatprep.subr.bf16.mxu0 0
      %4907 = vmatpush1.bf16.msra.mxu0 0
      %4908 = vmatprep.subr.bf16.mxu0 0
      %4909 = vmatpush1.bf16.msra.mxu0 0
      %4910 = vmatprep.subr.bf16.mxu0 0
      %4911 = vmatpush1.bf16.msra.mxu0 0
      %4912 = vmatprep.subr.bf16.mxu0 0
      %4913 = vmatpush1.bf16.msra.mxu0 0
      %4914 = vmatprep.subr.bf16.mxu0 0
      %4915 = vmatpush1.bf16.msra.mxu0 0
      %4916 = vmatprep.subr.bf16.mxu0 0
      %4917 = vmatpush1.bf16.msra.mxu0 0
      %4918 = vmatprep.subr.bf16.mxu0 0
      %4919 = vmatpush1.bf16.msra.mxu0 0
      %4920 = vmatprep.subr.bf16.mxu0 0
      %4921 = vmatpush1.bf16.msra.mxu0 0
      %4922 = vmatprep.subr.bf16.mxu0 0
      %4923 = vmatpush1.bf16.msra.mxu0 0
      %4924 = vmatprep.subr.bf16.mxu0 0
      %4925 = vmatpush1.bf16.msra.mxu0 0
      %4926 = vmatprep.mubr.bf16.mxu0 0
      %4927 = vmatmul.mubr.bf16.gmra.mrb[0].mxu0 %v4849
      %v4928 = vpop.f32.mrb[0].mxu0
      %v4929 = vadd.f32 0.0, %v4928
      %v4930 = vpop.f32.mrb[0].mxu0
      %v4931 = vpop.f32.mrb[0].mxu0
      %v4932 = vpop.f32.mrb[0].mxu0
      %4933 = vdwg.mxu0
      %v4934 = vsub.f32 %v4843, %v4889
      %v4935 = vpack.c.bf16 %v4934, %v4934
      %s4936 = scalar_lea.vmem %s300, 96
      %4937 = vst.msk [vmem:[%s4936] sm:$0xf] %vm449, %v4935
      %4938 = vmatprep.subr.bf16.mxu0 0
      %4939 = vmatpush1.bf16.msra.mxu0 %v4852
      %4940 = vmatprep.subr.bf16.mxu0 0
      %4941 = vmatpush1.bf16.msra.mxu0 0
      %4942 = vmatprep.subr.bf16.mxu0 0
      %4943 = vmatpush1.bf16.msra.mxu0 0
      %4944 = vmatprep.subr.bf16.mxu0 0
      %4945 = vmatpush1.bf16.msra.mxu0 0
      %4946 = vmatprep.subr.bf16.mxu0 0
      %4947 = vmatpush1.bf16.msra.mxu0 0
      %4948 = vmatprep.subr.bf16.mxu0 0
      %4949 = vmatpush1.bf16.msra.mxu0 0
      %4950 = vmatprep.subr.bf16.mxu0 0
      %4951 = vmatpush1.bf16.msra.mxu0 0
      %4952 = vmatprep.subr.bf16.mxu0 0
      %4953 = vmatpush1.bf16.msra.mxu0 0
      %4954 = vmatprep.subr.bf16.mxu0 0
      %4955 = vmatpush1.bf16.msra.mxu0 0
      %4956 = vmatprep.subr.bf16.mxu0 0
      %4957 = vmatpush1.bf16.msra.mxu0 0
      %4958 = vmatprep.subr.bf16.mxu0 0
      %4959 = vmatpush1.bf16.msra.mxu0 0
      %4960 = vmatprep.subr.bf16.mxu0 0
      %4961 = vmatpush1.bf16.msra.mxu0 0
      %4962 = vmatprep.subr.bf16.mxu0 0
      %4963 = vmatpush1.bf16.msra.mxu0 0
      %4964 = vmatprep.subr.bf16.mxu0 0
      %4965 = vmatpush1.bf16.msra.mxu0 0
      %4966 = vmatprep.subr.bf16.mxu0 0
      %4967 = vmatpush1.bf16.msra.mxu0 0
      %4968 = vmatprep.subr.bf16.mxu0 0
      %4969 = vmatpush1.bf16.msra.mxu0 0
      %4970 = vmatprep.mubr.bf16.mxu0 0
      %4971 = vmatmul.mubr.bf16.gmra.mrb[0].mxu0 %v4803
      %v4972 = vpop.f32.mrb[0].mxu0
      %v4973 = vadd.f32 %v4929, %v4972
      %v4974 = vpop.f32.mrb[0].mxu0
      %v4975 = vpop.f32.mrb[0].mxu0
      %v4976 = vpop.f32.mrb[0].mxu0
      %4977 = vdwg.mxu0
      %v4978 = vpack.c.bf16 %v4973, %v4973
      %s4979 = scalar_lea.vmem %s306, 96
      %4980 = vst.msk [vmem:[%s4979] sm:$0xf] %vm449, %v4978
      %s4981 = scalar_lea.vmem %s276, 100
      %v4982 = vld [vmem:[%s4981] sm:$0xf]
      %s4983 = scalar_lea.vmem %s282, 100
      %v4984 = vld [vmem:[%s4983] sm:$0xf]
      %s4985 = scalar_lea.vmem %s288, 100
      %v4986 = vld [vmem:[%s4985] sm:$0xf]
      %s4987 = scalar_lea.vmem %s294, 100
      %v4988 = vld [vmem:[%s4987] sm:$0xf]
      %v4990 = vsel %vm313, %v4982, 0
      %v4993 = vsel %vm317, %v4986, 0
      %4995 = vmatprep.subr.bf16.mxu0 0
      %4996 = vmatpush1.bf16.msra.mxu0 %v4993
      %4997 = vmatprep.subr.bf16.mxu0 0
      %4998 = vmatpush1.bf16.msra.mxu0 0
      %4999 = vmatprep.subr.bf16.mxu0 0
      %5000 = vmatpush1.bf16.msra.mxu0 0
      %5001 = vmatprep.subr.bf16.mxu0 0
      %5002 = vmatpush1.bf16.msra.mxu0 0
      %5003 = vmatprep.subr.bf16.mxu0 0
      %5004 = vmatpush1.bf16.msra.mxu0 0
      %5005 = vmatprep.subr.bf16.mxu0 0
      %5006 = vmatpush1.bf16.msra.mxu0 0
      %5007 = vmatprep.subr.bf16.mxu0 0
      %5008 = vmatpush1.bf16.msra.mxu0 0
      %5009 = vmatprep.subr.bf16.mxu0 0
      %5010 = vmatpush1.bf16.msra.mxu0 0
      %5011 = vmatprep.subr.bf16.mxu0 0
      %5012 = vmatpush1.bf16.msra.mxu0 0
      %5013 = vmatprep.subr.bf16.mxu0 0
      %5014 = vmatpush1.bf16.msra.mxu0 0
      %5015 = vmatprep.subr.bf16.mxu0 0
      %5016 = vmatpush1.bf16.msra.mxu0 0
      %5017 = vmatprep.subr.bf16.mxu0 0
      %5018 = vmatpush1.bf16.msra.mxu0 0
      %5019 = vmatprep.subr.bf16.mxu0 0
      %5020 = vmatpush1.bf16.msra.mxu0 0
      %5021 = vmatprep.subr.bf16.mxu0 0
      %5022 = vmatpush1.bf16.msra.mxu0 0
      %5023 = vmatprep.subr.bf16.mxu0 0
      %5024 = vmatpush1.bf16.msra.mxu0 0
      %5025 = vmatprep.subr.bf16.mxu0 0
      %5026 = vmatpush1.bf16.msra.mxu0 0
      %5027 = vmatprep.mubr.bf16.mxu0 0
      %5028 = vmatmul.mubr.bf16.gmra.mrb[0].mxu0 %v4990
      %v5029 = vpop.f32.mrb[0].mxu0
      %v5030 = vadd.f32 0.0, %v5029
      %v5031 = vpop.f32.mrb[0].mxu0
      %v5032 = vpop.f32.mrb[0].mxu0
      %v5033 = vpop.f32.mrb[0].mxu0
      %5034 = vdwg.mxu0
      %v5036 = vsel %vm313, %v4984, 0
      %v5039 = vsel %vm317, %v4988, 0
      %5041 = vmatprep.subr.bf16.mxu0 0
      %5042 = vmatpush1.bf16.msra.mxu0 %v5039
      %5043 = vmatprep.subr.bf16.mxu0 0
      %5044 = vmatpush1.bf16.msra.mxu0 0
      %5045 = vmatprep.subr.bf16.mxu0 0
      %5046 = vmatpush1.bf16.msra.mxu0 0
      %5047 = vmatprep.subr.bf16.mxu0 0
      %5048 = vmatpush1.bf16.msra.mxu0 0
      %5049 = vmatprep.subr.bf16.mxu0 0
      %5050 = vmatpush1.bf16.msra.mxu0 0
      %5051 = vmatprep.subr.bf16.mxu0 0
      %5052 = vmatpush1.bf16.msra.mxu0 0
      %5053 = vmatprep.subr.bf16.mxu0 0
      %5054 = vmatpush1.bf16.msra.mxu0 0
      %5055 = vmatprep.subr.bf16.mxu0 0
      %5056 = vmatpush1.bf16.msra.mxu0 0
      %5057 = vmatprep.subr.bf16.mxu0 0
      %5058 = vmatpush1.bf16.msra.mxu0 0
      %5059 = vmatprep.subr.bf16.mxu0 0
      %5060 = vmatpush1.bf16.msra.mxu0 0
      %5061 = vmatprep.subr.bf16.mxu0 0
      %5062 = vmatpush1.bf16.msra.mxu0 0
      %5063 = vmatprep.subr.bf16.mxu0 0
      %5064 = vmatpush1.bf16.msra.mxu0 0
      %5065 = vmatprep.subr.bf16.mxu0 0
      %5066 = vmatpush1.bf16.msra.mxu0 0
      %5067 = vmatprep.subr.bf16.mxu0 0
      %5068 = vmatpush1.bf16.msra.mxu0 0
      %5069 = vmatprep.subr.bf16.mxu0 0
      %5070 = vmatpush1.bf16.msra.mxu0 0
      %5071 = vmatprep.subr.bf16.mxu0 0
      %5072 = vmatpush1.bf16.msra.mxu0 0
      %5073 = vmatprep.mubr.bf16.mxu0 0
      %5074 = vmatmul.mubr.bf16.gmra.mrb[0].mxu0 %v5036
      %v5075 = vpop.f32.mrb[0].mxu0
      %v5076 = vadd.f32 0.0, %v5075
      %v5077 = vpop.f32.mrb[0].mxu0
      %v5078 = vpop.f32.mrb[0].mxu0
      %v5079 = vpop.f32.mrb[0].mxu0
      %5080 = vdwg.mxu0
      %5081 = vmatprep.subr.bf16.mxu0 0
      %5082 = vmatpush1.bf16.msra.mxu0 %v4993
      %5083 = vmatprep.subr.bf16.mxu0 0
      %5084 = vmatpush1.bf16.msra.mxu0 0
      %5085 = vmatprep.subr.bf16.mxu0 0
      %5086 = vmatpush1.bf16.msra.mxu0 0
      %5087 = vmatprep.subr.bf16.mxu0 0
      %5088 = vmatpush1.bf16.msra.mxu0 0
      %5089 = vmatprep.subr.bf16.mxu0 0
      %5090 = vmatpush1.bf16.msra.mxu0 0
      %5091 = vmatprep.subr.bf16.mxu0 0
      %5092 = vmatpush1.bf16.msra.mxu0 0
      %5093 = vmatprep.subr.bf16.mxu0 0
      %5094 = vmatpush1.bf16.msra.mxu0 0
      %5095 = vmatprep.subr.bf16.mxu0 0
      %5096 = vmatpush1.bf16.msra.mxu0 0
      %5097 = vmatprep.subr.bf16.mxu0 0
      %5098 = vmatpush1.bf16.msra.mxu0 0
      %5099 = vmatprep.subr.bf16.mxu0 0
      %5100 = vmatpush1.bf16.msra.mxu0 0
      %5101 = vmatprep.subr.bf16.mxu0 0
      %5102 = vmatpush1.bf16.msra.mxu0 0
      %5103 = vmatprep.subr.bf16.mxu0 0
      %5104 = vmatpush1.bf16.msra.mxu0 0
      %5105 = vmatprep.subr.bf16.mxu0 0
      %5106 = vmatpush1.bf16.msra.mxu0 0
      %5107 = vmatprep.subr.bf16.mxu0 0
      %5108 = vmatpush1.bf16.msra.mxu0 0
      %5109 = vmatprep.subr.bf16.mxu0 0
      %5110 = vmatpush1.bf16.msra.mxu0 0
      %5111 = vmatprep.subr.bf16.mxu0 0
      %5112 = vmatpush1.bf16.msra.mxu0 0
      %5113 = vmatprep.mubr.bf16.mxu0 0
      %5114 = vmatmul.mubr.bf16.gmra.mrb[0].mxu0 %v5036
      %v5115 = vpop.f32.mrb[0].mxu0
      %v5116 = vadd.f32 0.0, %v5115
      %v5117 = vpop.f32.mrb[0].mxu0
      %v5118 = vpop.f32.mrb[0].mxu0
      %v5119 = vpop.f32.mrb[0].mxu0
      %5120 = vdwg.mxu0
      %v5121 = vsub.f32 %v5030, %v5076
      %v5122 = vpack.c.bf16 %v5121, %v5121
      %s5123 = scalar_lea.vmem %s300, 100
      %5124 = vst.msk [vmem:[%s5123] sm:$0xf] %vm449, %v5122
      %5125 = vmatprep.subr.bf16.mxu0 0
      %5126 = vmatpush1.bf16.msra.mxu0 %v5039
      %5127 = vmatprep.subr.bf16.mxu0 0
      %5128 = vmatpush1.bf16.msra.mxu0 0
      %5129 = vmatprep.subr.bf16.mxu0 0
      %5130 = vmatpush1.bf16.msra.mxu0 0
      %5131 = vmatprep.subr.bf16.mxu0 0
      %5132 = vmatpush1.bf16.msra.mxu0 0
      %5133 = vmatprep.subr.bf16.mxu0 0
      %5134 = vmatpush1.bf16.msra.mxu0 0
      %5135 = vmatprep.subr.bf16.mxu0 0
      %5136 = vmatpush1.bf16.msra.mxu0 0
      %5137 = vmatprep.subr.bf16.mxu0 0
      %5138 = vmatpush1.bf16.msra.mxu0 0
      %5139 = vmatprep.subr.bf16.mxu0 0
      %5140 = vmatpush1.bf16.msra.mxu0 0
      %5141 = vmatprep.subr.bf16.mxu0 0
      %5142 = vmatpush1.bf16.msra.mxu0 0
      %5143 = vmatprep.subr.bf16.mxu0 0
      %5144 = vmatpush1.bf16.msra.mxu0 0
      %5145 = vmatprep.subr.bf16.mxu0 0
      %5146 = vmatpush1.bf16.msra.mxu0 0
      %5147 = vmatprep.subr.bf16.mxu0 0
      %5148 = vmatpush1.bf16.msra.mxu0 0
      %5149 = vmatprep.subr.bf16.mxu0 0
      %5150 = vmatpush1.bf16.msra.mxu0 0
      %5151 = vmatprep.subr.bf16.mxu0 0
      %5152 = vmatpush1.bf16.msra.mxu0 0
      %5153 = vmatprep.subr.bf16.mxu0 0
      %5154 = vmatpush1.bf16.msra.mxu0 0
      %5155 = vmatprep.subr.bf16.mxu0 0
      %5156 = vmatpush1.bf16.msra.mxu0 0
      %5157 = vmatprep.mubr.bf16.mxu0 0
      %5158 = vmatmul.mubr.bf16.gmra.mrb[0].mxu0 %v4990
      %v5159 = vpop.f32.mrb[0].mxu0
      %v5160 = vadd.f32 %v5116, %v5159
      %v5161 = vpop.f32.mrb[0].mxu0
      %v5162 = vpop.f32.mrb[0].mxu0
      %v5163 = vpop.f32.mrb[0].mxu0
      %5164 = vdwg.mxu0
      %v5165 = vpack.c.bf16 %v5160, %v5160
      %s5166 = scalar_lea.vmem %s306, 100
      %5167 = vst.msk [vmem:[%s5166] sm:$0xf] %vm449, %v5165
      %s5168 = scalar_lea.vmem %s276, 104
      %v5169 = vld [vmem:[%s5168] sm:$0xf]
      %s5170 = scalar_lea.vmem %s282, 104
      %v5171 = vld [vmem:[%s5170] sm:$0xf]
      %s5172 = scalar_lea.vmem %s288, 104
      %v5173 = vld [vmem:[%s5172] sm:$0xf]
      %s5174 = scalar_lea.vmem %s294, 104
      %v5175 = vld [vmem:[%s5174] sm:$0xf]
      %v5177 = vsel %vm313, %v5169, 0
      %v5180 = vsel %vm317, %v5173, 0
      %5182 = vmatprep.subr.bf16.mxu0 0
      %5183 = vmatpush1.bf16.msra.mxu0 %v5180
      %5184 = vmatprep.subr.bf16.mxu0 0
      %5185 = vmatpush1.bf16.msra.mxu0 0
      %5186 = vmatprep.subr.bf16.mxu0 0
      %5187 = vmatpush1.bf16.msra.mxu0 0
      %5188 = vmatprep.subr.bf16.mxu0 0
      %5189 = vmatpush1.bf16.msra.mxu0 0
      %5190 = vmatprep.subr.bf16.mxu0 0
      %5191 = vmatpush1.bf16.msra.mxu0 0
      %5192 = vmatprep.subr.bf16.mxu0 0
      %5193 = vmatpush1.bf16.msra.mxu0 0
      %5194 = vmatprep.subr.bf16.mxu0 0
      %5195 = vmatpush1.bf16.msra.mxu0 0
      %5196 = vmatprep.subr.bf16.mxu0 0
      %5197 = vmatpush1.bf16.msra.mxu0 0
      %5198 = vmatprep.subr.bf16.mxu0 0
      %5199 = vmatpush1.bf16.msra.mxu0 0
      %5200 = vmatprep.subr.bf16.mxu0 0
      %5201 = vmatpush1.bf16.msra.mxu0 0
      %5202 = vmatprep.subr.bf16.mxu0 0
      %5203 = vmatpush1.bf16.msra.mxu0 0
      %5204 = vmatprep.subr.bf16.mxu0 0
      %5205 = vmatpush1.bf16.msra.mxu0 0
      %5206 = vmatprep.subr.bf16.mxu0 0
      %5207 = vmatpush1.bf16.msra.mxu0 0
      %5208 = vmatprep.subr.bf16.mxu0 0
      %5209 = vmatpush1.bf16.msra.mxu0 0
      %5210 = vmatprep.subr.bf16.mxu0 0
      %5211 = vmatpush1.bf16.msra.mxu0 0
      %5212 = vmatprep.subr.bf16.mxu0 0
      %5213 = vmatpush1.bf16.msra.mxu0 0
      %5214 = vmatprep.mubr.bf16.mxu0 0
      %5215 = vmatmul.mubr.bf16.gmra.mrb[0].mxu0 %v5177
      %v5216 = vpop.f32.mrb[0].mxu0
      %v5217 = vadd.f32 0.0, %v5216
      %v5218 = vpop.f32.mrb[0].mxu0
      %v5219 = vpop.f32.mrb[0].mxu0
      %v5220 = vpop.f32.mrb[0].mxu0
      %5221 = vdwg.mxu0
      %v5223 = vsel %vm313, %v5171, 0
      %v5226 = vsel %vm317, %v5175, 0
      %5228 = vmatprep.subr.bf16.mxu0 0
      %5229 = vmatpush1.bf16.msra.mxu0 %v5226
      %5230 = vmatprep.subr.bf16.mxu0 0
      %5231 = vmatpush1.bf16.msra.mxu0 0
      %5232 = vmatprep.subr.bf16.mxu0 0
      %5233 = vmatpush1.bf16.msra.mxu0 0
      %5234 = vmatprep.subr.bf16.mxu0 0
      %5235 = vmatpush1.bf16.msra.mxu0 0
      %5236 = vmatprep.subr.bf16.mxu0 0
      %5237 = vmatpush1.bf16.msra.mxu0 0
      %5238 = vmatprep.subr.bf16.mxu0 0
      %5239 = vmatpush1.bf16.msra.mxu0 0
      %5240 = vmatprep.subr.bf16.mxu0 0
      %5241 = vmatpush1.bf16.msra.mxu0 0
      %5242 = vmatprep.subr.bf16.mxu0 0
      %5243 = vmatpush1.bf16.msra.mxu0 0
      %5244 = vmatprep.subr.bf16.mxu0 0
      %5245 = vmatpush1.bf16.msra.mxu0 0
      %5246 = vmatprep.subr.bf16.mxu0 0
      %5247 = vmatpush1.bf16.msra.mxu0 0
      %5248 = vmatprep.subr.bf16.mxu0 0
      %5249 = vmatpush1.bf16.msra.mxu0 0
      %5250 = vmatprep.subr.bf16.mxu0 0
      %5251 = vmatpush1.bf16.msra.mxu0 0
      %5252 = vmatprep.subr.bf16.mxu0 0
      %5253 = vmatpush1.bf16.msra.mxu0 0
      %5254 = vmatprep.subr.bf16.mxu0 0
      %5255 = vmatpush1.bf16.msra.mxu0 0
      %5256 = vmatprep.subr.bf16.mxu0 0
      %5257 = vmatpush1.bf16.msra.mxu0 0
      %5258 = vmatprep.subr.bf16.mxu0 0
      %5259 = vmatpush1.bf16.msra.mxu0 0
      %5260 = vmatprep.mubr.bf16.mxu0 0
      %5261 = vmatmul.mubr.bf16.gmra.mrb[0].mxu0 %v5223
      %v5262 = vpop.f32.mrb[0].mxu0
      %v5263 = vadd.f32 0.0, %v5262
      %v5264 = vpop.f32.mrb[0].mxu0
      %v5265 = vpop.f32.mrb[0].mxu0
      %v5266 = vpop.f32.mrb[0].mxu0
      %5267 = vdwg.mxu0
      %5268 = vmatprep.subr.bf16.mxu0 0
      %5269 = vmatpush1.bf16.msra.mxu0 %v5180
      %5270 = vmatprep.subr.bf16.mxu0 0
      %5271 = vmatpush1.bf16.msra.mxu0 0
      %5272 = vmatprep.subr.bf16.mxu0 0
      %5273 = vmatpush1.bf16.msra.mxu0 0
      %5274 = vmatprep.subr.bf16.mxu0 0
      %5275 = vmatpush1.bf16.msra.mxu0 0
      %5276 = vmatprep.subr.bf16.mxu0 0
      %5277 = vmatpush1.bf16.msra.mxu0 0
      %5278 = vmatprep.subr.bf16.mxu0 0
      %5279 = vmatpush1.bf16.msra.mxu0 0
      %5280 = vmatprep.subr.bf16.mxu0 0
      %5281 = vmatpush1.bf16.msra.mxu0 0
      %5282 = vmatprep.subr.bf16.mxu0 0
      %5283 = vmatpush1.bf16.msra.mxu0 0
      %5284 = vmatprep.subr.bf16.mxu0 0
      %5285 = vmatpush1.bf16.msra.mxu0 0
      %5286 = vmatprep.subr.bf16.mxu0 0
      %5287 = vmatpush1.bf16.msra.mxu0 0
      %5288 = vmatprep.subr.bf16.mxu0 0
      %5289 = vmatpush1.bf16.msra.mxu0 0
      %5290 = vmatprep.subr.bf16.mxu0 0
      %5291 = vmatpush1.bf16.msra.mxu0 0
      %5292 = vmatprep.subr.bf16.mxu0 0
      %5293 = vmatpush1.bf16.msra.mxu0 0
      %5294 = vmatprep.subr.bf16.mxu0 0
      %5295 = vmatpush1.bf16.msra.mxu0 0
      %5296 = vmatprep.subr.bf16.mxu0 0
      %5297 = vmatpush1.bf16.msra.mxu0 0
      %5298 = vmatprep.subr.bf16.mxu0 0
      %5299 = vmatpush1.bf16.msra.mxu0 0
      %5300 = vmatprep.mubr.bf16.mxu0 0
      %5301 = vmatmul.mubr.bf16.gmra.mrb[0].mxu0 %v5223
      %v5302 = vpop.f32.mrb[0].mxu0
      %v5303 = vadd.f32 0.0, %v5302
      %v5304 = vpop.f32.mrb[0].mxu0
      %v5305 = vpop.f32.mrb[0].mxu0
      %v5306 = vpop.f32.mrb[0].mxu0
      %5307 = vdwg.mxu0
      %v5308 = vsub.f32 %v5217, %v5263
      %v5309 = vpack.c.bf16 %v5308, %v5308
      %s5310 = scalar_lea.vmem %s300, 104
      %5311 = vst.msk [vmem:[%s5310] sm:$0xf] %vm449, %v5309
      %5312 = vmatprep.subr.bf16.mxu0 0
      %5313 = vmatpush1.bf16.msra.mxu0 %v5226
      %5314 = vmatprep.subr.bf16.mxu0 0
      %5315 = vmatpush1.bf16.msra.mxu0 0
      %5316 = vmatprep.subr.bf16.mxu0 0
      %5317 = vmatpush1.bf16.msra.mxu0 0
      %5318 = vmatprep.subr.bf16.mxu0 0
      %5319 = vmatpush1.bf16.msra.mxu0 0
      %5320 = vmatprep.subr.bf16.mxu0 0
      %5321 = vmatpush1.bf16.msra.mxu0 0
      %5322 = vmatprep.subr.bf16.mxu0 0
      %5323 = vmatpush1.bf16.msra.mxu0 0
      %5324 = vmatprep.subr.bf16.mxu0 0
      %5325 = vmatpush1.bf16.msra.mxu0 0
      %5326 = vmatprep.subr.bf16.mxu0 0
      %5327 = vmatpush1.bf16.msra.mxu0 0
      %5328 = vmatprep.subr.bf16.mxu0 0
      %5329 = vmatpush1.bf16.msra.mxu0 0
      %5330 = vmatprep.subr.bf16.mxu0 0
      %5331 = vmatpush1.bf16.msra.mxu0 0
      %5332 = vmatprep.subr.bf16.mxu0 0
      %5333 = vmatpush1.bf16.msra.mxu0 0
      %5334 = vmatprep.subr.bf16.mxu0 0
      %5335 = vmatpush1.bf16.msra.mxu0 0
      %5336 = vmatprep.subr.bf16.mxu0 0
      %5337 = vmatpush1.bf16.msra.mxu0 0
      %5338 = vmatprep.subr.bf16.mxu0 0
      %5339 = vmatpush1.bf16.msra.mxu0 0
      %5340 = vmatprep.subr.bf16.mxu0 0
      %5341 = vmatpush1.bf16.msra.mxu0 0
      %5342 = vmatprep.subr.bf16.mxu0 0
      %5343 = vmatpush1.bf16.msra.mxu0 0
      %5344 = vmatprep.mubr.bf16.mxu0 0
      %5345 = vmatmul.mubr.bf16.gmra.mrb[0].mxu0 %v5177
      %v5346 = vpop.f32.mrb[0].mxu0
      %v5347 = vadd.f32 %v5303, %v5346
      %v5348 = vpop.f32.mrb[0].mxu0
      %v5349 = vpop.f32.mrb[0].mxu0
      %v5350 = vpop.f32.mrb[0].mxu0
      %5351 = vdwg.mxu0
      %v5352 = vpack.c.bf16 %v5347, %v5347
      %s5353 = scalar_lea.vmem %s306, 104
      %5354 = vst.msk [vmem:[%s5353] sm:$0xf] %vm449, %v5352
      %s5355 = scalar_lea.vmem %s276, 108
      %v5356 = vld [vmem:[%s5355] sm:$0xf]
      %s5357 = scalar_lea.vmem %s282, 108
      %v5358 = vld [vmem:[%s5357] sm:$0xf]
      %s5359 = scalar_lea.vmem %s288, 108
      %v5360 = vld [vmem:[%s5359] sm:$0xf]
      %s5361 = scalar_lea.vmem %s294, 108
      %v5362 = vld [vmem:[%s5361] sm:$0xf]
      %v5364 = vsel %vm313, %v5356, 0
      %v5367 = vsel %vm317, %v5360, 0
      %5369 = vmatprep.subr.bf16.mxu0 0
      %5370 = vmatpush1.bf16.msra.mxu0 %v5367
      %5371 = vmatprep.subr.bf16.mxu0 0
      %5372 = vmatpush1.bf16.msra.mxu0 0
      %5373 = vmatprep.subr.bf16.mxu0 0
      %5374 = vmatpush1.bf16.msra.mxu0 0
      %5375 = vmatprep.subr.bf16.mxu0 0
      %5376 = vmatpush1.bf16.msra.mxu0 0
      %5377 = vmatprep.subr.bf16.mxu0 0
      %5378 = vmatpush1.bf16.msra.mxu0 0
      %5379 = vmatprep.subr.bf16.mxu0 0
      %5380 = vmatpush1.bf16.msra.mxu0 0
      %5381 = vmatprep.subr.bf16.mxu0 0
      %5382 = vmatpush1.bf16.msra.mxu0 0
      %5383 = vmatprep.subr.bf16.mxu0 0
      %5384 = vmatpush1.bf16.msra.mxu0 0
      %5385 = vmatprep.subr.bf16.mxu0 0
      %5386 = vmatpush1.bf16.msra.mxu0 0
      %5387 = vmatprep.subr.bf16.mxu0 0
      %5388 = vmatpush1.bf16.msra.mxu0 0
      %5389 = vmatprep.subr.bf16.mxu0 0
      %5390 = vmatpush1.bf16.msra.mxu0 0
      %5391 = vmatprep.subr.bf16.mxu0 0
      %5392 = vmatpush1.bf16.msra.mxu0 0
      %5393 = vmatprep.subr.bf16.mxu0 0
      %5394 = vmatpush1.bf16.msra.mxu0 0
      %5395 = vmatprep.subr.bf16.mxu0 0
      %5396 = vmatpush1.bf16.msra.mxu0 0
      %5397 = vmatprep.subr.bf16.mxu0 0
      %5398 = vmatpush1.bf16.msra.mxu0 0
      %5399 = vmatprep.subr.bf16.mxu0 0
      %5400 = vmatpush1.bf16.msra.mxu0 0
      %5401 = vmatprep.mubr.bf16.mxu0 0
      %5402 = vmatmul.mubr.bf16.gmra.mrb[0].mxu0 %v5364
      %v5403 = vpop.f32.mrb[0].mxu0
      %v5404 = vadd.f32 0.0, %v5403
      %v5405 = vpop.f32.mrb[0].mxu0
      %v5406 = vpop.f32.mrb[0].mxu0
      %v5407 = vpop.f32.mrb[0].mxu0
      %5408 = vdwg.mxu0
      %v5410 = vsel %vm313, %v5358, 0
      %v5413 = vsel %vm317, %v5362, 0
      %5415 = vmatprep.subr.bf16.mxu0 0
      %5416 = vmatpush1.bf16.msra.mxu0 %v5413
      %5417 = vmatprep.subr.bf16.mxu0 0
      %5418 = vmatpush1.bf16.msra.mxu0 0
      %5419 = vmatprep.subr.bf16.mxu0 0
      %5420 = vmatpush1.bf16.msra.mxu0 0
      %5421 = vmatprep.subr.bf16.mxu0 0
      %5422 = vmatpush1.bf16.msra.mxu0 0
      %5423 = vmatprep.subr.bf16.mxu0 0
      %5424 = vmatpush1.bf16.msra.mxu0 0
      %5425 = vmatprep.subr.bf16.mxu0 0
      %5426 = vmatpush1.bf16.msra.mxu0 0
      %5427 = vmatprep.subr.bf16.mxu0 0
      %5428 = vmatpush1.bf16.msra.mxu0 0
      %5429 = vmatprep.subr.bf16.mxu0 0
      %5430 = vmatpush1.bf16.msra.mxu0 0
      %5431 = vmatprep.subr.bf16.mxu0 0
      %5432 = vmatpush1.bf16.msra.mxu0 0
      %5433 = vmatprep.subr.bf16.mxu0 0
      %5434 = vmatpush1.bf16.msra.mxu0 0
      %5435 = vmatprep.subr.bf16.mxu0 0
      %5436 = vmatpush1.bf16.msra.mxu0 0
      %5437 = vmatprep.subr.bf16.mxu0 0
      %5438 = vmatpush1.bf16.msra.mxu0 0
      %5439 = vmatprep.subr.bf16.mxu0 0
      %5440 = vmatpush1.bf16.msra.mxu0 0
      %5441 = vmatprep.subr.bf16.mxu0 0
      %5442 = vmatpush1.bf16.msra.mxu0 0
      %5443 = vmatprep.subr.bf16.mxu0 0
      %5444 = vmatpush1.bf16.msra.mxu0 0
      %5445 = vmatprep.subr.bf16.mxu0 0
      %5446 = vmatpush1.bf16.msra.mxu0 0
      %5447 = vmatprep.mubr.bf16.mxu0 0
      %5448 = vmatmul.mubr.bf16.gmra.mrb[0].mxu0 %v5410
      %v5449 = vpop.f32.mrb[0].mxu0
      %v5450 = vadd.f32 0.0, %v5449
      %v5451 = vpop.f32.mrb[0].mxu0
      %v5452 = vpop.f32.mrb[0].mxu0
      %v5453 = vpop.f32.mrb[0].mxu0
      %5454 = vdwg.mxu0
      %5455 = vmatprep.subr.bf16.mxu0 0
      %5456 = vmatpush1.bf16.msra.mxu0 %v5367
      %5457 = vmatprep.subr.bf16.mxu0 0
      %5458 = vmatpush1.bf16.msra.mxu0 0
      %5459 = vmatprep.subr.bf16.mxu0 0
      %5460 = vmatpush1.bf16.msra.mxu0 0
      %5461 = vmatprep.subr.bf16.mxu0 0
      %5462 = vmatpush1.bf16.msra.mxu0 0
      %5463 = vmatprep.subr.bf16.mxu0 0
      %5464 = vmatpush1.bf16.msra.mxu0 0
      %5465 = vmatprep.subr.bf16.mxu0 0
      %5466 = vmatpush1.bf16.msra.mxu0 0
      %5467 = vmatprep.subr.bf16.mxu0 0
      %5468 = vmatpush1.bf16.msra.mxu0 0
      %5469 = vmatprep.subr.bf16.mxu0 0
      %5470 = vmatpush1.bf16.msra.mxu0 0
      %5471 = vmatprep.subr.bf16.mxu0 0
      %5472 = vmatpush1.bf16.msra.mxu0 0
      %5473 = vmatprep.subr.bf16.mxu0 0
      %5474 = vmatpush1.bf16.msra.mxu0 0
      %5475 = vmatprep.subr.bf16.mxu0 0
      %5476 = vmatpush1.bf16.msra.mxu0 0
      %5477 = vmatprep.subr.bf16.mxu0 0
      %5478 = vmatpush1.bf16.msra.mxu0 0
      %5479 = vmatprep.subr.bf16.mxu0 0
      %5480 = vmatpush1.bf16.msra.mxu0 0
      %5481 = vmatprep.subr.bf16.mxu0 0
      %5482 = vmatpush1.bf16.msra.mxu0 0
      %5483 = vmatprep.subr.bf16.mxu0 0
      %5484 = vmatpush1.bf16.msra.mxu0 0
      %5485 = vmatprep.subr.bf16.mxu0 0
      %5486 = vmatpush1.bf16.msra.mxu0 0
      %5487 = vmatprep.mubr.bf16.mxu0 0
      %5488 = vmatmul.mubr.bf16.gmra.mrb[0].mxu0 %v5410
      %v5489 = vpop.f32.mrb[0].mxu0
      %v5490 = vadd.f32 0.0, %v5489
      %v5491 = vpop.f32.mrb[0].mxu0
      %v5492 = vpop.f32.mrb[0].mxu0
      %v5493 = vpop.f32.mrb[0].mxu0
      %5494 = vdwg.mxu0
      %v5495 = vsub.f32 %v5404, %v5450
      %v5496 = vpack.c.bf16 %v5495, %v5495
      %s5497 = scalar_lea.vmem %s300, 108
      %5498 = vst.msk [vmem:[%s5497] sm:$0xf] %vm449, %v5496
      %5499 = vmatprep.subr.bf16.mxu0 0
      %5500 = vmatpush1.bf16.msra.mxu0 %v5413
      %5501 = vmatprep.subr.bf16.mxu0 0
      %5502 = vmatpush1.bf16.msra.mxu0 0
      %5503 = vmatprep.subr.bf16.mxu0 0
      %5504 = vmatpush1.bf16.msra.mxu0 0
      %5505 = vmatprep.subr.bf16.mxu0 0
      %5506 = vmatpush1.bf16.msra.mxu0 0
      %5507 = vmatprep.subr.bf16.mxu0 0
      %5508 = vmatpush1.bf16.msra.mxu0 0
      %5509 = vmatprep.subr.bf16.mxu0 0
      %5510 = vmatpush1.bf16.msra.mxu0 0
      %5511 = vmatprep.subr.bf16.mxu0 0
      %5512 = vmatpush1.bf16.msra.mxu0 0
      %5513 = vmatprep.subr.bf16.mxu0 0
      %5514 = vmatpush1.bf16.msra.mxu0 0
      %5515 = vmatprep.subr.bf16.mxu0 0
      %5516 = vmatpush1.bf16.msra.mxu0 0
      %5517 = vmatprep.subr.bf16.mxu0 0
      %5518 = vmatpush1.bf16.msra.mxu0 0
      %5519 = vmatprep.subr.bf16.mxu0 0
      %5520 = vmatpush1.bf16.msra.mxu0 0
      %5521 = vmatprep.subr.bf16.mxu0 0
      %5522 = vmatpush1.bf16.msra.mxu0 0
      %5523 = vmatprep.subr.bf16.mxu0 0
      %5524 = vmatpush1.bf16.msra.mxu0 0
      %5525 = vmatprep.subr.bf16.mxu0 0
      %5526 = vmatpush1.bf16.msra.mxu0 0
      %5527 = vmatprep.subr.bf16.mxu0 0
      %5528 = vmatpush1.bf16.msra.mxu0 0
      %5529 = vmatprep.subr.bf16.mxu0 0
      %5530 = vmatpush1.bf16.msra.mxu0 0
      %5531 = vmatprep.mubr.bf16.mxu0 0
      %5532 = vmatmul.mubr.bf16.gmra.mrb[0].mxu0 %v5364
      %v5533 = vpop.f32.mrb[0].mxu0
      %v5534 = vadd.f32 %v5490, %v5533
      %v5535 = vpop.f32.mrb[0].mxu0
      %v5536 = vpop.f32.mrb[0].mxu0
      %v5537 = vpop.f32.mrb[0].mxu0
      %5538 = vdwg.mxu0
      %v5539 = vpack.c.bf16 %v5534, %v5534
      %s5540 = scalar_lea.vmem %s306, 108
      %5541 = vst.msk [vmem:[%s5540] sm:$0xf] %vm449, %v5539
      %s5542 = scalar_lea.vmem %s276, 112
      %v5543 = vld [vmem:[%s5542] sm:$0xf]
      %s5544 = scalar_lea.vmem %s282, 112
      %v5545 = vld [vmem:[%s5544] sm:$0xf]
      %s5546 = scalar_lea.vmem %s288, 112
      %v5547 = vld [vmem:[%s5546] sm:$0xf]
      %s5548 = scalar_lea.vmem %s294, 112
      %v5549 = vld [vmem:[%s5548] sm:$0xf]
      %v5551 = vsel %vm313, %v5543, 0
      %v5554 = vsel %vm317, %v5547, 0
      %5556 = vmatprep.subr.bf16.mxu0 0
      %5557 = vmatpush1.bf16.msra.mxu0 %v5554
      %5558 = vmatprep.subr.bf16.mxu0 0
      %5559 = vmatpush1.bf16.msra.mxu0 0
      %5560 = vmatprep.subr.bf16.mxu0 0
      %5561 = vmatpush1.bf16.msra.mxu0 0
      %5562 = vmatprep.subr.bf16.mxu0 0
      %5563 = vmatpush1.bf16.msra.mxu0 0
      %5564 = vmatprep.subr.bf16.mxu0 0
      %5565 = vmatpush1.bf16.msra.mxu0 0
      %5566 = vmatprep.subr.bf16.mxu0 0
      %5567 = vmatpush1.bf16.msra.mxu0 0
      %5568 = vmatprep.subr.bf16.mxu0 0
      %5569 = vmatpush1.bf16.msra.mxu0 0
      %5570 = vmatprep.subr.bf16.mxu0 0
      %5571 = vmatpush1.bf16.msra.mxu0 0
      %5572 = vmatprep.subr.bf16.mxu0 0
      %5573 = vmatpush1.bf16.msra.mxu0 0
      %5574 = vmatprep.subr.bf16.mxu0 0
      %5575 = vmatpush1.bf16.msra.mxu0 0
      %5576 = vmatprep.subr.bf16.mxu0 0
      %5577 = vmatpush1.bf16.msra.mxu0 0
      %5578 = vmatprep.subr.bf16.mxu0 0
      %5579 = vmatpush1.bf16.msra.mxu0 0
      %5580 = vmatprep.subr.bf16.mxu0 0
      %5581 = vmatpush1.bf16.msra.mxu0 0
      %5582 = vmatprep.subr.bf16.mxu0 0
      %5583 = vmatpush1.bf16.msra.mxu0 0
      %5584 = vmatprep.subr.bf16.mxu0 0
      %5585 = vmatpush1.bf16.msra.mxu0 0
      %5586 = vmatprep.subr.bf16.mxu0 0
      %5587 = vmatpush1.bf16.msra.mxu0 0
      %5588 = vmatprep.mubr.bf16.mxu0 0
      %5589 = vmatmul.mubr.bf16.gmra.mrb[0].mxu0 %v5551
      %v5590 = vpop.f32.mrb[0].mxu0
      %v5591 = vadd.f32 0.0, %v5590
      %v5592 = vpop.f32.mrb[0].mxu0
      %v5593 = vpop.f32.mrb[0].mxu0
      %v5594 = vpop.f32.mrb[0].mxu0
      %5595 = vdwg.mxu0
      %v5597 = vsel %vm313, %v5545, 0
      %v5600 = vsel %vm317, %v5549, 0
      %5602 = vmatprep.subr.bf16.mxu0 0
      %5603 = vmatpush1.bf16.msra.mxu0 %v5600
      %5604 = vmatprep.subr.bf16.mxu0 0
      %5605 = vmatpush1.bf16.msra.mxu0 0
      %5606 = vmatprep.subr.bf16.mxu0 0
      %5607 = vmatpush1.bf16.msra.mxu0 0
      %5608 = vmatprep.subr.bf16.mxu0 0
      %5609 = vmatpush1.bf16.msra.mxu0 0
      %5610 = vmatprep.subr.bf16.mxu0 0
      %5611 = vmatpush1.bf16.msra.mxu0 0
      %5612 = vmatprep.subr.bf16.mxu0 0
      %5613 = vmatpush1.bf16.msra.mxu0 0
      %5614 = vmatprep.subr.bf16.mxu0 0
      %5615 = vmatpush1.bf16.msra.mxu0 0
      %5616 = vmatprep.subr.bf16.mxu0 0
      %5617 = vmatpush1.bf16.msra.mxu0 0
      %5618 = vmatprep.subr.bf16.mxu0 0
      %5619 = vmatpush1.bf16.msra.mxu0 0
      %5620 = vmatprep.subr.bf16.mxu0 0
      %5621 = vmatpush1.bf16.msra.mxu0 0
      %5622 = vmatprep.subr.bf16.mxu0 0
      %5623 = vmatpush1.bf16.msra.mxu0 0
      %5624 = vmatprep.subr.bf16.mxu0 0
      %5625 = vmatpush1.bf16.msra.mxu0 0
      %5626 = vmatprep.subr.bf16.mxu0 0
      %5627 = vmatpush1.bf16.msra.mxu0 0
      %5628 = vmatprep.subr.bf16.mxu0 0
      %5629 = vmatpush1.bf16.msra.mxu0 0
      %5630 = vmatprep.subr.bf16.mxu0 0
      %5631 = vmatpush1.bf16.msra.mxu0 0
      %5632 = vmatprep.subr.bf16.mxu0 0
      %5633 = vmatpush1.bf16.msra.mxu0 0
      %5634 = vmatprep.mubr.bf16.mxu0 0
      %5635 = vmatmul.mubr.bf16.gmra.mrb[0].mxu0 %v5597
      %v5636 = vpop.f32.mrb[0].mxu0
      %v5637 = vadd.f32 0.0, %v5636
      %v5638 = vpop.f32.mrb[0].mxu0
      %v5639 = vpop.f32.mrb[0].mxu0
      %v5640 = vpop.f32.mrb[0].mxu0
      %5641 = vdwg.mxu0
      %5642 = vmatprep.subr.bf16.mxu0 0
      %5643 = vmatpush1.bf16.msra.mxu0 %v5554
      %5644 = vmatprep.subr.bf16.mxu0 0
      %5645 = vmatpush1.bf16.msra.mxu0 0
      %5646 = vmatprep.subr.bf16.mxu0 0
      %5647 = vmatpush1.bf16.msra.mxu0 0
      %5648 = vmatprep.subr.bf16.mxu0 0
      %5649 = vmatpush1.bf16.msra.mxu0 0
      %5650 = vmatprep.subr.bf16.mxu0 0
      %5651 = vmatpush1.bf16.msra.mxu0 0
      %5652 = vmatprep.subr.bf16.mxu0 0
      %5653 = vmatpush1.bf16.msra.mxu0 0
      %5654 = vmatprep.subr.bf16.mxu0 0
      %5655 = vmatpush1.bf16.msra.mxu0 0
      %5656 = vmatprep.subr.bf16.mxu0 0
      %5657 = vmatpush1.bf16.msra.mxu0 0
      %5658 = vmatprep.subr.bf16.mxu0 0
      %5659 = vmatpush1.bf16.msra.mxu0 0
      %5660 = vmatprep.subr.bf16.mxu0 0
      %5661 = vmatpush1.bf16.msra.mxu0 0
      %5662 = vmatprep.subr.bf16.mxu0 0
      %5663 = vmatpush1.bf16.msra.mxu0 0
      %5664 = vmatprep.subr.bf16.mxu0 0
      %5665 = vmatpush1.bf16.msra.mxu0 0
      %5666 = vmatprep.subr.bf16.mxu0 0
      %5667 = vmatpush1.bf16.msra.mxu0 0
      %5668 = vmatprep.subr.bf16.mxu0 0
      %5669 = vmatpush1.bf16.msra.mxu0 0
      %5670 = vmatprep.subr.bf16.mxu0 0
      %5671 = vmatpush1.bf16.msra.mxu0 0
      %5672 = vmatprep.subr.bf16.mxu0 0
      %5673 = vmatpush1.bf16.msra.mxu0 0
      %5674 = vmatprep.mubr.bf16.mxu0 0
      %5675 = vmatmul.mubr.bf16.gmra.mrb[0].mxu0 %v5597
      %v5676 = vpop.f32.mrb[0].mxu0
      %v5677 = vadd.f32 0.0, %v5676
      %v5678 = vpop.f32.mrb[0].mxu0
      %v5679 = vpop.f32.mrb[0].mxu0
      %v5680 = vpop.f32.mrb[0].mxu0
      %5681 = vdwg.mxu0
      %v5682 = vsub.f32 %v5591, %v5637
      %v5683 = vpack.c.bf16 %v5682, %v5682
      %s5684 = scalar_lea.vmem %s300, 112
      %5685 = vst.msk [vmem:[%s5684] sm:$0xf] %vm449, %v5683
      %5686 = vmatprep.subr.bf16.mxu0 0
      %5687 = vmatpush1.bf16.msra.mxu0 %v5600
      %5688 = vmatprep.subr.bf16.mxu0 0
      %5689 = vmatpush1.bf16.msra.mxu0 0
      %5690 = vmatprep.subr.bf16.mxu0 0
      %5691 = vmatpush1.bf16.msra.mxu0 0
      %5692 = vmatprep.subr.bf16.mxu0 0
      %5693 = vmatpush1.bf16.msra.mxu0 0
      %5694 = vmatprep.subr.bf16.mxu0 0
      %5695 = vmatpush1.bf16.msra.mxu0 0
      %5696 = vmatprep.subr.bf16.mxu0 0
      %5697 = vmatpush1.bf16.msra.mxu0 0
      %5698 = vmatprep.subr.bf16.mxu0 0
      %5699 = vmatpush1.bf16.msra.mxu0 0
      %5700 = vmatprep.subr.bf16.mxu0 0
      %5701 = vmatpush1.bf16.msra.mxu0 0
      %5702 = vmatprep.subr.bf16.mxu0 0
      %5703 = vmatpush1.bf16.msra.mxu0 0
      %5704 = vmatprep.subr.bf16.mxu0 0
      %5705 = vmatpush1.bf16.msra.mxu0 0
      %5706 = vmatprep.subr.bf16.mxu0 0
      %5707 = vmatpush1.bf16.msra.mxu0 0
      %5708 = vmatprep.subr.bf16.mxu0 0
      %5709 = vmatpush1.bf16.msra.mxu0 0
      %5710 = vmatprep.subr.bf16.mxu0 0
      %5711 = vmatpush1.bf16.msra.mxu0 0
      %5712 = vmatprep.subr.bf16.mxu0 0
      %5713 = vmatpush1.bf16.msra.mxu0 0
      %5714 = vmatprep.subr.bf16.mxu0 0
      %5715 = vmatpush1.bf16.msra.mxu0 0
      %5716 = vmatprep.subr.bf16.mxu0 0
      %5717 = vmatpush1.bf16.msra.mxu0 0
      %5718 = vmatprep.mubr.bf16.mxu0 0
      %5719 = vmatmul.mubr.bf16.gmra.mrb[0].mxu0 %v5551
      %v5720 = vpop.f32.mrb[0].mxu0
      %v5721 = vadd.f32 %v5677, %v5720
      %v5722 = vpop.f32.mrb[0].mxu0
      %v5723 = vpop.f32.mrb[0].mxu0
      %v5724 = vpop.f32.mrb[0].mxu0
      %5725 = vdwg.mxu0
      %v5726 = vpack.c.bf16 %v5721, %v5721
      %s5727 = scalar_lea.vmem %s306, 112
      %5728 = vst.msk [vmem:[%s5727] sm:$0xf] %vm449, %v5726
      %s5729 = scalar_lea.vmem %s276, 116
      %v5730 = vld [vmem:[%s5729] sm:$0xf]
      %s5731 = scalar_lea.vmem %s282, 116
      %v5732 = vld [vmem:[%s5731] sm:$0xf]
      %s5733 = scalar_lea.vmem %s288, 116
      %v5734 = vld [vmem:[%s5733] sm:$0xf]
      %s5735 = scalar_lea.vmem %s294, 116
      %v5736 = vld [vmem:[%s5735] sm:$0xf]
      %v5738 = vsel %vm313, %v5730, 0
      %v5741 = vsel %vm317, %v5734, 0
      %5743 = vmatprep.subr.bf16.mxu0 0
      %5744 = vmatpush1.bf16.msra.mxu0 %v5741
      %5745 = vmatprep.subr.bf16.mxu0 0
      %5746 = vmatpush1.bf16.msra.mxu0 0
      %5747 = vmatprep.subr.bf16.mxu0 0
      %5748 = vmatpush1.bf16.msra.mxu0 0
      %5749 = vmatprep.subr.bf16.mxu0 0
      %5750 = vmatpush1.bf16.msra.mxu0 0
      %5751 = vmatprep.subr.bf16.mxu0 0
      %5752 = vmatpush1.bf16.msra.mxu0 0
      %5753 = vmatprep.subr.bf16.mxu0 0
      %5754 = vmatpush1.bf16.msra.mxu0 0
      %5755 = vmatprep.subr.bf16.mxu0 0
      %5756 = vmatpush1.bf16.msra.mxu0 0
      %5757 = vmatprep.subr.bf16.mxu0 0
      %5758 = vmatpush1.bf16.msra.mxu0 0
      %5759 = vmatprep.subr.bf16.mxu0 0
      %5760 = vmatpush1.bf16.msra.mxu0 0
      %5761 = vmatprep.subr.bf16.mxu0 0
      %5762 = vmatpush1.bf16.msra.mxu0 0
      %5763 = vmatprep.subr.bf16.mxu0 0
      %5764 = vmatpush1.bf16.msra.mxu0 0
      %5765 = vmatprep.subr.bf16.mxu0 0
      %5766 = vmatpush1.bf16.msra.mxu0 0
      %5767 = vmatprep.subr.bf16.mxu0 0
      %5768 = vmatpush1.bf16.msra.mxu0 0
      %5769 = vmatprep.subr.bf16.mxu0 0
      %5770 = vmatpush1.bf16.msra.mxu0 0
      %5771 = vmatprep.subr.bf16.mxu0 0
      %5772 = vmatpush1.bf16.msra.mxu0 0
      %5773 = vmatprep.subr.bf16.mxu0 0
      %5774 = vmatpush1.bf16.msra.mxu0 0
      %5775 = vmatprep.mubr.bf16.mxu0 0
      %5776 = vmatmul.mubr.bf16.gmra.mrb[0].mxu0 %v5738
      %v5777 = vpop.f32.mrb[0].mxu0
      %v5778 = vadd.f32 0.0, %v5777
      %v5779 = vpop.f32.mrb[0].mxu0
      %v5780 = vpop.f32.mrb[0].mxu0
      %v5781 = vpop.f32.mrb[0].mxu0
      %5782 = vdwg.mxu0
      %v5784 = vsel %vm313, %v5732, 0
      %v5787 = vsel %vm317, %v5736, 0
      %5789 = vmatprep.subr.bf16.mxu0 0
      %5790 = vmatpush1.bf16.msra.mxu0 %v5787
      %5791 = vmatprep.subr.bf16.mxu0 0
      %5792 = vmatpush1.bf16.msra.mxu0 0
      %5793 = vmatprep.subr.bf16.mxu0 0
      %5794 = vmatpush1.bf16.msra.mxu0 0
      %5795 = vmatprep.subr.bf16.mxu0 0
      %5796 = vmatpush1.bf16.msra.mxu0 0
      %5797 = vmatprep.subr.bf16.mxu0 0
      %5798 = vmatpush1.bf16.msra.mxu0 0
      %5799 = vmatprep.subr.bf16.mxu0 0
      %5800 = vmatpush1.bf16.msra.mxu0 0
      %5801 = vmatprep.subr.bf16.mxu0 0
      %5802 = vmatpush1.bf16.msra.mxu0 0
      %5803 = vmatprep.subr.bf16.mxu0 0
      %5804 = vmatpush1.bf16.msra.mxu0 0
      %5805 = vmatprep.subr.bf16.mxu0 0
      %5806 = vmatpush1.bf16.msra.mxu0 0
      %5807 = vmatprep.subr.bf16.mxu0 0
      %5808 = vmatpush1.bf16.msra.mxu0 0
      %5809 = vmatprep.subr.bf16.mxu0 0
      %5810 = vmatpush1.bf16.msra.mxu0 0
      %5811 = vmatprep.subr.bf16.mxu0 0
      %5812 = vmatpush1.bf16.msra.mxu0 0
      %5813 = vmatprep.subr.bf16.mxu0 0
      %5814 = vmatpush1.bf16.msra.mxu0 0
      %5815 = vmatprep.subr.bf16.mxu0 0
      %5816 = vmatpush1.bf16.msra.mxu0 0
      %5817 = vmatprep.subr.bf16.mxu0 0
      %5818 = vmatpush1.bf16.msra.mxu0 0
      %5819 = vmatprep.subr.bf16.mxu0 0
      %5820 = vmatpush1.bf16.msra.mxu0 0
      %5821 = vmatprep.mubr.bf16.mxu0 0
      %5822 = vmatmul.mubr.bf16.gmra.mrb[0].mxu0 %v5784
      %v5823 = vpop.f32.mrb[0].mxu0
      %v5824 = vadd.f32 0.0, %v5823
      %v5825 = vpop.f32.mrb[0].mxu0
      %v5826 = vpop.f32.mrb[0].mxu0
      %v5827 = vpop.f32.mrb[0].mxu0
      %5828 = vdwg.mxu0
      %5829 = vmatprep.subr.bf16.mxu0 0
      %5830 = vmatpush1.bf16.msra.mxu0 %v5741
      %5831 = vmatprep.subr.bf16.mxu0 0
      %5832 = vmatpush1.bf16.msra.mxu0 0
      %5833 = vmatprep.subr.bf16.mxu0 0
      %5834 = vmatpush1.bf16.msra.mxu0 0
      %5835 = vmatprep.subr.bf16.mxu0 0
      %5836 = vmatpush1.bf16.msra.mxu0 0
      %5837 = vmatprep.subr.bf16.mxu0 0
      %5838 = vmatpush1.bf16.msra.mxu0 0
      %5839 = vmatprep.subr.bf16.mxu0 0
      %5840 = vmatpush1.bf16.msra.mxu0 0
      %5841 = vmatprep.subr.bf16.mxu0 0
      %5842 = vmatpush1.bf16.msra.mxu0 0
      %5843 = vmatprep.subr.bf16.mxu0 0
      %5844 = vmatpush1.bf16.msra.mxu0 0
      %5845 = vmatprep.subr.bf16.mxu0 0
      %5846 = vmatpush1.bf16.msra.mxu0 0
      %5847 = vmatprep.subr.bf16.mxu0 0
      %5848 = vmatpush1.bf16.msra.mxu0 0
      %5849 = vmatprep.subr.bf16.mxu0 0
      %5850 = vmatpush1.bf16.msra.mxu0 0
      %5851 = vmatprep.subr.bf16.mxu0 0
      %5852 = vmatpush1.bf16.msra.mxu0 0
      %5853 = vmatprep.subr.bf16.mxu0 0
      %5854 = vmatpush1.bf16.msra.mxu0 0
      %5855 = vmatprep.subr.bf16.mxu0 0
      %5856 = vmatpush1.bf16.msra.mxu0 0
      %5857 = vmatprep.subr.bf16.mxu0 0
      %5858 = vmatpush1.bf16.msra.mxu0 0
      %5859 = vmatprep.subr.bf16.mxu0 0
      %5860 = vmatpush1.bf16.msra.mxu0 0
      %5861 = vmatprep.mubr.bf16.mxu0 0
      %5862 = vmatmul.mubr.bf16.gmra.mrb[0].mxu0 %v5784
      %v5863 = vpop.f32.mrb[0].mxu0
      %v5864 = vadd.f32 0.0, %v5863
      %v5865 = vpop.f32.mrb[0].mxu0
      %v5866 = vpop.f32.mrb[0].mxu0
      %v5867 = vpop.f32.mrb[0].mxu0
      %5868 = vdwg.mxu0
      %v5869 = vsub.f32 %v5778, %v5824
      %v5870 = vpack.c.bf16 %v5869, %v5869
      %s5871 = scalar_lea.vmem %s300, 116
      %5872 = vst.msk [vmem:[%s5871] sm:$0xf] %vm449, %v5870
      %5873 = vmatprep.subr.bf16.mxu0 0
      %5874 = vmatpush1.bf16.msra.mxu0 %v5787
      %5875 = vmatprep.subr.bf16.mxu0 0
      %5876 = vmatpush1.bf16.msra.mxu0 0
      %5877 = vmatprep.subr.bf16.mxu0 0
      %5878 = vmatpush1.bf16.msra.mxu0 0
      %5879 = vmatprep.subr.bf16.mxu0 0
      %5880 = vmatpush1.bf16.msra.mxu0 0
      %5881 = vmatprep.subr.bf16.mxu0 0
      %5882 = vmatpush1.bf16.msra.mxu0 0
      %5883 = vmatprep.subr.bf16.mxu0 0
      %5884 = vmatpush1.bf16.msra.mxu0 0
      %5885 = vmatprep.subr.bf16.mxu0 0
      %5886 = vmatpush1.bf16.msra.mxu0 0
      %5887 = vmatprep.subr.bf16.mxu0 0
      %5888 = vmatpush1.bf16.msra.mxu0 0
      %5889 = vmatprep.subr.bf16.mxu0 0
      %5890 = vmatpush1.bf16.msra.mxu0 0
      %5891 = vmatprep.subr.bf16.mxu0 0
      %5892 = vmatpush1.bf16.msra.mxu0 0
      %5893 = vmatprep.subr.bf16.mxu0 0
      %5894 = vmatpush1.bf16.msra.mxu0 0
      %5895 = vmatprep.subr.bf16.mxu0 0
      %5896 = vmatpush1.bf16.msra.mxu0 0
      %5897 = vmatprep.subr.bf16.mxu0 0
      %5898 = vmatpush1.bf16.msra.mxu0 0
      %5899 = vmatprep.subr.bf16.mxu0 0
      %5900 = vmatpush1.bf16.msra.mxu0 0
      %5901 = vmatprep.subr.bf16.mxu0 0
      %5902 = vmatpush1.bf16.msra.mxu0 0
      %5903 = vmatprep.subr.bf16.mxu0 0
      %5904 = vmatpush1.bf16.msra.mxu0 0
      %5905 = vmatprep.mubr.bf16.mxu0 0
      %5906 = vmatmul.mubr.bf16.gmra.mrb[0].mxu0 %v5738
      %v5907 = vpop.f32.mrb[0].mxu0
      %v5908 = vadd.f32 %v5864, %v5907
      %v5909 = vpop.f32.mrb[0].mxu0
      %v5910 = vpop.f32.mrb[0].mxu0
      %v5911 = vpop.f32.mrb[0].mxu0
      %5912 = vdwg.mxu0
      %v5913 = vpack.c.bf16 %v5908, %v5908
      %s5914 = scalar_lea.vmem %s306, 116
      %5915 = vst.msk [vmem:[%s5914] sm:$0xf] %vm449, %v5913
      %s5916 = scalar_lea.vmem %s276, 120
      %v5917 = vld [vmem:[%s5916] sm:$0xf]
      %s5918 = scalar_lea.vmem %s282, 120
      %v5919 = vld [vmem:[%s5918] sm:$0xf]
      %s5920 = scalar_lea.vmem %s288, 120
      %v5921 = vld [vmem:[%s5920] sm:$0xf]
      %s5922 = scalar_lea.vmem %s294, 120
      %v5923 = vld [vmem:[%s5922] sm:$0xf]
      %v5925 = vsel %vm313, %v5917, 0
      %v5928 = vsel %vm317, %v5921, 0
      %5930 = vmatprep.subr.bf16.mxu0 0
      %5931 = vmatpush1.bf16.msra.mxu0 %v5928
      %5932 = vmatprep.subr.bf16.mxu0 0
      %5933 = vmatpush1.bf16.msra.mxu0 0
      %5934 = vmatprep.subr.bf16.mxu0 0
      %5935 = vmatpush1.bf16.msra.mxu0 0
      %5936 = vmatprep.subr.bf16.mxu0 0
      %5937 = vmatpush1.bf16.msra.mxu0 0
      %5938 = vmatprep.subr.bf16.mxu0 0
      %5939 = vmatpush1.bf16.msra.mxu0 0
      %5940 = vmatprep.subr.bf16.mxu0 0
      %5941 = vmatpush1.bf16.msra.mxu0 0
      %5942 = vmatprep.subr.bf16.mxu0 0
      %5943 = vmatpush1.bf16.msra.mxu0 0
      %5944 = vmatprep.subr.bf16.mxu0 0
      %5945 = vmatpush1.bf16.msra.mxu0 0
      %5946 = vmatprep.subr.bf16.mxu0 0
      %5947 = vmatpush1.bf16.msra.mxu0 0
      %5948 = vmatprep.subr.bf16.mxu0 0
      %5949 = vmatpush1.bf16.msra.mxu0 0
      %5950 = vmatprep.subr.bf16.mxu0 0
      %5951 = vmatpush1.bf16.msra.mxu0 0
      %5952 = vmatprep.subr.bf16.mxu0 0
      %5953 = vmatpush1.bf16.msra.mxu0 0
      %5954 = vmatprep.subr.bf16.mxu0 0
      %5955 = vmatpush1.bf16.msra.mxu0 0
      %5956 = vmatprep.subr.bf16.mxu0 0
      %5957 = vmatpush1.bf16.msra.mxu0 0
      %5958 = vmatprep.subr.bf16.mxu0 0
      %5959 = vmatpush1.bf16.msra.mxu0 0
      %5960 = vmatprep.subr.bf16.mxu0 0
      %5961 = vmatpush1.bf16.msra.mxu0 0
      %5962 = vmatprep.mubr.bf16.mxu0 0
      %5963 = vmatmul.mubr.bf16.gmra.mrb[0].mxu0 %v5925
      %v5964 = vpop.f32.mrb[0].mxu0
      %v5965 = vadd.f32 0.0, %v5964
      %v5966 = vpop.f32.mrb[0].mxu0
      %v5967 = vpop.f32.mrb[0].mxu0
      %v5968 = vpop.f32.mrb[0].mxu0
      %5969 = vdwg.mxu0
      %v5971 = vsel %vm313, %v5919, 0
      %v5974 = vsel %vm317, %v5923, 0
      %5976 = vmatprep.subr.bf16.mxu0 0
      %5977 = vmatpush1.bf16.msra.mxu0 %v5974
      %5978 = vmatprep.subr.bf16.mxu0 0
      %5979 = vmatpush1.bf16.msra.mxu0 0
      %5980 = vmatprep.subr.bf16.mxu0 0
      %5981 = vmatpush1.bf16.msra.mxu0 0
      %5982 = vmatprep.subr.bf16.mxu0 0
      %5983 = vmatpush1.bf16.msra.mxu0 0
      %5984 = vmatprep.subr.bf16.mxu0 0
      %5985 = vmatpush1.bf16.msra.mxu0 0
      %5986 = vmatprep.subr.bf16.mxu0 0
      %5987 = vmatpush1.bf16.msra.mxu0 0
      %5988 = vmatprep.subr.bf16.mxu0 0
      %5989 = vmatpush1.bf16.msra.mxu0 0
      %5990 = vmatprep.subr.bf16.mxu0 0
      %5991 = vmatpush1.bf16.msra.mxu0 0
      %5992 = vmatprep.subr.bf16.mxu0 0
      %5993 = vmatpush1.bf16.msra.mxu0 0
      %5994 = vmatprep.subr.bf16.mxu0 0
      %5995 = vmatpush1.bf16.msra.mxu0 0
      %5996 = vmatprep.subr.bf16.mxu0 0
      %5997 = vmatpush1.bf16.msra.mxu0 0
      %5998 = vmatprep.subr.bf16.mxu0 0
      %5999 = vmatpush1.bf16.msra.mxu0 0
      %6000 = vmatprep.subr.bf16.mxu0 0
      %6001 = vmatpush1.bf16.msra.mxu0 0
      %6002 = vmatprep.subr.bf16.mxu0 0
      %6003 = vmatpush1.bf16.msra.mxu0 0
      %6004 = vmatprep.subr.bf16.mxu0 0
      %6005 = vmatpush1.bf16.msra.mxu0 0
      %6006 = vmatprep.subr.bf16.mxu0 0
      %6007 = vmatpush1.bf16.msra.mxu0 0
      %6008 = vmatprep.mubr.bf16.mxu0 0
      %6009 = vmatmul.mubr.bf16.gmra.mrb[0].mxu0 %v5971
      %v6010 = vpop.f32.mrb[0].mxu0
      %v6011 = vadd.f32 0.0, %v6010
      %v6012 = vpop.f32.mrb[0].mxu0
      %v6013 = vpop.f32.mrb[0].mxu0
      %v6014 = vpop.f32.mrb[0].mxu0
      %6015 = vdwg.mxu0
      %6016 = vmatprep.subr.bf16.mxu0 0
      %6017 = vmatpush1.bf16.msra.mxu0 %v5928
      %6018 = vmatprep.subr.bf16.mxu0 0
      %6019 = vmatpush1.bf16.msra.mxu0 0
      %6020 = vmatprep.subr.bf16.mxu0 0
      %6021 = vmatpush1.bf16.msra.mxu0 0
      %6022 = vmatprep.subr.bf16.mxu0 0
      %6023 = vmatpush1.bf16.msra.mxu0 0
      %6024 = vmatprep.subr.bf16.mxu0 0
      %6025 = vmatpush1.bf16.msra.mxu0 0
      %6026 = vmatprep.subr.bf16.mxu0 0
      %6027 = vmatpush1.bf16.msra.mxu0 0
      %6028 = vmatprep.subr.bf16.mxu0 0
      %6029 = vmatpush1.bf16.msra.mxu0 0
      %6030 = vmatprep.subr.bf16.mxu0 0
      %6031 = vmatpush1.bf16.msra.mxu0 0
      %6032 = vmatprep.subr.bf16.mxu0 0
      %6033 = vmatpush1.bf16.msra.mxu0 0
      %6034 = vmatprep.subr.bf16.mxu0 0
      %6035 = vmatpush1.bf16.msra.mxu0 0
      %6036 = vmatprep.subr.bf16.mxu0 0
      %6037 = vmatpush1.bf16.msra.mxu0 0
      %6038 = vmatprep.subr.bf16.mxu0 0
      %6039 = vmatpush1.bf16.msra.mxu0 0
      %6040 = vmatprep.subr.bf16.mxu0 0
      %6041 = vmatpush1.bf16.msra.mxu0 0
      %6042 = vmatprep.subr.bf16.mxu0 0
      %6043 = vmatpush1.bf16.msra.mxu0 0
      %6044 = vmatprep.subr.bf16.mxu0 0
      %6045 = vmatpush1.bf16.msra.mxu0 0
      %6046 = vmatprep.subr.bf16.mxu0 0
      %6047 = vmatpush1.bf16.msra.mxu0 0
      %6048 = vmatprep.mubr.bf16.mxu0 0
      %6049 = vmatmul.mubr.bf16.gmra.mrb[0].mxu0 %v5971
      %v6050 = vpop.f32.mrb[0].mxu0
      %v6051 = vadd.f32 0.0, %v6050
      %v6052 = vpop.f32.mrb[0].mxu0
      %v6053 = vpop.f32.mrb[0].mxu0
      %v6054 = vpop.f32.mrb[0].mxu0
      %6055 = vdwg.mxu0
      %v6056 = vsub.f32 %v5965, %v6011
      %v6057 = vpack.c.bf16 %v6056, %v6056
      %s6058 = scalar_lea.vmem %s300, 120
      %6059 = vst.msk [vmem:[%s6058] sm:$0xf] %vm449, %v6057
      %6060 = vmatprep.subr.bf16.mxu0 0
      %6061 = vmatpush1.bf16.msra.mxu0 %v5974
      %6062 = vmatprep.subr.bf16.mxu0 0
      %6063 = vmatpush1.bf16.msra.mxu0 0
      %6064 = vmatprep.subr.bf16.mxu0 0
      %6065 = vmatpush1.bf16.msra.mxu0 0
      %6066 = vmatprep.subr.bf16.mxu0 0
      %6067 = vmatpush1.bf16.msra.mxu0 0
      %6068 = vmatprep.subr.bf16.mxu0 0
      %6069 = vmatpush1.bf16.msra.mxu0 0
      %6070 = vmatprep.subr.bf16.mxu0 0
      %6071 = vmatpush1.bf16.msra.mxu0 0
      %6072 = vmatprep.subr.bf16.mxu0 0
      %6073 = vmatpush1.bf16.msra.mxu0 0
      %6074 = vmatprep.subr.bf16.mxu0 0
      %6075 = vmatpush1.bf16.msra.mxu0 0
      %6076 = vmatprep.subr.bf16.mxu0 0
      %6077 = vmatpush1.bf16.msra.mxu0 0
      %6078 = vmatprep.subr.bf16.mxu0 0
      %6079 = vmatpush1.bf16.msra.mxu0 0
      %6080 = vmatprep.subr.bf16.mxu0 0
      %6081 = vmatpush1.bf16.msra.mxu0 0
      %6082 = vmatprep.subr.bf16.mxu0 0
      %6083 = vmatpush1.bf16.msra.mxu0 0
      %6084 = vmatprep.subr.bf16.mxu0 0
      %6085 = vmatpush1.bf16.msra.mxu0 0
      %6086 = vmatprep.subr.bf16.mxu0 0
      %6087 = vmatpush1.bf16.msra.mxu0 0
      %6088 = vmatprep.subr.bf16.mxu0 0
      %6089 = vmatpush1.bf16.msra.mxu0 0
      %6090 = vmatprep.subr.bf16.mxu0 0
      %6091 = vmatpush1.bf16.msra.mxu0 0
      %6092 = vmatprep.mubr.bf16.mxu0 0
      %6093 = vmatmul.mubr.bf16.gmra.mrb[0].mxu0 %v5925
      %v6094 = vpop.f32.mrb[0].mxu0
      %v6095 = vadd.f32 %v6051, %v6094
      %v6096 = vpop.f32.mrb[0].mxu0
      %v6097 = vpop.f32.mrb[0].mxu0
      %v6098 = vpop.f32.mrb[0].mxu0
      %6099 = vdwg.mxu0
      %v6100 = vpack.c.bf16 %v6095, %v6095
      %s6101 = scalar_lea.vmem %s306, 120
      %6102 = vst.msk [vmem:[%s6101] sm:$0xf] %vm449, %v6100
      %s6103 = scalar_lea.vmem %s276, 124
      %v6104 = vld [vmem:[%s6103] sm:$0xf]
      %s6105 = scalar_lea.vmem %s282, 124
      %v6106 = vld [vmem:[%s6105] sm:$0xf]
      %s6107 = scalar_lea.vmem %s288, 124
      %v6108 = vld [vmem:[%s6107] sm:$0xf]
      %s6109 = scalar_lea.vmem %s294, 124
      %v6110 = vld [vmem:[%s6109] sm:$0xf]
      %v6112 = vsel %vm313, %v6104, 0
      %v6115 = vsel %vm317, %v6108, 0
      %6117 = vmatprep.subr.bf16.mxu0 0
      %6118 = vmatpush1.bf16.msra.mxu0 %v6115
      %6119 = vmatprep.subr.bf16.mxu0 0
      %6120 = vmatpush1.bf16.msra.mxu0 0
      %6121 = vmatprep.subr.bf16.mxu0 0
      %6122 = vmatpush1.bf16.msra.mxu0 0
      %6123 = vmatprep.subr.bf16.mxu0 0
      %6124 = vmatpush1.bf16.msra.mxu0 0
      %6125 = vmatprep.subr.bf16.mxu0 0
      %6126 = vmatpush1.bf16.msra.mxu0 0
      %6127 = vmatprep.subr.bf16.mxu0 0
      %6128 = vmatpush1.bf16.msra.mxu0 0
      %6129 = vmatprep.subr.bf16.mxu0 0
      %6130 = vmatpush1.bf16.msra.mxu0 0
      %6131 = vmatprep.subr.bf16.mxu0 0
      %6132 = vmatpush1.bf16.msra.mxu0 0
      %6133 = vmatprep.subr.bf16.mxu0 0
      %6134 = vmatpush1.bf16.msra.mxu0 0
      %6135 = vmatprep.subr.bf16.mxu0 0
      %6136 = vmatpush1.bf16.msra.mxu0 0
      %6137 = vmatprep.subr.bf16.mxu0 0
      %6138 = vmatpush1.bf16.msra.mxu0 0
      %6139 = vmatprep.subr.bf16.mxu0 0
      %6140 = vmatpush1.bf16.msra.mxu0 0
      %6141 = vmatprep.subr.bf16.mxu0 0
      %6142 = vmatpush1.bf16.msra.mxu0 0
      %6143 = vmatprep.subr.bf16.mxu0 0
      %6144 = vmatpush1.bf16.msra.mxu0 0
      %6145 = vmatprep.subr.bf16.mxu0 0
      %6146 = vmatpush1.bf16.msra.mxu0 0
      %6147 = vmatprep.subr.bf16.mxu0 0
      %6148 = vmatpush1.bf16.msra.mxu0 0
      %6149 = vmatprep.mubr.bf16.mxu0 0
      %6150 = vmatmul.mubr.bf16.gmra.mrb[0].mxu0 %v6112
      %v6151 = vpop.f32.mrb[0].mxu0
      %v6152 = vadd.f32 0.0, %v6151
      %v6153 = vpop.f32.mrb[0].mxu0
      %v6154 = vpop.f32.mrb[0].mxu0
      %v6155 = vpop.f32.mrb[0].mxu0
      %6156 = vdwg.mxu0
      %v6158 = vsel %vm313, %v6106, 0
      %v6161 = vsel %vm317, %v6110, 0
      %6163 = vmatprep.subr.bf16.mxu0 0
      %6164 = vmatpush1.bf16.msra.mxu0 %v6161
      %6165 = vmatprep.subr.bf16.mxu0 0
      %6166 = vmatpush1.bf16.msra.mxu0 0
      %6167 = vmatprep.subr.bf16.mxu0 0
      %6168 = vmatpush1.bf16.msra.mxu0 0
      %6169 = vmatprep.subr.bf16.mxu0 0
      %6170 = vmatpush1.bf16.msra.mxu0 0
      %6171 = vmatprep.subr.bf16.mxu0 0
      %6172 = vmatpush1.bf16.msra.mxu0 0
      %6173 = vmatprep.subr.bf16.mxu0 0
      %6174 = vmatpush1.bf16.msra.mxu0 0
      %6175 = vmatprep.subr.bf16.mxu0 0
      %6176 = vmatpush1.bf16.msra.mxu0 0
      %6177 = vmatprep.subr.bf16.mxu0 0
      %6178 = vmatpush1.bf16.msra.mxu0 0
      %6179 = vmatprep.subr.bf16.mxu0 0
      %6180 = vmatpush1.bf16.msra.mxu0 0
      %6181 = vmatprep.subr.bf16.mxu0 0
      %6182 = vmatpush1.bf16.msra.mxu0 0
      %6183 = vmatprep.subr.bf16.mxu0 0
      %6184 = vmatpush1.bf16.msra.mxu0 0
      %6185 = vmatprep.subr.bf16.mxu0 0
      %6186 = vmatpush1.bf16.msra.mxu0 0
      %6187 = vmatprep.subr.bf16.mxu0 0
      %6188 = vmatpush1.bf16.msra.mxu0 0
      %6189 = vmatprep.subr.bf16.mxu0 0
      %6190 = vmatpush1.bf16.msra.mxu0 0
      %6191 = vmatprep.subr.bf16.mxu0 0
      %6192 = vmatpush1.bf16.msra.mxu0 0
      %6193 = vmatprep.subr.bf16.mxu0 0
      %6194 = vmatpush1.bf16.msra.mxu0 0
      %6195 = vmatprep.mubr.bf16.mxu0 0
      %6196 = vmatmul.mubr.bf16.gmra.mrb[0].mxu0 %v6158
      %v6197 = vpop.f32.mrb[0].mxu0
      %v6198 = vadd.f32 0.0, %v6197
      %v6199 = vpop.f32.mrb[0].mxu0
      %v6200 = vpop.f32.mrb[0].mxu0
      %v6201 = vpop.f32.mrb[0].mxu0
      %6202 = vdwg.mxu0
      %6203 = vmatprep.subr.bf16.mxu0 0
      %6204 = vmatpush1.bf16.msra.mxu0 %v6115
      %6205 = vmatprep.subr.bf16.mxu0 0
      %6206 = vmatpush1.bf16.msra.mxu0 0
      %6207 = vmatprep.subr.bf16.mxu0 0
      %6208 = vmatpush1.bf16.msra.mxu0 0
      %6209 = vmatprep.subr.bf16.mxu0 0
      %6210 = vmatpush1.bf16.msra.mxu0 0
      %6211 = vmatprep.subr.bf16.mxu0 0
      %6212 = vmatpush1.bf16.msra.mxu0 0
      %6213 = vmatprep.subr.bf16.mxu0 0
      %6214 = vmatpush1.bf16.msra.mxu0 0
      %6215 = vmatprep.subr.bf16.mxu0 0
      %6216 = vmatpush1.bf16.msra.mxu0 0
      %6217 = vmatprep.subr.bf16.mxu0 0
      %6218 = vmatpush1.bf16.msra.mxu0 0
      %6219 = vmatprep.subr.bf16.mxu0 0
      %6220 = vmatpush1.bf16.msra.mxu0 0
      %6221 = vmatprep.subr.bf16.mxu0 0
      %6222 = vmatpush1.bf16.msra.mxu0 0
      %6223 = vmatprep.subr.bf16.mxu0 0
      %6224 = vmatpush1.bf16.msra.mxu0 0
      %6225 = vmatprep.subr.bf16.mxu0 0
      %6226 = vmatpush1.bf16.msra.mxu0 0
      %6227 = vmatprep.subr.bf16.mxu0 0
      %6228 = vmatpush1.bf16.msra.mxu0 0
      %6229 = vmatprep.subr.bf16.mxu0 0
      %6230 = vmatpush1.bf16.msra.mxu0 0
      %6231 = vmatprep.subr.bf16.mxu0 0
      %6232 = vmatpush1.bf16.msra.mxu0 0
      %6233 = vmatprep.subr.bf16.mxu0 0
      %6234 = vmatpush1.bf16.msra.mxu0 0
      %6235 = vmatprep.mubr.bf16.mxu0 0
      %6236 = vmatmul.mubr.bf16.gmra.mrb[0].mxu0 %v6158
      %v6237 = vpop.f32.mrb[0].mxu0
      %v6238 = vadd.f32 0.0, %v6237
      %v6239 = vpop.f32.mrb[0].mxu0
      %v6240 = vpop.f32.mrb[0].mxu0
      %v6241 = vpop.f32.mrb[0].mxu0
      %6242 = vdwg.mxu0
      %v6243 = vsub.f32 %v6152, %v6198
      %v6244 = vpack.c.bf16 %v6243, %v6243
      %s6245 = scalar_lea.vmem %s300, 124
      %6246 = vst.msk [vmem:[%s6245] sm:$0xf] %vm449, %v6244
      %6247 = vmatprep.subr.bf16.mxu0 0
      %6248 = vmatpush1.bf16.msra.mxu0 %v6161
      %6249 = vmatprep.subr.bf16.mxu0 0
      %6250 = vmatpush1.bf16.msra.mxu0 0
      %6251 = vmatprep.subr.bf16.mxu0 0
      %6252 = vmatpush1.bf16.msra.mxu0 0
      %6253 = vmatprep.subr.bf16.mxu0 0
      %6254 = vmatpush1.bf16.msra.mxu0 0
      %6255 = vmatprep.subr.bf16.mxu0 0
      %6256 = vmatpush1.bf16.msra.mxu0 0
      %6257 = vmatprep.subr.bf16.mxu0 0
      %6258 = vmatpush1.bf16.msra.mxu0 0
      %6259 = vmatprep.subr.bf16.mxu0 0
      %6260 = vmatpush1.bf16.msra.mxu0 0
      %6261 = vmatprep.subr.bf16.mxu0 0
      %6262 = vmatpush1.bf16.msra.mxu0 0
      %6263 = vmatprep.subr.bf16.mxu0 0
      %6264 = vmatpush1.bf16.msra.mxu0 0
      %6265 = vmatprep.subr.bf16.mxu0 0
      %6266 = vmatpush1.bf16.msra.mxu0 0
      %6267 = vmatprep.subr.bf16.mxu0 0
      %6268 = vmatpush1.bf16.msra.mxu0 0
      %6269 = vmatprep.subr.bf16.mxu0 0
      %6270 = vmatpush1.bf16.msra.mxu0 0
      %6271 = vmatprep.subr.bf16.mxu0 0
      %6272 = vmatpush1.bf16.msra.mxu0 0
      %6273 = vmatprep.subr.bf16.mxu0 0
      %6274 = vmatpush1.bf16.msra.mxu0 0
      %6275 = vmatprep.subr.bf16.mxu0 0
      %6276 = vmatpush1.bf16.msra.mxu0 0
      %6277 = vmatprep.subr.bf16.mxu0 0
      %6278 = vmatpush1.bf16.msra.mxu0 0
      %6279 = vmatprep.mubr.bf16.mxu0 0
      %6280 = vmatmul.mubr.bf16.gmra.mrb[0].mxu0 %v6112
      %v6281 = vpop.f32.mrb[0].mxu0
      %v6282 = vadd.f32 %v6238, %v6281
      %v6283 = vpop.f32.mrb[0].mxu0
      %v6284 = vpop.f32.mrb[0].mxu0
      %v6285 = vpop.f32.mrb[0].mxu0
      %6286 = vdwg.mxu0
      %v6287 = vpack.c.bf16 %v6282, %v6282
      %s6288 = scalar_lea.vmem %s306, 124
      %6289 = vst.msk [vmem:[%s6288] sm:$0xf] %vm449, %v6287
      %s6290 = smul.u32 32, %s17
      %p6291 = scmp.lt.s32.totalorder %s6290, 95
      %s6292 = scalar_select %p6291, %s6290, 95
      %s6293 = smul.addr %s6292, 4
      %s6294 = scalar_lea.vmem %s4, %s6293
      %s6295 = smul.u32 32, %s17
      %p6296 = scmp.lt.s32.totalorder %s6295, 95
      %s6297 = scalar_select %p6296, %s6295, 95
      %s6298 = smul.addr %s6297, 4
      %s6299 = scalar_lea.vmem %s5, %s6298
      // Predicated region
      $region37: #{spectral_conv2d.1} parent=35 // pred_check
        %p6300 = pneg %p139
      $region38: #{spectral_conv2d.1} parent=35 // pred_check_branch
        %6302 = sbr.rel (%p6300) target = $region40
      $region39: #{spectral_conv2d.1} parent=35 // pred_region
        %s6303 = smul.u32 32, %s17
      $region40: #{spectral_conv2d.1} parent=35 // pred_fallthru
        _
      // Predicated region
      $region41: #{spectral_conv2d.1} parent=35 // pred_check
        %p6304 = pneg %p165
      $region42: #{spectral_conv2d.1} parent=35 // pred_check_branch
        %6306 = sbr.rel (%p6304) target = $region44
      $region43: #{spectral_conv2d.1} parent=35 // pred_region
        %s6307 = smul.u32 32, %s17
      $region44: #{spectral_conv2d.1} parent=35 // pred_fallthru
        _
    $region36: #{spectral_conv2d.1} parent=5 // pred_fallthru
      _
    %p6308 = scmp.le.s32.totalorder 2, %s12
    // Predicated region
    $region45: #{spectral_conv2d.1} parent=5 // pred_check
      %p6309 = pneg %p6308
    $region46: #{spectral_conv2d.1} parent=5 // pred_check_branch
      %6311 = sbr.rel (%p6309) target = $region48
    $region47: #{spectral_conv2d.1} parent=5 // pred_region
      %s6312 = ssub.s32 %s12, 2
      // Predicated region
      $region49: #{spectral_conv2d.1} parent=47 // pred_check
        %p6313 = pneg %p145
      $region50: #{spectral_conv2d.1} parent=47 // pred_check_branch
        %6315 = sbr.rel (%p6313) target = $region52
      $region51: #{spectral_conv2d.1} parent=47 // pred_region
        %s6316 = smul.u32 32, %s18
        %p6317 = scmp.lt.s32.totalorder %s6316, 95
        %s6318 = scalar_select %p6317, %s6316, 95
        %s6319 = smul.addr %s6318, 4
        %s6320 = scalar_lea.vmem %s4, %s6319
      $region52: #{spectral_conv2d.1} parent=47 // pred_fallthru
        _
      // Predicated region
      $region53: #{spectral_conv2d.1} parent=47 // pred_check
        %p6321 = pneg %p171
      $region54: #{spectral_conv2d.1} parent=47 // pred_check_branch
        %6323 = sbr.rel (%p6321) target = $region56
      $region55: #{spectral_conv2d.1} parent=47 // pred_region
        %s6324 = smul.u32 32, %s18
        %p6325 = scmp.lt.s32.totalorder %s6324, 95
        %s6326 = scalar_select %p6325, %s6324, 95
        %s6327 = smul.addr %s6326, 4
        %s6328 = scalar_lea.vmem %s5, %s6327
      $region56: #{spectral_conv2d.1} parent=47 // pred_fallthru
        _
    $region48: #{spectral_conv2d.1} parent=5 // pred_fallthru
      _
  $region6: #{spectral_conv2d.1} parent=0 // loop_footer
    %s16 = sadd.s32 1, %s12
  $region7: #{spectral_conv2d.1} parent=0 // loop_footer_branch
    %11 = sbr.rel target = $region3
  $region8: #{spectral_conv2d.1} parent=0 // loop_exit
    _

</llo_original>
